<compile_context>
chip_gen: v5e
topology: v5e:2x2
jax: 0.10.0
libtpu: 0.0.40
codegen_flags: <defaults>
</compile_context>

<pallas_src>
import functools

import jax
import jax.numpy as jnp
from jax.experimental import pallas as pl
from jax.experimental.pallas import tpu as pltpu

INPUT_SIZE = 2
HIDDEN_SIZE = 7
OUTPUT_SIZE = 1
NUM_LAYERS = 10
MAX_DIM = max(INPUT_SIZE, HIDDEN_SIZE, OUTPUT_SIZE)   # 7

LANE = 128               # batch minor axis (lane width)
MAX_SUB_BLOCK = 256      # max sublanes per grid step -> 32768 rows/step
CHUNK_SUB = 16           # sublanes per inner-loop chunk (2048 rows, ~30 vregs)

_DIMS = tuple([INPUT_SIZE] + [HIDDEN_SIZE] * (NUM_LAYERS - 1) + [OUTPUT_SIZE])


def _round_up(v, m):
    return -(-v // m) * m


def _choose_block_sub(batch):
    """Sublanes per grid step: multiple of 8, <= MAX_SUB_BLOCK, grid kept >= 2
    (and even) when there is enough data, padding bounded to ~1 tile row."""
    s_data = -(-batch // LANE)                 # sublanes holding real rows
    if s_data <= 8:
        return 8                               # tiny batch: one minimal tile
    s_min = _round_up(s_data, 8)
    # even number of grid steps so both v7x TensorCores stay balanced
    g = max(2, 2 * (-(-s_min // (2 * MAX_SUB_BLOCK))))
    blk = _round_up(-(-s_min // g), 8)
    return min(blk, MAX_SUB_BLOCK)


def _apply_layers(h, w_ref, dims):
    """h: list of d_in (size,128) f32 slabs -> list of d_out slabs."""
    for l in range(len(dims) - 1):
        d_in, d_out = dims[l], dims[l + 1]
        base = l * MAX_DIM * MAX_DIM
        new_h = []
        for j in range(d_out):                 # 7 independent accumulator chains
            acc = w_ref[base + j * MAX_DIM] * h[0]
            for i in range(1, d_in):
                acc = acc + w_ref[base + j * MAX_DIM + i] * h[i]
            # leaky_relu(negative_slope=0.01) == max(x, 0.01*x) exactly in f32
            new_h.append(jnp.maximum(acc, 0.01 * acc))
        h = new_h
    return h


def _mlp_kernel(w_ref, x_ref, o_ref, *, dims, block_sub):
    # w_ref: SMEM (NUM_LAYERS*49,) f32, PyTorch (out,in) order padded to 7x7:
    #        w[l, j, i] at index l*49 + j*7 + i.
    # x_ref: VMEM (INPUT_SIZE,  block_sub, 128) f32
    # o_ref: VMEM (OUTPUT_SIZE, block_sub, 128) f32
    d_in0 = dims[0]

    def process_chunk(start, size):            # size is static (16 or 8)
        sl = pl.ds(start, size)
        h = [x_ref[i, sl, :] for i in range(d_in0)]
        h = _apply_layers(h, w_ref, dims)
        for j in range(len(h)):
            o_ref[j, sl, :] = h[j]

    n_full = block_sub // CHUNK_SUB            # rolled loop bounds live ranges
    if n_full > 0:
        @pl.loop(0, n_full)
        def _(c):
            process_chunk(pl.multiple_of(c * CHUNK_SUB, CHUNK_SUB), CHUNK_SUB)
    if block_sub % CHUNK_SUB:                  # static 8-sublane tail chunk
        process_chunk(n_full * CHUNK_SUB, 8)


def deep_mlp_pallas(x, weights):
    """DeepMLP forward.

    Args:
      x: (B, INPUT_SIZE) float32.
      weights: NUM_LAYERS arrays in PyTorch (out_features, in_features) layout:
               (7,2), 8x(7,7), (1,7).
    Returns:
      (B, OUTPUT_SIZE) float32.
    """
    B = x.shape[0]

    # Flat SMEM weight table: pad each (out,in) matrix to (7,7), stack, flatten.
    w_pad = [
        jnp.pad(w.astype(jnp.float32),
                ((0, MAX_DIM - w.shape[0]), (0, MAX_DIM - w.shape[1])))
        for w in weights
    ]
    w_flat = jnp.stack(w_pad).reshape(-1)      # (NUM_LAYERS * 49,) f32, ~2 KiB

    block_sub = _choose_block_sub(B)
    rows_per_step = block_sub * LANE
    Bp = _round_up(B, rows_per_step)
    xp = jnp.pad(x.astype(jnp.float32), ((0, Bp - B), (0, 0)))
    x_r = xp.T.reshape(INPUT_SIZE, Bp // LANE, LANE)

    grid = (Bp // rows_per_step,)

    kernel = functools.partial(_mlp_kernel, dims=_DIMS, block_sub=block_sub)

    out_r = pl.pallas_call(
        kernel,
        out_shape=jax.ShapeDtypeStruct((OUTPUT_SIZE, Bp // LANE, LANE),
                                       jnp.float32),
        grid_spec=pltpu.PrefetchScalarGridSpec(
            num_scalar_prefetch=1,             # w_flat -> SMEM once, pre-grid
            grid=grid,
            in_specs=[
                pl.BlockSpec((INPUT_SIZE, block_sub, LANE),
                             lambda i, w: (0, i, 0)),
            ],
            out_specs=pl.BlockSpec((OUTPUT_SIZE, block_sub, LANE),
                                   lambda i, w: (0, i, 0)),
        ),
        compiler_params=pltpu.CompilerParams(
            dimension_semantics=("parallel",)),
    )(w_flat, x_r)

    # (OUT, Bp/128, 128) -> (Bp, OUT); drop batch padding.
    return out_r.reshape(OUTPUT_SIZE, Bp).T[:B]


def _reference(x, weights):
    h = x.astype(jnp.float32)
    for w in weights:
        h = jnp.dot(h, w.T, precision=jax.lax.Precision.HIGHEST)
        h = jnp.where(h > 0, h, 0.01 * h)
    return h


def _init_weights(key):
    # Matches nn.init.uniform_(layer.weight, a=-1.0, b=1.0); PyTorch weight
    # layout is (out_features, in_features).
    sizes = ([(HIDDEN_SIZE, INPUT_SIZE)]
             + [(HIDDEN_SIZE, HIDDEN_SIZE)] * (NUM_LAYERS - 2)
             + [(OUTPUT_SIZE, HIDDEN_SIZE)])
    keys = jax.random.split(key, NUM_LAYERS)
    return [jax.random.uniform(k, s, jnp.float32, minval=-1.0, maxval=1.0)
            for k, s in zip(keys, sizes)]


if __name__ == "__main__":
    key = jax.random.PRNGKey(0)
    k_w, k_x = jax.random.split(key)
    weights = _init_weights(k_w)

    # Non-multiple batch: exercises padding, the 16-sublane loop + 8-sublane
    # tail, and grid = 2 (both v7x TensorCores get a tile).
    B = 5000
    x = jax.random.normal(k_x, (B, INPUT_SIZE), jnp.float32)

    out = jax.block_until_ready(deep_mlp_pallas(x, weights))

    ref = _reference(x, weights)
    assert out.shape == (B, OUTPUT_SIZE)
    err = float(jnp.max(jnp.abs(out - ref)))
    assert jnp.allclose(out, ref, rtol=1e-4, atol=1e-4), err
    print("KERNEL_OK")
</pallas_src>

<mosaic_0001>
module attributes {stable_mosaic.version = 11 : i64} {
  func.func @_mlp_kernel(%arg0: i32, %arg1: memref<490xf32, #tpu.memory_space<smem>>, %arg2: memref<2x24x128xf32, #tpu.memory_space<vmem>>, %arg3: memref<1x24x128xf32, #tpu.memory_space<vmem>>) attributes {dimension_semantics = [#tpu.dimension_semantics<parallel>], iteration_bounds = array<i64: 2>, scalar_prefetch = 1 : i64, scratch_operands = 0 : i64, tpu.core_type = #tpu.core_type<tc>, window_params = [{transform_indices = @transform_0, window_bounds = array<i64: 2, 24, 128>}, {transform_indices = @transform_1, window_bounds = array<i64: 1, 24, 128>}]} {
    %c0_i32 = arith.constant 0 : i32
    %c1_i32 = arith.constant 1 : i32
    %0 = arith.muli %c0_i32, %c1_i32 : i32
    %c0_i32_0 = arith.constant 0 : i32
    %1 = arith.addi %c0_i32_0, %0 : i32
    %c16_i32 = arith.constant 16 : i32
    %2 = arith.muli %1, %c16_i32 : i32
    %3 = tpu.assume_multiple %2, 16 : i32
    %c0 = arith.constant 0 : index
    %4 = arith.index_cast %3 : i32 to index
    %c0_1 = arith.constant 0 : index
    %5 = vector.load %arg2[%c0, %4, %c0_1] : memref<2x24x128xf32, #tpu.memory_space<vmem>>, vector<1x16x128xf32>
    %6 = vector.shape_cast %5 : vector<1x16x128xf32> to vector<16x128xf32>
    %c1 = arith.constant 1 : index
    %7 = arith.index_cast %3 : i32 to index
    %c0_2 = arith.constant 0 : index
    %8 = vector.load %arg2[%c1, %7, %c0_2] : memref<2x24x128xf32, #tpu.memory_space<vmem>>, vector<1x16x128xf32>
    %9 = vector.shape_cast %8 : vector<1x16x128xf32> to vector<16x128xf32>
    %c0_3 = arith.constant 0 : index
    %10 = memref.load %arg1[%c0_3] : memref<490xf32, #tpu.memory_space<smem>>
    %11 = vector.broadcast %10 : f32 to vector<16x128xf32>
    %12 = arith.mulf %11, %6 : vector<16x128xf32>
    %c1_4 = arith.constant 1 : index
    %13 = memref.load %arg1[%c1_4] : memref<490xf32, #tpu.memory_space<smem>>
    %14 = vector.broadcast %13 : f32 to vector<16x128xf32>
    %15 = arith.mulf %14, %9 : vector<16x128xf32>
    %16 = arith.addf %12, %15 : vector<16x128xf32>
    %cst = arith.constant 0.00999999977 : f32
    %17 = vector.broadcast %cst : f32 to vector<16x128xf32>
    %18 = arith.mulf %17, %16 : vector<16x128xf32>
    %19 = arith.maximumf %16, %18 : vector<16x128xf32>
    %c7 = arith.constant 7 : index
    %20 = memref.load %arg1[%c7] : memref<490xf32, #tpu.memory_space<smem>>
    %21 = vector.broadcast %20 : f32 to vector<16x128xf32>
    %22 = arith.mulf %21, %6 : vector<16x128xf32>
    %c8 = arith.constant 8 : index
    %23 = memref.load %arg1[%c8] : memref<490xf32, #tpu.memory_space<smem>>
    %24 = vector.broadcast %23 : f32 to vector<16x128xf32>
    %25 = arith.mulf %24, %9 : vector<16x128xf32>
    %26 = arith.addf %22, %25 : vector<16x128xf32>
    %cst_5 = arith.constant 0.00999999977 : f32
    %27 = vector.broadcast %cst_5 : f32 to vector<16x128xf32>
    %28 = arith.mulf %27, %26 : vector<16x128xf32>
    %29 = arith.maximumf %26, %28 : vector<16x128xf32>
    %c14 = arith.constant 14 : index
    %30 = memref.load %arg1[%c14] : memref<490xf32, #tpu.memory_space<smem>>
    %31 = vector.broadcast %30 : f32 to vector<16x128xf32>
    %32 = arith.mulf %31, %6 : vector<16x128xf32>
    %c15 = arith.constant 15 : index
    %33 = memref.load %arg1[%c15] : memref<490xf32, #tpu.memory_space<smem>>
    %34 = vector.broadcast %33 : f32 to vector<16x128xf32>
    %35 = arith.mulf %34, %9 : vector<16x128xf32>
    %36 = arith.addf %32, %35 : vector<16x128xf32>
    %cst_6 = arith.constant 0.00999999977 : f32
    %37 = vector.broadcast %cst_6 : f32 to vector<16x128xf32>
    %38 = arith.mulf %37, %36 : vector<16x128xf32>
    %39 = arith.maximumf %36, %38 : vector<16x128xf32>
    %c21 = arith.constant 21 : index
    %40 = memref.load %arg1[%c21] : memref<490xf32, #tpu.memory_space<smem>>
    %41 = vector.broadcast %40 : f32 to vector<16x128xf32>
    %42 = arith.mulf %41, %6 : vector<16x128xf32>
    %c22 = arith.constant 22 : index
    %43 = memref.load %arg1[%c22] : memref<490xf32, #tpu.memory_space<smem>>
    %44 = vector.broadcast %43 : f32 to vector<16x128xf32>
    %45 = arith.mulf %44, %9 : vector<16x128xf32>
    %46 = arith.addf %42, %45 : vector<16x128xf32>
    %cst_7 = arith.constant 0.00999999977 : f32
    %47 = vector.broadcast %cst_7 : f32 to vector<16x128xf32>
    %48 = arith.mulf %47, %46 : vector<16x128xf32>
    %49 = arith.maximumf %46, %48 : vector<16x128xf32>
    %c28 = arith.constant 28 : index
    %50 = memref.load %arg1[%c28] : memref<490xf32, #tpu.memory_space<smem>>
    %51 = vector.broadcast %50 : f32 to vector<16x128xf32>
    %52 = arith.mulf %51, %6 : vector<16x128xf32>
    %c29 = arith.constant 29 : index
    %53 = memref.load %arg1[%c29] : memref<490xf32, #tpu.memory_space<smem>>
    %54 = vector.broadcast %53 : f32 to vector<16x128xf32>
    %55 = arith.mulf %54, %9 : vector<16x128xf32>
    %56 = arith.addf %52, %55 : vector<16x128xf32>
    %cst_8 = arith.constant 0.00999999977 : f32
    %57 = vector.broadcast %cst_8 : f32 to vector<16x128xf32>
    %58 = arith.mulf %57, %56 : vector<16x128xf32>
    %59 = arith.maximumf %56, %58 : vector<16x128xf32>
    %c35 = arith.constant 35 : index
    %60 = memref.load %arg1[%c35] : memref<490xf32, #tpu.memory_space<smem>>
    %61 = vector.broadcast %60 : f32 to vector<16x128xf32>
    %62 = arith.mulf %61, %6 : vector<16x128xf32>
    %c36 = arith.constant 36 : index
    %63 = memref.load %arg1[%c36] : memref<490xf32, #tpu.memory_space<smem>>
    %64 = vector.broadcast %63 : f32 to vector<16x128xf32>
    %65 = arith.mulf %64, %9 : vector<16x128xf32>
    %66 = arith.addf %62, %65 : vector<16x128xf32>
    %cst_9 = arith.constant 0.00999999977 : f32
    %67 = vector.broadcast %cst_9 : f32 to vector<16x128xf32>
    %68 = arith.mulf %67, %66 : vector<16x128xf32>
    %69 = arith.maximumf %66, %68 : vector<16x128xf32>
    %c42 = arith.constant 42 : index
    %70 = memref.load %arg1[%c42] : memref<490xf32, #tpu.memory_space<smem>>
    %71 = vector.broadcast %70 : f32 to vector<16x128xf32>
    %72 = arith.mulf %71, %6 : vector<16x128xf32>
    %c43 = arith.constant 43 : index
    %73 = memref.load %arg1[%c43] : memref<490xf32, #tpu.memory_space<smem>>
    %74 = vector.broadcast %73 : f32 to vector<16x128xf32>
    %75 = arith.mulf %74, %9 : vector<16x128xf32>
    %76 = arith.addf %72, %75 : vector<16x128xf32>
    %cst_10 = arith.constant 0.00999999977 : f32
    %77 = vector.broadcast %cst_10 : f32 to vector<16x128xf32>
    %78 = arith.mulf %77, %76 : vector<16x128xf32>
    %79 = arith.maximumf %76, %78 : vector<16x128xf32>
    %c49 = arith.constant 49 : index
    %80 = memref.load %arg1[%c49] : memref<490xf32, #tpu.memory_space<smem>>
    %81 = vector.broadcast %80 : f32 to vector<16x128xf32>
    %82 = arith.mulf %81, %19 : vector<16x128xf32>
    %c50 = arith.constant 50 : index
    %83 = memref.load %arg1[%c50] : memref<490xf32, #tpu.memory_space<smem>>
    %84 = vector.broadcast %83 : f32 to vector<16x128xf32>
    %85 = arith.mulf %84, %29 : vector<16x128xf32>
    %86 = arith.addf %82, %85 : vector<16x128xf32>
    %c51 = arith.constant 51 : index
    %87 = memref.load %arg1[%c51] : memref<490xf32, #tpu.memory_space<smem>>
    %88 = vector.broadcast %87 : f32 to vector<16x128xf32>
    %89 = arith.mulf %88, %39 : vector<16x128xf32>
    %90 = arith.addf %86, %89 : vector<16x128xf32>
    %c52 = arith.constant 52 : index
    %91 = memref.load %arg1[%c52] : memref<490xf32, #tpu.memory_space<smem>>
    %92 = vector.broadcast %91 : f32 to vector<16x128xf32>
    %93 = arith.mulf %92, %49 : vector<16x128xf32>
    %94 = arith.addf %90, %93 : vector<16x128xf32>
    %c53 = arith.constant 53 : index
    %95 = memref.load %arg1[%c53] : memref<490xf32, #tpu.memory_space<smem>>
    %96 = vector.broadcast %95 : f32 to vector<16x128xf32>
    %97 = arith.mulf %96, %59 : vector<16x128xf32>
    %98 = arith.addf %94, %97 : vector<16x128xf32>
    %c54 = arith.constant 54 : index
    %99 = memref.load %arg1[%c54] : memref<490xf32, #tpu.memory_space<smem>>
    %100 = vector.broadcast %99 : f32 to vector<16x128xf32>
    %101 = arith.mulf %100, %69 : vector<16x128xf32>
    %102 = arith.addf %98, %101 : vector<16x128xf32>
    %c55 = arith.constant 55 : index
    %103 = memref.load %arg1[%c55] : memref<490xf32, #tpu.memory_space<smem>>
    %104 = vector.broadcast %103 : f32 to vector<16x128xf32>
    %105 = arith.mulf %104, %79 : vector<16x128xf32>
    %106 = arith.addf %102, %105 : vector<16x128xf32>
    %cst_11 = arith.constant 0.00999999977 : f32
    %107 = vector.broadcast %cst_11 : f32 to vector<16x128xf32>
    %108 = arith.mulf %107, %106 : vector<16x128xf32>
    %109 = arith.maximumf %106, %108 : vector<16x128xf32>
    %c56 = arith.constant 56 : index
    %110 = memref.load %arg1[%c56] : memref<490xf32, #tpu.memory_space<smem>>
    %111 = vector.broadcast %110 : f32 to vector<16x128xf32>
    %112 = arith.mulf %111, %19 : vector<16x128xf32>
    %c57 = arith.constant 57 : index
    %113 = memref.load %arg1[%c57] : memref<490xf32, #tpu.memory_space<smem>>
    %114 = vector.broadcast %113 : f32 to vector<16x128xf32>
    %115 = arith.mulf %114, %29 : vector<16x128xf32>
    %116 = arith.addf %112, %115 : vector<16x128xf32>
    %c58 = arith.constant 58 : index
    %117 = memref.load %arg1[%c58] : memref<490xf32, #tpu.memory_space<smem>>
    %118 = vector.broadcast %117 : f32 to vector<16x128xf32>
    %119 = arith.mulf %118, %39 : vector<16x128xf32>
    %120 = arith.addf %116, %119 : vector<16x128xf32>
    %c59 = arith.constant 59 : index
    %121 = memref.load %arg1[%c59] : memref<490xf32, #tpu.memory_space<smem>>
    %122 = vector.broadcast %121 : f32 to vector<16x128xf32>
    %123 = arith.mulf %122, %49 : vector<16x128xf32>
    %124 = arith.addf %120, %123 : vector<16x128xf32>
    %c60 = arith.constant 60 : index
    %125 = memref.load %arg1[%c60] : memref<490xf32, #tpu.memory_space<smem>>
    %126 = vector.broadcast %125 : f32 to vector<16x128xf32>
    %127 = arith.mulf %126, %59 : vector<16x128xf32>
    %128 = arith.addf %124, %127 : vector<16x128xf32>
    %c61 = arith.constant 61 : index
    %129 = memref.load %arg1[%c61] : memref<490xf32, #tpu.memory_space<smem>>
    %130 = vector.broadcast %129 : f32 to vector<16x128xf32>
    %131 = arith.mulf %130, %69 : vector<16x128xf32>
    %132 = arith.addf %128, %131 : vector<16x128xf32>
    %c62 = arith.constant 62 : index
    %133 = memref.load %arg1[%c62] : memref<490xf32, #tpu.memory_space<smem>>
    %134 = vector.broadcast %133 : f32 to vector<16x128xf32>
    %135 = arith.mulf %134, %79 : vector<16x128xf32>
    %136 = arith.addf %132, %135 : vector<16x128xf32>
    %cst_12 = arith.constant 0.00999999977 : f32
    %137 = vector.broadcast %cst_12 : f32 to vector<16x128xf32>
    %138 = arith.mulf %137, %136 : vector<16x128xf32>
    %139 = arith.maximumf %136, %138 : vector<16x128xf32>
    %c63 = arith.constant 63 : index
    %140 = memref.load %arg1[%c63] : memref<490xf32, #tpu.memory_space<smem>>
    %141 = vector.broadcast %140 : f32 to vector<16x128xf32>
    %142 = arith.mulf %141, %19 : vector<16x128xf32>
    %c64 = arith.constant 64 : index
    %143 = memref.load %arg1[%c64] : memref<490xf32, #tpu.memory_space<smem>>
    %144 = vector.broadcast %143 : f32 to vector<16x128xf32>
    %145 = arith.mulf %144, %29 : vector<16x128xf32>
    %146 = arith.addf %142, %145 : vector<16x128xf32>
    %c65 = arith.constant 65 : index
    %147 = memref.load %arg1[%c65] : memref<490xf32, #tpu.memory_space<smem>>
    %148 = vector.broadcast %147 : f32 to vector<16x128xf32>
    %149 = arith.mulf %148, %39 : vector<16x128xf32>
    %150 = arith.addf %146, %149 : vector<16x128xf32>
    %c66 = arith.constant 66 : index
    %151 = memref.load %arg1[%c66] : memref<490xf32, #tpu.memory_space<smem>>
    %152 = vector.broadcast %151 : f32 to vector<16x128xf32>
    %153 = arith.mulf %152, %49 : vector<16x128xf32>
    %154 = arith.addf %150, %153 : vector<16x128xf32>
    %c67 = arith.constant 67 : index
    %155 = memref.load %arg1[%c67] : memref<490xf32, #tpu.memory_space<smem>>
    %156 = vector.broadcast %155 : f32 to vector<16x128xf32>
    %157 = arith.mulf %156, %59 : vector<16x128xf32>
    %158 = arith.addf %154, %157 : vector<16x128xf32>
    %c68 = arith.constant 68 : index
    %159 = memref.load %arg1[%c68] : memref<490xf32, #tpu.memory_space<smem>>
    %160 = vector.broadcast %159 : f32 to vector<16x128xf32>
    %161 = arith.mulf %160, %69 : vector<16x128xf32>
    %162 = arith.addf %158, %161 : vector<16x128xf32>
    %c69 = arith.constant 69 : index
    %163 = memref.load %arg1[%c69] : memref<490xf32, #tpu.memory_space<smem>>
    %164 = vector.broadcast %163 : f32 to vector<16x128xf32>
    %165 = arith.mulf %164, %79 : vector<16x128xf32>
    %166 = arith.addf %162, %165 : vector<16x128xf32>
    %cst_13 = arith.constant 0.00999999977 : f32
    %167 = vector.broadcast %cst_13 : f32 to vector<16x128xf32>
    %168 = arith.mulf %167, %166 : vector<16x128xf32>
    %169 = arith.maximumf %166, %168 : vector<16x128xf32>
    %c70 = arith.constant 70 : index
    %170 = memref.load %arg1[%c70] : memref<490xf32, #tpu.memory_space<smem>>
    %171 = vector.broadcast %170 : f32 to vector<16x128xf32>
    %172 = arith.mulf %171, %19 : vector<16x128xf32>
    %c71 = arith.constant 71 : index
    %173 = memref.load %arg1[%c71] : memref<490xf32, #tpu.memory_space<smem>>
    %174 = vector.broadcast %173 : f32 to vector<16x128xf32>
    %175 = arith.mulf %174, %29 : vector<16x128xf32>
    %176 = arith.addf %172, %175 : vector<16x128xf32>
    %c72 = arith.constant 72 : index
    %177 = memref.load %arg1[%c72] : memref<490xf32, #tpu.memory_space<smem>>
    %178 = vector.broadcast %177 : f32 to vector<16x128xf32>
    %179 = arith.mulf %178, %39 : vector<16x128xf32>
    %180 = arith.addf %176, %179 : vector<16x128xf32>
    %c73 = arith.constant 73 : index
    %181 = memref.load %arg1[%c73] : memref<490xf32, #tpu.memory_space<smem>>
    %182 = vector.broadcast %181 : f32 to vector<16x128xf32>
    %183 = arith.mulf %182, %49 : vector<16x128xf32>
    %184 = arith.addf %180, %183 : vector<16x128xf32>
    %c74 = arith.constant 74 : index
    %185 = memref.load %arg1[%c74] : memref<490xf32, #tpu.memory_space<smem>>
    %186 = vector.broadcast %185 : f32 to vector<16x128xf32>
    %187 = arith.mulf %186, %59 : vector<16x128xf32>
    %188 = arith.addf %184, %187 : vector<16x128xf32>
    %c75 = arith.constant 75 : index
    %189 = memref.load %arg1[%c75] : memref<490xf32, #tpu.memory_space<smem>>
    %190 = vector.broadcast %189 : f32 to vector<16x128xf32>
    %191 = arith.mulf %190, %69 : vector<16x128xf32>
    %192 = arith.addf %188, %191 : vector<16x128xf32>
    %c76 = arith.constant 76 : index
    %193 = memref.load %arg1[%c76] : memref<490xf32, #tpu.memory_space<smem>>
    %194 = vector.broadcast %193 : f32 to vector<16x128xf32>
    %195 = arith.mulf %194, %79 : vector<16x128xf32>
    %196 = arith.addf %192, %195 : vector<16x128xf32>
    %cst_14 = arith.constant 0.00999999977 : f32
    %197 = vector.broadcast %cst_14 : f32 to vector<16x128xf32>
    %198 = arith.mulf %197, %196 : vector<16x128xf32>
    %199 = arith.maximumf %196, %198 : vector<16x128xf32>
    %c77 = arith.constant 77 : index
    %200 = memref.load %arg1[%c77] : memref<490xf32, #tpu.memory_space<smem>>
    %201 = vector.broadcast %200 : f32 to vector<16x128xf32>
    %202 = arith.mulf %201, %19 : vector<16x128xf32>
    %c78 = arith.constant 78 : index
    %203 = memref.load %arg1[%c78] : memref<490xf32, #tpu.memory_space<smem>>
    %204 = vector.broadcast %203 : f32 to vector<16x128xf32>
    %205 = arith.mulf %204, %29 : vector<16x128xf32>
    %206 = arith.addf %202, %205 : vector<16x128xf32>
    %c79 = arith.constant 79 : index
    %207 = memref.load %arg1[%c79] : memref<490xf32, #tpu.memory_space<smem>>
    %208 = vector.broadcast %207 : f32 to vector<16x128xf32>
    %209 = arith.mulf %208, %39 : vector<16x128xf32>
    %210 = arith.addf %206, %209 : vector<16x128xf32>
    %c80 = arith.constant 80 : index
    %211 = memref.load %arg1[%c80] : memref<490xf32, #tpu.memory_space<smem>>
    %212 = vector.broadcast %211 : f32 to vector<16x128xf32>
    %213 = arith.mulf %212, %49 : vector<16x128xf32>
    %214 = arith.addf %210, %213 : vector<16x128xf32>
    %c81 = arith.constant 81 : index
    %215 = memref.load %arg1[%c81] : memref<490xf32, #tpu.memory_space<smem>>
    %216 = vector.broadcast %215 : f32 to vector<16x128xf32>
    %217 = arith.mulf %216, %59 : vector<16x128xf32>
    %218 = arith.addf %214, %217 : vector<16x128xf32>
    %c82 = arith.constant 82 : index
    %219 = memref.load %arg1[%c82] : memref<490xf32, #tpu.memory_space<smem>>
    %220 = vector.broadcast %219 : f32 to vector<16x128xf32>
    %221 = arith.mulf %220, %69 : vector<16x128xf32>
    %222 = arith.addf %218, %221 : vector<16x128xf32>
    %c83 = arith.constant 83 : index
    %223 = memref.load %arg1[%c83] : memref<490xf32, #tpu.memory_space<smem>>
    %224 = vector.broadcast %223 : f32 to vector<16x128xf32>
    %225 = arith.mulf %224, %79 : vector<16x128xf32>
    %226 = arith.addf %222, %225 : vector<16x128xf32>
    %cst_15 = arith.constant 0.00999999977 : f32
    %227 = vector.broadcast %cst_15 : f32 to vector<16x128xf32>
    %228 = arith.mulf %227, %226 : vector<16x128xf32>
    %229 = arith.maximumf %226, %228 : vector<16x128xf32>
    %c84 = arith.constant 84 : index
    %230 = memref.load %arg1[%c84] : memref<490xf32, #tpu.memory_space<smem>>
    %231 = vector.broadcast %230 : f32 to vector<16x128xf32>
    %232 = arith.mulf %231, %19 : vector<16x128xf32>
    %c85 = arith.constant 85 : index
    %233 = memref.load %arg1[%c85] : memref<490xf32, #tpu.memory_space<smem>>
    %234 = vector.broadcast %233 : f32 to vector<16x128xf32>
    %235 = arith.mulf %234, %29 : vector<16x128xf32>
    %236 = arith.addf %232, %235 : vector<16x128xf32>
    %c86 = arith.constant 86 : index
    %237 = memref.load %arg1[%c86] : memref<490xf32, #tpu.memory_space<smem>>
    %238 = vector.broadcast %237 : f32 to vector<16x128xf32>
    %239 = arith.mulf %238, %39 : vector<16x128xf32>
    %240 = arith.addf %236, %239 : vector<16x128xf32>
    %c87 = arith.constant 87 : index
    %241 = memref.load %arg1[%c87] : memref<490xf32, #tpu.memory_space<smem>>
    %242 = vector.broadcast %241 : f32 to vector<16x128xf32>
    %243 = arith.mulf %242, %49 : vector<16x128xf32>
    %244 = arith.addf %240, %243 : vector<16x128xf32>
    %c88 = arith.constant 88 : index
    %245 = memref.load %arg1[%c88] : memref<490xf32, #tpu.memory_space<smem>>
    %246 = vector.broadcast %245 : f32 to vector<16x128xf32>
    %247 = arith.mulf %246, %59 : vector<16x128xf32>
    %248 = arith.addf %244, %247 : vector<16x128xf32>
    %c89 = arith.constant 89 : index
    %249 = memref.load %arg1[%c89] : memref<490xf32, #tpu.memory_space<smem>>
    %250 = vector.broadcast %249 : f32 to vector<16x128xf32>
    %251 = arith.mulf %250, %69 : vector<16x128xf32>
    %252 = arith.addf %248, %251 : vector<16x128xf32>
    %c90 = arith.constant 90 : index
    %253 = memref.load %arg1[%c90] : memref<490xf32, #tpu.memory_space<smem>>
    %254 = vector.broadcast %253 : f32 to vector<16x128xf32>
    %255 = arith.mulf %254, %79 : vector<16x128xf32>
    %256 = arith.addf %252, %255 : vector<16x128xf32>
    %cst_16 = arith.constant 0.00999999977 : f32
    %257 = vector.broadcast %cst_16 : f32 to vector<16x128xf32>
    %258 = arith.mulf %257, %256 : vector<16x128xf32>
    %259 = arith.maximumf %256, %258 : vector<16x128xf32>
    %c91 = arith.constant 91 : index
    %260 = memref.load %arg1[%c91] : memref<490xf32, #tpu.memory_space<smem>>
    %261 = vector.broadcast %260 : f32 to vector<16x128xf32>
    %262 = arith.mulf %261, %19 : vector<16x128xf32>
    %c92 = arith.constant 92 : index
    %263 = memref.load %arg1[%c92] : memref<490xf32, #tpu.memory_space<smem>>
    %264 = vector.broadcast %263 : f32 to vector<16x128xf32>
    %265 = arith.mulf %264, %29 : vector<16x128xf32>
    %266 = arith.addf %262, %265 : vector<16x128xf32>
    %c93 = arith.constant 93 : index
    %267 = memref.load %arg1[%c93] : memref<490xf32, #tpu.memory_space<smem>>
    %268 = vector.broadcast %267 : f32 to vector<16x128xf32>
    %269 = arith.mulf %268, %39 : vector<16x128xf32>
    %270 = arith.addf %266, %269 : vector<16x128xf32>
    %c94 = arith.constant 94 : index
    %271 = memref.load %arg1[%c94] : memref<490xf32, #tpu.memory_space<smem>>
    %272 = vector.broadcast %271 : f32 to vector<16x128xf32>
    %273 = arith.mulf %272, %49 : vector<16x128xf32>
    %274 = arith.addf %270, %273 : vector<16x128xf32>
    %c95 = arith.constant 95 : index
    %275 = memref.load %arg1[%c95] : memref<490xf32, #tpu.memory_space<smem>>
    %276 = vector.broadcast %275 : f32 to vector<16x128xf32>
    %277 = arith.mulf %276, %59 : vector<16x128xf32>
    %278 = arith.addf %274, %277 : vector<16x128xf32>
    %c96 = arith.constant 96 : index
    %279 = memref.load %arg1[%c96] : memref<490xf32, #tpu.memory_space<smem>>
    %280 = vector.broadcast %279 : f32 to vector<16x128xf32>
    %281 = arith.mulf %280, %69 : vector<16x128xf32>
    %282 = arith.addf %278, %281 : vector<16x128xf32>
    %c97 = arith.constant 97 : index
    %283 = memref.load %arg1[%c97] : memref<490xf32, #tpu.memory_space<smem>>
    %284 = vector.broadcast %283 : f32 to vector<16x128xf32>
    %285 = arith.mulf %284, %79 : vector<16x128xf32>
    %286 = arith.addf %282, %285 : vector<16x128xf32>
    %cst_17 = arith.constant 0.00999999977 : f32
    %287 = vector.broadcast %cst_17 : f32 to vector<16x128xf32>
    %288 = arith.mulf %287, %286 : vector<16x128xf32>
    %289 = arith.maximumf %286, %288 : vector<16x128xf32>
    %c98 = arith.constant 98 : index
    %290 = memref.load %arg1[%c98] : memref<490xf32, #tpu.memory_space<smem>>
    %291 = vector.broadcast %290 : f32 to vector<16x128xf32>
    %292 = arith.mulf %291, %109 : vector<16x128xf32>
    %c99 = arith.constant 99 : index
    %293 = memref.load %arg1[%c99] : memref<490xf32, #tpu.memory_space<smem>>
    %294 = vector.broadcast %293 : f32 to vector<16x128xf32>
    %295 = arith.mulf %294, %139 : vector<16x128xf32>
    %296 = arith.addf %292, %295 : vector<16x128xf32>
    %c100 = arith.constant 100 : index
    %297 = memref.load %arg1[%c100] : memref<490xf32, #tpu.memory_space<smem>>
    %298 = vector.broadcast %297 : f32 to vector<16x128xf32>
    %299 = arith.mulf %298, %169 : vector<16x128xf32>
    %300 = arith.addf %296, %299 : vector<16x128xf32>
    %c101 = arith.constant 101 : index
    %301 = memref.load %arg1[%c101] : memref<490xf32, #tpu.memory_space<smem>>
    %302 = vector.broadcast %301 : f32 to vector<16x128xf32>
    %303 = arith.mulf %302, %199 : vector<16x128xf32>
    %304 = arith.addf %300, %303 : vector<16x128xf32>
    %c102 = arith.constant 102 : index
    %305 = memref.load %arg1[%c102] : memref<490xf32, #tpu.memory_space<smem>>
    %306 = vector.broadcast %305 : f32 to vector<16x128xf32>
    %307 = arith.mulf %306, %229 : vector<16x128xf32>
    %308 = arith.addf %304, %307 : vector<16x128xf32>
    %c103 = arith.constant 103 : index
    %309 = memref.load %arg1[%c103] : memref<490xf32, #tpu.memory_space<smem>>
    %310 = vector.broadcast %309 : f32 to vector<16x128xf32>
    %311 = arith.mulf %310, %259 : vector<16x128xf32>
    %312 = arith.addf %308, %311 : vector<16x128xf32>
    %c104 = arith.constant 104 : index
    %313 = memref.load %arg1[%c104] : memref<490xf32, #tpu.memory_space<smem>>
    %314 = vector.broadcast %313 : f32 to vector<16x128xf32>
    %315 = arith.mulf %314, %289 : vector<16x128xf32>
    %316 = arith.addf %312, %315 : vector<16x128xf32>
    %cst_18 = arith.constant 0.00999999977 : f32
    %317 = vector.broadcast %cst_18 : f32 to vector<16x128xf32>
    %318 = arith.mulf %317, %316 : vector<16x128xf32>
    %319 = arith.maximumf %316, %318 : vector<16x128xf32>
    %c105 = arith.constant 105 : index
    %320 = memref.load %arg1[%c105] : memref<490xf32, #tpu.memory_space<smem>>
    %321 = vector.broadcast %320 : f32 to vector<16x128xf32>
    %322 = arith.mulf %321, %109 : vector<16x128xf32>
    %c106 = arith.constant 106 : index
    %323 = memref.load %arg1[%c106] : memref<490xf32, #tpu.memory_space<smem>>
    %324 = vector.broadcast %323 : f32 to vector<16x128xf32>
    %325 = arith.mulf %324, %139 : vector<16x128xf32>
    %326 = arith.addf %322, %325 : vector<16x128xf32>
    %c107 = arith.constant 107 : index
    %327 = memref.load %arg1[%c107] : memref<490xf32, #tpu.memory_space<smem>>
    %328 = vector.broadcast %327 : f32 to vector<16x128xf32>
    %329 = arith.mulf %328, %169 : vector<16x128xf32>
    %330 = arith.addf %326, %329 : vector<16x128xf32>
    %c108 = arith.constant 108 : index
    %331 = memref.load %arg1[%c108] : memref<490xf32, #tpu.memory_space<smem>>
    %332 = vector.broadcast %331 : f32 to vector<16x128xf32>
    %333 = arith.mulf %332, %199 : vector<16x128xf32>
    %334 = arith.addf %330, %333 : vector<16x128xf32>
    %c109 = arith.constant 109 : index
    %335 = memref.load %arg1[%c109] : memref<490xf32, #tpu.memory_space<smem>>
    %336 = vector.broadcast %335 : f32 to vector<16x128xf32>
    %337 = arith.mulf %336, %229 : vector<16x128xf32>
    %338 = arith.addf %334, %337 : vector<16x128xf32>
    %c110 = arith.constant 110 : index
    %339 = memref.load %arg1[%c110] : memref<490xf32, #tpu.memory_space<smem>>
    %340 = vector.broadcast %339 : f32 to vector<16x128xf32>
    %341 = arith.mulf %340, %259 : vector<16x128xf32>
    %342 = arith.addf %338, %341 : vector<16x128xf32>
    %c111 = arith.constant 111 : index
    %343 = memref.load %arg1[%c111] : memref<490xf32, #tpu.memory_space<smem>>
    %344 = vector.broadcast %343 : f32 to vector<16x128xf32>
    %345 = arith.mulf %344, %289 : vector<16x128xf32>
    %346 = arith.addf %342, %345 : vector<16x128xf32>
    %cst_19 = arith.constant 0.00999999977 : f32
    %347 = vector.broadcast %cst_19 : f32 to vector<16x128xf32>
    %348 = arith.mulf %347, %346 : vector<16x128xf32>
    %349 = arith.maximumf %346, %348 : vector<16x128xf32>
    %c112 = arith.constant 112 : index
    %350 = memref.load %arg1[%c112] : memref<490xf32, #tpu.memory_space<smem>>
    %351 = vector.broadcast %350 : f32 to vector<16x128xf32>
    %352 = arith.mulf %351, %109 : vector<16x128xf32>
    %c113 = arith.constant 113 : index
    %353 = memref.load %arg1[%c113] : memref<490xf32, #tpu.memory_space<smem>>
    %354 = vector.broadcast %353 : f32 to vector<16x128xf32>
    %355 = arith.mulf %354, %139 : vector<16x128xf32>
    %356 = arith.addf %352, %355 : vector<16x128xf32>
    %c114 = arith.constant 114 : index
    %357 = memref.load %arg1[%c114] : memref<490xf32, #tpu.memory_space<smem>>
    %358 = vector.broadcast %357 : f32 to vector<16x128xf32>
    %359 = arith.mulf %358, %169 : vector<16x128xf32>
    %360 = arith.addf %356, %359 : vector<16x128xf32>
    %c115 = arith.constant 115 : index
    %361 = memref.load %arg1[%c115] : memref<490xf32, #tpu.memory_space<smem>>
    %362 = vector.broadcast %361 : f32 to vector<16x128xf32>
    %363 = arith.mulf %362, %199 : vector<16x128xf32>
    %364 = arith.addf %360, %363 : vector<16x128xf32>
    %c116 = arith.constant 116 : index
    %365 = memref.load %arg1[%c116] : memref<490xf32, #tpu.memory_space<smem>>
    %366 = vector.broadcast %365 : f32 to vector<16x128xf32>
    %367 = arith.mulf %366, %229 : vector<16x128xf32>
    %368 = arith.addf %364, %367 : vector<16x128xf32>
    %c117 = arith.constant 117 : index
    %369 = memref.load %arg1[%c117] : memref<490xf32, #tpu.memory_space<smem>>
    %370 = vector.broadcast %369 : f32 to vector<16x128xf32>
    %371 = arith.mulf %370, %259 : vector<16x128xf32>
    %372 = arith.addf %368, %371 : vector<16x128xf32>
    %c118 = arith.constant 118 : index
    %373 = memref.load %arg1[%c118] : memref<490xf32, #tpu.memory_space<smem>>
    %374 = vector.broadcast %373 : f32 to vector<16x128xf32>
    %375 = arith.mulf %374, %289 : vector<16x128xf32>
    %376 = arith.addf %372, %375 : vector<16x128xf32>
    %cst_20 = arith.constant 0.00999999977 : f32
    %377 = vector.broadcast %cst_20 : f32 to vector<16x128xf32>
    %378 = arith.mulf %377, %376 : vector<16x128xf32>
    %379 = arith.maximumf %376, %378 : vector<16x128xf32>
    %c119 = arith.constant 119 : index
    %380 = memref.load %arg1[%c119] : memref<490xf32, #tpu.memory_space<smem>>
    %381 = vector.broadcast %380 : f32 to vector<16x128xf32>
    %382 = arith.mulf %381, %109 : vector<16x128xf32>
    %c120 = arith.constant 120 : index
    %383 = memref.load %arg1[%c120] : memref<490xf32, #tpu.memory_space<smem>>
    %384 = vector.broadcast %383 : f32 to vector<16x128xf32>
    %385 = arith.mulf %384, %139 : vector<16x128xf32>
    %386 = arith.addf %382, %385 : vector<16x128xf32>
    %c121 = arith.constant 121 : index
    %387 = memref.load %arg1[%c121] : memref<490xf32, #tpu.memory_space<smem>>
    %388 = vector.broadcast %387 : f32 to vector<16x128xf32>
    %389 = arith.mulf %388, %169 : vector<16x128xf32>
    %390 = arith.addf %386, %389 : vector<16x128xf32>
    %c122 = arith.constant 122 : index
    %391 = memref.load %arg1[%c122] : memref<490xf32, #tpu.memory_space<smem>>
    %392 = vector.broadcast %391 : f32 to vector<16x128xf32>
    %393 = arith.mulf %392, %199 : vector<16x128xf32>
    %394 = arith.addf %390, %393 : vector<16x128xf32>
    %c123 = arith.constant 123 : index
    %395 = memref.load %arg1[%c123] : memref<490xf32, #tpu.memory_space<smem>>
    %396 = vector.broadcast %395 : f32 to vector<16x128xf32>
    %397 = arith.mulf %396, %229 : vector<16x128xf32>
    %398 = arith.addf %394, %397 : vector<16x128xf32>
    %c124 = arith.constant 124 : index
    %399 = memref.load %arg1[%c124] : memref<490xf32, #tpu.memory_space<smem>>
    %400 = vector.broadcast %399 : f32 to vector<16x128xf32>
    %401 = arith.mulf %400, %259 : vector<16x128xf32>
    %402 = arith.addf %398, %401 : vector<16x128xf32>
    %c125 = arith.constant 125 : index
    %403 = memref.load %arg1[%c125] : memref<490xf32, #tpu.memory_space<smem>>
    %404 = vector.broadcast %403 : f32 to vector<16x128xf32>
    %405 = arith.mulf %404, %289 : vector<16x128xf32>
    %406 = arith.addf %402, %405 : vector<16x128xf32>
    %cst_21 = arith.constant 0.00999999977 : f32
    %407 = vector.broadcast %cst_21 : f32 to vector<16x128xf32>
    %408 = arith.mulf %407, %406 : vector<16x128xf32>
    %409 = arith.maximumf %406, %408 : vector<16x128xf32>
    %c126 = arith.constant 126 : index
    %410 = memref.load %arg1[%c126] : memref<490xf32, #tpu.memory_space<smem>>
    %411 = vector.broadcast %410 : f32 to vector<16x128xf32>
    %412 = arith.mulf %411, %109 : vector<16x128xf32>
    %c127 = arith.constant 127 : index
    %413 = memref.load %arg1[%c127] : memref<490xf32, #tpu.memory_space<smem>>
    %414 = vector.broadcast %413 : f32 to vector<16x128xf32>
    %415 = arith.mulf %414, %139 : vector<16x128xf32>
    %416 = arith.addf %412, %415 : vector<16x128xf32>
    %c128 = arith.constant 128 : index
    %417 = memref.load %arg1[%c128] : memref<490xf32, #tpu.memory_space<smem>>
    %418 = vector.broadcast %417 : f32 to vector<16x128xf32>
    %419 = arith.mulf %418, %169 : vector<16x128xf32>
    %420 = arith.addf %416, %419 : vector<16x128xf32>
    %c129 = arith.constant 129 : index
    %421 = memref.load %arg1[%c129] : memref<490xf32, #tpu.memory_space<smem>>
    %422 = vector.broadcast %421 : f32 to vector<16x128xf32>
    %423 = arith.mulf %422, %199 : vector<16x128xf32>
    %424 = arith.addf %420, %423 : vector<16x128xf32>
    %c130 = arith.constant 130 : index
    %425 = memref.load %arg1[%c130] : memref<490xf32, #tpu.memory_space<smem>>
    %426 = vector.broadcast %425 : f32 to vector<16x128xf32>
    %427 = arith.mulf %426, %229 : vector<16x128xf32>
    %428 = arith.addf %424, %427 : vector<16x128xf32>
    %c131 = arith.constant 131 : index
    %429 = memref.load %arg1[%c131] : memref<490xf32, #tpu.memory_space<smem>>
    %430 = vector.broadcast %429 : f32 to vector<16x128xf32>
    %431 = arith.mulf %430, %259 : vector<16x128xf32>
    %432 = arith.addf %428, %431 : vector<16x128xf32>
    %c132 = arith.constant 132 : index
    %433 = memref.load %arg1[%c132] : memref<490xf32, #tpu.memory_space<smem>>
    %434 = vector.broadcast %433 : f32 to vector<16x128xf32>
    %435 = arith.mulf %434, %289 : vector<16x128xf32>
    %436 = arith.addf %432, %435 : vector<16x128xf32>
    %cst_22 = arith.constant 0.00999999977 : f32
    %437 = vector.broadcast %cst_22 : f32 to vector<16x128xf32>
    %438 = arith.mulf %437, %436 : vector<16x128xf32>
    %439 = arith.maximumf %436, %438 : vector<16x128xf32>
    %c133 = arith.constant 133 : index
    %440 = memref.load %arg1[%c133] : memref<490xf32, #tpu.memory_space<smem>>
    %441 = vector.broadcast %440 : f32 to vector<16x128xf32>
    %442 = arith.mulf %441, %109 : vector<16x128xf32>
    %c134 = arith.constant 134 : index
    %443 = memref.load %arg1[%c134] : memref<490xf32, #tpu.memory_space<smem>>
    %444 = vector.broadcast %443 : f32 to vector<16x128xf32>
    %445 = arith.mulf %444, %139 : vector<16x128xf32>
    %446 = arith.addf %442, %445 : vector<16x128xf32>
    %c135 = arith.constant 135 : index
    %447 = memref.load %arg1[%c135] : memref<490xf32, #tpu.memory_space<smem>>
    %448 = vector.broadcast %447 : f32 to vector<16x128xf32>
    %449 = arith.mulf %448, %169 : vector<16x128xf32>
    %450 = arith.addf %446, %449 : vector<16x128xf32>
    %c136 = arith.constant 136 : index
    %451 = memref.load %arg1[%c136] : memref<490xf32, #tpu.memory_space<smem>>
    %452 = vector.broadcast %451 : f32 to vector<16x128xf32>
    %453 = arith.mulf %452, %199 : vector<16x128xf32>
    %454 = arith.addf %450, %453 : vector<16x128xf32>
    %c137 = arith.constant 137 : index
    %455 = memref.load %arg1[%c137] : memref<490xf32, #tpu.memory_space<smem>>
    %456 = vector.broadcast %455 : f32 to vector<16x128xf32>
    %457 = arith.mulf %456, %229 : vector<16x128xf32>
    %458 = arith.addf %454, %457 : vector<16x128xf32>
    %c138 = arith.constant 138 : index
    %459 = memref.load %arg1[%c138] : memref<490xf32, #tpu.memory_space<smem>>
    %460 = vector.broadcast %459 : f32 to vector<16x128xf32>
    %461 = arith.mulf %460, %259 : vector<16x128xf32>
    %462 = arith.addf %458, %461 : vector<16x128xf32>
    %c139 = arith.constant 139 : index
    %463 = memref.load %arg1[%c139] : memref<490xf32, #tpu.memory_space<smem>>
    %464 = vector.broadcast %463 : f32 to vector<16x128xf32>
    %465 = arith.mulf %464, %289 : vector<16x128xf32>
    %466 = arith.addf %462, %465 : vector<16x128xf32>
    %cst_23 = arith.constant 0.00999999977 : f32
    %467 = vector.broadcast %cst_23 : f32 to vector<16x128xf32>
    %468 = arith.mulf %467, %466 : vector<16x128xf32>
    %469 = arith.maximumf %466, %468 : vector<16x128xf32>
    %c140 = arith.constant 140 : index
    %470 = memref.load %arg1[%c140] : memref<490xf32, #tpu.memory_space<smem>>
    %471 = vector.broadcast %470 : f32 to vector<16x128xf32>
    %472 = arith.mulf %471, %109 : vector<16x128xf32>
    %c141 = arith.constant 141 : index
    %473 = memref.load %arg1[%c141] : memref<490xf32, #tpu.memory_space<smem>>
    %474 = vector.broadcast %473 : f32 to vector<16x128xf32>
    %475 = arith.mulf %474, %139 : vector<16x128xf32>
    %476 = arith.addf %472, %475 : vector<16x128xf32>
    %c142 = arith.constant 142 : index
    %477 = memref.load %arg1[%c142] : memref<490xf32, #tpu.memory_space<smem>>
    %478 = vector.broadcast %477 : f32 to vector<16x128xf32>
    %479 = arith.mulf %478, %169 : vector<16x128xf32>
    %480 = arith.addf %476, %479 : vector<16x128xf32>
    %c143 = arith.constant 143 : index
    %481 = memref.load %arg1[%c143] : memref<490xf32, #tpu.memory_space<smem>>
    %482 = vector.broadcast %481 : f32 to vector<16x128xf32>
    %483 = arith.mulf %482, %199 : vector<16x128xf32>
    %484 = arith.addf %480, %483 : vector<16x128xf32>
    %c144 = arith.constant 144 : index
    %485 = memref.load %arg1[%c144] : memref<490xf32, #tpu.memory_space<smem>>
    %486 = vector.broadcast %485 : f32 to vector<16x128xf32>
    %487 = arith.mulf %486, %229 : vector<16x128xf32>
    %488 = arith.addf %484, %487 : vector<16x128xf32>
    %c145 = arith.constant 145 : index
    %489 = memref.load %arg1[%c145] : memref<490xf32, #tpu.memory_space<smem>>
    %490 = vector.broadcast %489 : f32 to vector<16x128xf32>
    %491 = arith.mulf %490, %259 : vector<16x128xf32>
    %492 = arith.addf %488, %491 : vector<16x128xf32>
    %c146 = arith.constant 146 : index
    %493 = memref.load %arg1[%c146] : memref<490xf32, #tpu.memory_space<smem>>
    %494 = vector.broadcast %493 : f32 to vector<16x128xf32>
    %495 = arith.mulf %494, %289 : vector<16x128xf32>
    %496 = arith.addf %492, %495 : vector<16x128xf32>
    %cst_24 = arith.constant 0.00999999977 : f32
    %497 = vector.broadcast %cst_24 : f32 to vector<16x128xf32>
    %498 = arith.mulf %497, %496 : vector<16x128xf32>
    %499 = arith.maximumf %496, %498 : vector<16x128xf32>
    %c147 = arith.constant 147 : index
    %500 = memref.load %arg1[%c147] : memref<490xf32, #tpu.memory_space<smem>>
    %501 = vector.broadcast %500 : f32 to vector<16x128xf32>
    %502 = arith.mulf %501, %319 : vector<16x128xf32>
    %c148 = arith.constant 148 : index
    %503 = memref.load %arg1[%c148] : memref<490xf32, #tpu.memory_space<smem>>
    %504 = vector.broadcast %503 : f32 to vector<16x128xf32>
    %505 = arith.mulf %504, %349 : vector<16x128xf32>
    %506 = arith.addf %502, %505 : vector<16x128xf32>
    %c149 = arith.constant 149 : index
    %507 = memref.load %arg1[%c149] : memref<490xf32, #tpu.memory_space<smem>>
    %508 = vector.broadcast %507 : f32 to vector<16x128xf32>
    %509 = arith.mulf %508, %379 : vector<16x128xf32>
    %510 = arith.addf %506, %509 : vector<16x128xf32>
    %c150 = arith.constant 150 : index
    %511 = memref.load %arg1[%c150] : memref<490xf32, #tpu.memory_space<smem>>
    %512 = vector.broadcast %511 : f32 to vector<16x128xf32>
    %513 = arith.mulf %512, %409 : vector<16x128xf32>
    %514 = arith.addf %510, %513 : vector<16x128xf32>
    %c151 = arith.constant 151 : index
    %515 = memref.load %arg1[%c151] : memref<490xf32, #tpu.memory_space<smem>>
    %516 = vector.broadcast %515 : f32 to vector<16x128xf32>
    %517 = arith.mulf %516, %439 : vector<16x128xf32>
    %518 = arith.addf %514, %517 : vector<16x128xf32>
    %c152 = arith.constant 152 : index
    %519 = memref.load %arg1[%c152] : memref<490xf32, #tpu.memory_space<smem>>
    %520 = vector.broadcast %519 : f32 to vector<16x128xf32>
    %521 = arith.mulf %520, %469 : vector<16x128xf32>
    %522 = arith.addf %518, %521 : vector<16x128xf32>
    %c153 = arith.constant 153 : index
    %523 = memref.load %arg1[%c153] : memref<490xf32, #tpu.memory_space<smem>>
    %524 = vector.broadcast %523 : f32 to vector<16x128xf32>
    %525 = arith.mulf %524, %499 : vector<16x128xf32>
    %526 = arith.addf %522, %525 : vector<16x128xf32>
    %cst_25 = arith.constant 0.00999999977 : f32
    %527 = vector.broadcast %cst_25 : f32 to vector<16x128xf32>
    %528 = arith.mulf %527, %526 : vector<16x128xf32>
    %529 = arith.maximumf %526, %528 : vector<16x128xf32>
    %c154 = arith.constant 154 : index
    %530 = memref.load %arg1[%c154] : memref<490xf32, #tpu.memory_space<smem>>
    %531 = vector.broadcast %530 : f32 to vector<16x128xf32>
    %532 = arith.mulf %531, %319 : vector<16x128xf32>
    %c155 = arith.constant 155 : index
    %533 = memref.load %arg1[%c155] : memref<490xf32, #tpu.memory_space<smem>>
    %534 = vector.broadcast %533 : f32 to vector<16x128xf32>
    %535 = arith.mulf %534, %349 : vector<16x128xf32>
    %536 = arith.addf %532, %535 : vector<16x128xf32>
    %c156 = arith.constant 156 : index
    %537 = memref.load %arg1[%c156] : memref<490xf32, #tpu.memory_space<smem>>
    %538 = vector.broadcast %537 : f32 to vector<16x128xf32>
    %539 = arith.mulf %538, %379 : vector<16x128xf32>
    %540 = arith.addf %536, %539 : vector<16x128xf32>
    %c157 = arith.constant 157 : index
    %541 = memref.load %arg1[%c157] : memref<490xf32, #tpu.memory_space<smem>>
    %542 = vector.broadcast %541 : f32 to vector<16x128xf32>
    %543 = arith.mulf %542, %409 : vector<16x128xf32>
    %544 = arith.addf %540, %543 : vector<16x128xf32>
    %c158 = arith.constant 158 : index
    %545 = memref.load %arg1[%c158] : memref<490xf32, #tpu.memory_space<smem>>
    %546 = vector.broadcast %545 : f32 to vector<16x128xf32>
    %547 = arith.mulf %546, %439 : vector<16x128xf32>
    %548 = arith.addf %544, %547 : vector<16x128xf32>
    %c159 = arith.constant 159 : index
    %549 = memref.load %arg1[%c159] : memref<490xf32, #tpu.memory_space<smem>>
    %550 = vector.broadcast %549 : f32 to vector<16x128xf32>
    %551 = arith.mulf %550, %469 : vector<16x128xf32>
    %552 = arith.addf %548, %551 : vector<16x128xf32>
    %c160 = arith.constant 160 : index
    %553 = memref.load %arg1[%c160] : memref<490xf32, #tpu.memory_space<smem>>
    %554 = vector.broadcast %553 : f32 to vector<16x128xf32>
    %555 = arith.mulf %554, %499 : vector<16x128xf32>
    %556 = arith.addf %552, %555 : vector<16x128xf32>
    %cst_26 = arith.constant 0.00999999977 : f32
    %557 = vector.broadcast %cst_26 : f32 to vector<16x128xf32>
    %558 = arith.mulf %557, %556 : vector<16x128xf32>
    %559 = arith.maximumf %556, %558 : vector<16x128xf32>
    %c161 = arith.constant 161 : index
    %560 = memref.load %arg1[%c161] : memref<490xf32, #tpu.memory_space<smem>>
    %561 = vector.broadcast %560 : f32 to vector<16x128xf32>
    %562 = arith.mulf %561, %319 : vector<16x128xf32>
    %c162 = arith.constant 162 : index
    %563 = memref.load %arg1[%c162] : memref<490xf32, #tpu.memory_space<smem>>
    %564 = vector.broadcast %563 : f32 to vector<16x128xf32>
    %565 = arith.mulf %564, %349 : vector<16x128xf32>
    %566 = arith.addf %562, %565 : vector<16x128xf32>
    %c163 = arith.constant 163 : index
    %567 = memref.load %arg1[%c163] : memref<490xf32, #tpu.memory_space<smem>>
    %568 = vector.broadcast %567 : f32 to vector<16x128xf32>
    %569 = arith.mulf %568, %379 : vector<16x128xf32>
    %570 = arith.addf %566, %569 : vector<16x128xf32>
    %c164 = arith.constant 164 : index
    %571 = memref.load %arg1[%c164] : memref<490xf32, #tpu.memory_space<smem>>
    %572 = vector.broadcast %571 : f32 to vector<16x128xf32>
    %573 = arith.mulf %572, %409 : vector<16x128xf32>
    %574 = arith.addf %570, %573 : vector<16x128xf32>
    %c165 = arith.constant 165 : index
    %575 = memref.load %arg1[%c165] : memref<490xf32, #tpu.memory_space<smem>>
    %576 = vector.broadcast %575 : f32 to vector<16x128xf32>
    %577 = arith.mulf %576, %439 : vector<16x128xf32>
    %578 = arith.addf %574, %577 : vector<16x128xf32>
    %c166 = arith.constant 166 : index
    %579 = memref.load %arg1[%c166] : memref<490xf32, #tpu.memory_space<smem>>
    %580 = vector.broadcast %579 : f32 to vector<16x128xf32>
    %581 = arith.mulf %580, %469 : vector<16x128xf32>
    %582 = arith.addf %578, %581 : vector<16x128xf32>
    %c167 = arith.constant 167 : index
    %583 = memref.load %arg1[%c167] : memref<490xf32, #tpu.memory_space<smem>>
    %584 = vector.broadcast %583 : f32 to vector<16x128xf32>
    %585 = arith.mulf %584, %499 : vector<16x128xf32>
    %586 = arith.addf %582, %585 : vector<16x128xf32>
    %cst_27 = arith.constant 0.00999999977 : f32
    %587 = vector.broadcast %cst_27 : f32 to vector<16x128xf32>
    %588 = arith.mulf %587, %586 : vector<16x128xf32>
    %589 = arith.maximumf %586, %588 : vector<16x128xf32>
    %c168 = arith.constant 168 : index
    %590 = memref.load %arg1[%c168] : memref<490xf32, #tpu.memory_space<smem>>
    %591 = vector.broadcast %590 : f32 to vector<16x128xf32>
    %592 = arith.mulf %591, %319 : vector<16x128xf32>
    %c169 = arith.constant 169 : index
    %593 = memref.load %arg1[%c169] : memref<490xf32, #tpu.memory_space<smem>>
    %594 = vector.broadcast %593 : f32 to vector<16x128xf32>
    %595 = arith.mulf %594, %349 : vector<16x128xf32>
    %596 = arith.addf %592, %595 : vector<16x128xf32>
    %c170 = arith.constant 170 : index
    %597 = memref.load %arg1[%c170] : memref<490xf32, #tpu.memory_space<smem>>
    %598 = vector.broadcast %597 : f32 to vector<16x128xf32>
    %599 = arith.mulf %598, %379 : vector<16x128xf32>
    %600 = arith.addf %596, %599 : vector<16x128xf32>
    %c171 = arith.constant 171 : index
    %601 = memref.load %arg1[%c171] : memref<490xf32, #tpu.memory_space<smem>>
    %602 = vector.broadcast %601 : f32 to vector<16x128xf32>
    %603 = arith.mulf %602, %409 : vector<16x128xf32>
    %604 = arith.addf %600, %603 : vector<16x128xf32>
    %c172 = arith.constant 172 : index
    %605 = memref.load %arg1[%c172] : memref<490xf32, #tpu.memory_space<smem>>
    %606 = vector.broadcast %605 : f32 to vector<16x128xf32>
    %607 = arith.mulf %606, %439 : vector<16x128xf32>
    %608 = arith.addf %604, %607 : vector<16x128xf32>
    %c173 = arith.constant 173 : index
    %609 = memref.load %arg1[%c173] : memref<490xf32, #tpu.memory_space<smem>>
    %610 = vector.broadcast %609 : f32 to vector<16x128xf32>
    %611 = arith.mulf %610, %469 : vector<16x128xf32>
    %612 = arith.addf %608, %611 : vector<16x128xf32>
    %c174 = arith.constant 174 : index
    %613 = memref.load %arg1[%c174] : memref<490xf32, #tpu.memory_space<smem>>
    %614 = vector.broadcast %613 : f32 to vector<16x128xf32>
    %615 = arith.mulf %614, %499 : vector<16x128xf32>
    %616 = arith.addf %612, %615 : vector<16x128xf32>
    %cst_28 = arith.constant 0.00999999977 : f32
    %617 = vector.broadcast %cst_28 : f32 to vector<16x128xf32>
    %618 = arith.mulf %617, %616 : vector<16x128xf32>
    %619 = arith.maximumf %616, %618 : vector<16x128xf32>
    %c175 = arith.constant 175 : index
    %620 = memref.load %arg1[%c175] : memref<490xf32, #tpu.memory_space<smem>>
    %621 = vector.broadcast %620 : f32 to vector<16x128xf32>
    %622 = arith.mulf %621, %319 : vector<16x128xf32>
    %c176 = arith.constant 176 : index
    %623 = memref.load %arg1[%c176] : memref<490xf32, #tpu.memory_space<smem>>
    %624 = vector.broadcast %623 : f32 to vector<16x128xf32>
    %625 = arith.mulf %624, %349 : vector<16x128xf32>
    %626 = arith.addf %622, %625 : vector<16x128xf32>
    %c177 = arith.constant 177 : index
    %627 = memref.load %arg1[%c177] : memref<490xf32, #tpu.memory_space<smem>>
    %628 = vector.broadcast %627 : f32 to vector<16x128xf32>
    %629 = arith.mulf %628, %379 : vector<16x128xf32>
    %630 = arith.addf %626, %629 : vector<16x128xf32>
    %c178 = arith.constant 178 : index
    %631 = memref.load %arg1[%c178] : memref<490xf32, #tpu.memory_space<smem>>
    %632 = vector.broadcast %631 : f32 to vector<16x128xf32>
    %633 = arith.mulf %632, %409 : vector<16x128xf32>
    %634 = arith.addf %630, %633 : vector<16x128xf32>
    %c179 = arith.constant 179 : index
    %635 = memref.load %arg1[%c179] : memref<490xf32, #tpu.memory_space<smem>>
    %636 = vector.broadcast %635 : f32 to vector<16x128xf32>
    %637 = arith.mulf %636, %439 : vector<16x128xf32>
    %638 = arith.addf %634, %637 : vector<16x128xf32>
    %c180 = arith.constant 180 : index
    %639 = memref.load %arg1[%c180] : memref<490xf32, #tpu.memory_space<smem>>
    %640 = vector.broadcast %639 : f32 to vector<16x128xf32>
    %641 = arith.mulf %640, %469 : vector<16x128xf32>
    %642 = arith.addf %638, %641 : vector<16x128xf32>
    %c181 = arith.constant 181 : index
    %643 = memref.load %arg1[%c181] : memref<490xf32, #tpu.memory_space<smem>>
    %644 = vector.broadcast %643 : f32 to vector<16x128xf32>
    %645 = arith.mulf %644, %499 : vector<16x128xf32>
    %646 = arith.addf %642, %645 : vector<16x128xf32>
    %cst_29 = arith.constant 0.00999999977 : f32
    %647 = vector.broadcast %cst_29 : f32 to vector<16x128xf32>
    %648 = arith.mulf %647, %646 : vector<16x128xf32>
    %649 = arith.maximumf %646, %648 : vector<16x128xf32>
    %c182 = arith.constant 182 : index
    %650 = memref.load %arg1[%c182] : memref<490xf32, #tpu.memory_space<smem>>
    %651 = vector.broadcast %650 : f32 to vector<16x128xf32>
    %652 = arith.mulf %651, %319 : vector<16x128xf32>
    %c183 = arith.constant 183 : index
    %653 = memref.load %arg1[%c183] : memref<490xf32, #tpu.memory_space<smem>>
    %654 = vector.broadcast %653 : f32 to vector<16x128xf32>
    %655 = arith.mulf %654, %349 : vector<16x128xf32>
    %656 = arith.addf %652, %655 : vector<16x128xf32>
    %c184 = arith.constant 184 : index
    %657 = memref.load %arg1[%c184] : memref<490xf32, #tpu.memory_space<smem>>
    %658 = vector.broadcast %657 : f32 to vector<16x128xf32>
    %659 = arith.mulf %658, %379 : vector<16x128xf32>
    %660 = arith.addf %656, %659 : vector<16x128xf32>
    %c185 = arith.constant 185 : index
    %661 = memref.load %arg1[%c185] : memref<490xf32, #tpu.memory_space<smem>>
    %662 = vector.broadcast %661 : f32 to vector<16x128xf32>
    %663 = arith.mulf %662, %409 : vector<16x128xf32>
    %664 = arith.addf %660, %663 : vector<16x128xf32>
    %c186 = arith.constant 186 : index
    %665 = memref.load %arg1[%c186] : memref<490xf32, #tpu.memory_space<smem>>
    %666 = vector.broadcast %665 : f32 to vector<16x128xf32>
    %667 = arith.mulf %666, %439 : vector<16x128xf32>
    %668 = arith.addf %664, %667 : vector<16x128xf32>
    %c187 = arith.constant 187 : index
    %669 = memref.load %arg1[%c187] : memref<490xf32, #tpu.memory_space<smem>>
    %670 = vector.broadcast %669 : f32 to vector<16x128xf32>
    %671 = arith.mulf %670, %469 : vector<16x128xf32>
    %672 = arith.addf %668, %671 : vector<16x128xf32>
    %c188 = arith.constant 188 : index
    %673 = memref.load %arg1[%c188] : memref<490xf32, #tpu.memory_space<smem>>
    %674 = vector.broadcast %673 : f32 to vector<16x128xf32>
    %675 = arith.mulf %674, %499 : vector<16x128xf32>
    %676 = arith.addf %672, %675 : vector<16x128xf32>
    %cst_30 = arith.constant 0.00999999977 : f32
    %677 = vector.broadcast %cst_30 : f32 to vector<16x128xf32>
    %678 = arith.mulf %677, %676 : vector<16x128xf32>
    %679 = arith.maximumf %676, %678 : vector<16x128xf32>
    %c189 = arith.constant 189 : index
    %680 = memref.load %arg1[%c189] : memref<490xf32, #tpu.memory_space<smem>>
    %681 = vector.broadcast %680 : f32 to vector<16x128xf32>
    %682 = arith.mulf %681, %319 : vector<16x128xf32>
    %c190 = arith.constant 190 : index
    %683 = memref.load %arg1[%c190] : memref<490xf32, #tpu.memory_space<smem>>
    %684 = vector.broadcast %683 : f32 to vector<16x128xf32>
    %685 = arith.mulf %684, %349 : vector<16x128xf32>
    %686 = arith.addf %682, %685 : vector<16x128xf32>
    %c191 = arith.constant 191 : index
    %687 = memref.load %arg1[%c191] : memref<490xf32, #tpu.memory_space<smem>>
    %688 = vector.broadcast %687 : f32 to vector<16x128xf32>
    %689 = arith.mulf %688, %379 : vector<16x128xf32>
    %690 = arith.addf %686, %689 : vector<16x128xf32>
    %c192 = arith.constant 192 : index
    %691 = memref.load %arg1[%c192] : memref<490xf32, #tpu.memory_space<smem>>
    %692 = vector.broadcast %691 : f32 to vector<16x128xf32>
    %693 = arith.mulf %692, %409 : vector<16x128xf32>
    %694 = arith.addf %690, %693 : vector<16x128xf32>
    %c193 = arith.constant 193 : index
    %695 = memref.load %arg1[%c193] : memref<490xf32, #tpu.memory_space<smem>>
    %696 = vector.broadcast %695 : f32 to vector<16x128xf32>
    %697 = arith.mulf %696, %439 : vector<16x128xf32>
    %698 = arith.addf %694, %697 : vector<16x128xf32>
    %c194 = arith.constant 194 : index
    %699 = memref.load %arg1[%c194] : memref<490xf32, #tpu.memory_space<smem>>
    %700 = vector.broadcast %699 : f32 to vector<16x128xf32>
    %701 = arith.mulf %700, %469 : vector<16x128xf32>
    %702 = arith.addf %698, %701 : vector<16x128xf32>
    %c195 = arith.constant 195 : index
    %703 = memref.load %arg1[%c195] : memref<490xf32, #tpu.memory_space<smem>>
    %704 = vector.broadcast %703 : f32 to vector<16x128xf32>
    %705 = arith.mulf %704, %499 : vector<16x128xf32>
    %706 = arith.addf %702, %705 : vector<16x128xf32>
    %cst_31 = arith.constant 0.00999999977 : f32
    %707 = vector.broadcast %cst_31 : f32 to vector<16x128xf32>
    %708 = arith.mulf %707, %706 : vector<16x128xf32>
    %709 = arith.maximumf %706, %708 : vector<16x128xf32>
    %c196 = arith.constant 196 : index
    %710 = memref.load %arg1[%c196] : memref<490xf32, #tpu.memory_space<smem>>
    %711 = vector.broadcast %710 : f32 to vector<16x128xf32>
    %712 = arith.mulf %711, %529 : vector<16x128xf32>
    %c197 = arith.constant 197 : index
    %713 = memref.load %arg1[%c197] : memref<490xf32, #tpu.memory_space<smem>>
    %714 = vector.broadcast %713 : f32 to vector<16x128xf32>
    %715 = arith.mulf %714, %559 : vector<16x128xf32>
    %716 = arith.addf %712, %715 : vector<16x128xf32>
    %c198 = arith.constant 198 : index
    %717 = memref.load %arg1[%c198] : memref<490xf32, #tpu.memory_space<smem>>
    %718 = vector.broadcast %717 : f32 to vector<16x128xf32>
    %719 = arith.mulf %718, %589 : vector<16x128xf32>
    %720 = arith.addf %716, %719 : vector<16x128xf32>
    %c199 = arith.constant 199 : index
    %721 = memref.load %arg1[%c199] : memref<490xf32, #tpu.memory_space<smem>>
    %722 = vector.broadcast %721 : f32 to vector<16x128xf32>
    %723 = arith.mulf %722, %619 : vector<16x128xf32>
    %724 = arith.addf %720, %723 : vector<16x128xf32>
    %c200 = arith.constant 200 : index
    %725 = memref.load %arg1[%c200] : memref<490xf32, #tpu.memory_space<smem>>
    %726 = vector.broadcast %725 : f32 to vector<16x128xf32>
    %727 = arith.mulf %726, %649 : vector<16x128xf32>
    %728 = arith.addf %724, %727 : vector<16x128xf32>
    %c201 = arith.constant 201 : index
    %729 = memref.load %arg1[%c201] : memref<490xf32, #tpu.memory_space<smem>>
    %730 = vector.broadcast %729 : f32 to vector<16x128xf32>
    %731 = arith.mulf %730, %679 : vector<16x128xf32>
    %732 = arith.addf %728, %731 : vector<16x128xf32>
    %c202 = arith.constant 202 : index
    %733 = memref.load %arg1[%c202] : memref<490xf32, #tpu.memory_space<smem>>
    %734 = vector.broadcast %733 : f32 to vector<16x128xf32>
    %735 = arith.mulf %734, %709 : vector<16x128xf32>
    %736 = arith.addf %732, %735 : vector<16x128xf32>
    %cst_32 = arith.constant 0.00999999977 : f32
    %737 = vector.broadcast %cst_32 : f32 to vector<16x128xf32>
    %738 = arith.mulf %737, %736 : vector<16x128xf32>
    %739 = arith.maximumf %736, %738 : vector<16x128xf32>
    %c203 = arith.constant 203 : index
    %740 = memref.load %arg1[%c203] : memref<490xf32, #tpu.memory_space<smem>>
    %741 = vector.broadcast %740 : f32 to vector<16x128xf32>
    %742 = arith.mulf %741, %529 : vector<16x128xf32>
    %c204 = arith.constant 204 : index
    %743 = memref.load %arg1[%c204] : memref<490xf32, #tpu.memory_space<smem>>
    %744 = vector.broadcast %743 : f32 to vector<16x128xf32>
    %745 = arith.mulf %744, %559 : vector<16x128xf32>
    %746 = arith.addf %742, %745 : vector<16x128xf32>
    %c205 = arith.constant 205 : index
    %747 = memref.load %arg1[%c205] : memref<490xf32, #tpu.memory_space<smem>>
    %748 = vector.broadcast %747 : f32 to vector<16x128xf32>
    %749 = arith.mulf %748, %589 : vector<16x128xf32>
    %750 = arith.addf %746, %749 : vector<16x128xf32>
    %c206 = arith.constant 206 : index
    %751 = memref.load %arg1[%c206] : memref<490xf32, #tpu.memory_space<smem>>
    %752 = vector.broadcast %751 : f32 to vector<16x128xf32>
    %753 = arith.mulf %752, %619 : vector<16x128xf32>
    %754 = arith.addf %750, %753 : vector<16x128xf32>
    %c207 = arith.constant 207 : index
    %755 = memref.load %arg1[%c207] : memref<490xf32, #tpu.memory_space<smem>>
    %756 = vector.broadcast %755 : f32 to vector<16x128xf32>
    %757 = arith.mulf %756, %649 : vector<16x128xf32>
    %758 = arith.addf %754, %757 : vector<16x128xf32>
    %c208 = arith.constant 208 : index
    %759 = memref.load %arg1[%c208] : memref<490xf32, #tpu.memory_space<smem>>
    %760 = vector.broadcast %759 : f32 to vector<16x128xf32>
    %761 = arith.mulf %760, %679 : vector<16x128xf32>
    %762 = arith.addf %758, %761 : vector<16x128xf32>
    %c209 = arith.constant 209 : index
    %763 = memref.load %arg1[%c209] : memref<490xf32, #tpu.memory_space<smem>>
    %764 = vector.broadcast %763 : f32 to vector<16x128xf32>
    %765 = arith.mulf %764, %709 : vector<16x128xf32>
    %766 = arith.addf %762, %765 : vector<16x128xf32>
    %cst_33 = arith.constant 0.00999999977 : f32
    %767 = vector.broadcast %cst_33 : f32 to vector<16x128xf32>
    %768 = arith.mulf %767, %766 : vector<16x128xf32>
    %769 = arith.maximumf %766, %768 : vector<16x128xf32>
    %c210 = arith.constant 210 : index
    %770 = memref.load %arg1[%c210] : memref<490xf32, #tpu.memory_space<smem>>
    %771 = vector.broadcast %770 : f32 to vector<16x128xf32>
    %772 = arith.mulf %771, %529 : vector<16x128xf32>
    %c211 = arith.constant 211 : index
    %773 = memref.load %arg1[%c211] : memref<490xf32, #tpu.memory_space<smem>>
    %774 = vector.broadcast %773 : f32 to vector<16x128xf32>
    %775 = arith.mulf %774, %559 : vector<16x128xf32>
    %776 = arith.addf %772, %775 : vector<16x128xf32>
    %c212 = arith.constant 212 : index
    %777 = memref.load %arg1[%c212] : memref<490xf32, #tpu.memory_space<smem>>
    %778 = vector.broadcast %777 : f32 to vector<16x128xf32>
    %779 = arith.mulf %778, %589 : vector<16x128xf32>
    %780 = arith.addf %776, %779 : vector<16x128xf32>
    %c213 = arith.constant 213 : index
    %781 = memref.load %arg1[%c213] : memref<490xf32, #tpu.memory_space<smem>>
    %782 = vector.broadcast %781 : f32 to vector<16x128xf32>
    %783 = arith.mulf %782, %619 : vector<16x128xf32>
    %784 = arith.addf %780, %783 : vector<16x128xf32>
    %c214 = arith.constant 214 : index
    %785 = memref.load %arg1[%c214] : memref<490xf32, #tpu.memory_space<smem>>
    %786 = vector.broadcast %785 : f32 to vector<16x128xf32>
    %787 = arith.mulf %786, %649 : vector<16x128xf32>
    %788 = arith.addf %784, %787 : vector<16x128xf32>
    %c215 = arith.constant 215 : index
    %789 = memref.load %arg1[%c215] : memref<490xf32, #tpu.memory_space<smem>>
    %790 = vector.broadcast %789 : f32 to vector<16x128xf32>
    %791 = arith.mulf %790, %679 : vector<16x128xf32>
    %792 = arith.addf %788, %791 : vector<16x128xf32>
    %c216 = arith.constant 216 : index
    %793 = memref.load %arg1[%c216] : memref<490xf32, #tpu.memory_space<smem>>
    %794 = vector.broadcast %793 : f32 to vector<16x128xf32>
    %795 = arith.mulf %794, %709 : vector<16x128xf32>
    %796 = arith.addf %792, %795 : vector<16x128xf32>
    %cst_34 = arith.constant 0.00999999977 : f32
    %797 = vector.broadcast %cst_34 : f32 to vector<16x128xf32>
    %798 = arith.mulf %797, %796 : vector<16x128xf32>
    %799 = arith.maximumf %796, %798 : vector<16x128xf32>
    %c217 = arith.constant 217 : index
    %800 = memref.load %arg1[%c217] : memref<490xf32, #tpu.memory_space<smem>>
    %801 = vector.broadcast %800 : f32 to vector<16x128xf32>
    %802 = arith.mulf %801, %529 : vector<16x128xf32>
    %c218 = arith.constant 218 : index
    %803 = memref.load %arg1[%c218] : memref<490xf32, #tpu.memory_space<smem>>
    %804 = vector.broadcast %803 : f32 to vector<16x128xf32>
    %805 = arith.mulf %804, %559 : vector<16x128xf32>
    %806 = arith.addf %802, %805 : vector<16x128xf32>
    %c219 = arith.constant 219 : index
    %807 = memref.load %arg1[%c219] : memref<490xf32, #tpu.memory_space<smem>>
    %808 = vector.broadcast %807 : f32 to vector<16x128xf32>
    %809 = arith.mulf %808, %589 : vector<16x128xf32>
    %810 = arith.addf %806, %809 : vector<16x128xf32>
    %c220 = arith.constant 220 : index
    %811 = memref.load %arg1[%c220] : memref<490xf32, #tpu.memory_space<smem>>
    %812 = vector.broadcast %811 : f32 to vector<16x128xf32>
    %813 = arith.mulf %812, %619 : vector<16x128xf32>
    %814 = arith.addf %810, %813 : vector<16x128xf32>
    %c221 = arith.constant 221 : index
    %815 = memref.load %arg1[%c221] : memref<490xf32, #tpu.memory_space<smem>>
    %816 = vector.broadcast %815 : f32 to vector<16x128xf32>
    %817 = arith.mulf %816, %649 : vector<16x128xf32>
    %818 = arith.addf %814, %817 : vector<16x128xf32>
    %c222 = arith.constant 222 : index
    %819 = memref.load %arg1[%c222] : memref<490xf32, #tpu.memory_space<smem>>
    %820 = vector.broadcast %819 : f32 to vector<16x128xf32>
    %821 = arith.mulf %820, %679 : vector<16x128xf32>
    %822 = arith.addf %818, %821 : vector<16x128xf32>
    %c223 = arith.constant 223 : index
    %823 = memref.load %arg1[%c223] : memref<490xf32, #tpu.memory_space<smem>>
    %824 = vector.broadcast %823 : f32 to vector<16x128xf32>
    %825 = arith.mulf %824, %709 : vector<16x128xf32>
    %826 = arith.addf %822, %825 : vector<16x128xf32>
    %cst_35 = arith.constant 0.00999999977 : f32
    %827 = vector.broadcast %cst_35 : f32 to vector<16x128xf32>
    %828 = arith.mulf %827, %826 : vector<16x128xf32>
    %829 = arith.maximumf %826, %828 : vector<16x128xf32>
    %c224 = arith.constant 224 : index
    %830 = memref.load %arg1[%c224] : memref<490xf32, #tpu.memory_space<smem>>
    %831 = vector.broadcast %830 : f32 to vector<16x128xf32>
    %832 = arith.mulf %831, %529 : vector<16x128xf32>
    %c225 = arith.constant 225 : index
    %833 = memref.load %arg1[%c225] : memref<490xf32, #tpu.memory_space<smem>>
    %834 = vector.broadcast %833 : f32 to vector<16x128xf32>
    %835 = arith.mulf %834, %559 : vector<16x128xf32>
    %836 = arith.addf %832, %835 : vector<16x128xf32>
    %c226 = arith.constant 226 : index
    %837 = memref.load %arg1[%c226] : memref<490xf32, #tpu.memory_space<smem>>
    %838 = vector.broadcast %837 : f32 to vector<16x128xf32>
    %839 = arith.mulf %838, %589 : vector<16x128xf32>
    %840 = arith.addf %836, %839 : vector<16x128xf32>
    %c227 = arith.constant 227 : index
    %841 = memref.load %arg1[%c227] : memref<490xf32, #tpu.memory_space<smem>>
    %842 = vector.broadcast %841 : f32 to vector<16x128xf32>
    %843 = arith.mulf %842, %619 : vector<16x128xf32>
    %844 = arith.addf %840, %843 : vector<16x128xf32>
    %c228 = arith.constant 228 : index
    %845 = memref.load %arg1[%c228] : memref<490xf32, #tpu.memory_space<smem>>
    %846 = vector.broadcast %845 : f32 to vector<16x128xf32>
    %847 = arith.mulf %846, %649 : vector<16x128xf32>
    %848 = arith.addf %844, %847 : vector<16x128xf32>
    %c229 = arith.constant 229 : index
    %849 = memref.load %arg1[%c229] : memref<490xf32, #tpu.memory_space<smem>>
    %850 = vector.broadcast %849 : f32 to vector<16x128xf32>
    %851 = arith.mulf %850, %679 : vector<16x128xf32>
    %852 = arith.addf %848, %851 : vector<16x128xf32>
    %c230 = arith.constant 230 : index
    %853 = memref.load %arg1[%c230] : memref<490xf32, #tpu.memory_space<smem>>
    %854 = vector.broadcast %853 : f32 to vector<16x128xf32>
    %855 = arith.mulf %854, %709 : vector<16x128xf32>
    %856 = arith.addf %852, %855 : vector<16x128xf32>
    %cst_36 = arith.constant 0.00999999977 : f32
    %857 = vector.broadcast %cst_36 : f32 to vector<16x128xf32>
    %858 = arith.mulf %857, %856 : vector<16x128xf32>
    %859 = arith.maximumf %856, %858 : vector<16x128xf32>
    %c231 = arith.constant 231 : index
    %860 = memref.load %arg1[%c231] : memref<490xf32, #tpu.memory_space<smem>>
    %861 = vector.broadcast %860 : f32 to vector<16x128xf32>
    %862 = arith.mulf %861, %529 : vector<16x128xf32>
    %c232 = arith.constant 232 : index
    %863 = memref.load %arg1[%c232] : memref<490xf32, #tpu.memory_space<smem>>
    %864 = vector.broadcast %863 : f32 to vector<16x128xf32>
    %865 = arith.mulf %864, %559 : vector<16x128xf32>
    %866 = arith.addf %862, %865 : vector<16x128xf32>
    %c233 = arith.constant 233 : index
    %867 = memref.load %arg1[%c233] : memref<490xf32, #tpu.memory_space<smem>>
    %868 = vector.broadcast %867 : f32 to vector<16x128xf32>
    %869 = arith.mulf %868, %589 : vector<16x128xf32>
    %870 = arith.addf %866, %869 : vector<16x128xf32>
    %c234 = arith.constant 234 : index
    %871 = memref.load %arg1[%c234] : memref<490xf32, #tpu.memory_space<smem>>
    %872 = vector.broadcast %871 : f32 to vector<16x128xf32>
    %873 = arith.mulf %872, %619 : vector<16x128xf32>
    %874 = arith.addf %870, %873 : vector<16x128xf32>
    %c235 = arith.constant 235 : index
    %875 = memref.load %arg1[%c235] : memref<490xf32, #tpu.memory_space<smem>>
    %876 = vector.broadcast %875 : f32 to vector<16x128xf32>
    %877 = arith.mulf %876, %649 : vector<16x128xf32>
    %878 = arith.addf %874, %877 : vector<16x128xf32>
    %c236 = arith.constant 236 : index
    %879 = memref.load %arg1[%c236] : memref<490xf32, #tpu.memory_space<smem>>
    %880 = vector.broadcast %879 : f32 to vector<16x128xf32>
    %881 = arith.mulf %880, %679 : vector<16x128xf32>
    %882 = arith.addf %878, %881 : vector<16x128xf32>
    %c237 = arith.constant 237 : index
    %883 = memref.load %arg1[%c237] : memref<490xf32, #tpu.memory_space<smem>>
    %884 = vector.broadcast %883 : f32 to vector<16x128xf32>
    %885 = arith.mulf %884, %709 : vector<16x128xf32>
    %886 = arith.addf %882, %885 : vector<16x128xf32>
    %cst_37 = arith.constant 0.00999999977 : f32
    %887 = vector.broadcast %cst_37 : f32 to vector<16x128xf32>
    %888 = arith.mulf %887, %886 : vector<16x128xf32>
    %889 = arith.maximumf %886, %888 : vector<16x128xf32>
    %c238 = arith.constant 238 : index
    %890 = memref.load %arg1[%c238] : memref<490xf32, #tpu.memory_space<smem>>
    %891 = vector.broadcast %890 : f32 to vector<16x128xf32>
    %892 = arith.mulf %891, %529 : vector<16x128xf32>
    %c239 = arith.constant 239 : index
    %893 = memref.load %arg1[%c239] : memref<490xf32, #tpu.memory_space<smem>>
    %894 = vector.broadcast %893 : f32 to vector<16x128xf32>
    %895 = arith.mulf %894, %559 : vector<16x128xf32>
    %896 = arith.addf %892, %895 : vector<16x128xf32>
    %c240 = arith.constant 240 : index
    %897 = memref.load %arg1[%c240] : memref<490xf32, #tpu.memory_space<smem>>
    %898 = vector.broadcast %897 : f32 to vector<16x128xf32>
    %899 = arith.mulf %898, %589 : vector<16x128xf32>
    %900 = arith.addf %896, %899 : vector<16x128xf32>
    %c241 = arith.constant 241 : index
    %901 = memref.load %arg1[%c241] : memref<490xf32, #tpu.memory_space<smem>>
    %902 = vector.broadcast %901 : f32 to vector<16x128xf32>
    %903 = arith.mulf %902, %619 : vector<16x128xf32>
    %904 = arith.addf %900, %903 : vector<16x128xf32>
    %c242 = arith.constant 242 : index
    %905 = memref.load %arg1[%c242] : memref<490xf32, #tpu.memory_space<smem>>
    %906 = vector.broadcast %905 : f32 to vector<16x128xf32>
    %907 = arith.mulf %906, %649 : vector<16x128xf32>
    %908 = arith.addf %904, %907 : vector<16x128xf32>
    %c243 = arith.constant 243 : index
    %909 = memref.load %arg1[%c243] : memref<490xf32, #tpu.memory_space<smem>>
    %910 = vector.broadcast %909 : f32 to vector<16x128xf32>
    %911 = arith.mulf %910, %679 : vector<16x128xf32>
    %912 = arith.addf %908, %911 : vector<16x128xf32>
    %c244 = arith.constant 244 : index
    %913 = memref.load %arg1[%c244] : memref<490xf32, #tpu.memory_space<smem>>
    %914 = vector.broadcast %913 : f32 to vector<16x128xf32>
    %915 = arith.mulf %914, %709 : vector<16x128xf32>
    %916 = arith.addf %912, %915 : vector<16x128xf32>
    %cst_38 = arith.constant 0.00999999977 : f32
    %917 = vector.broadcast %cst_38 : f32 to vector<16x128xf32>
    %918 = arith.mulf %917, %916 : vector<16x128xf32>
    %919 = arith.maximumf %916, %918 : vector<16x128xf32>
    %c245 = arith.constant 245 : index
    %920 = memref.load %arg1[%c245] : memref<490xf32, #tpu.memory_space<smem>>
    %921 = vector.broadcast %920 : f32 to vector<16x128xf32>
    %922 = arith.mulf %921, %739 : vector<16x128xf32>
    %c246 = arith.constant 246 : index
    %923 = memref.load %arg1[%c246] : memref<490xf32, #tpu.memory_space<smem>>
    %924 = vector.broadcast %923 : f32 to vector<16x128xf32>
    %925 = arith.mulf %924, %769 : vector<16x128xf32>
    %926 = arith.addf %922, %925 : vector<16x128xf32>
    %c247 = arith.constant 247 : index
    %927 = memref.load %arg1[%c247] : memref<490xf32, #tpu.memory_space<smem>>
    %928 = vector.broadcast %927 : f32 to vector<16x128xf32>
    %929 = arith.mulf %928, %799 : vector<16x128xf32>
    %930 = arith.addf %926, %929 : vector<16x128xf32>
    %c248 = arith.constant 248 : index
    %931 = memref.load %arg1[%c248] : memref<490xf32, #tpu.memory_space<smem>>
    %932 = vector.broadcast %931 : f32 to vector<16x128xf32>
    %933 = arith.mulf %932, %829 : vector<16x128xf32>
    %934 = arith.addf %930, %933 : vector<16x128xf32>
    %c249 = arith.constant 249 : index
    %935 = memref.load %arg1[%c249] : memref<490xf32, #tpu.memory_space<smem>>
    %936 = vector.broadcast %935 : f32 to vector<16x128xf32>
    %937 = arith.mulf %936, %859 : vector<16x128xf32>
    %938 = arith.addf %934, %937 : vector<16x128xf32>
    %c250 = arith.constant 250 : index
    %939 = memref.load %arg1[%c250] : memref<490xf32, #tpu.memory_space<smem>>
    %940 = vector.broadcast %939 : f32 to vector<16x128xf32>
    %941 = arith.mulf %940, %889 : vector<16x128xf32>
    %942 = arith.addf %938, %941 : vector<16x128xf32>
    %c251 = arith.constant 251 : index
    %943 = memref.load %arg1[%c251] : memref<490xf32, #tpu.memory_space<smem>>
    %944 = vector.broadcast %943 : f32 to vector<16x128xf32>
    %945 = arith.mulf %944, %919 : vector<16x128xf32>
    %946 = arith.addf %942, %945 : vector<16x128xf32>
    %cst_39 = arith.constant 0.00999999977 : f32
    %947 = vector.broadcast %cst_39 : f32 to vector<16x128xf32>
    %948 = arith.mulf %947, %946 : vector<16x128xf32>
    %949 = arith.maximumf %946, %948 : vector<16x128xf32>
    %c252 = arith.constant 252 : index
    %950 = memref.load %arg1[%c252] : memref<490xf32, #tpu.memory_space<smem>>
    %951 = vector.broadcast %950 : f32 to vector<16x128xf32>
    %952 = arith.mulf %951, %739 : vector<16x128xf32>
    %c253 = arith.constant 253 : index
    %953 = memref.load %arg1[%c253] : memref<490xf32, #tpu.memory_space<smem>>
    %954 = vector.broadcast %953 : f32 to vector<16x128xf32>
    %955 = arith.mulf %954, %769 : vector<16x128xf32>
    %956 = arith.addf %952, %955 : vector<16x128xf32>
    %c254 = arith.constant 254 : index
    %957 = memref.load %arg1[%c254] : memref<490xf32, #tpu.memory_space<smem>>
    %958 = vector.broadcast %957 : f32 to vector<16x128xf32>
    %959 = arith.mulf %958, %799 : vector<16x128xf32>
    %960 = arith.addf %956, %959 : vector<16x128xf32>
    %c255 = arith.constant 255 : index
    %961 = memref.load %arg1[%c255] : memref<490xf32, #tpu.memory_space<smem>>
    %962 = vector.broadcast %961 : f32 to vector<16x128xf32>
    %963 = arith.mulf %962, %829 : vector<16x128xf32>
    %964 = arith.addf %960, %963 : vector<16x128xf32>
    %c256 = arith.constant 256 : index
    %965 = memref.load %arg1[%c256] : memref<490xf32, #tpu.memory_space<smem>>
    %966 = vector.broadcast %965 : f32 to vector<16x128xf32>
    %967 = arith.mulf %966, %859 : vector<16x128xf32>
    %968 = arith.addf %964, %967 : vector<16x128xf32>
    %c257 = arith.constant 257 : index
    %969 = memref.load %arg1[%c257] : memref<490xf32, #tpu.memory_space<smem>>
    %970 = vector.broadcast %969 : f32 to vector<16x128xf32>
    %971 = arith.mulf %970, %889 : vector<16x128xf32>
    %972 = arith.addf %968, %971 : vector<16x128xf32>
    %c258 = arith.constant 258 : index
    %973 = memref.load %arg1[%c258] : memref<490xf32, #tpu.memory_space<smem>>
    %974 = vector.broadcast %973 : f32 to vector<16x128xf32>
    %975 = arith.mulf %974, %919 : vector<16x128xf32>
    %976 = arith.addf %972, %975 : vector<16x128xf32>
    %cst_40 = arith.constant 0.00999999977 : f32
    %977 = vector.broadcast %cst_40 : f32 to vector<16x128xf32>
    %978 = arith.mulf %977, %976 : vector<16x128xf32>
    %979 = arith.maximumf %976, %978 : vector<16x128xf32>
    %c259 = arith.constant 259 : index
    %980 = memref.load %arg1[%c259] : memref<490xf32, #tpu.memory_space<smem>>
    %981 = vector.broadcast %980 : f32 to vector<16x128xf32>
    %982 = arith.mulf %981, %739 : vector<16x128xf32>
    %c260 = arith.constant 260 : index
    %983 = memref.load %arg1[%c260] : memref<490xf32, #tpu.memory_space<smem>>
    %984 = vector.broadcast %983 : f32 to vector<16x128xf32>
    %985 = arith.mulf %984, %769 : vector<16x128xf32>
    %986 = arith.addf %982, %985 : vector<16x128xf32>
    %c261 = arith.constant 261 : index
    %987 = memref.load %arg1[%c261] : memref<490xf32, #tpu.memory_space<smem>>
    %988 = vector.broadcast %987 : f32 to vector<16x128xf32>
    %989 = arith.mulf %988, %799 : vector<16x128xf32>
    %990 = arith.addf %986, %989 : vector<16x128xf32>
    %c262 = arith.constant 262 : index
    %991 = memref.load %arg1[%c262] : memref<490xf32, #tpu.memory_space<smem>>
    %992 = vector.broadcast %991 : f32 to vector<16x128xf32>
    %993 = arith.mulf %992, %829 : vector<16x128xf32>
    %994 = arith.addf %990, %993 : vector<16x128xf32>
    %c263 = arith.constant 263 : index
    %995 = memref.load %arg1[%c263] : memref<490xf32, #tpu.memory_space<smem>>
    %996 = vector.broadcast %995 : f32 to vector<16x128xf32>
    %997 = arith.mulf %996, %859 : vector<16x128xf32>
    %998 = arith.addf %994, %997 : vector<16x128xf32>
    %c264 = arith.constant 264 : index
    %999 = memref.load %arg1[%c264] : memref<490xf32, #tpu.memory_space<smem>>
    %1000 = vector.broadcast %999 : f32 to vector<16x128xf32>
    %1001 = arith.mulf %1000, %889 : vector<16x128xf32>
    %1002 = arith.addf %998, %1001 : vector<16x128xf32>
    %c265 = arith.constant 265 : index
    %1003 = memref.load %arg1[%c265] : memref<490xf32, #tpu.memory_space<smem>>
    %1004 = vector.broadcast %1003 : f32 to vector<16x128xf32>
    %1005 = arith.mulf %1004, %919 : vector<16x128xf32>
    %1006 = arith.addf %1002, %1005 : vector<16x128xf32>
    %cst_41 = arith.constant 0.00999999977 : f32
    %1007 = vector.broadcast %cst_41 : f32 to vector<16x128xf32>
    %1008 = arith.mulf %1007, %1006 : vector<16x128xf32>
    %1009 = arith.maximumf %1006, %1008 : vector<16x128xf32>
    %c266 = arith.constant 266 : index
    %1010 = memref.load %arg1[%c266] : memref<490xf32, #tpu.memory_space<smem>>
    %1011 = vector.broadcast %1010 : f32 to vector<16x128xf32>
    %1012 = arith.mulf %1011, %739 : vector<16x128xf32>
    %c267 = arith.constant 267 : index
    %1013 = memref.load %arg1[%c267] : memref<490xf32, #tpu.memory_space<smem>>
    %1014 = vector.broadcast %1013 : f32 to vector<16x128xf32>
    %1015 = arith.mulf %1014, %769 : vector<16x128xf32>
    %1016 = arith.addf %1012, %1015 : vector<16x128xf32>
    %c268 = arith.constant 268 : index
    %1017 = memref.load %arg1[%c268] : memref<490xf32, #tpu.memory_space<smem>>
    %1018 = vector.broadcast %1017 : f32 to vector<16x128xf32>
    %1019 = arith.mulf %1018, %799 : vector<16x128xf32>
    %1020 = arith.addf %1016, %1019 : vector<16x128xf32>
    %c269 = arith.constant 269 : index
    %1021 = memref.load %arg1[%c269] : memref<490xf32, #tpu.memory_space<smem>>
    %1022 = vector.broadcast %1021 : f32 to vector<16x128xf32>
    %1023 = arith.mulf %1022, %829 : vector<16x128xf32>
    %1024 = arith.addf %1020, %1023 : vector<16x128xf32>
    %c270 = arith.constant 270 : index
    %1025 = memref.load %arg1[%c270] : memref<490xf32, #tpu.memory_space<smem>>
    %1026 = vector.broadcast %1025 : f32 to vector<16x128xf32>
    %1027 = arith.mulf %1026, %859 : vector<16x128xf32>
    %1028 = arith.addf %1024, %1027 : vector<16x128xf32>
    %c271 = arith.constant 271 : index
    %1029 = memref.load %arg1[%c271] : memref<490xf32, #tpu.memory_space<smem>>
    %1030 = vector.broadcast %1029 : f32 to vector<16x128xf32>
    %1031 = arith.mulf %1030, %889 : vector<16x128xf32>
    %1032 = arith.addf %1028, %1031 : vector<16x128xf32>
    %c272 = arith.constant 272 : index
    %1033 = memref.load %arg1[%c272] : memref<490xf32, #tpu.memory_space<smem>>
    %1034 = vector.broadcast %1033 : f32 to vector<16x128xf32>
    %1035 = arith.mulf %1034, %919 : vector<16x128xf32>
    %1036 = arith.addf %1032, %1035 : vector<16x128xf32>
    %cst_42 = arith.constant 0.00999999977 : f32
    %1037 = vector.broadcast %cst_42 : f32 to vector<16x128xf32>
    %1038 = arith.mulf %1037, %1036 : vector<16x128xf32>
    %1039 = arith.maximumf %1036, %1038 : vector<16x128xf32>
    %c273 = arith.constant 273 : index
    %1040 = memref.load %arg1[%c273] : memref<490xf32, #tpu.memory_space<smem>>
    %1041 = vector.broadcast %1040 : f32 to vector<16x128xf32>
    %1042 = arith.mulf %1041, %739 : vector<16x128xf32>
    %c274 = arith.constant 274 : index
    %1043 = memref.load %arg1[%c274] : memref<490xf32, #tpu.memory_space<smem>>
    %1044 = vector.broadcast %1043 : f32 to vector<16x128xf32>
    %1045 = arith.mulf %1044, %769 : vector<16x128xf32>
    %1046 = arith.addf %1042, %1045 : vector<16x128xf32>
    %c275 = arith.constant 275 : index
    %1047 = memref.load %arg1[%c275] : memref<490xf32, #tpu.memory_space<smem>>
    %1048 = vector.broadcast %1047 : f32 to vector<16x128xf32>
    %1049 = arith.mulf %1048, %799 : vector<16x128xf32>
    %1050 = arith.addf %1046, %1049 : vector<16x128xf32>
    %c276 = arith.constant 276 : index
    %1051 = memref.load %arg1[%c276] : memref<490xf32, #tpu.memory_space<smem>>
    %1052 = vector.broadcast %1051 : f32 to vector<16x128xf32>
    %1053 = arith.mulf %1052, %829 : vector<16x128xf32>
    %1054 = arith.addf %1050, %1053 : vector<16x128xf32>
    %c277 = arith.constant 277 : index
    %1055 = memref.load %arg1[%c277] : memref<490xf32, #tpu.memory_space<smem>>
    %1056 = vector.broadcast %1055 : f32 to vector<16x128xf32>
    %1057 = arith.mulf %1056, %859 : vector<16x128xf32>
    %1058 = arith.addf %1054, %1057 : vector<16x128xf32>
    %c278 = arith.constant 278 : index
    %1059 = memref.load %arg1[%c278] : memref<490xf32, #tpu.memory_space<smem>>
    %1060 = vector.broadcast %1059 : f32 to vector<16x128xf32>
    %1061 = arith.mulf %1060, %889 : vector<16x128xf32>
    %1062 = arith.addf %1058, %1061 : vector<16x128xf32>
    %c279 = arith.constant 279 : index
    %1063 = memref.load %arg1[%c279] : memref<490xf32, #tpu.memory_space<smem>>
    %1064 = vector.broadcast %1063 : f32 to vector<16x128xf32>
    %1065 = arith.mulf %1064, %919 : vector<16x128xf32>
    %1066 = arith.addf %1062, %1065 : vector<16x128xf32>
    %cst_43 = arith.constant 0.00999999977 : f32
    %1067 = vector.broadcast %cst_43 : f32 to vector<16x128xf32>
    %1068 = arith.mulf %1067, %1066 : vector<16x128xf32>
    %1069 = arith.maximumf %1066, %1068 : vector<16x128xf32>
    %c280 = arith.constant 280 : index
    %1070 = memref.load %arg1[%c280] : memref<490xf32, #tpu.memory_space<smem>>
    %1071 = vector.broadcast %1070 : f32 to vector<16x128xf32>
    %1072 = arith.mulf %1071, %739 : vector<16x128xf32>
    %c281 = arith.constant 281 : index
    %1073 = memref.load %arg1[%c281] : memref<490xf32, #tpu.memory_space<smem>>
    %1074 = vector.broadcast %1073 : f32 to vector<16x128xf32>
    %1075 = arith.mulf %1074, %769 : vector<16x128xf32>
    %1076 = arith.addf %1072, %1075 : vector<16x128xf32>
    %c282 = arith.constant 282 : index
    %1077 = memref.load %arg1[%c282] : memref<490xf32, #tpu.memory_space<smem>>
    %1078 = vector.broadcast %1077 : f32 to vector<16x128xf32>
    %1079 = arith.mulf %1078, %799 : vector<16x128xf32>
    %1080 = arith.addf %1076, %1079 : vector<16x128xf32>
    %c283 = arith.constant 283 : index
    %1081 = memref.load %arg1[%c283] : memref<490xf32, #tpu.memory_space<smem>>
    %1082 = vector.broadcast %1081 : f32 to vector<16x128xf32>
    %1083 = arith.mulf %1082, %829 : vector<16x128xf32>
    %1084 = arith.addf %1080, %1083 : vector<16x128xf32>
    %c284 = arith.constant 284 : index
    %1085 = memref.load %arg1[%c284] : memref<490xf32, #tpu.memory_space<smem>>
    %1086 = vector.broadcast %1085 : f32 to vector<16x128xf32>
    %1087 = arith.mulf %1086, %859 : vector<16x128xf32>
    %1088 = arith.addf %1084, %1087 : vector<16x128xf32>
    %c285 = arith.constant 285 : index
    %1089 = memref.load %arg1[%c285] : memref<490xf32, #tpu.memory_space<smem>>
    %1090 = vector.broadcast %1089 : f32 to vector<16x128xf32>
    %1091 = arith.mulf %1090, %889 : vector<16x128xf32>
    %1092 = arith.addf %1088, %1091 : vector<16x128xf32>
    %c286 = arith.constant 286 : index
    %1093 = memref.load %arg1[%c286] : memref<490xf32, #tpu.memory_space<smem>>
    %1094 = vector.broadcast %1093 : f32 to vector<16x128xf32>
    %1095 = arith.mulf %1094, %919 : vector<16x128xf32>
    %1096 = arith.addf %1092, %1095 : vector<16x128xf32>
    %cst_44 = arith.constant 0.00999999977 : f32
    %1097 = vector.broadcast %cst_44 : f32 to vector<16x128xf32>
    %1098 = arith.mulf %1097, %1096 : vector<16x128xf32>
    %1099 = arith.maximumf %1096, %1098 : vector<16x128xf32>
    %c287 = arith.constant 287 : index
    %1100 = memref.load %arg1[%c287] : memref<490xf32, #tpu.memory_space<smem>>
    %1101 = vector.broadcast %1100 : f32 to vector<16x128xf32>
    %1102 = arith.mulf %1101, %739 : vector<16x128xf32>
    %c288 = arith.constant 288 : index
    %1103 = memref.load %arg1[%c288] : memref<490xf32, #tpu.memory_space<smem>>
    %1104 = vector.broadcast %1103 : f32 to vector<16x128xf32>
    %1105 = arith.mulf %1104, %769 : vector<16x128xf32>
    %1106 = arith.addf %1102, %1105 : vector<16x128xf32>
    %c289 = arith.constant 289 : index
    %1107 = memref.load %arg1[%c289] : memref<490xf32, #tpu.memory_space<smem>>
    %1108 = vector.broadcast %1107 : f32 to vector<16x128xf32>
    %1109 = arith.mulf %1108, %799 : vector<16x128xf32>
    %1110 = arith.addf %1106, %1109 : vector<16x128xf32>
    %c290 = arith.constant 290 : index
    %1111 = memref.load %arg1[%c290] : memref<490xf32, #tpu.memory_space<smem>>
    %1112 = vector.broadcast %1111 : f32 to vector<16x128xf32>
    %1113 = arith.mulf %1112, %829 : vector<16x128xf32>
    %1114 = arith.addf %1110, %1113 : vector<16x128xf32>
    %c291 = arith.constant 291 : index
    %1115 = memref.load %arg1[%c291] : memref<490xf32, #tpu.memory_space<smem>>
    %1116 = vector.broadcast %1115 : f32 to vector<16x128xf32>
    %1117 = arith.mulf %1116, %859 : vector<16x128xf32>
    %1118 = arith.addf %1114, %1117 : vector<16x128xf32>
    %c292 = arith.constant 292 : index
    %1119 = memref.load %arg1[%c292] : memref<490xf32, #tpu.memory_space<smem>>
    %1120 = vector.broadcast %1119 : f32 to vector<16x128xf32>
    %1121 = arith.mulf %1120, %889 : vector<16x128xf32>
    %1122 = arith.addf %1118, %1121 : vector<16x128xf32>
    %c293 = arith.constant 293 : index
    %1123 = memref.load %arg1[%c293] : memref<490xf32, #tpu.memory_space<smem>>
    %1124 = vector.broadcast %1123 : f32 to vector<16x128xf32>
    %1125 = arith.mulf %1124, %919 : vector<16x128xf32>
    %1126 = arith.addf %1122, %1125 : vector<16x128xf32>
    %cst_45 = arith.constant 0.00999999977 : f32
    %1127 = vector.broadcast %cst_45 : f32 to vector<16x128xf32>
    %1128 = arith.mulf %1127, %1126 : vector<16x128xf32>
    %1129 = arith.maximumf %1126, %1128 : vector<16x128xf32>
    %c294 = arith.constant 294 : index
    %1130 = memref.load %arg1[%c294] : memref<490xf32, #tpu.memory_space<smem>>
    %1131 = vector.broadcast %1130 : f32 to vector<16x128xf32>
    %1132 = arith.mulf %1131, %949 : vector<16x128xf32>
    %c295 = arith.constant 295 : index
    %1133 = memref.load %arg1[%c295] : memref<490xf32, #tpu.memory_space<smem>>
    %1134 = vector.broadcast %1133 : f32 to vector<16x128xf32>
    %1135 = arith.mulf %1134, %979 : vector<16x128xf32>
    %1136 = arith.addf %1132, %1135 : vector<16x128xf32>
    %c296 = arith.constant 296 : index
    %1137 = memref.load %arg1[%c296] : memref<490xf32, #tpu.memory_space<smem>>
    %1138 = vector.broadcast %1137 : f32 to vector<16x128xf32>
    %1139 = arith.mulf %1138, %1009 : vector<16x128xf32>
    %1140 = arith.addf %1136, %1139 : vector<16x128xf32>
    %c297 = arith.constant 297 : index
    %1141 = memref.load %arg1[%c297] : memref<490xf32, #tpu.memory_space<smem>>
    %1142 = vector.broadcast %1141 : f32 to vector<16x128xf32>
    %1143 = arith.mulf %1142, %1039 : vector<16x128xf32>
    %1144 = arith.addf %1140, %1143 : vector<16x128xf32>
    %c298 = arith.constant 298 : index
    %1145 = memref.load %arg1[%c298] : memref<490xf32, #tpu.memory_space<smem>>
    %1146 = vector.broadcast %1145 : f32 to vector<16x128xf32>
    %1147 = arith.mulf %1146, %1069 : vector<16x128xf32>
    %1148 = arith.addf %1144, %1147 : vector<16x128xf32>
    %c299 = arith.constant 299 : index
    %1149 = memref.load %arg1[%c299] : memref<490xf32, #tpu.memory_space<smem>>
    %1150 = vector.broadcast %1149 : f32 to vector<16x128xf32>
    %1151 = arith.mulf %1150, %1099 : vector<16x128xf32>
    %1152 = arith.addf %1148, %1151 : vector<16x128xf32>
    %c300 = arith.constant 300 : index
    %1153 = memref.load %arg1[%c300] : memref<490xf32, #tpu.memory_space<smem>>
    %1154 = vector.broadcast %1153 : f32 to vector<16x128xf32>
    %1155 = arith.mulf %1154, %1129 : vector<16x128xf32>
    %1156 = arith.addf %1152, %1155 : vector<16x128xf32>
    %cst_46 = arith.constant 0.00999999977 : f32
    %1157 = vector.broadcast %cst_46 : f32 to vector<16x128xf32>
    %1158 = arith.mulf %1157, %1156 : vector<16x128xf32>
    %1159 = arith.maximumf %1156, %1158 : vector<16x128xf32>
    %c301 = arith.constant 301 : index
    %1160 = memref.load %arg1[%c301] : memref<490xf32, #tpu.memory_space<smem>>
    %1161 = vector.broadcast %1160 : f32 to vector<16x128xf32>
    %1162 = arith.mulf %1161, %949 : vector<16x128xf32>
    %c302 = arith.constant 302 : index
    %1163 = memref.load %arg1[%c302] : memref<490xf32, #tpu.memory_space<smem>>
    %1164 = vector.broadcast %1163 : f32 to vector<16x128xf32>
    %1165 = arith.mulf %1164, %979 : vector<16x128xf32>
    %1166 = arith.addf %1162, %1165 : vector<16x128xf32>
    %c303 = arith.constant 303 : index
    %1167 = memref.load %arg1[%c303] : memref<490xf32, #tpu.memory_space<smem>>
    %1168 = vector.broadcast %1167 : f32 to vector<16x128xf32>
    %1169 = arith.mulf %1168, %1009 : vector<16x128xf32>
    %1170 = arith.addf %1166, %1169 : vector<16x128xf32>
    %c304 = arith.constant 304 : index
    %1171 = memref.load %arg1[%c304] : memref<490xf32, #tpu.memory_space<smem>>
    %1172 = vector.broadcast %1171 : f32 to vector<16x128xf32>
    %1173 = arith.mulf %1172, %1039 : vector<16x128xf32>
    %1174 = arith.addf %1170, %1173 : vector<16x128xf32>
    %c305 = arith.constant 305 : index
    %1175 = memref.load %arg1[%c305] : memref<490xf32, #tpu.memory_space<smem>>
    %1176 = vector.broadcast %1175 : f32 to vector<16x128xf32>
    %1177 = arith.mulf %1176, %1069 : vector<16x128xf32>
    %1178 = arith.addf %1174, %1177 : vector<16x128xf32>
    %c306 = arith.constant 306 : index
    %1179 = memref.load %arg1[%c306] : memref<490xf32, #tpu.memory_space<smem>>
    %1180 = vector.broadcast %1179 : f32 to vector<16x128xf32>
    %1181 = arith.mulf %1180, %1099 : vector<16x128xf32>
    %1182 = arith.addf %1178, %1181 : vector<16x128xf32>
    %c307 = arith.constant 307 : index
    %1183 = memref.load %arg1[%c307] : memref<490xf32, #tpu.memory_space<smem>>
    %1184 = vector.broadcast %1183 : f32 to vector<16x128xf32>
    %1185 = arith.mulf %1184, %1129 : vector<16x128xf32>
    %1186 = arith.addf %1182, %1185 : vector<16x128xf32>
    %cst_47 = arith.constant 0.00999999977 : f32
    %1187 = vector.broadcast %cst_47 : f32 to vector<16x128xf32>
    %1188 = arith.mulf %1187, %1186 : vector<16x128xf32>
    %1189 = arith.maximumf %1186, %1188 : vector<16x128xf32>
    %c308 = arith.constant 308 : index
    %1190 = memref.load %arg1[%c308] : memref<490xf32, #tpu.memory_space<smem>>
    %1191 = vector.broadcast %1190 : f32 to vector<16x128xf32>
    %1192 = arith.mulf %1191, %949 : vector<16x128xf32>
    %c309 = arith.constant 309 : index
    %1193 = memref.load %arg1[%c309] : memref<490xf32, #tpu.memory_space<smem>>
    %1194 = vector.broadcast %1193 : f32 to vector<16x128xf32>
    %1195 = arith.mulf %1194, %979 : vector<16x128xf32>
    %1196 = arith.addf %1192, %1195 : vector<16x128xf32>
    %c310 = arith.constant 310 : index
    %1197 = memref.load %arg1[%c310] : memref<490xf32, #tpu.memory_space<smem>>
    %1198 = vector.broadcast %1197 : f32 to vector<16x128xf32>
    %1199 = arith.mulf %1198, %1009 : vector<16x128xf32>
    %1200 = arith.addf %1196, %1199 : vector<16x128xf32>
    %c311 = arith.constant 311 : index
    %1201 = memref.load %arg1[%c311] : memref<490xf32, #tpu.memory_space<smem>>
    %1202 = vector.broadcast %1201 : f32 to vector<16x128xf32>
    %1203 = arith.mulf %1202, %1039 : vector<16x128xf32>
    %1204 = arith.addf %1200, %1203 : vector<16x128xf32>
    %c312 = arith.constant 312 : index
    %1205 = memref.load %arg1[%c312] : memref<490xf32, #tpu.memory_space<smem>>
    %1206 = vector.broadcast %1205 : f32 to vector<16x128xf32>
    %1207 = arith.mulf %1206, %1069 : vector<16x128xf32>
    %1208 = arith.addf %1204, %1207 : vector<16x128xf32>
    %c313 = arith.constant 313 : index
    %1209 = memref.load %arg1[%c313] : memref<490xf32, #tpu.memory_space<smem>>
    %1210 = vector.broadcast %1209 : f32 to vector<16x128xf32>
    %1211 = arith.mulf %1210, %1099 : vector<16x128xf32>
    %1212 = arith.addf %1208, %1211 : vector<16x128xf32>
    %c314 = arith.constant 314 : index
    %1213 = memref.load %arg1[%c314] : memref<490xf32, #tpu.memory_space<smem>>
    %1214 = vector.broadcast %1213 : f32 to vector<16x128xf32>
    %1215 = arith.mulf %1214, %1129 : vector<16x128xf32>
    %1216 = arith.addf %1212, %1215 : vector<16x128xf32>
    %cst_48 = arith.constant 0.00999999977 : f32
    %1217 = vector.broadcast %cst_48 : f32 to vector<16x128xf32>
    %1218 = arith.mulf %1217, %1216 : vector<16x128xf32>
    %1219 = arith.maximumf %1216, %1218 : vector<16x128xf32>
    %c315 = arith.constant 315 : index
    %1220 = memref.load %arg1[%c315] : memref<490xf32, #tpu.memory_space<smem>>
    %1221 = vector.broadcast %1220 : f32 to vector<16x128xf32>
    %1222 = arith.mulf %1221, %949 : vector<16x128xf32>
    %c316 = arith.constant 316 : index
    %1223 = memref.load %arg1[%c316] : memref<490xf32, #tpu.memory_space<smem>>
    %1224 = vector.broadcast %1223 : f32 to vector<16x128xf32>
    %1225 = arith.mulf %1224, %979 : vector<16x128xf32>
    %1226 = arith.addf %1222, %1225 : vector<16x128xf32>
    %c317 = arith.constant 317 : index
    %1227 = memref.load %arg1[%c317] : memref<490xf32, #tpu.memory_space<smem>>
    %1228 = vector.broadcast %1227 : f32 to vector<16x128xf32>
    %1229 = arith.mulf %1228, %1009 : vector<16x128xf32>
    %1230 = arith.addf %1226, %1229 : vector<16x128xf32>
    %c318 = arith.constant 318 : index
    %1231 = memref.load %arg1[%c318] : memref<490xf32, #tpu.memory_space<smem>>
    %1232 = vector.broadcast %1231 : f32 to vector<16x128xf32>
    %1233 = arith.mulf %1232, %1039 : vector<16x128xf32>
    %1234 = arith.addf %1230, %1233 : vector<16x128xf32>
    %c319 = arith.constant 319 : index
    %1235 = memref.load %arg1[%c319] : memref<490xf32, #tpu.memory_space<smem>>
    %1236 = vector.broadcast %1235 : f32 to vector<16x128xf32>
    %1237 = arith.mulf %1236, %1069 : vector<16x128xf32>
    %1238 = arith.addf %1234, %1237 : vector<16x128xf32>
    %c320 = arith.constant 320 : index
    %1239 = memref.load %arg1[%c320] : memref<490xf32, #tpu.memory_space<smem>>
    %1240 = vector.broadcast %1239 : f32 to vector<16x128xf32>
    %1241 = arith.mulf %1240, %1099 : vector<16x128xf32>
    %1242 = arith.addf %1238, %1241 : vector<16x128xf32>
    %c321 = arith.constant 321 : index
    %1243 = memref.load %arg1[%c321] : memref<490xf32, #tpu.memory_space<smem>>
    %1244 = vector.broadcast %1243 : f32 to vector<16x128xf32>
    %1245 = arith.mulf %1244, %1129 : vector<16x128xf32>
    %1246 = arith.addf %1242, %1245 : vector<16x128xf32>
    %cst_49 = arith.constant 0.00999999977 : f32
    %1247 = vector.broadcast %cst_49 : f32 to vector<16x128xf32>
    %1248 = arith.mulf %1247, %1246 : vector<16x128xf32>
    %1249 = arith.maximumf %1246, %1248 : vector<16x128xf32>
    %c322 = arith.constant 322 : index
    %1250 = memref.load %arg1[%c322] : memref<490xf32, #tpu.memory_space<smem>>
    %1251 = vector.broadcast %1250 : f32 to vector<16x128xf32>
    %1252 = arith.mulf %1251, %949 : vector<16x128xf32>
    %c323 = arith.constant 323 : index
    %1253 = memref.load %arg1[%c323] : memref<490xf32, #tpu.memory_space<smem>>
    %1254 = vector.broadcast %1253 : f32 to vector<16x128xf32>
    %1255 = arith.mulf %1254, %979 : vector<16x128xf32>
    %1256 = arith.addf %1252, %1255 : vector<16x128xf32>
    %c324 = arith.constant 324 : index
    %1257 = memref.load %arg1[%c324] : memref<490xf32, #tpu.memory_space<smem>>
    %1258 = vector.broadcast %1257 : f32 to vector<16x128xf32>
    %1259 = arith.mulf %1258, %1009 : vector<16x128xf32>
    %1260 = arith.addf %1256, %1259 : vector<16x128xf32>
    %c325 = arith.constant 325 : index
    %1261 = memref.load %arg1[%c325] : memref<490xf32, #tpu.memory_space<smem>>
    %1262 = vector.broadcast %1261 : f32 to vector<16x128xf32>
    %1263 = arith.mulf %1262, %1039 : vector<16x128xf32>
    %1264 = arith.addf %1260, %1263 : vector<16x128xf32>
    %c326 = arith.constant 326 : index
    %1265 = memref.load %arg1[%c326] : memref<490xf32, #tpu.memory_space<smem>>
    %1266 = vector.broadcast %1265 : f32 to vector<16x128xf32>
    %1267 = arith.mulf %1266, %1069 : vector<16x128xf32>
    %1268 = arith.addf %1264, %1267 : vector<16x128xf32>
    %c327 = arith.constant 327 : index
    %1269 = memref.load %arg1[%c327] : memref<490xf32, #tpu.memory_space<smem>>
    %1270 = vector.broadcast %1269 : f32 to vector<16x128xf32>
    %1271 = arith.mulf %1270, %1099 : vector<16x128xf32>
    %1272 = arith.addf %1268, %1271 : vector<16x128xf32>
    %c328 = arith.constant 328 : index
    %1273 = memref.load %arg1[%c328] : memref<490xf32, #tpu.memory_space<smem>>
    %1274 = vector.broadcast %1273 : f32 to vector<16x128xf32>
    %1275 = arith.mulf %1274, %1129 : vector<16x128xf32>
    %1276 = arith.addf %1272, %1275 : vector<16x128xf32>
    %cst_50 = arith.constant 0.00999999977 : f32
    %1277 = vector.broadcast %cst_50 : f32 to vector<16x128xf32>
    %1278 = arith.mulf %1277, %1276 : vector<16x128xf32>
    %1279 = arith.maximumf %1276, %1278 : vector<16x128xf32>
    %c329 = arith.constant 329 : index
    %1280 = memref.load %arg1[%c329] : memref<490xf32, #tpu.memory_space<smem>>
    %1281 = vector.broadcast %1280 : f32 to vector<16x128xf32>
    %1282 = arith.mulf %1281, %949 : vector<16x128xf32>
    %c330 = arith.constant 330 : index
    %1283 = memref.load %arg1[%c330] : memref<490xf32, #tpu.memory_space<smem>>
    %1284 = vector.broadcast %1283 : f32 to vector<16x128xf32>
    %1285 = arith.mulf %1284, %979 : vector<16x128xf32>
    %1286 = arith.addf %1282, %1285 : vector<16x128xf32>
    %c331 = arith.constant 331 : index
    %1287 = memref.load %arg1[%c331] : memref<490xf32, #tpu.memory_space<smem>>
    %1288 = vector.broadcast %1287 : f32 to vector<16x128xf32>
    %1289 = arith.mulf %1288, %1009 : vector<16x128xf32>
    %1290 = arith.addf %1286, %1289 : vector<16x128xf32>
    %c332 = arith.constant 332 : index
    %1291 = memref.load %arg1[%c332] : memref<490xf32, #tpu.memory_space<smem>>
    %1292 = vector.broadcast %1291 : f32 to vector<16x128xf32>
    %1293 = arith.mulf %1292, %1039 : vector<16x128xf32>
    %1294 = arith.addf %1290, %1293 : vector<16x128xf32>
    %c333 = arith.constant 333 : index
    %1295 = memref.load %arg1[%c333] : memref<490xf32, #tpu.memory_space<smem>>
    %1296 = vector.broadcast %1295 : f32 to vector<16x128xf32>
    %1297 = arith.mulf %1296, %1069 : vector<16x128xf32>
    %1298 = arith.addf %1294, %1297 : vector<16x128xf32>
    %c334 = arith.constant 334 : index
    %1299 = memref.load %arg1[%c334] : memref<490xf32, #tpu.memory_space<smem>>
    %1300 = vector.broadcast %1299 : f32 to vector<16x128xf32>
    %1301 = arith.mulf %1300, %1099 : vector<16x128xf32>
    %1302 = arith.addf %1298, %1301 : vector<16x128xf32>
    %c335 = arith.constant 335 : index
    %1303 = memref.load %arg1[%c335] : memref<490xf32, #tpu.memory_space<smem>>
    %1304 = vector.broadcast %1303 : f32 to vector<16x128xf32>
    %1305 = arith.mulf %1304, %1129 : vector<16x128xf32>
    %1306 = arith.addf %1302, %1305 : vector<16x128xf32>
    %cst_51 = arith.constant 0.00999999977 : f32
    %1307 = vector.broadcast %cst_51 : f32 to vector<16x128xf32>
    %1308 = arith.mulf %1307, %1306 : vector<16x128xf32>
    %1309 = arith.maximumf %1306, %1308 : vector<16x128xf32>
    %c336 = arith.constant 336 : index
    %1310 = memref.load %arg1[%c336] : memref<490xf32, #tpu.memory_space<smem>>
    %1311 = vector.broadcast %1310 : f32 to vector<16x128xf32>
    %1312 = arith.mulf %1311, %949 : vector<16x128xf32>
    %c337 = arith.constant 337 : index
    %1313 = memref.load %arg1[%c337] : memref<490xf32, #tpu.memory_space<smem>>
    %1314 = vector.broadcast %1313 : f32 to vector<16x128xf32>
    %1315 = arith.mulf %1314, %979 : vector<16x128xf32>
    %1316 = arith.addf %1312, %1315 : vector<16x128xf32>
    %c338 = arith.constant 338 : index
    %1317 = memref.load %arg1[%c338] : memref<490xf32, #tpu.memory_space<smem>>
    %1318 = vector.broadcast %1317 : f32 to vector<16x128xf32>
    %1319 = arith.mulf %1318, %1009 : vector<16x128xf32>
    %1320 = arith.addf %1316, %1319 : vector<16x128xf32>
    %c339 = arith.constant 339 : index
    %1321 = memref.load %arg1[%c339] : memref<490xf32, #tpu.memory_space<smem>>
    %1322 = vector.broadcast %1321 : f32 to vector<16x128xf32>
    %1323 = arith.mulf %1322, %1039 : vector<16x128xf32>
    %1324 = arith.addf %1320, %1323 : vector<16x128xf32>
    %c340 = arith.constant 340 : index
    %1325 = memref.load %arg1[%c340] : memref<490xf32, #tpu.memory_space<smem>>
    %1326 = vector.broadcast %1325 : f32 to vector<16x128xf32>
    %1327 = arith.mulf %1326, %1069 : vector<16x128xf32>
    %1328 = arith.addf %1324, %1327 : vector<16x128xf32>
    %c341 = arith.constant 341 : index
    %1329 = memref.load %arg1[%c341] : memref<490xf32, #tpu.memory_space<smem>>
    %1330 = vector.broadcast %1329 : f32 to vector<16x128xf32>
    %1331 = arith.mulf %1330, %1099 : vector<16x128xf32>
    %1332 = arith.addf %1328, %1331 : vector<16x128xf32>
    %c342 = arith.constant 342 : index
    %1333 = memref.load %arg1[%c342] : memref<490xf32, #tpu.memory_space<smem>>
    %1334 = vector.broadcast %1333 : f32 to vector<16x128xf32>
    %1335 = arith.mulf %1334, %1129 : vector<16x128xf32>
    %1336 = arith.addf %1332, %1335 : vector<16x128xf32>
    %cst_52 = arith.constant 0.00999999977 : f32
    %1337 = vector.broadcast %cst_52 : f32 to vector<16x128xf32>
    %1338 = arith.mulf %1337, %1336 : vector<16x128xf32>
    %1339 = arith.maximumf %1336, %1338 : vector<16x128xf32>
    %c343 = arith.constant 343 : index
    %1340 = memref.load %arg1[%c343] : memref<490xf32, #tpu.memory_space<smem>>
    %1341 = vector.broadcast %1340 : f32 to vector<16x128xf32>
    %1342 = arith.mulf %1341, %1159 : vector<16x128xf32>
    %c344 = arith.constant 344 : index
    %1343 = memref.load %arg1[%c344] : memref<490xf32, #tpu.memory_space<smem>>
    %1344 = vector.broadcast %1343 : f32 to vector<16x128xf32>
    %1345 = arith.mulf %1344, %1189 : vector<16x128xf32>
    %1346 = arith.addf %1342, %1345 : vector<16x128xf32>
    %c345 = arith.constant 345 : index
    %1347 = memref.load %arg1[%c345] : memref<490xf32, #tpu.memory_space<smem>>
    %1348 = vector.broadcast %1347 : f32 to vector<16x128xf32>
    %1349 = arith.mulf %1348, %1219 : vector<16x128xf32>
    %1350 = arith.addf %1346, %1349 : vector<16x128xf32>
    %c346 = arith.constant 346 : index
    %1351 = memref.load %arg1[%c346] : memref<490xf32, #tpu.memory_space<smem>>
    %1352 = vector.broadcast %1351 : f32 to vector<16x128xf32>
    %1353 = arith.mulf %1352, %1249 : vector<16x128xf32>
    %1354 = arith.addf %1350, %1353 : vector<16x128xf32>
    %c347 = arith.constant 347 : index
    %1355 = memref.load %arg1[%c347] : memref<490xf32, #tpu.memory_space<smem>>
    %1356 = vector.broadcast %1355 : f32 to vector<16x128xf32>
    %1357 = arith.mulf %1356, %1279 : vector<16x128xf32>
    %1358 = arith.addf %1354, %1357 : vector<16x128xf32>
    %c348 = arith.constant 348 : index
    %1359 = memref.load %arg1[%c348] : memref<490xf32, #tpu.memory_space<smem>>
    %1360 = vector.broadcast %1359 : f32 to vector<16x128xf32>
    %1361 = arith.mulf %1360, %1309 : vector<16x128xf32>
    %1362 = arith.addf %1358, %1361 : vector<16x128xf32>
    %c349 = arith.constant 349 : index
    %1363 = memref.load %arg1[%c349] : memref<490xf32, #tpu.memory_space<smem>>
    %1364 = vector.broadcast %1363 : f32 to vector<16x128xf32>
    %1365 = arith.mulf %1364, %1339 : vector<16x128xf32>
    %1366 = arith.addf %1362, %1365 : vector<16x128xf32>
    %cst_53 = arith.constant 0.00999999977 : f32
    %1367 = vector.broadcast %cst_53 : f32 to vector<16x128xf32>
    %1368 = arith.mulf %1367, %1366 : vector<16x128xf32>
    %1369 = arith.maximumf %1366, %1368 : vector<16x128xf32>
    %c350 = arith.constant 350 : index
    %1370 = memref.load %arg1[%c350] : memref<490xf32, #tpu.memory_space<smem>>
    %1371 = vector.broadcast %1370 : f32 to vector<16x128xf32>
    %1372 = arith.mulf %1371, %1159 : vector<16x128xf32>
    %c351 = arith.constant 351 : index
    %1373 = memref.load %arg1[%c351] : memref<490xf32, #tpu.memory_space<smem>>
    %1374 = vector.broadcast %1373 : f32 to vector<16x128xf32>
    %1375 = arith.mulf %1374, %1189 : vector<16x128xf32>
    %1376 = arith.addf %1372, %1375 : vector<16x128xf32>
    %c352 = arith.constant 352 : index
    %1377 = memref.load %arg1[%c352] : memref<490xf32, #tpu.memory_space<smem>>
    %1378 = vector.broadcast %1377 : f32 to vector<16x128xf32>
    %1379 = arith.mulf %1378, %1219 : vector<16x128xf32>
    %1380 = arith.addf %1376, %1379 : vector<16x128xf32>
    %c353 = arith.constant 353 : index
    %1381 = memref.load %arg1[%c353] : memref<490xf32, #tpu.memory_space<smem>>
    %1382 = vector.broadcast %1381 : f32 to vector<16x128xf32>
    %1383 = arith.mulf %1382, %1249 : vector<16x128xf32>
    %1384 = arith.addf %1380, %1383 : vector<16x128xf32>
    %c354 = arith.constant 354 : index
    %1385 = memref.load %arg1[%c354] : memref<490xf32, #tpu.memory_space<smem>>
    %1386 = vector.broadcast %1385 : f32 to vector<16x128xf32>
    %1387 = arith.mulf %1386, %1279 : vector<16x128xf32>
    %1388 = arith.addf %1384, %1387 : vector<16x128xf32>
    %c355 = arith.constant 355 : index
    %1389 = memref.load %arg1[%c355] : memref<490xf32, #tpu.memory_space<smem>>
    %1390 = vector.broadcast %1389 : f32 to vector<16x128xf32>
    %1391 = arith.mulf %1390, %1309 : vector<16x128xf32>
    %1392 = arith.addf %1388, %1391 : vector<16x128xf32>
    %c356 = arith.constant 356 : index
    %1393 = memref.load %arg1[%c356] : memref<490xf32, #tpu.memory_space<smem>>
    %1394 = vector.broadcast %1393 : f32 to vector<16x128xf32>
    %1395 = arith.mulf %1394, %1339 : vector<16x128xf32>
    %1396 = arith.addf %1392, %1395 : vector<16x128xf32>
    %cst_54 = arith.constant 0.00999999977 : f32
    %1397 = vector.broadcast %cst_54 : f32 to vector<16x128xf32>
    %1398 = arith.mulf %1397, %1396 : vector<16x128xf32>
    %1399 = arith.maximumf %1396, %1398 : vector<16x128xf32>
    %c357 = arith.constant 357 : index
    %1400 = memref.load %arg1[%c357] : memref<490xf32, #tpu.memory_space<smem>>
    %1401 = vector.broadcast %1400 : f32 to vector<16x128xf32>
    %1402 = arith.mulf %1401, %1159 : vector<16x128xf32>
    %c358 = arith.constant 358 : index
    %1403 = memref.load %arg1[%c358] : memref<490xf32, #tpu.memory_space<smem>>
    %1404 = vector.broadcast %1403 : f32 to vector<16x128xf32>
    %1405 = arith.mulf %1404, %1189 : vector<16x128xf32>
    %1406 = arith.addf %1402, %1405 : vector<16x128xf32>
    %c359 = arith.constant 359 : index
    %1407 = memref.load %arg1[%c359] : memref<490xf32, #tpu.memory_space<smem>>
    %1408 = vector.broadcast %1407 : f32 to vector<16x128xf32>
    %1409 = arith.mulf %1408, %1219 : vector<16x128xf32>
    %1410 = arith.addf %1406, %1409 : vector<16x128xf32>
    %c360 = arith.constant 360 : index
    %1411 = memref.load %arg1[%c360] : memref<490xf32, #tpu.memory_space<smem>>
    %1412 = vector.broadcast %1411 : f32 to vector<16x128xf32>
    %1413 = arith.mulf %1412, %1249 : vector<16x128xf32>
    %1414 = arith.addf %1410, %1413 : vector<16x128xf32>
    %c361 = arith.constant 361 : index
    %1415 = memref.load %arg1[%c361] : memref<490xf32, #tpu.memory_space<smem>>
    %1416 = vector.broadcast %1415 : f32 to vector<16x128xf32>
    %1417 = arith.mulf %1416, %1279 : vector<16x128xf32>
    %1418 = arith.addf %1414, %1417 : vector<16x128xf32>
    %c362 = arith.constant 362 : index
    %1419 = memref.load %arg1[%c362] : memref<490xf32, #tpu.memory_space<smem>>
    %1420 = vector.broadcast %1419 : f32 to vector<16x128xf32>
    %1421 = arith.mulf %1420, %1309 : vector<16x128xf32>
    %1422 = arith.addf %1418, %1421 : vector<16x128xf32>
    %c363 = arith.constant 363 : index
    %1423 = memref.load %arg1[%c363] : memref<490xf32, #tpu.memory_space<smem>>
    %1424 = vector.broadcast %1423 : f32 to vector<16x128xf32>
    %1425 = arith.mulf %1424, %1339 : vector<16x128xf32>
    %1426 = arith.addf %1422, %1425 : vector<16x128xf32>
    %cst_55 = arith.constant 0.00999999977 : f32
    %1427 = vector.broadcast %cst_55 : f32 to vector<16x128xf32>
    %1428 = arith.mulf %1427, %1426 : vector<16x128xf32>
    %1429 = arith.maximumf %1426, %1428 : vector<16x128xf32>
    %c364 = arith.constant 364 : index
    %1430 = memref.load %arg1[%c364] : memref<490xf32, #tpu.memory_space<smem>>
    %1431 = vector.broadcast %1430 : f32 to vector<16x128xf32>
    %1432 = arith.mulf %1431, %1159 : vector<16x128xf32>
    %c365 = arith.constant 365 : index
    %1433 = memref.load %arg1[%c365] : memref<490xf32, #tpu.memory_space<smem>>
    %1434 = vector.broadcast %1433 : f32 to vector<16x128xf32>
    %1435 = arith.mulf %1434, %1189 : vector<16x128xf32>
    %1436 = arith.addf %1432, %1435 : vector<16x128xf32>
    %c366 = arith.constant 366 : index
    %1437 = memref.load %arg1[%c366] : memref<490xf32, #tpu.memory_space<smem>>
    %1438 = vector.broadcast %1437 : f32 to vector<16x128xf32>
    %1439 = arith.mulf %1438, %1219 : vector<16x128xf32>
    %1440 = arith.addf %1436, %1439 : vector<16x128xf32>
    %c367 = arith.constant 367 : index
    %1441 = memref.load %arg1[%c367] : memref<490xf32, #tpu.memory_space<smem>>
    %1442 = vector.broadcast %1441 : f32 to vector<16x128xf32>
    %1443 = arith.mulf %1442, %1249 : vector<16x128xf32>
    %1444 = arith.addf %1440, %1443 : vector<16x128xf32>
    %c368 = arith.constant 368 : index
    %1445 = memref.load %arg1[%c368] : memref<490xf32, #tpu.memory_space<smem>>
    %1446 = vector.broadcast %1445 : f32 to vector<16x128xf32>
    %1447 = arith.mulf %1446, %1279 : vector<16x128xf32>
    %1448 = arith.addf %1444, %1447 : vector<16x128xf32>
    %c369 = arith.constant 369 : index
    %1449 = memref.load %arg1[%c369] : memref<490xf32, #tpu.memory_space<smem>>
    %1450 = vector.broadcast %1449 : f32 to vector<16x128xf32>
    %1451 = arith.mulf %1450, %1309 : vector<16x128xf32>
    %1452 = arith.addf %1448, %1451 : vector<16x128xf32>
    %c370 = arith.constant 370 : index
    %1453 = memref.load %arg1[%c370] : memref<490xf32, #tpu.memory_space<smem>>
    %1454 = vector.broadcast %1453 : f32 to vector<16x128xf32>
    %1455 = arith.mulf %1454, %1339 : vector<16x128xf32>
    %1456 = arith.addf %1452, %1455 : vector<16x128xf32>
    %cst_56 = arith.constant 0.00999999977 : f32
    %1457 = vector.broadcast %cst_56 : f32 to vector<16x128xf32>
    %1458 = arith.mulf %1457, %1456 : vector<16x128xf32>
    %1459 = arith.maximumf %1456, %1458 : vector<16x128xf32>
    %c371 = arith.constant 371 : index
    %1460 = memref.load %arg1[%c371] : memref<490xf32, #tpu.memory_space<smem>>
    %1461 = vector.broadcast %1460 : f32 to vector<16x128xf32>
    %1462 = arith.mulf %1461, %1159 : vector<16x128xf32>
    %c372 = arith.constant 372 : index
    %1463 = memref.load %arg1[%c372] : memref<490xf32, #tpu.memory_space<smem>>
    %1464 = vector.broadcast %1463 : f32 to vector<16x128xf32>
    %1465 = arith.mulf %1464, %1189 : vector<16x128xf32>
    %1466 = arith.addf %1462, %1465 : vector<16x128xf32>
    %c373 = arith.constant 373 : index
    %1467 = memref.load %arg1[%c373] : memref<490xf32, #tpu.memory_space<smem>>
    %1468 = vector.broadcast %1467 : f32 to vector<16x128xf32>
    %1469 = arith.mulf %1468, %1219 : vector<16x128xf32>
    %1470 = arith.addf %1466, %1469 : vector<16x128xf32>
    %c374 = arith.constant 374 : index
    %1471 = memref.load %arg1[%c374] : memref<490xf32, #tpu.memory_space<smem>>
    %1472 = vector.broadcast %1471 : f32 to vector<16x128xf32>
    %1473 = arith.mulf %1472, %1249 : vector<16x128xf32>
    %1474 = arith.addf %1470, %1473 : vector<16x128xf32>
    %c375 = arith.constant 375 : index
    %1475 = memref.load %arg1[%c375] : memref<490xf32, #tpu.memory_space<smem>>
    %1476 = vector.broadcast %1475 : f32 to vector<16x128xf32>
    %1477 = arith.mulf %1476, %1279 : vector<16x128xf32>
    %1478 = arith.addf %1474, %1477 : vector<16x128xf32>
    %c376 = arith.constant 376 : index
    %1479 = memref.load %arg1[%c376] : memref<490xf32, #tpu.memory_space<smem>>
    %1480 = vector.broadcast %1479 : f32 to vector<16x128xf32>
    %1481 = arith.mulf %1480, %1309 : vector<16x128xf32>
    %1482 = arith.addf %1478, %1481 : vector<16x128xf32>
    %c377 = arith.constant 377 : index
    %1483 = memref.load %arg1[%c377] : memref<490xf32, #tpu.memory_space<smem>>
    %1484 = vector.broadcast %1483 : f32 to vector<16x128xf32>
    %1485 = arith.mulf %1484, %1339 : vector<16x128xf32>
    %1486 = arith.addf %1482, %1485 : vector<16x128xf32>
    %cst_57 = arith.constant 0.00999999977 : f32
    %1487 = vector.broadcast %cst_57 : f32 to vector<16x128xf32>
    %1488 = arith.mulf %1487, %1486 : vector<16x128xf32>
    %1489 = arith.maximumf %1486, %1488 : vector<16x128xf32>
    %c378 = arith.constant 378 : index
    %1490 = memref.load %arg1[%c378] : memref<490xf32, #tpu.memory_space<smem>>
    %1491 = vector.broadcast %1490 : f32 to vector<16x128xf32>
    %1492 = arith.mulf %1491, %1159 : vector<16x128xf32>
    %c379 = arith.constant 379 : index
    %1493 = memref.load %arg1[%c379] : memref<490xf32, #tpu.memory_space<smem>>
    %1494 = vector.broadcast %1493 : f32 to vector<16x128xf32>
    %1495 = arith.mulf %1494, %1189 : vector<16x128xf32>
    %1496 = arith.addf %1492, %1495 : vector<16x128xf32>
    %c380 = arith.constant 380 : index
    %1497 = memref.load %arg1[%c380] : memref<490xf32, #tpu.memory_space<smem>>
    %1498 = vector.broadcast %1497 : f32 to vector<16x128xf32>
    %1499 = arith.mulf %1498, %1219 : vector<16x128xf32>
    %1500 = arith.addf %1496, %1499 : vector<16x128xf32>
    %c381 = arith.constant 381 : index
    %1501 = memref.load %arg1[%c381] : memref<490xf32, #tpu.memory_space<smem>>
    %1502 = vector.broadcast %1501 : f32 to vector<16x128xf32>
    %1503 = arith.mulf %1502, %1249 : vector<16x128xf32>
    %1504 = arith.addf %1500, %1503 : vector<16x128xf32>
    %c382 = arith.constant 382 : index
    %1505 = memref.load %arg1[%c382] : memref<490xf32, #tpu.memory_space<smem>>
    %1506 = vector.broadcast %1505 : f32 to vector<16x128xf32>
    %1507 = arith.mulf %1506, %1279 : vector<16x128xf32>
    %1508 = arith.addf %1504, %1507 : vector<16x128xf32>
    %c383 = arith.constant 383 : index
    %1509 = memref.load %arg1[%c383] : memref<490xf32, #tpu.memory_space<smem>>
    %1510 = vector.broadcast %1509 : f32 to vector<16x128xf32>
    %1511 = arith.mulf %1510, %1309 : vector<16x128xf32>
    %1512 = arith.addf %1508, %1511 : vector<16x128xf32>
    %c384 = arith.constant 384 : index
    %1513 = memref.load %arg1[%c384] : memref<490xf32, #tpu.memory_space<smem>>
    %1514 = vector.broadcast %1513 : f32 to vector<16x128xf32>
    %1515 = arith.mulf %1514, %1339 : vector<16x128xf32>
    %1516 = arith.addf %1512, %1515 : vector<16x128xf32>
    %cst_58 = arith.constant 0.00999999977 : f32
    %1517 = vector.broadcast %cst_58 : f32 to vector<16x128xf32>
    %1518 = arith.mulf %1517, %1516 : vector<16x128xf32>
    %1519 = arith.maximumf %1516, %1518 : vector<16x128xf32>
    %c385 = arith.constant 385 : index
    %1520 = memref.load %arg1[%c385] : memref<490xf32, #tpu.memory_space<smem>>
    %1521 = vector.broadcast %1520 : f32 to vector<16x128xf32>
    %1522 = arith.mulf %1521, %1159 : vector<16x128xf32>
    %c386 = arith.constant 386 : index
    %1523 = memref.load %arg1[%c386] : memref<490xf32, #tpu.memory_space<smem>>
    %1524 = vector.broadcast %1523 : f32 to vector<16x128xf32>
    %1525 = arith.mulf %1524, %1189 : vector<16x128xf32>
    %1526 = arith.addf %1522, %1525 : vector<16x128xf32>
    %c387 = arith.constant 387 : index
    %1527 = memref.load %arg1[%c387] : memref<490xf32, #tpu.memory_space<smem>>
    %1528 = vector.broadcast %1527 : f32 to vector<16x128xf32>
    %1529 = arith.mulf %1528, %1219 : vector<16x128xf32>
    %1530 = arith.addf %1526, %1529 : vector<16x128xf32>
    %c388 = arith.constant 388 : index
    %1531 = memref.load %arg1[%c388] : memref<490xf32, #tpu.memory_space<smem>>
    %1532 = vector.broadcast %1531 : f32 to vector<16x128xf32>
    %1533 = arith.mulf %1532, %1249 : vector<16x128xf32>
    %1534 = arith.addf %1530, %1533 : vector<16x128xf32>
    %c389 = arith.constant 389 : index
    %1535 = memref.load %arg1[%c389] : memref<490xf32, #tpu.memory_space<smem>>
    %1536 = vector.broadcast %1535 : f32 to vector<16x128xf32>
    %1537 = arith.mulf %1536, %1279 : vector<16x128xf32>
    %1538 = arith.addf %1534, %1537 : vector<16x128xf32>
    %c390 = arith.constant 390 : index
    %1539 = memref.load %arg1[%c390] : memref<490xf32, #tpu.memory_space<smem>>
    %1540 = vector.broadcast %1539 : f32 to vector<16x128xf32>
    %1541 = arith.mulf %1540, %1309 : vector<16x128xf32>
    %1542 = arith.addf %1538, %1541 : vector<16x128xf32>
    %c391 = arith.constant 391 : index
    %1543 = memref.load %arg1[%c391] : memref<490xf32, #tpu.memory_space<smem>>
    %1544 = vector.broadcast %1543 : f32 to vector<16x128xf32>
    %1545 = arith.mulf %1544, %1339 : vector<16x128xf32>
    %1546 = arith.addf %1542, %1545 : vector<16x128xf32>
    %cst_59 = arith.constant 0.00999999977 : f32
    %1547 = vector.broadcast %cst_59 : f32 to vector<16x128xf32>
    %1548 = arith.mulf %1547, %1546 : vector<16x128xf32>
    %1549 = arith.maximumf %1546, %1548 : vector<16x128xf32>
    %c392 = arith.constant 392 : index
    %1550 = memref.load %arg1[%c392] : memref<490xf32, #tpu.memory_space<smem>>
    %1551 = vector.broadcast %1550 : f32 to vector<16x128xf32>
    %1552 = arith.mulf %1551, %1369 : vector<16x128xf32>
    %c393 = arith.constant 393 : index
    %1553 = memref.load %arg1[%c393] : memref<490xf32, #tpu.memory_space<smem>>
    %1554 = vector.broadcast %1553 : f32 to vector<16x128xf32>
    %1555 = arith.mulf %1554, %1399 : vector<16x128xf32>
    %1556 = arith.addf %1552, %1555 : vector<16x128xf32>
    %c394 = arith.constant 394 : index
    %1557 = memref.load %arg1[%c394] : memref<490xf32, #tpu.memory_space<smem>>
    %1558 = vector.broadcast %1557 : f32 to vector<16x128xf32>
    %1559 = arith.mulf %1558, %1429 : vector<16x128xf32>
    %1560 = arith.addf %1556, %1559 : vector<16x128xf32>
    %c395 = arith.constant 395 : index
    %1561 = memref.load %arg1[%c395] : memref<490xf32, #tpu.memory_space<smem>>
    %1562 = vector.broadcast %1561 : f32 to vector<16x128xf32>
    %1563 = arith.mulf %1562, %1459 : vector<16x128xf32>
    %1564 = arith.addf %1560, %1563 : vector<16x128xf32>
    %c396 = arith.constant 396 : index
    %1565 = memref.load %arg1[%c396] : memref<490xf32, #tpu.memory_space<smem>>
    %1566 = vector.broadcast %1565 : f32 to vector<16x128xf32>
    %1567 = arith.mulf %1566, %1489 : vector<16x128xf32>
    %1568 = arith.addf %1564, %1567 : vector<16x128xf32>
    %c397 = arith.constant 397 : index
    %1569 = memref.load %arg1[%c397] : memref<490xf32, #tpu.memory_space<smem>>
    %1570 = vector.broadcast %1569 : f32 to vector<16x128xf32>
    %1571 = arith.mulf %1570, %1519 : vector<16x128xf32>
    %1572 = arith.addf %1568, %1571 : vector<16x128xf32>
    %c398 = arith.constant 398 : index
    %1573 = memref.load %arg1[%c398] : memref<490xf32, #tpu.memory_space<smem>>
    %1574 = vector.broadcast %1573 : f32 to vector<16x128xf32>
    %1575 = arith.mulf %1574, %1549 : vector<16x128xf32>
    %1576 = arith.addf %1572, %1575 : vector<16x128xf32>
    %cst_60 = arith.constant 0.00999999977 : f32
    %1577 = vector.broadcast %cst_60 : f32 to vector<16x128xf32>
    %1578 = arith.mulf %1577, %1576 : vector<16x128xf32>
    %1579 = arith.maximumf %1576, %1578 : vector<16x128xf32>
    %c399 = arith.constant 399 : index
    %1580 = memref.load %arg1[%c399] : memref<490xf32, #tpu.memory_space<smem>>
    %1581 = vector.broadcast %1580 : f32 to vector<16x128xf32>
    %1582 = arith.mulf %1581, %1369 : vector<16x128xf32>
    %c400 = arith.constant 400 : index
    %1583 = memref.load %arg1[%c400] : memref<490xf32, #tpu.memory_space<smem>>
    %1584 = vector.broadcast %1583 : f32 to vector<16x128xf32>
    %1585 = arith.mulf %1584, %1399 : vector<16x128xf32>
    %1586 = arith.addf %1582, %1585 : vector<16x128xf32>
    %c401 = arith.constant 401 : index
    %1587 = memref.load %arg1[%c401] : memref<490xf32, #tpu.memory_space<smem>>
    %1588 = vector.broadcast %1587 : f32 to vector<16x128xf32>
    %1589 = arith.mulf %1588, %1429 : vector<16x128xf32>
    %1590 = arith.addf %1586, %1589 : vector<16x128xf32>
    %c402 = arith.constant 402 : index
    %1591 = memref.load %arg1[%c402] : memref<490xf32, #tpu.memory_space<smem>>
    %1592 = vector.broadcast %1591 : f32 to vector<16x128xf32>
    %1593 = arith.mulf %1592, %1459 : vector<16x128xf32>
    %1594 = arith.addf %1590, %1593 : vector<16x128xf32>
    %c403 = arith.constant 403 : index
    %1595 = memref.load %arg1[%c403] : memref<490xf32, #tpu.memory_space<smem>>
    %1596 = vector.broadcast %1595 : f32 to vector<16x128xf32>
    %1597 = arith.mulf %1596, %1489 : vector<16x128xf32>
    %1598 = arith.addf %1594, %1597 : vector<16x128xf32>
    %c404 = arith.constant 404 : index
    %1599 = memref.load %arg1[%c404] : memref<490xf32, #tpu.memory_space<smem>>
    %1600 = vector.broadcast %1599 : f32 to vector<16x128xf32>
    %1601 = arith.mulf %1600, %1519 : vector<16x128xf32>
    %1602 = arith.addf %1598, %1601 : vector<16x128xf32>
    %c405 = arith.constant 405 : index
    %1603 = memref.load %arg1[%c405] : memref<490xf32, #tpu.memory_space<smem>>
    %1604 = vector.broadcast %1603 : f32 to vector<16x128xf32>
    %1605 = arith.mulf %1604, %1549 : vector<16x128xf32>
    %1606 = arith.addf %1602, %1605 : vector<16x128xf32>
    %cst_61 = arith.constant 0.00999999977 : f32
    %1607 = vector.broadcast %cst_61 : f32 to vector<16x128xf32>
    %1608 = arith.mulf %1607, %1606 : vector<16x128xf32>
    %1609 = arith.maximumf %1606, %1608 : vector<16x128xf32>
    %c406 = arith.constant 406 : index
    %1610 = memref.load %arg1[%c406] : memref<490xf32, #tpu.memory_space<smem>>
    %1611 = vector.broadcast %1610 : f32 to vector<16x128xf32>
    %1612 = arith.mulf %1611, %1369 : vector<16x128xf32>
    %c407 = arith.constant 407 : index
    %1613 = memref.load %arg1[%c407] : memref<490xf32, #tpu.memory_space<smem>>
    %1614 = vector.broadcast %1613 : f32 to vector<16x128xf32>
    %1615 = arith.mulf %1614, %1399 : vector<16x128xf32>
    %1616 = arith.addf %1612, %1615 : vector<16x128xf32>
    %c408 = arith.constant 408 : index
    %1617 = memref.load %arg1[%c408] : memref<490xf32, #tpu.memory_space<smem>>
    %1618 = vector.broadcast %1617 : f32 to vector<16x128xf32>
    %1619 = arith.mulf %1618, %1429 : vector<16x128xf32>
    %1620 = arith.addf %1616, %1619 : vector<16x128xf32>
    %c409 = arith.constant 409 : index
    %1621 = memref.load %arg1[%c409] : memref<490xf32, #tpu.memory_space<smem>>
    %1622 = vector.broadcast %1621 : f32 to vector<16x128xf32>
    %1623 = arith.mulf %1622, %1459 : vector<16x128xf32>
    %1624 = arith.addf %1620, %1623 : vector<16x128xf32>
    %c410 = arith.constant 410 : index
    %1625 = memref.load %arg1[%c410] : memref<490xf32, #tpu.memory_space<smem>>
    %1626 = vector.broadcast %1625 : f32 to vector<16x128xf32>
    %1627 = arith.mulf %1626, %1489 : vector<16x128xf32>
    %1628 = arith.addf %1624, %1627 : vector<16x128xf32>
    %c411 = arith.constant 411 : index
    %1629 = memref.load %arg1[%c411] : memref<490xf32, #tpu.memory_space<smem>>
    %1630 = vector.broadcast %1629 : f32 to vector<16x128xf32>
    %1631 = arith.mulf %1630, %1519 : vector<16x128xf32>
    %1632 = arith.addf %1628, %1631 : vector<16x128xf32>
    %c412 = arith.constant 412 : index
    %1633 = memref.load %arg1[%c412] : memref<490xf32, #tpu.memory_space<smem>>
    %1634 = vector.broadcast %1633 : f32 to vector<16x128xf32>
    %1635 = arith.mulf %1634, %1549 : vector<16x128xf32>
    %1636 = arith.addf %1632, %1635 : vector<16x128xf32>
    %cst_62 = arith.constant 0.00999999977 : f32
    %1637 = vector.broadcast %cst_62 : f32 to vector<16x128xf32>
    %1638 = arith.mulf %1637, %1636 : vector<16x128xf32>
    %1639 = arith.maximumf %1636, %1638 : vector<16x128xf32>
    %c413 = arith.constant 413 : index
    %1640 = memref.load %arg1[%c413] : memref<490xf32, #tpu.memory_space<smem>>
    %1641 = vector.broadcast %1640 : f32 to vector<16x128xf32>
    %1642 = arith.mulf %1641, %1369 : vector<16x128xf32>
    %c414 = arith.constant 414 : index
    %1643 = memref.load %arg1[%c414] : memref<490xf32, #tpu.memory_space<smem>>
    %1644 = vector.broadcast %1643 : f32 to vector<16x128xf32>
    %1645 = arith.mulf %1644, %1399 : vector<16x128xf32>
    %1646 = arith.addf %1642, %1645 : vector<16x128xf32>
    %c415 = arith.constant 415 : index
    %1647 = memref.load %arg1[%c415] : memref<490xf32, #tpu.memory_space<smem>>
    %1648 = vector.broadcast %1647 : f32 to vector<16x128xf32>
    %1649 = arith.mulf %1648, %1429 : vector<16x128xf32>
    %1650 = arith.addf %1646, %1649 : vector<16x128xf32>
    %c416 = arith.constant 416 : index
    %1651 = memref.load %arg1[%c416] : memref<490xf32, #tpu.memory_space<smem>>
    %1652 = vector.broadcast %1651 : f32 to vector<16x128xf32>
    %1653 = arith.mulf %1652, %1459 : vector<16x128xf32>
    %1654 = arith.addf %1650, %1653 : vector<16x128xf32>
    %c417 = arith.constant 417 : index
    %1655 = memref.load %arg1[%c417] : memref<490xf32, #tpu.memory_space<smem>>
    %1656 = vector.broadcast %1655 : f32 to vector<16x128xf32>
    %1657 = arith.mulf %1656, %1489 : vector<16x128xf32>
    %1658 = arith.addf %1654, %1657 : vector<16x128xf32>
    %c418 = arith.constant 418 : index
    %1659 = memref.load %arg1[%c418] : memref<490xf32, #tpu.memory_space<smem>>
    %1660 = vector.broadcast %1659 : f32 to vector<16x128xf32>
    %1661 = arith.mulf %1660, %1519 : vector<16x128xf32>
    %1662 = arith.addf %1658, %1661 : vector<16x128xf32>
    %c419 = arith.constant 419 : index
    %1663 = memref.load %arg1[%c419] : memref<490xf32, #tpu.memory_space<smem>>
    %1664 = vector.broadcast %1663 : f32 to vector<16x128xf32>
    %1665 = arith.mulf %1664, %1549 : vector<16x128xf32>
    %1666 = arith.addf %1662, %1665 : vector<16x128xf32>
    %cst_63 = arith.constant 0.00999999977 : f32
    %1667 = vector.broadcast %cst_63 : f32 to vector<16x128xf32>
    %1668 = arith.mulf %1667, %1666 : vector<16x128xf32>
    %1669 = arith.maximumf %1666, %1668 : vector<16x128xf32>
    %c420 = arith.constant 420 : index
    %1670 = memref.load %arg1[%c420] : memref<490xf32, #tpu.memory_space<smem>>
    %1671 = vector.broadcast %1670 : f32 to vector<16x128xf32>
    %1672 = arith.mulf %1671, %1369 : vector<16x128xf32>
    %c421 = arith.constant 421 : index
    %1673 = memref.load %arg1[%c421] : memref<490xf32, #tpu.memory_space<smem>>
    %1674 = vector.broadcast %1673 : f32 to vector<16x128xf32>
    %1675 = arith.mulf %1674, %1399 : vector<16x128xf32>
    %1676 = arith.addf %1672, %1675 : vector<16x128xf32>
    %c422 = arith.constant 422 : index
    %1677 = memref.load %arg1[%c422] : memref<490xf32, #tpu.memory_space<smem>>
    %1678 = vector.broadcast %1677 : f32 to vector<16x128xf32>
    %1679 = arith.mulf %1678, %1429 : vector<16x128xf32>
    %1680 = arith.addf %1676, %1679 : vector<16x128xf32>
    %c423 = arith.constant 423 : index
    %1681 = memref.load %arg1[%c423] : memref<490xf32, #tpu.memory_space<smem>>
    %1682 = vector.broadcast %1681 : f32 to vector<16x128xf32>
    %1683 = arith.mulf %1682, %1459 : vector<16x128xf32>
    %1684 = arith.addf %1680, %1683 : vector<16x128xf32>
    %c424 = arith.constant 424 : index
    %1685 = memref.load %arg1[%c424] : memref<490xf32, #tpu.memory_space<smem>>
    %1686 = vector.broadcast %1685 : f32 to vector<16x128xf32>
    %1687 = arith.mulf %1686, %1489 : vector<16x128xf32>
    %1688 = arith.addf %1684, %1687 : vector<16x128xf32>
    %c425 = arith.constant 425 : index
    %1689 = memref.load %arg1[%c425] : memref<490xf32, #tpu.memory_space<smem>>
    %1690 = vector.broadcast %1689 : f32 to vector<16x128xf32>
    %1691 = arith.mulf %1690, %1519 : vector<16x128xf32>
    %1692 = arith.addf %1688, %1691 : vector<16x128xf32>
    %c426 = arith.constant 426 : index
    %1693 = memref.load %arg1[%c426] : memref<490xf32, #tpu.memory_space<smem>>
    %1694 = vector.broadcast %1693 : f32 to vector<16x128xf32>
    %1695 = arith.mulf %1694, %1549 : vector<16x128xf32>
    %1696 = arith.addf %1692, %1695 : vector<16x128xf32>
    %cst_64 = arith.constant 0.00999999977 : f32
    %1697 = vector.broadcast %cst_64 : f32 to vector<16x128xf32>
    %1698 = arith.mulf %1697, %1696 : vector<16x128xf32>
    %1699 = arith.maximumf %1696, %1698 : vector<16x128xf32>
    %c427 = arith.constant 427 : index
    %1700 = memref.load %arg1[%c427] : memref<490xf32, #tpu.memory_space<smem>>
    %1701 = vector.broadcast %1700 : f32 to vector<16x128xf32>
    %1702 = arith.mulf %1701, %1369 : vector<16x128xf32>
    %c428 = arith.constant 428 : index
    %1703 = memref.load %arg1[%c428] : memref<490xf32, #tpu.memory_space<smem>>
    %1704 = vector.broadcast %1703 : f32 to vector<16x128xf32>
    %1705 = arith.mulf %1704, %1399 : vector<16x128xf32>
    %1706 = arith.addf %1702, %1705 : vector<16x128xf32>
    %c429 = arith.constant 429 : index
    %1707 = memref.load %arg1[%c429] : memref<490xf32, #tpu.memory_space<smem>>
    %1708 = vector.broadcast %1707 : f32 to vector<16x128xf32>
    %1709 = arith.mulf %1708, %1429 : vector<16x128xf32>
    %1710 = arith.addf %1706, %1709 : vector<16x128xf32>
    %c430 = arith.constant 430 : index
    %1711 = memref.load %arg1[%c430] : memref<490xf32, #tpu.memory_space<smem>>
    %1712 = vector.broadcast %1711 : f32 to vector<16x128xf32>
    %1713 = arith.mulf %1712, %1459 : vector<16x128xf32>
    %1714 = arith.addf %1710, %1713 : vector<16x128xf32>
    %c431 = arith.constant 431 : index
    %1715 = memref.load %arg1[%c431] : memref<490xf32, #tpu.memory_space<smem>>
    %1716 = vector.broadcast %1715 : f32 to vector<16x128xf32>
    %1717 = arith.mulf %1716, %1489 : vector<16x128xf32>
    %1718 = arith.addf %1714, %1717 : vector<16x128xf32>
    %c432 = arith.constant 432 : index
    %1719 = memref.load %arg1[%c432] : memref<490xf32, #tpu.memory_space<smem>>
    %1720 = vector.broadcast %1719 : f32 to vector<16x128xf32>
    %1721 = arith.mulf %1720, %1519 : vector<16x128xf32>
    %1722 = arith.addf %1718, %1721 : vector<16x128xf32>
    %c433 = arith.constant 433 : index
    %1723 = memref.load %arg1[%c433] : memref<490xf32, #tpu.memory_space<smem>>
    %1724 = vector.broadcast %1723 : f32 to vector<16x128xf32>
    %1725 = arith.mulf %1724, %1549 : vector<16x128xf32>
    %1726 = arith.addf %1722, %1725 : vector<16x128xf32>
    %cst_65 = arith.constant 0.00999999977 : f32
    %1727 = vector.broadcast %cst_65 : f32 to vector<16x128xf32>
    %1728 = arith.mulf %1727, %1726 : vector<16x128xf32>
    %1729 = arith.maximumf %1726, %1728 : vector<16x128xf32>
    %c434 = arith.constant 434 : index
    %1730 = memref.load %arg1[%c434] : memref<490xf32, #tpu.memory_space<smem>>
    %1731 = vector.broadcast %1730 : f32 to vector<16x128xf32>
    %1732 = arith.mulf %1731, %1369 : vector<16x128xf32>
    %c435 = arith.constant 435 : index
    %1733 = memref.load %arg1[%c435] : memref<490xf32, #tpu.memory_space<smem>>
    %1734 = vector.broadcast %1733 : f32 to vector<16x128xf32>
    %1735 = arith.mulf %1734, %1399 : vector<16x128xf32>
    %1736 = arith.addf %1732, %1735 : vector<16x128xf32>
    %c436 = arith.constant 436 : index
    %1737 = memref.load %arg1[%c436] : memref<490xf32, #tpu.memory_space<smem>>
    %1738 = vector.broadcast %1737 : f32 to vector<16x128xf32>
    %1739 = arith.mulf %1738, %1429 : vector<16x128xf32>
    %1740 = arith.addf %1736, %1739 : vector<16x128xf32>
    %c437 = arith.constant 437 : index
    %1741 = memref.load %arg1[%c437] : memref<490xf32, #tpu.memory_space<smem>>
    %1742 = vector.broadcast %1741 : f32 to vector<16x128xf32>
    %1743 = arith.mulf %1742, %1459 : vector<16x128xf32>
    %1744 = arith.addf %1740, %1743 : vector<16x128xf32>
    %c438 = arith.constant 438 : index
    %1745 = memref.load %arg1[%c438] : memref<490xf32, #tpu.memory_space<smem>>
    %1746 = vector.broadcast %1745 : f32 to vector<16x128xf32>
    %1747 = arith.mulf %1746, %1489 : vector<16x128xf32>
    %1748 = arith.addf %1744, %1747 : vector<16x128xf32>
    %c439 = arith.constant 439 : index
    %1749 = memref.load %arg1[%c439] : memref<490xf32, #tpu.memory_space<smem>>
    %1750 = vector.broadcast %1749 : f32 to vector<16x128xf32>
    %1751 = arith.mulf %1750, %1519 : vector<16x128xf32>
    %1752 = arith.addf %1748, %1751 : vector<16x128xf32>
    %c440 = arith.constant 440 : index
    %1753 = memref.load %arg1[%c440] : memref<490xf32, #tpu.memory_space<smem>>
    %1754 = vector.broadcast %1753 : f32 to vector<16x128xf32>
    %1755 = arith.mulf %1754, %1549 : vector<16x128xf32>
    %1756 = arith.addf %1752, %1755 : vector<16x128xf32>
    %cst_66 = arith.constant 0.00999999977 : f32
    %1757 = vector.broadcast %cst_66 : f32 to vector<16x128xf32>
    %1758 = arith.mulf %1757, %1756 : vector<16x128xf32>
    %1759 = arith.maximumf %1756, %1758 : vector<16x128xf32>
    %c441 = arith.constant 441 : index
    %1760 = memref.load %arg1[%c441] : memref<490xf32, #tpu.memory_space<smem>>
    %1761 = vector.broadcast %1760 : f32 to vector<16x128xf32>
    %1762 = arith.mulf %1761, %1579 : vector<16x128xf32>
    %c442 = arith.constant 442 : index
    %1763 = memref.load %arg1[%c442] : memref<490xf32, #tpu.memory_space<smem>>
    %1764 = vector.broadcast %1763 : f32 to vector<16x128xf32>
    %1765 = arith.mulf %1764, %1609 : vector<16x128xf32>
    %1766 = arith.addf %1762, %1765 : vector<16x128xf32>
    %c443 = arith.constant 443 : index
    %1767 = memref.load %arg1[%c443] : memref<490xf32, #tpu.memory_space<smem>>
    %1768 = vector.broadcast %1767 : f32 to vector<16x128xf32>
    %1769 = arith.mulf %1768, %1639 : vector<16x128xf32>
    %1770 = arith.addf %1766, %1769 : vector<16x128xf32>
    %c444 = arith.constant 444 : index
    %1771 = memref.load %arg1[%c444] : memref<490xf32, #tpu.memory_space<smem>>
    %1772 = vector.broadcast %1771 : f32 to vector<16x128xf32>
    %1773 = arith.mulf %1772, %1669 : vector<16x128xf32>
    %1774 = arith.addf %1770, %1773 : vector<16x128xf32>
    %c445 = arith.constant 445 : index
    %1775 = memref.load %arg1[%c445] : memref<490xf32, #tpu.memory_space<smem>>
    %1776 = vector.broadcast %1775 : f32 to vector<16x128xf32>
    %1777 = arith.mulf %1776, %1699 : vector<16x128xf32>
    %1778 = arith.addf %1774, %1777 : vector<16x128xf32>
    %c446 = arith.constant 446 : index
    %1779 = memref.load %arg1[%c446] : memref<490xf32, #tpu.memory_space<smem>>
    %1780 = vector.broadcast %1779 : f32 to vector<16x128xf32>
    %1781 = arith.mulf %1780, %1729 : vector<16x128xf32>
    %1782 = arith.addf %1778, %1781 : vector<16x128xf32>
    %c447 = arith.constant 447 : index
    %1783 = memref.load %arg1[%c447] : memref<490xf32, #tpu.memory_space<smem>>
    %1784 = vector.broadcast %1783 : f32 to vector<16x128xf32>
    %1785 = arith.mulf %1784, %1759 : vector<16x128xf32>
    %1786 = arith.addf %1782, %1785 : vector<16x128xf32>
    %cst_67 = arith.constant 0.00999999977 : f32
    %1787 = vector.broadcast %cst_67 : f32 to vector<16x128xf32>
    %1788 = arith.mulf %1787, %1786 : vector<16x128xf32>
    %1789 = arith.maximumf %1786, %1788 : vector<16x128xf32>
    %c0_68 = arith.constant 0 : index
    %1790 = arith.index_cast %3 : i32 to index
    %c0_69 = arith.constant 0 : index
    %1791 = vector.load %arg3[%c0_68, %1790, %c0_69] : memref<1x24x128xf32, #tpu.memory_space<vmem>>, vector<1x16x128xf32>
    %1792 = vector.shape_cast %1791 : vector<1x16x128xf32> to vector<16x128xf32>
    %1793 = vector.shape_cast %1789 : vector<16x128xf32> to vector<1x16x128xf32>
    tpu.vector_store %arg3[%c0_68, %1790, %c0_69], %1793 {strides = array<i32>} : memref<1x24x128xf32, #tpu.memory_space<vmem>>, vector<1x16x128xf32>,
    %c1_i32_70 = arith.constant 1 : i32
    %c0_71 = arith.constant 0 : index
    %c16 = arith.constant 16 : index
    %c0_72 = arith.constant 0 : index
    %1794 = vector.load %arg2[%c0_71, %c16, %c0_72] : memref<2x24x128xf32, #tpu.memory_space<vmem>>, vector<1x8x128xf32>
    %1795 = vector.shape_cast %1794 : vector<1x8x128xf32> to vector<8x128xf32>
    %c1_73 = arith.constant 1 : index
    %c16_74 = arith.constant 16 : index
    %c0_75 = arith.constant 0 : index
    %1796 = vector.load %arg2[%c1_73, %c16_74, %c0_75] : memref<2x24x128xf32, #tpu.memory_space<vmem>>, vector<1x8x128xf32>
    %1797 = vector.shape_cast %1796 : vector<1x8x128xf32> to vector<8x128xf32>
    %c0_76 = arith.constant 0 : index
    %1798 = memref.load %arg1[%c0_76] : memref<490xf32, #tpu.memory_space<smem>>
    %1799 = vector.broadcast %1798 : f32 to vector<8x128xf32>
    %1800 = arith.mulf %1799, %1795 : vector<8x128xf32>
    %c1_77 = arith.constant 1 : index
    %1801 = memref.load %arg1[%c1_77] : memref<490xf32, #tpu.memory_space<smem>>
    %1802 = vector.broadcast %1801 : f32 to vector<8x128xf32>
    %1803 = arith.mulf %1802, %1797 : vector<8x128xf32>
    %1804 = arith.addf %1800, %1803 : vector<8x128xf32>
    %cst_78 = arith.constant 0.00999999977 : f32
    %1805 = vector.broadcast %cst_78 : f32 to vector<8x128xf32>
    %1806 = arith.mulf %1805, %1804 : vector<8x128xf32>
    %1807 = arith.maximumf %1804, %1806 : vector<8x128xf32>
    %c7_79 = arith.constant 7 : index
    %1808 = memref.load %arg1[%c7_79] : memref<490xf32, #tpu.memory_space<smem>>
    %1809 = vector.broadcast %1808 : f32 to vector<8x128xf32>
    %1810 = arith.mulf %1809, %1795 : vector<8x128xf32>
    %c8_80 = arith.constant 8 : index
    %1811 = memref.load %arg1[%c8_80] : memref<490xf32, #tpu.memory_space<smem>>
    %1812 = vector.broadcast %1811 : f32 to vector<8x128xf32>
    %1813 = arith.mulf %1812, %1797 : vector<8x128xf32>
    %1814 = arith.addf %1810, %1813 : vector<8x128xf32>
    %cst_81 = arith.constant 0.00999999977 : f32
    %1815 = vector.broadcast %cst_81 : f32 to vector<8x128xf32>
    %1816 = arith.mulf %1815, %1814 : vector<8x128xf32>
    %1817 = arith.maximumf %1814, %1816 : vector<8x128xf32>
    %c14_82 = arith.constant 14 : index
    %1818 = memref.load %arg1[%c14_82] : memref<490xf32, #tpu.memory_space<smem>>
    %1819 = vector.broadcast %1818 : f32 to vector<8x128xf32>
    %1820 = arith.mulf %1819, %1795 : vector<8x128xf32>
    %c15_83 = arith.constant 15 : index
    %1821 = memref.load %arg1[%c15_83] : memref<490xf32, #tpu.memory_space<smem>>
    %1822 = vector.broadcast %1821 : f32 to vector<8x128xf32>
    %1823 = arith.mulf %1822, %1797 : vector<8x128xf32>
    %1824 = arith.addf %1820, %1823 : vector<8x128xf32>
    %cst_84 = arith.constant 0.00999999977 : f32
    %1825 = vector.broadcast %cst_84 : f32 to vector<8x128xf32>
    %1826 = arith.mulf %1825, %1824 : vector<8x128xf32>
    %1827 = arith.maximumf %1824, %1826 : vector<8x128xf32>
    %c21_85 = arith.constant 21 : index
    %1828 = memref.load %arg1[%c21_85] : memref<490xf32, #tpu.memory_space<smem>>
    %1829 = vector.broadcast %1828 : f32 to vector<8x128xf32>
    %1830 = arith.mulf %1829, %1795 : vector<8x128xf32>
    %c22_86 = arith.constant 22 : index
    %1831 = memref.load %arg1[%c22_86] : memref<490xf32, #tpu.memory_space<smem>>
    %1832 = vector.broadcast %1831 : f32 to vector<8x128xf32>
    %1833 = arith.mulf %1832, %1797 : vector<8x128xf32>
    %1834 = arith.addf %1830, %1833 : vector<8x128xf32>
    %cst_87 = arith.constant 0.00999999977 : f32
    %1835 = vector.broadcast %cst_87 : f32 to vector<8x128xf32>
    %1836 = arith.mulf %1835, %1834 : vector<8x128xf32>
    %1837 = arith.maximumf %1834, %1836 : vector<8x128xf32>
    %c28_88 = arith.constant 28 : index
    %1838 = memref.load %arg1[%c28_88] : memref<490xf32, #tpu.memory_space<smem>>
    %1839 = vector.broadcast %1838 : f32 to vector<8x128xf32>
    %1840 = arith.mulf %1839, %1795 : vector<8x128xf32>
    %c29_89 = arith.constant 29 : index
    %1841 = memref.load %arg1[%c29_89] : memref<490xf32, #tpu.memory_space<smem>>
    %1842 = vector.broadcast %1841 : f32 to vector<8x128xf32>
    %1843 = arith.mulf %1842, %1797 : vector<8x128xf32>
    %1844 = arith.addf %1840, %1843 : vector<8x128xf32>
    %cst_90 = arith.constant 0.00999999977 : f32
    %1845 = vector.broadcast %cst_90 : f32 to vector<8x128xf32>
    %1846 = arith.mulf %1845, %1844 : vector<8x128xf32>
    %1847 = arith.maximumf %1844, %1846 : vector<8x128xf32>
    %c35_91 = arith.constant 35 : index
    %1848 = memref.load %arg1[%c35_91] : memref<490xf32, #tpu.memory_space<smem>>
    %1849 = vector.broadcast %1848 : f32 to vector<8x128xf32>
    %1850 = arith.mulf %1849, %1795 : vector<8x128xf32>
    %c36_92 = arith.constant 36 : index
    %1851 = memref.load %arg1[%c36_92] : memref<490xf32, #tpu.memory_space<smem>>
    %1852 = vector.broadcast %1851 : f32 to vector<8x128xf32>
    %1853 = arith.mulf %1852, %1797 : vector<8x128xf32>
    %1854 = arith.addf %1850, %1853 : vector<8x128xf32>
    %cst_93 = arith.constant 0.00999999977 : f32
    %1855 = vector.broadcast %cst_93 : f32 to vector<8x128xf32>
    %1856 = arith.mulf %1855, %1854 : vector<8x128xf32>
    %1857 = arith.maximumf %1854, %1856 : vector<8x128xf32>
    %c42_94 = arith.constant 42 : index
    %1858 = memref.load %arg1[%c42_94] : memref<490xf32, #tpu.memory_space<smem>>
    %1859 = vector.broadcast %1858 : f32 to vector<8x128xf32>
    %1860 = arith.mulf %1859, %1795 : vector<8x128xf32>
    %c43_95 = arith.constant 43 : index
    %1861 = memref.load %arg1[%c43_95] : memref<490xf32, #tpu.memory_space<smem>>
    %1862 = vector.broadcast %1861 : f32 to vector<8x128xf32>
    %1863 = arith.mulf %1862, %1797 : vector<8x128xf32>
    %1864 = arith.addf %1860, %1863 : vector<8x128xf32>
    %cst_96 = arith.constant 0.00999999977 : f32
    %1865 = vector.broadcast %cst_96 : f32 to vector<8x128xf32>
    %1866 = arith.mulf %1865, %1864 : vector<8x128xf32>
    %1867 = arith.maximumf %1864, %1866 : vector<8x128xf32>
    %c49_97 = arith.constant 49 : index
    %1868 = memref.load %arg1[%c49_97] : memref<490xf32, #tpu.memory_space<smem>>
    %1869 = vector.broadcast %1868 : f32 to vector<8x128xf32>
    %1870 = arith.mulf %1869, %1807 : vector<8x128xf32>
    %c50_98 = arith.constant 50 : index
    %1871 = memref.load %arg1[%c50_98] : memref<490xf32, #tpu.memory_space<smem>>
    %1872 = vector.broadcast %1871 : f32 to vector<8x128xf32>
    %1873 = arith.mulf %1872, %1817 : vector<8x128xf32>
    %1874 = arith.addf %1870, %1873 : vector<8x128xf32>
    %c51_99 = arith.constant 51 : index
    %1875 = memref.load %arg1[%c51_99] : memref<490xf32, #tpu.memory_space<smem>>
    %1876 = vector.broadcast %1875 : f32 to vector<8x128xf32>
    %1877 = arith.mulf %1876, %1827 : vector<8x128xf32>
    %1878 = arith.addf %1874, %1877 : vector<8x128xf32>
    %c52_100 = arith.constant 52 : index
    %1879 = memref.load %arg1[%c52_100] : memref<490xf32, #tpu.memory_space<smem>>
    %1880 = vector.broadcast %1879 : f32 to vector<8x128xf32>
    %1881 = arith.mulf %1880, %1837 : vector<8x128xf32>
    %1882 = arith.addf %1878, %1881 : vector<8x128xf32>
    %c53_101 = arith.constant 53 : index
    %1883 = memref.load %arg1[%c53_101] : memref<490xf32, #tpu.memory_space<smem>>
    %1884 = vector.broadcast %1883 : f32 to vector<8x128xf32>
    %1885 = arith.mulf %1884, %1847 : vector<8x128xf32>
    %1886 = arith.addf %1882, %1885 : vector<8x128xf32>
    %c54_102 = arith.constant 54 : index
    %1887 = memref.load %arg1[%c54_102] : memref<490xf32, #tpu.memory_space<smem>>
    %1888 = vector.broadcast %1887 : f32 to vector<8x128xf32>
    %1889 = arith.mulf %1888, %1857 : vector<8x128xf32>
    %1890 = arith.addf %1886, %1889 : vector<8x128xf32>
    %c55_103 = arith.constant 55 : index
    %1891 = memref.load %arg1[%c55_103] : memref<490xf32, #tpu.memory_space<smem>>
    %1892 = vector.broadcast %1891 : f32 to vector<8x128xf32>
    %1893 = arith.mulf %1892, %1867 : vector<8x128xf32>
    %1894 = arith.addf %1890, %1893 : vector<8x128xf32>
    %cst_104 = arith.constant 0.00999999977 : f32
    %1895 = vector.broadcast %cst_104 : f32 to vector<8x128xf32>
    %1896 = arith.mulf %1895, %1894 : vector<8x128xf32>
    %1897 = arith.maximumf %1894, %1896 : vector<8x128xf32>
    %c56_105 = arith.constant 56 : index
    %1898 = memref.load %arg1[%c56_105] : memref<490xf32, #tpu.memory_space<smem>>
    %1899 = vector.broadcast %1898 : f32 to vector<8x128xf32>
    %1900 = arith.mulf %1899, %1807 : vector<8x128xf32>
    %c57_106 = arith.constant 57 : index
    %1901 = memref.load %arg1[%c57_106] : memref<490xf32, #tpu.memory_space<smem>>
    %1902 = vector.broadcast %1901 : f32 to vector<8x128xf32>
    %1903 = arith.mulf %1902, %1817 : vector<8x128xf32>
    %1904 = arith.addf %1900, %1903 : vector<8x128xf32>
    %c58_107 = arith.constant 58 : index
    %1905 = memref.load %arg1[%c58_107] : memref<490xf32, #tpu.memory_space<smem>>
    %1906 = vector.broadcast %1905 : f32 to vector<8x128xf32>
    %1907 = arith.mulf %1906, %1827 : vector<8x128xf32>
    %1908 = arith.addf %1904, %1907 : vector<8x128xf32>
    %c59_108 = arith.constant 59 : index
    %1909 = memref.load %arg1[%c59_108] : memref<490xf32, #tpu.memory_space<smem>>
    %1910 = vector.broadcast %1909 : f32 to vector<8x128xf32>
    %1911 = arith.mulf %1910, %1837 : vector<8x128xf32>
    %1912 = arith.addf %1908, %1911 : vector<8x128xf32>
    %c60_109 = arith.constant 60 : index
    %1913 = memref.load %arg1[%c60_109] : memref<490xf32, #tpu.memory_space<smem>>
    %1914 = vector.broadcast %1913 : f32 to vector<8x128xf32>
    %1915 = arith.mulf %1914, %1847 : vector<8x128xf32>
    %1916 = arith.addf %1912, %1915 : vector<8x128xf32>
    %c61_110 = arith.constant 61 : index
    %1917 = memref.load %arg1[%c61_110] : memref<490xf32, #tpu.memory_space<smem>>
    %1918 = vector.broadcast %1917 : f32 to vector<8x128xf32>
    %1919 = arith.mulf %1918, %1857 : vector<8x128xf32>
    %1920 = arith.addf %1916, %1919 : vector<8x128xf32>
    %c62_111 = arith.constant 62 : index
    %1921 = memref.load %arg1[%c62_111] : memref<490xf32, #tpu.memory_space<smem>>
    %1922 = vector.broadcast %1921 : f32 to vector<8x128xf32>
    %1923 = arith.mulf %1922, %1867 : vector<8x128xf32>
    %1924 = arith.addf %1920, %1923 : vector<8x128xf32>
    %cst_112 = arith.constant 0.00999999977 : f32
    %1925 = vector.broadcast %cst_112 : f32 to vector<8x128xf32>
    %1926 = arith.mulf %1925, %1924 : vector<8x128xf32>
    %1927 = arith.maximumf %1924, %1926 : vector<8x128xf32>
    %c63_113 = arith.constant 63 : index
    %1928 = memref.load %arg1[%c63_113] : memref<490xf32, #tpu.memory_space<smem>>
    %1929 = vector.broadcast %1928 : f32 to vector<8x128xf32>
    %1930 = arith.mulf %1929, %1807 : vector<8x128xf32>
    %c64_114 = arith.constant 64 : index
    %1931 = memref.load %arg1[%c64_114] : memref<490xf32, #tpu.memory_space<smem>>
    %1932 = vector.broadcast %1931 : f32 to vector<8x128xf32>
    %1933 = arith.mulf %1932, %1817 : vector<8x128xf32>
    %1934 = arith.addf %1930, %1933 : vector<8x128xf32>
    %c65_115 = arith.constant 65 : index
    %1935 = memref.load %arg1[%c65_115] : memref<490xf32, #tpu.memory_space<smem>>
    %1936 = vector.broadcast %1935 : f32 to vector<8x128xf32>
    %1937 = arith.mulf %1936, %1827 : vector<8x128xf32>
    %1938 = arith.addf %1934, %1937 : vector<8x128xf32>
    %c66_116 = arith.constant 66 : index
    %1939 = memref.load %arg1[%c66_116] : memref<490xf32, #tpu.memory_space<smem>>
    %1940 = vector.broadcast %1939 : f32 to vector<8x128xf32>
    %1941 = arith.mulf %1940, %1837 : vector<8x128xf32>
    %1942 = arith.addf %1938, %1941 : vector<8x128xf32>
    %c67_117 = arith.constant 67 : index
    %1943 = memref.load %arg1[%c67_117] : memref<490xf32, #tpu.memory_space<smem>>
    %1944 = vector.broadcast %1943 : f32 to vector<8x128xf32>
    %1945 = arith.mulf %1944, %1847 : vector<8x128xf32>
    %1946 = arith.addf %1942, %1945 : vector<8x128xf32>
    %c68_118 = arith.constant 68 : index
    %1947 = memref.load %arg1[%c68_118] : memref<490xf32, #tpu.memory_space<smem>>
    %1948 = vector.broadcast %1947 : f32 to vector<8x128xf32>
    %1949 = arith.mulf %1948, %1857 : vector<8x128xf32>
    %1950 = arith.addf %1946, %1949 : vector<8x128xf32>
    %c69_119 = arith.constant 69 : index
    %1951 = memref.load %arg1[%c69_119] : memref<490xf32, #tpu.memory_space<smem>>
    %1952 = vector.broadcast %1951 : f32 to vector<8x128xf32>
    %1953 = arith.mulf %1952, %1867 : vector<8x128xf32>
    %1954 = arith.addf %1950, %1953 : vector<8x128xf32>
    %cst_120 = arith.constant 0.00999999977 : f32
    %1955 = vector.broadcast %cst_120 : f32 to vector<8x128xf32>
    %1956 = arith.mulf %1955, %1954 : vector<8x128xf32>
    %1957 = arith.maximumf %1954, %1956 : vector<8x128xf32>
    %c70_121 = arith.constant 70 : index
    %1958 = memref.load %arg1[%c70_121] : memref<490xf32, #tpu.memory_space<smem>>
    %1959 = vector.broadcast %1958 : f32 to vector<8x128xf32>
    %1960 = arith.mulf %1959, %1807 : vector<8x128xf32>
    %c71_122 = arith.constant 71 : index
    %1961 = memref.load %arg1[%c71_122] : memref<490xf32, #tpu.memory_space<smem>>
    %1962 = vector.broadcast %1961 : f32 to vector<8x128xf32>
    %1963 = arith.mulf %1962, %1817 : vector<8x128xf32>
    %1964 = arith.addf %1960, %1963 : vector<8x128xf32>
    %c72_123 = arith.constant 72 : index
    %1965 = memref.load %arg1[%c72_123] : memref<490xf32, #tpu.memory_space<smem>>
    %1966 = vector.broadcast %1965 : f32 to vector<8x128xf32>
    %1967 = arith.mulf %1966, %1827 : vector<8x128xf32>
    %1968 = arith.addf %1964, %1967 : vector<8x128xf32>
    %c73_124 = arith.constant 73 : index
    %1969 = memref.load %arg1[%c73_124] : memref<490xf32, #tpu.memory_space<smem>>
    %1970 = vector.broadcast %1969 : f32 to vector<8x128xf32>
    %1971 = arith.mulf %1970, %1837 : vector<8x128xf32>
    %1972 = arith.addf %1968, %1971 : vector<8x128xf32>
    %c74_125 = arith.constant 74 : index
    %1973 = memref.load %arg1[%c74_125] : memref<490xf32, #tpu.memory_space<smem>>
    %1974 = vector.broadcast %1973 : f32 to vector<8x128xf32>
    %1975 = arith.mulf %1974, %1847 : vector<8x128xf32>
    %1976 = arith.addf %1972, %1975 : vector<8x128xf32>
    %c75_126 = arith.constant 75 : index
    %1977 = memref.load %arg1[%c75_126] : memref<490xf32, #tpu.memory_space<smem>>
    %1978 = vector.broadcast %1977 : f32 to vector<8x128xf32>
    %1979 = arith.mulf %1978, %1857 : vector<8x128xf32>
    %1980 = arith.addf %1976, %1979 : vector<8x128xf32>
    %c76_127 = arith.constant 76 : index
    %1981 = memref.load %arg1[%c76_127] : memref<490xf32, #tpu.memory_space<smem>>
    %1982 = vector.broadcast %1981 : f32 to vector<8x128xf32>
    %1983 = arith.mulf %1982, %1867 : vector<8x128xf32>
    %1984 = arith.addf %1980, %1983 : vector<8x128xf32>
    %cst_128 = arith.constant 0.00999999977 : f32
    %1985 = vector.broadcast %cst_128 : f32 to vector<8x128xf32>
    %1986 = arith.mulf %1985, %1984 : vector<8x128xf32>
    %1987 = arith.maximumf %1984, %1986 : vector<8x128xf32>
    %c77_129 = arith.constant 77 : index
    %1988 = memref.load %arg1[%c77_129] : memref<490xf32, #tpu.memory_space<smem>>
    %1989 = vector.broadcast %1988 : f32 to vector<8x128xf32>
    %1990 = arith.mulf %1989, %1807 : vector<8x128xf32>
    %c78_130 = arith.constant 78 : index
    %1991 = memref.load %arg1[%c78_130] : memref<490xf32, #tpu.memory_space<smem>>
    %1992 = vector.broadcast %1991 : f32 to vector<8x128xf32>
    %1993 = arith.mulf %1992, %1817 : vector<8x128xf32>
    %1994 = arith.addf %1990, %1993 : vector<8x128xf32>
    %c79_131 = arith.constant 79 : index
    %1995 = memref.load %arg1[%c79_131] : memref<490xf32, #tpu.memory_space<smem>>
    %1996 = vector.broadcast %1995 : f32 to vector<8x128xf32>
    %1997 = arith.mulf %1996, %1827 : vector<8x128xf32>
    %1998 = arith.addf %1994, %1997 : vector<8x128xf32>
    %c80_132 = arith.constant 80 : index
    %1999 = memref.load %arg1[%c80_132] : memref<490xf32, #tpu.memory_space<smem>>
    %2000 = vector.broadcast %1999 : f32 to vector<8x128xf32>
    %2001 = arith.mulf %2000, %1837 : vector<8x128xf32>
    %2002 = arith.addf %1998, %2001 : vector<8x128xf32>
    %c81_133 = arith.constant 81 : index
    %2003 = memref.load %arg1[%c81_133] : memref<490xf32, #tpu.memory_space<smem>>
    %2004 = vector.broadcast %2003 : f32 to vector<8x128xf32>
    %2005 = arith.mulf %2004, %1847 : vector<8x128xf32>
    %2006 = arith.addf %2002, %2005 : vector<8x128xf32>
    %c82_134 = arith.constant 82 : index
    %2007 = memref.load %arg1[%c82_134] : memref<490xf32, #tpu.memory_space<smem>>
    %2008 = vector.broadcast %2007 : f32 to vector<8x128xf32>
    %2009 = arith.mulf %2008, %1857 : vector<8x128xf32>
    %2010 = arith.addf %2006, %2009 : vector<8x128xf32>
    %c83_135 = arith.constant 83 : index
    %2011 = memref.load %arg1[%c83_135] : memref<490xf32, #tpu.memory_space<smem>>
    %2012 = vector.broadcast %2011 : f32 to vector<8x128xf32>
    %2013 = arith.mulf %2012, %1867 : vector<8x128xf32>
    %2014 = arith.addf %2010, %2013 : vector<8x128xf32>
    %cst_136 = arith.constant 0.00999999977 : f32
    %2015 = vector.broadcast %cst_136 : f32 to vector<8x128xf32>
    %2016 = arith.mulf %2015, %2014 : vector<8x128xf32>
    %2017 = arith.maximumf %2014, %2016 : vector<8x128xf32>
    %c84_137 = arith.constant 84 : index
    %2018 = memref.load %arg1[%c84_137] : memref<490xf32, #tpu.memory_space<smem>>
    %2019 = vector.broadcast %2018 : f32 to vector<8x128xf32>
    %2020 = arith.mulf %2019, %1807 : vector<8x128xf32>
    %c85_138 = arith.constant 85 : index
    %2021 = memref.load %arg1[%c85_138] : memref<490xf32, #tpu.memory_space<smem>>
    %2022 = vector.broadcast %2021 : f32 to vector<8x128xf32>
    %2023 = arith.mulf %2022, %1817 : vector<8x128xf32>
    %2024 = arith.addf %2020, %2023 : vector<8x128xf32>
    %c86_139 = arith.constant 86 : index
    %2025 = memref.load %arg1[%c86_139] : memref<490xf32, #tpu.memory_space<smem>>
    %2026 = vector.broadcast %2025 : f32 to vector<8x128xf32>
    %2027 = arith.mulf %2026, %1827 : vector<8x128xf32>
    %2028 = arith.addf %2024, %2027 : vector<8x128xf32>
    %c87_140 = arith.constant 87 : index
    %2029 = memref.load %arg1[%c87_140] : memref<490xf32, #tpu.memory_space<smem>>
    %2030 = vector.broadcast %2029 : f32 to vector<8x128xf32>
    %2031 = arith.mulf %2030, %1837 : vector<8x128xf32>
    %2032 = arith.addf %2028, %2031 : vector<8x128xf32>
    %c88_141 = arith.constant 88 : index
    %2033 = memref.load %arg1[%c88_141] : memref<490xf32, #tpu.memory_space<smem>>
    %2034 = vector.broadcast %2033 : f32 to vector<8x128xf32>
    %2035 = arith.mulf %2034, %1847 : vector<8x128xf32>
    %2036 = arith.addf %2032, %2035 : vector<8x128xf32>
    %c89_142 = arith.constant 89 : index
    %2037 = memref.load %arg1[%c89_142] : memref<490xf32, #tpu.memory_space<smem>>
    %2038 = vector.broadcast %2037 : f32 to vector<8x128xf32>
    %2039 = arith.mulf %2038, %1857 : vector<8x128xf32>
    %2040 = arith.addf %2036, %2039 : vector<8x128xf32>
    %c90_143 = arith.constant 90 : index
    %2041 = memref.load %arg1[%c90_143] : memref<490xf32, #tpu.memory_space<smem>>
    %2042 = vector.broadcast %2041 : f32 to vector<8x128xf32>
    %2043 = arith.mulf %2042, %1867 : vector<8x128xf32>
    %2044 = arith.addf %2040, %2043 : vector<8x128xf32>
    %cst_144 = arith.constant 0.00999999977 : f32
    %2045 = vector.broadcast %cst_144 : f32 to vector<8x128xf32>
    %2046 = arith.mulf %2045, %2044 : vector<8x128xf32>
    %2047 = arith.maximumf %2044, %2046 : vector<8x128xf32>
    %c91_145 = arith.constant 91 : index
    %2048 = memref.load %arg1[%c91_145] : memref<490xf32, #tpu.memory_space<smem>>
    %2049 = vector.broadcast %2048 : f32 to vector<8x128xf32>
    %2050 = arith.mulf %2049, %1807 : vector<8x128xf32>
    %c92_146 = arith.constant 92 : index
    %2051 = memref.load %arg1[%c92_146] : memref<490xf32, #tpu.memory_space<smem>>
    %2052 = vector.broadcast %2051 : f32 to vector<8x128xf32>
    %2053 = arith.mulf %2052, %1817 : vector<8x128xf32>
    %2054 = arith.addf %2050, %2053 : vector<8x128xf32>
    %c93_147 = arith.constant 93 : index
    %2055 = memref.load %arg1[%c93_147] : memref<490xf32, #tpu.memory_space<smem>>
    %2056 = vector.broadcast %2055 : f32 to vector<8x128xf32>
    %2057 = arith.mulf %2056, %1827 : vector<8x128xf32>
    %2058 = arith.addf %2054, %2057 : vector<8x128xf32>
    %c94_148 = arith.constant 94 : index
    %2059 = memref.load %arg1[%c94_148] : memref<490xf32, #tpu.memory_space<smem>>
    %2060 = vector.broadcast %2059 : f32 to vector<8x128xf32>
    %2061 = arith.mulf %2060, %1837 : vector<8x128xf32>
    %2062 = arith.addf %2058, %2061 : vector<8x128xf32>
    %c95_149 = arith.constant 95 : index
    %2063 = memref.load %arg1[%c95_149] : memref<490xf32, #tpu.memory_space<smem>>
    %2064 = vector.broadcast %2063 : f32 to vector<8x128xf32>
    %2065 = arith.mulf %2064, %1847 : vector<8x128xf32>
    %2066 = arith.addf %2062, %2065 : vector<8x128xf32>
    %c96_150 = arith.constant 96 : index
    %2067 = memref.load %arg1[%c96_150] : memref<490xf32, #tpu.memory_space<smem>>
    %2068 = vector.broadcast %2067 : f32 to vector<8x128xf32>
    %2069 = arith.mulf %2068, %1857 : vector<8x128xf32>
    %2070 = arith.addf %2066, %2069 : vector<8x128xf32>
    %c97_151 = arith.constant 97 : index
    %2071 = memref.load %arg1[%c97_151] : memref<490xf32, #tpu.memory_space<smem>>
    %2072 = vector.broadcast %2071 : f32 to vector<8x128xf32>
    %2073 = arith.mulf %2072, %1867 : vector<8x128xf32>
    %2074 = arith.addf %2070, %2073 : vector<8x128xf32>
    %cst_152 = arith.constant 0.00999999977 : f32
    %2075 = vector.broadcast %cst_152 : f32 to vector<8x128xf32>
    %2076 = arith.mulf %2075, %2074 : vector<8x128xf32>
    %2077 = arith.maximumf %2074, %2076 : vector<8x128xf32>
    %c98_153 = arith.constant 98 : index
    %2078 = memref.load %arg1[%c98_153] : memref<490xf32, #tpu.memory_space<smem>>
    %2079 = vector.broadcast %2078 : f32 to vector<8x128xf32>
    %2080 = arith.mulf %2079, %1897 : vector<8x128xf32>
    %c99_154 = arith.constant 99 : index
    %2081 = memref.load %arg1[%c99_154] : memref<490xf32, #tpu.memory_space<smem>>
    %2082 = vector.broadcast %2081 : f32 to vector<8x128xf32>
    %2083 = arith.mulf %2082, %1927 : vector<8x128xf32>
    %2084 = arith.addf %2080, %2083 : vector<8x128xf32>
    %c100_155 = arith.constant 100 : index
    %2085 = memref.load %arg1[%c100_155] : memref<490xf32, #tpu.memory_space<smem>>
    %2086 = vector.broadcast %2085 : f32 to vector<8x128xf32>
    %2087 = arith.mulf %2086, %1957 : vector<8x128xf32>
    %2088 = arith.addf %2084, %2087 : vector<8x128xf32>
    %c101_156 = arith.constant 101 : index
    %2089 = memref.load %arg1[%c101_156] : memref<490xf32, #tpu.memory_space<smem>>
    %2090 = vector.broadcast %2089 : f32 to vector<8x128xf32>
    %2091 = arith.mulf %2090, %1987 : vector<8x128xf32>
    %2092 = arith.addf %2088, %2091 : vector<8x128xf32>
    %c102_157 = arith.constant 102 : index
    %2093 = memref.load %arg1[%c102_157] : memref<490xf32, #tpu.memory_space<smem>>
    %2094 = vector.broadcast %2093 : f32 to vector<8x128xf32>
    %2095 = arith.mulf %2094, %2017 : vector<8x128xf32>
    %2096 = arith.addf %2092, %2095 : vector<8x128xf32>
    %c103_158 = arith.constant 103 : index
    %2097 = memref.load %arg1[%c103_158] : memref<490xf32, #tpu.memory_space<smem>>
    %2098 = vector.broadcast %2097 : f32 to vector<8x128xf32>
    %2099 = arith.mulf %2098, %2047 : vector<8x128xf32>
    %2100 = arith.addf %2096, %2099 : vector<8x128xf32>
    %c104_159 = arith.constant 104 : index
    %2101 = memref.load %arg1[%c104_159] : memref<490xf32, #tpu.memory_space<smem>>
    %2102 = vector.broadcast %2101 : f32 to vector<8x128xf32>
    %2103 = arith.mulf %2102, %2077 : vector<8x128xf32>
    %2104 = arith.addf %2100, %2103 : vector<8x128xf32>
    %cst_160 = arith.constant 0.00999999977 : f32
    %2105 = vector.broadcast %cst_160 : f32 to vector<8x128xf32>
    %2106 = arith.mulf %2105, %2104 : vector<8x128xf32>
    %2107 = arith.maximumf %2104, %2106 : vector<8x128xf32>
    %c105_161 = arith.constant 105 : index
    %2108 = memref.load %arg1[%c105_161] : memref<490xf32, #tpu.memory_space<smem>>
    %2109 = vector.broadcast %2108 : f32 to vector<8x128xf32>
    %2110 = arith.mulf %2109, %1897 : vector<8x128xf32>
    %c106_162 = arith.constant 106 : index
    %2111 = memref.load %arg1[%c106_162] : memref<490xf32, #tpu.memory_space<smem>>
    %2112 = vector.broadcast %2111 : f32 to vector<8x128xf32>
    %2113 = arith.mulf %2112, %1927 : vector<8x128xf32>
    %2114 = arith.addf %2110, %2113 : vector<8x128xf32>
    %c107_163 = arith.constant 107 : index
    %2115 = memref.load %arg1[%c107_163] : memref<490xf32, #tpu.memory_space<smem>>
    %2116 = vector.broadcast %2115 : f32 to vector<8x128xf32>
    %2117 = arith.mulf %2116, %1957 : vector<8x128xf32>
    %2118 = arith.addf %2114, %2117 : vector<8x128xf32>
    %c108_164 = arith.constant 108 : index
    %2119 = memref.load %arg1[%c108_164] : memref<490xf32, #tpu.memory_space<smem>>
    %2120 = vector.broadcast %2119 : f32 to vector<8x128xf32>
    %2121 = arith.mulf %2120, %1987 : vector<8x128xf32>
    %2122 = arith.addf %2118, %2121 : vector<8x128xf32>
    %c109_165 = arith.constant 109 : index
    %2123 = memref.load %arg1[%c109_165] : memref<490xf32, #tpu.memory_space<smem>>
    %2124 = vector.broadcast %2123 : f32 to vector<8x128xf32>
    %2125 = arith.mulf %2124, %2017 : vector<8x128xf32>
    %2126 = arith.addf %2122, %2125 : vector<8x128xf32>
    %c110_166 = arith.constant 110 : index
    %2127 = memref.load %arg1[%c110_166] : memref<490xf32, #tpu.memory_space<smem>>
    %2128 = vector.broadcast %2127 : f32 to vector<8x128xf32>
    %2129 = arith.mulf %2128, %2047 : vector<8x128xf32>
    %2130 = arith.addf %2126, %2129 : vector<8x128xf32>
    %c111_167 = arith.constant 111 : index
    %2131 = memref.load %arg1[%c111_167] : memref<490xf32, #tpu.memory_space<smem>>
    %2132 = vector.broadcast %2131 : f32 to vector<8x128xf32>
    %2133 = arith.mulf %2132, %2077 : vector<8x128xf32>
    %2134 = arith.addf %2130, %2133 : vector<8x128xf32>
    %cst_168 = arith.constant 0.00999999977 : f32
    %2135 = vector.broadcast %cst_168 : f32 to vector<8x128xf32>
    %2136 = arith.mulf %2135, %2134 : vector<8x128xf32>
    %2137 = arith.maximumf %2134, %2136 : vector<8x128xf32>
    %c112_169 = arith.constant 112 : index
    %2138 = memref.load %arg1[%c112_169] : memref<490xf32, #tpu.memory_space<smem>>
    %2139 = vector.broadcast %2138 : f32 to vector<8x128xf32>
    %2140 = arith.mulf %2139, %1897 : vector<8x128xf32>
    %c113_170 = arith.constant 113 : index
    %2141 = memref.load %arg1[%c113_170] : memref<490xf32, #tpu.memory_space<smem>>
    %2142 = vector.broadcast %2141 : f32 to vector<8x128xf32>
    %2143 = arith.mulf %2142, %1927 : vector<8x128xf32>
    %2144 = arith.addf %2140, %2143 : vector<8x128xf32>
    %c114_171 = arith.constant 114 : index
    %2145 = memref.load %arg1[%c114_171] : memref<490xf32, #tpu.memory_space<smem>>
    %2146 = vector.broadcast %2145 : f32 to vector<8x128xf32>
    %2147 = arith.mulf %2146, %1957 : vector<8x128xf32>
    %2148 = arith.addf %2144, %2147 : vector<8x128xf32>
    %c115_172 = arith.constant 115 : index
    %2149 = memref.load %arg1[%c115_172] : memref<490xf32, #tpu.memory_space<smem>>
    %2150 = vector.broadcast %2149 : f32 to vector<8x128xf32>
    %2151 = arith.mulf %2150, %1987 : vector<8x128xf32>
    %2152 = arith.addf %2148, %2151 : vector<8x128xf32>
    %c116_173 = arith.constant 116 : index
    %2153 = memref.load %arg1[%c116_173] : memref<490xf32, #tpu.memory_space<smem>>
    %2154 = vector.broadcast %2153 : f32 to vector<8x128xf32>
    %2155 = arith.mulf %2154, %2017 : vector<8x128xf32>
    %2156 = arith.addf %2152, %2155 : vector<8x128xf32>
    %c117_174 = arith.constant 117 : index
    %2157 = memref.load %arg1[%c117_174] : memref<490xf32, #tpu.memory_space<smem>>
    %2158 = vector.broadcast %2157 : f32 to vector<8x128xf32>
    %2159 = arith.mulf %2158, %2047 : vector<8x128xf32>
    %2160 = arith.addf %2156, %2159 : vector<8x128xf32>
    %c118_175 = arith.constant 118 : index
    %2161 = memref.load %arg1[%c118_175] : memref<490xf32, #tpu.memory_space<smem>>
    %2162 = vector.broadcast %2161 : f32 to vector<8x128xf32>
    %2163 = arith.mulf %2162, %2077 : vector<8x128xf32>
    %2164 = arith.addf %2160, %2163 : vector<8x128xf32>
    %cst_176 = arith.constant 0.00999999977 : f32
    %2165 = vector.broadcast %cst_176 : f32 to vector<8x128xf32>
    %2166 = arith.mulf %2165, %2164 : vector<8x128xf32>
    %2167 = arith.maximumf %2164, %2166 : vector<8x128xf32>
    %c119_177 = arith.constant 119 : index
    %2168 = memref.load %arg1[%c119_177] : memref<490xf32, #tpu.memory_space<smem>>
    %2169 = vector.broadcast %2168 : f32 to vector<8x128xf32>
    %2170 = arith.mulf %2169, %1897 : vector<8x128xf32>
    %c120_178 = arith.constant 120 : index
    %2171 = memref.load %arg1[%c120_178] : memref<490xf32, #tpu.memory_space<smem>>
    %2172 = vector.broadcast %2171 : f32 to vector<8x128xf32>
    %2173 = arith.mulf %2172, %1927 : vector<8x128xf32>
    %2174 = arith.addf %2170, %2173 : vector<8x128xf32>
    %c121_179 = arith.constant 121 : index
    %2175 = memref.load %arg1[%c121_179] : memref<490xf32, #tpu.memory_space<smem>>
    %2176 = vector.broadcast %2175 : f32 to vector<8x128xf32>
    %2177 = arith.mulf %2176, %1957 : vector<8x128xf32>
    %2178 = arith.addf %2174, %2177 : vector<8x128xf32>
    %c122_180 = arith.constant 122 : index
    %2179 = memref.load %arg1[%c122_180] : memref<490xf32, #tpu.memory_space<smem>>
    %2180 = vector.broadcast %2179 : f32 to vector<8x128xf32>
    %2181 = arith.mulf %2180, %1987 : vector<8x128xf32>
    %2182 = arith.addf %2178, %2181 : vector<8x128xf32>
    %c123_181 = arith.constant 123 : index
    %2183 = memref.load %arg1[%c123_181] : memref<490xf32, #tpu.memory_space<smem>>
    %2184 = vector.broadcast %2183 : f32 to vector<8x128xf32>
    %2185 = arith.mulf %2184, %2017 : vector<8x128xf32>
    %2186 = arith.addf %2182, %2185 : vector<8x128xf32>
    %c124_182 = arith.constant 124 : index
    %2187 = memref.load %arg1[%c124_182] : memref<490xf32, #tpu.memory_space<smem>>
    %2188 = vector.broadcast %2187 : f32 to vector<8x128xf32>
    %2189 = arith.mulf %2188, %2047 : vector<8x128xf32>
    %2190 = arith.addf %2186, %2189 : vector<8x128xf32>
    %c125_183 = arith.constant 125 : index
    %2191 = memref.load %arg1[%c125_183] : memref<490xf32, #tpu.memory_space<smem>>
    %2192 = vector.broadcast %2191 : f32 to vector<8x128xf32>
    %2193 = arith.mulf %2192, %2077 : vector<8x128xf32>
    %2194 = arith.addf %2190, %2193 : vector<8x128xf32>
    %cst_184 = arith.constant 0.00999999977 : f32
    %2195 = vector.broadcast %cst_184 : f32 to vector<8x128xf32>
    %2196 = arith.mulf %2195, %2194 : vector<8x128xf32>
    %2197 = arith.maximumf %2194, %2196 : vector<8x128xf32>
    %c126_185 = arith.constant 126 : index
    %2198 = memref.load %arg1[%c126_185] : memref<490xf32, #tpu.memory_space<smem>>
    %2199 = vector.broadcast %2198 : f32 to vector<8x128xf32>
    %2200 = arith.mulf %2199, %1897 : vector<8x128xf32>
    %c127_186 = arith.constant 127 : index
    %2201 = memref.load %arg1[%c127_186] : memref<490xf32, #tpu.memory_space<smem>>
    %2202 = vector.broadcast %2201 : f32 to vector<8x128xf32>
    %2203 = arith.mulf %2202, %1927 : vector<8x128xf32>
    %2204 = arith.addf %2200, %2203 : vector<8x128xf32>
    %c128_187 = arith.constant 128 : index
    %2205 = memref.load %arg1[%c128_187] : memref<490xf32, #tpu.memory_space<smem>>
    %2206 = vector.broadcast %2205 : f32 to vector<8x128xf32>
    %2207 = arith.mulf %2206, %1957 : vector<8x128xf32>
    %2208 = arith.addf %2204, %2207 : vector<8x128xf32>
    %c129_188 = arith.constant 129 : index
    %2209 = memref.load %arg1[%c129_188] : memref<490xf32, #tpu.memory_space<smem>>
    %2210 = vector.broadcast %2209 : f32 to vector<8x128xf32>
    %2211 = arith.mulf %2210, %1987 : vector<8x128xf32>
    %2212 = arith.addf %2208, %2211 : vector<8x128xf32>
    %c130_189 = arith.constant 130 : index
    %2213 = memref.load %arg1[%c130_189] : memref<490xf32, #tpu.memory_space<smem>>
    %2214 = vector.broadcast %2213 : f32 to vector<8x128xf32>
    %2215 = arith.mulf %2214, %2017 : vector<8x128xf32>
    %2216 = arith.addf %2212, %2215 : vector<8x128xf32>
    %c131_190 = arith.constant 131 : index
    %2217 = memref.load %arg1[%c131_190] : memref<490xf32, #tpu.memory_space<smem>>
    %2218 = vector.broadcast %2217 : f32 to vector<8x128xf32>
    %2219 = arith.mulf %2218, %2047 : vector<8x128xf32>
    %2220 = arith.addf %2216, %2219 : vector<8x128xf32>
    %c132_191 = arith.constant 132 : index
    %2221 = memref.load %arg1[%c132_191] : memref<490xf32, #tpu.memory_space<smem>>
    %2222 = vector.broadcast %2221 : f32 to vector<8x128xf32>
    %2223 = arith.mulf %2222, %2077 : vector<8x128xf32>
    %2224 = arith.addf %2220, %2223 : vector<8x128xf32>
    %cst_192 = arith.constant 0.00999999977 : f32
    %2225 = vector.broadcast %cst_192 : f32 to vector<8x128xf32>
    %2226 = arith.mulf %2225, %2224 : vector<8x128xf32>
    %2227 = arith.maximumf %2224, %2226 : vector<8x128xf32>
    %c133_193 = arith.constant 133 : index
    %2228 = memref.load %arg1[%c133_193] : memref<490xf32, #tpu.memory_space<smem>>
    %2229 = vector.broadcast %2228 : f32 to vector<8x128xf32>
    %2230 = arith.mulf %2229, %1897 : vector<8x128xf32>
    %c134_194 = arith.constant 134 : index
    %2231 = memref.load %arg1[%c134_194] : memref<490xf32, #tpu.memory_space<smem>>
    %2232 = vector.broadcast %2231 : f32 to vector<8x128xf32>
    %2233 = arith.mulf %2232, %1927 : vector<8x128xf32>
    %2234 = arith.addf %2230, %2233 : vector<8x128xf32>
    %c135_195 = arith.constant 135 : index
    %2235 = memref.load %arg1[%c135_195] : memref<490xf32, #tpu.memory_space<smem>>
    %2236 = vector.broadcast %2235 : f32 to vector<8x128xf32>
    %2237 = arith.mulf %2236, %1957 : vector<8x128xf32>
    %2238 = arith.addf %2234, %2237 : vector<8x128xf32>
    %c136_196 = arith.constant 136 : index
    %2239 = memref.load %arg1[%c136_196] : memref<490xf32, #tpu.memory_space<smem>>
    %2240 = vector.broadcast %2239 : f32 to vector<8x128xf32>
    %2241 = arith.mulf %2240, %1987 : vector<8x128xf32>
    %2242 = arith.addf %2238, %2241 : vector<8x128xf32>
    %c137_197 = arith.constant 137 : index
    %2243 = memref.load %arg1[%c137_197] : memref<490xf32, #tpu.memory_space<smem>>
    %2244 = vector.broadcast %2243 : f32 to vector<8x128xf32>
    %2245 = arith.mulf %2244, %2017 : vector<8x128xf32>
    %2246 = arith.addf %2242, %2245 : vector<8x128xf32>
    %c138_198 = arith.constant 138 : index
    %2247 = memref.load %arg1[%c138_198] : memref<490xf32, #tpu.memory_space<smem>>
    %2248 = vector.broadcast %2247 : f32 to vector<8x128xf32>
    %2249 = arith.mulf %2248, %2047 : vector<8x128xf32>
    %2250 = arith.addf %2246, %2249 : vector<8x128xf32>
    %c139_199 = arith.constant 139 : index
    %2251 = memref.load %arg1[%c139_199] : memref<490xf32, #tpu.memory_space<smem>>
    %2252 = vector.broadcast %2251 : f32 to vector<8x128xf32>
    %2253 = arith.mulf %2252, %2077 : vector<8x128xf32>
    %2254 = arith.addf %2250, %2253 : vector<8x128xf32>
    %cst_200 = arith.constant 0.00999999977 : f32
    %2255 = vector.broadcast %cst_200 : f32 to vector<8x128xf32>
    %2256 = arith.mulf %2255, %2254 : vector<8x128xf32>
    %2257 = arith.maximumf %2254, %2256 : vector<8x128xf32>
    %c140_201 = arith.constant 140 : index
    %2258 = memref.load %arg1[%c140_201] : memref<490xf32, #tpu.memory_space<smem>>
    %2259 = vector.broadcast %2258 : f32 to vector<8x128xf32>
    %2260 = arith.mulf %2259, %1897 : vector<8x128xf32>
    %c141_202 = arith.constant 141 : index
    %2261 = memref.load %arg1[%c141_202] : memref<490xf32, #tpu.memory_space<smem>>
    %2262 = vector.broadcast %2261 : f32 to vector<8x128xf32>
    %2263 = arith.mulf %2262, %1927 : vector<8x128xf32>
    %2264 = arith.addf %2260, %2263 : vector<8x128xf32>
    %c142_203 = arith.constant 142 : index
    %2265 = memref.load %arg1[%c142_203] : memref<490xf32, #tpu.memory_space<smem>>
    %2266 = vector.broadcast %2265 : f32 to vector<8x128xf32>
    %2267 = arith.mulf %2266, %1957 : vector<8x128xf32>
    %2268 = arith.addf %2264, %2267 : vector<8x128xf32>
    %c143_204 = arith.constant 143 : index
    %2269 = memref.load %arg1[%c143_204] : memref<490xf32, #tpu.memory_space<smem>>
    %2270 = vector.broadcast %2269 : f32 to vector<8x128xf32>
    %2271 = arith.mulf %2270, %1987 : vector<8x128xf32>
    %2272 = arith.addf %2268, %2271 : vector<8x128xf32>
    %c144_205 = arith.constant 144 : index
    %2273 = memref.load %arg1[%c144_205] : memref<490xf32, #tpu.memory_space<smem>>
    %2274 = vector.broadcast %2273 : f32 to vector<8x128xf32>
    %2275 = arith.mulf %2274, %2017 : vector<8x128xf32>
    %2276 = arith.addf %2272, %2275 : vector<8x128xf32>
    %c145_206 = arith.constant 145 : index
    %2277 = memref.load %arg1[%c145_206] : memref<490xf32, #tpu.memory_space<smem>>
    %2278 = vector.broadcast %2277 : f32 to vector<8x128xf32>
    %2279 = arith.mulf %2278, %2047 : vector<8x128xf32>
    %2280 = arith.addf %2276, %2279 : vector<8x128xf32>
    %c146_207 = arith.constant 146 : index
    %2281 = memref.load %arg1[%c146_207] : memref<490xf32, #tpu.memory_space<smem>>
    %2282 = vector.broadcast %2281 : f32 to vector<8x128xf32>
    %2283 = arith.mulf %2282, %2077 : vector<8x128xf32>
    %2284 = arith.addf %2280, %2283 : vector<8x128xf32>
    %cst_208 = arith.constant 0.00999999977 : f32
    %2285 = vector.broadcast %cst_208 : f32 to vector<8x128xf32>
    %2286 = arith.mulf %2285, %2284 : vector<8x128xf32>
    %2287 = arith.maximumf %2284, %2286 : vector<8x128xf32>
    %c147_209 = arith.constant 147 : index
    %2288 = memref.load %arg1[%c147_209] : memref<490xf32, #tpu.memory_space<smem>>
    %2289 = vector.broadcast %2288 : f32 to vector<8x128xf32>
    %2290 = arith.mulf %2289, %2107 : vector<8x128xf32>
    %c148_210 = arith.constant 148 : index
    %2291 = memref.load %arg1[%c148_210] : memref<490xf32, #tpu.memory_space<smem>>
    %2292 = vector.broadcast %2291 : f32 to vector<8x128xf32>
    %2293 = arith.mulf %2292, %2137 : vector<8x128xf32>
    %2294 = arith.addf %2290, %2293 : vector<8x128xf32>
    %c149_211 = arith.constant 149 : index
    %2295 = memref.load %arg1[%c149_211] : memref<490xf32, #tpu.memory_space<smem>>
    %2296 = vector.broadcast %2295 : f32 to vector<8x128xf32>
    %2297 = arith.mulf %2296, %2167 : vector<8x128xf32>
    %2298 = arith.addf %2294, %2297 : vector<8x128xf32>
    %c150_212 = arith.constant 150 : index
    %2299 = memref.load %arg1[%c150_212] : memref<490xf32, #tpu.memory_space<smem>>
    %2300 = vector.broadcast %2299 : f32 to vector<8x128xf32>
    %2301 = arith.mulf %2300, %2197 : vector<8x128xf32>
    %2302 = arith.addf %2298, %2301 : vector<8x128xf32>
    %c151_213 = arith.constant 151 : index
    %2303 = memref.load %arg1[%c151_213] : memref<490xf32, #tpu.memory_space<smem>>
    %2304 = vector.broadcast %2303 : f32 to vector<8x128xf32>
    %2305 = arith.mulf %2304, %2227 : vector<8x128xf32>
    %2306 = arith.addf %2302, %2305 : vector<8x128xf32>
    %c152_214 = arith.constant 152 : index
    %2307 = memref.load %arg1[%c152_214] : memref<490xf32, #tpu.memory_space<smem>>
    %2308 = vector.broadcast %2307 : f32 to vector<8x128xf32>
    %2309 = arith.mulf %2308, %2257 : vector<8x128xf32>
    %2310 = arith.addf %2306, %2309 : vector<8x128xf32>
    %c153_215 = arith.constant 153 : index
    %2311 = memref.load %arg1[%c153_215] : memref<490xf32, #tpu.memory_space<smem>>
    %2312 = vector.broadcast %2311 : f32 to vector<8x128xf32>
    %2313 = arith.mulf %2312, %2287 : vector<8x128xf32>
    %2314 = arith.addf %2310, %2313 : vector<8x128xf32>
    %cst_216 = arith.constant 0.00999999977 : f32
    %2315 = vector.broadcast %cst_216 : f32 to vector<8x128xf32>
    %2316 = arith.mulf %2315, %2314 : vector<8x128xf32>
    %2317 = arith.maximumf %2314, %2316 : vector<8x128xf32>
    %c154_217 = arith.constant 154 : index
    %2318 = memref.load %arg1[%c154_217] : memref<490xf32, #tpu.memory_space<smem>>
    %2319 = vector.broadcast %2318 : f32 to vector<8x128xf32>
    %2320 = arith.mulf %2319, %2107 : vector<8x128xf32>
    %c155_218 = arith.constant 155 : index
    %2321 = memref.load %arg1[%c155_218] : memref<490xf32, #tpu.memory_space<smem>>
    %2322 = vector.broadcast %2321 : f32 to vector<8x128xf32>
    %2323 = arith.mulf %2322, %2137 : vector<8x128xf32>
    %2324 = arith.addf %2320, %2323 : vector<8x128xf32>
    %c156_219 = arith.constant 156 : index
    %2325 = memref.load %arg1[%c156_219] : memref<490xf32, #tpu.memory_space<smem>>
    %2326 = vector.broadcast %2325 : f32 to vector<8x128xf32>
    %2327 = arith.mulf %2326, %2167 : vector<8x128xf32>
    %2328 = arith.addf %2324, %2327 : vector<8x128xf32>
    %c157_220 = arith.constant 157 : index
    %2329 = memref.load %arg1[%c157_220] : memref<490xf32, #tpu.memory_space<smem>>
    %2330 = vector.broadcast %2329 : f32 to vector<8x128xf32>
    %2331 = arith.mulf %2330, %2197 : vector<8x128xf32>
    %2332 = arith.addf %2328, %2331 : vector<8x128xf32>
    %c158_221 = arith.constant 158 : index
    %2333 = memref.load %arg1[%c158_221] : memref<490xf32, #tpu.memory_space<smem>>
    %2334 = vector.broadcast %2333 : f32 to vector<8x128xf32>
    %2335 = arith.mulf %2334, %2227 : vector<8x128xf32>
    %2336 = arith.addf %2332, %2335 : vector<8x128xf32>
    %c159_222 = arith.constant 159 : index
    %2337 = memref.load %arg1[%c159_222] : memref<490xf32, #tpu.memory_space<smem>>
    %2338 = vector.broadcast %2337 : f32 to vector<8x128xf32>
    %2339 = arith.mulf %2338, %2257 : vector<8x128xf32>
    %2340 = arith.addf %2336, %2339 : vector<8x128xf32>
    %c160_223 = arith.constant 160 : index
    %2341 = memref.load %arg1[%c160_223] : memref<490xf32, #tpu.memory_space<smem>>
    %2342 = vector.broadcast %2341 : f32 to vector<8x128xf32>
    %2343 = arith.mulf %2342, %2287 : vector<8x128xf32>
    %2344 = arith.addf %2340, %2343 : vector<8x128xf32>
    %cst_224 = arith.constant 0.00999999977 : f32
    %2345 = vector.broadcast %cst_224 : f32 to vector<8x128xf32>
    %2346 = arith.mulf %2345, %2344 : vector<8x128xf32>
    %2347 = arith.maximumf %2344, %2346 : vector<8x128xf32>
    %c161_225 = arith.constant 161 : index
    %2348 = memref.load %arg1[%c161_225] : memref<490xf32, #tpu.memory_space<smem>>
    %2349 = vector.broadcast %2348 : f32 to vector<8x128xf32>
    %2350 = arith.mulf %2349, %2107 : vector<8x128xf32>
    %c162_226 = arith.constant 162 : index
    %2351 = memref.load %arg1[%c162_226] : memref<490xf32, #tpu.memory_space<smem>>
    %2352 = vector.broadcast %2351 : f32 to vector<8x128xf32>
    %2353 = arith.mulf %2352, %2137 : vector<8x128xf32>
    %2354 = arith.addf %2350, %2353 : vector<8x128xf32>
    %c163_227 = arith.constant 163 : index
    %2355 = memref.load %arg1[%c163_227] : memref<490xf32, #tpu.memory_space<smem>>
    %2356 = vector.broadcast %2355 : f32 to vector<8x128xf32>
    %2357 = arith.mulf %2356, %2167 : vector<8x128xf32>
    %2358 = arith.addf %2354, %2357 : vector<8x128xf32>
    %c164_228 = arith.constant 164 : index
    %2359 = memref.load %arg1[%c164_228] : memref<490xf32, #tpu.memory_space<smem>>
    %2360 = vector.broadcast %2359 : f32 to vector<8x128xf32>
    %2361 = arith.mulf %2360, %2197 : vector<8x128xf32>
    %2362 = arith.addf %2358, %2361 : vector<8x128xf32>
    %c165_229 = arith.constant 165 : index
    %2363 = memref.load %arg1[%c165_229] : memref<490xf32, #tpu.memory_space<smem>>
    %2364 = vector.broadcast %2363 : f32 to vector<8x128xf32>
    %2365 = arith.mulf %2364, %2227 : vector<8x128xf32>
    %2366 = arith.addf %2362, %2365 : vector<8x128xf32>
    %c166_230 = arith.constant 166 : index
    %2367 = memref.load %arg1[%c166_230] : memref<490xf32, #tpu.memory_space<smem>>
    %2368 = vector.broadcast %2367 : f32 to vector<8x128xf32>
    %2369 = arith.mulf %2368, %2257 : vector<8x128xf32>
    %2370 = arith.addf %2366, %2369 : vector<8x128xf32>
    %c167_231 = arith.constant 167 : index
    %2371 = memref.load %arg1[%c167_231] : memref<490xf32, #tpu.memory_space<smem>>
    %2372 = vector.broadcast %2371 : f32 to vector<8x128xf32>
    %2373 = arith.mulf %2372, %2287 : vector<8x128xf32>
    %2374 = arith.addf %2370, %2373 : vector<8x128xf32>
    %cst_232 = arith.constant 0.00999999977 : f32
    %2375 = vector.broadcast %cst_232 : f32 to vector<8x128xf32>
    %2376 = arith.mulf %2375, %2374 : vector<8x128xf32>
    %2377 = arith.maximumf %2374, %2376 : vector<8x128xf32>
    %c168_233 = arith.constant 168 : index
    %2378 = memref.load %arg1[%c168_233] : memref<490xf32, #tpu.memory_space<smem>>
    %2379 = vector.broadcast %2378 : f32 to vector<8x128xf32>
    %2380 = arith.mulf %2379, %2107 : vector<8x128xf32>
    %c169_234 = arith.constant 169 : index
    %2381 = memref.load %arg1[%c169_234] : memref<490xf32, #tpu.memory_space<smem>>
    %2382 = vector.broadcast %2381 : f32 to vector<8x128xf32>
    %2383 = arith.mulf %2382, %2137 : vector<8x128xf32>
    %2384 = arith.addf %2380, %2383 : vector<8x128xf32>
    %c170_235 = arith.constant 170 : index
    %2385 = memref.load %arg1[%c170_235] : memref<490xf32, #tpu.memory_space<smem>>
    %2386 = vector.broadcast %2385 : f32 to vector<8x128xf32>
    %2387 = arith.mulf %2386, %2167 : vector<8x128xf32>
    %2388 = arith.addf %2384, %2387 : vector<8x128xf32>
    %c171_236 = arith.constant 171 : index
    %2389 = memref.load %arg1[%c171_236] : memref<490xf32, #tpu.memory_space<smem>>
    %2390 = vector.broadcast %2389 : f32 to vector<8x128xf32>
    %2391 = arith.mulf %2390, %2197 : vector<8x128xf32>
    %2392 = arith.addf %2388, %2391 : vector<8x128xf32>
    %c172_237 = arith.constant 172 : index
    %2393 = memref.load %arg1[%c172_237] : memref<490xf32, #tpu.memory_space<smem>>
    %2394 = vector.broadcast %2393 : f32 to vector<8x128xf32>
    %2395 = arith.mulf %2394, %2227 : vector<8x128xf32>
    %2396 = arith.addf %2392, %2395 : vector<8x128xf32>
    %c173_238 = arith.constant 173 : index
    %2397 = memref.load %arg1[%c173_238] : memref<490xf32, #tpu.memory_space<smem>>
    %2398 = vector.broadcast %2397 : f32 to vector<8x128xf32>
    %2399 = arith.mulf %2398, %2257 : vector<8x128xf32>
    %2400 = arith.addf %2396, %2399 : vector<8x128xf32>
    %c174_239 = arith.constant 174 : index
    %2401 = memref.load %arg1[%c174_239] : memref<490xf32, #tpu.memory_space<smem>>
    %2402 = vector.broadcast %2401 : f32 to vector<8x128xf32>
    %2403 = arith.mulf %2402, %2287 : vector<8x128xf32>
    %2404 = arith.addf %2400, %2403 : vector<8x128xf32>
    %cst_240 = arith.constant 0.00999999977 : f32
    %2405 = vector.broadcast %cst_240 : f32 to vector<8x128xf32>
    %2406 = arith.mulf %2405, %2404 : vector<8x128xf32>
    %2407 = arith.maximumf %2404, %2406 : vector<8x128xf32>
    %c175_241 = arith.constant 175 : index
    %2408 = memref.load %arg1[%c175_241] : memref<490xf32, #tpu.memory_space<smem>>
    %2409 = vector.broadcast %2408 : f32 to vector<8x128xf32>
    %2410 = arith.mulf %2409, %2107 : vector<8x128xf32>
    %c176_242 = arith.constant 176 : index
    %2411 = memref.load %arg1[%c176_242] : memref<490xf32, #tpu.memory_space<smem>>
    %2412 = vector.broadcast %2411 : f32 to vector<8x128xf32>
    %2413 = arith.mulf %2412, %2137 : vector<8x128xf32>
    %2414 = arith.addf %2410, %2413 : vector<8x128xf32>
    %c177_243 = arith.constant 177 : index
    %2415 = memref.load %arg1[%c177_243] : memref<490xf32, #tpu.memory_space<smem>>
    %2416 = vector.broadcast %2415 : f32 to vector<8x128xf32>
    %2417 = arith.mulf %2416, %2167 : vector<8x128xf32>
    %2418 = arith.addf %2414, %2417 : vector<8x128xf32>
    %c178_244 = arith.constant 178 : index
    %2419 = memref.load %arg1[%c178_244] : memref<490xf32, #tpu.memory_space<smem>>
    %2420 = vector.broadcast %2419 : f32 to vector<8x128xf32>
    %2421 = arith.mulf %2420, %2197 : vector<8x128xf32>
    %2422 = arith.addf %2418, %2421 : vector<8x128xf32>
    %c179_245 = arith.constant 179 : index
    %2423 = memref.load %arg1[%c179_245] : memref<490xf32, #tpu.memory_space<smem>>
    %2424 = vector.broadcast %2423 : f32 to vector<8x128xf32>
    %2425 = arith.mulf %2424, %2227 : vector<8x128xf32>
    %2426 = arith.addf %2422, %2425 : vector<8x128xf32>
    %c180_246 = arith.constant 180 : index
    %2427 = memref.load %arg1[%c180_246] : memref<490xf32, #tpu.memory_space<smem>>
    %2428 = vector.broadcast %2427 : f32 to vector<8x128xf32>
    %2429 = arith.mulf %2428, %2257 : vector<8x128xf32>
    %2430 = arith.addf %2426, %2429 : vector<8x128xf32>
    %c181_247 = arith.constant 181 : index
    %2431 = memref.load %arg1[%c181_247] : memref<490xf32, #tpu.memory_space<smem>>
    %2432 = vector.broadcast %2431 : f32 to vector<8x128xf32>
    %2433 = arith.mulf %2432, %2287 : vector<8x128xf32>
    %2434 = arith.addf %2430, %2433 : vector<8x128xf32>
    %cst_248 = arith.constant 0.00999999977 : f32
    %2435 = vector.broadcast %cst_248 : f32 to vector<8x128xf32>
    %2436 = arith.mulf %2435, %2434 : vector<8x128xf32>
    %2437 = arith.maximumf %2434, %2436 : vector<8x128xf32>
    %c182_249 = arith.constant 182 : index
    %2438 = memref.load %arg1[%c182_249] : memref<490xf32, #tpu.memory_space<smem>>
    %2439 = vector.broadcast %2438 : f32 to vector<8x128xf32>
    %2440 = arith.mulf %2439, %2107 : vector<8x128xf32>
    %c183_250 = arith.constant 183 : index
    %2441 = memref.load %arg1[%c183_250] : memref<490xf32, #tpu.memory_space<smem>>
    %2442 = vector.broadcast %2441 : f32 to vector<8x128xf32>
    %2443 = arith.mulf %2442, %2137 : vector<8x128xf32>
    %2444 = arith.addf %2440, %2443 : vector<8x128xf32>
    %c184_251 = arith.constant 184 : index
    %2445 = memref.load %arg1[%c184_251] : memref<490xf32, #tpu.memory_space<smem>>
    %2446 = vector.broadcast %2445 : f32 to vector<8x128xf32>
    %2447 = arith.mulf %2446, %2167 : vector<8x128xf32>
    %2448 = arith.addf %2444, %2447 : vector<8x128xf32>
    %c185_252 = arith.constant 185 : index
    %2449 = memref.load %arg1[%c185_252] : memref<490xf32, #tpu.memory_space<smem>>
    %2450 = vector.broadcast %2449 : f32 to vector<8x128xf32>
    %2451 = arith.mulf %2450, %2197 : vector<8x128xf32>
    %2452 = arith.addf %2448, %2451 : vector<8x128xf32>
    %c186_253 = arith.constant 186 : index
    %2453 = memref.load %arg1[%c186_253] : memref<490xf32, #tpu.memory_space<smem>>
    %2454 = vector.broadcast %2453 : f32 to vector<8x128xf32>
    %2455 = arith.mulf %2454, %2227 : vector<8x128xf32>
    %2456 = arith.addf %2452, %2455 : vector<8x128xf32>
    %c187_254 = arith.constant 187 : index
    %2457 = memref.load %arg1[%c187_254] : memref<490xf32, #tpu.memory_space<smem>>
    %2458 = vector.broadcast %2457 : f32 to vector<8x128xf32>
    %2459 = arith.mulf %2458, %2257 : vector<8x128xf32>
    %2460 = arith.addf %2456, %2459 : vector<8x128xf32>
    %c188_255 = arith.constant 188 : index
    %2461 = memref.load %arg1[%c188_255] : memref<490xf32, #tpu.memory_space<smem>>
    %2462 = vector.broadcast %2461 : f32 to vector<8x128xf32>
    %2463 = arith.mulf %2462, %2287 : vector<8x128xf32>
    %2464 = arith.addf %2460, %2463 : vector<8x128xf32>
    %cst_256 = arith.constant 0.00999999977 : f32
    %2465 = vector.broadcast %cst_256 : f32 to vector<8x128xf32>
    %2466 = arith.mulf %2465, %2464 : vector<8x128xf32>
    %2467 = arith.maximumf %2464, %2466 : vector<8x128xf32>
    %c189_257 = arith.constant 189 : index
    %2468 = memref.load %arg1[%c189_257] : memref<490xf32, #tpu.memory_space<smem>>
    %2469 = vector.broadcast %2468 : f32 to vector<8x128xf32>
    %2470 = arith.mulf %2469, %2107 : vector<8x128xf32>
    %c190_258 = arith.constant 190 : index
    %2471 = memref.load %arg1[%c190_258] : memref<490xf32, #tpu.memory_space<smem>>
    %2472 = vector.broadcast %2471 : f32 to vector<8x128xf32>
    %2473 = arith.mulf %2472, %2137 : vector<8x128xf32>
    %2474 = arith.addf %2470, %2473 : vector<8x128xf32>
    %c191_259 = arith.constant 191 : index
    %2475 = memref.load %arg1[%c191_259] : memref<490xf32, #tpu.memory_space<smem>>
    %2476 = vector.broadcast %2475 : f32 to vector<8x128xf32>
    %2477 = arith.mulf %2476, %2167 : vector<8x128xf32>
    %2478 = arith.addf %2474, %2477 : vector<8x128xf32>
    %c192_260 = arith.constant 192 : index
    %2479 = memref.load %arg1[%c192_260] : memref<490xf32, #tpu.memory_space<smem>>
    %2480 = vector.broadcast %2479 : f32 to vector<8x128xf32>
    %2481 = arith.mulf %2480, %2197 : vector<8x128xf32>
    %2482 = arith.addf %2478, %2481 : vector<8x128xf32>
    %c193_261 = arith.constant 193 : index
    %2483 = memref.load %arg1[%c193_261] : memref<490xf32, #tpu.memory_space<smem>>
    %2484 = vector.broadcast %2483 : f32 to vector<8x128xf32>
    %2485 = arith.mulf %2484, %2227 : vector<8x128xf32>
    %2486 = arith.addf %2482, %2485 : vector<8x128xf32>
    %c194_262 = arith.constant 194 : index
    %2487 = memref.load %arg1[%c194_262] : memref<490xf32, #tpu.memory_space<smem>>
    %2488 = vector.broadcast %2487 : f32 to vector<8x128xf32>
    %2489 = arith.mulf %2488, %2257 : vector<8x128xf32>
    %2490 = arith.addf %2486, %2489 : vector<8x128xf32>
    %c195_263 = arith.constant 195 : index
    %2491 = memref.load %arg1[%c195_263] : memref<490xf32, #tpu.memory_space<smem>>
    %2492 = vector.broadcast %2491 : f32 to vector<8x128xf32>
    %2493 = arith.mulf %2492, %2287 : vector<8x128xf32>
    %2494 = arith.addf %2490, %2493 : vector<8x128xf32>
    %cst_264 = arith.constant 0.00999999977 : f32
    %2495 = vector.broadcast %cst_264 : f32 to vector<8x128xf32>
    %2496 = arith.mulf %2495, %2494 : vector<8x128xf32>
    %2497 = arith.maximumf %2494, %2496 : vector<8x128xf32>
    %c196_265 = arith.constant 196 : index
    %2498 = memref.load %arg1[%c196_265] : memref<490xf32, #tpu.memory_space<smem>>
    %2499 = vector.broadcast %2498 : f32 to vector<8x128xf32>
    %2500 = arith.mulf %2499, %2317 : vector<8x128xf32>
    %c197_266 = arith.constant 197 : index
    %2501 = memref.load %arg1[%c197_266] : memref<490xf32, #tpu.memory_space<smem>>
    %2502 = vector.broadcast %2501 : f32 to vector<8x128xf32>
    %2503 = arith.mulf %2502, %2347 : vector<8x128xf32>
    %2504 = arith.addf %2500, %2503 : vector<8x128xf32>
    %c198_267 = arith.constant 198 : index
    %2505 = memref.load %arg1[%c198_267] : memref<490xf32, #tpu.memory_space<smem>>
    %2506 = vector.broadcast %2505 : f32 to vector<8x128xf32>
    %2507 = arith.mulf %2506, %2377 : vector<8x128xf32>
    %2508 = arith.addf %2504, %2507 : vector<8x128xf32>
    %c199_268 = arith.constant 199 : index
    %2509 = memref.load %arg1[%c199_268] : memref<490xf32, #tpu.memory_space<smem>>
    %2510 = vector.broadcast %2509 : f32 to vector<8x128xf32>
    %2511 = arith.mulf %2510, %2407 : vector<8x128xf32>
    %2512 = arith.addf %2508, %2511 : vector<8x128xf32>
    %c200_269 = arith.constant 200 : index
    %2513 = memref.load %arg1[%c200_269] : memref<490xf32, #tpu.memory_space<smem>>
    %2514 = vector.broadcast %2513 : f32 to vector<8x128xf32>
    %2515 = arith.mulf %2514, %2437 : vector<8x128xf32>
    %2516 = arith.addf %2512, %2515 : vector<8x128xf32>
    %c201_270 = arith.constant 201 : index
    %2517 = memref.load %arg1[%c201_270] : memref<490xf32, #tpu.memory_space<smem>>
    %2518 = vector.broadcast %2517 : f32 to vector<8x128xf32>
    %2519 = arith.mulf %2518, %2467 : vector<8x128xf32>
    %2520 = arith.addf %2516, %2519 : vector<8x128xf32>
    %c202_271 = arith.constant 202 : index
    %2521 = memref.load %arg1[%c202_271] : memref<490xf32, #tpu.memory_space<smem>>
    %2522 = vector.broadcast %2521 : f32 to vector<8x128xf32>
    %2523 = arith.mulf %2522, %2497 : vector<8x128xf32>
    %2524 = arith.addf %2520, %2523 : vector<8x128xf32>
    %cst_272 = arith.constant 0.00999999977 : f32
    %2525 = vector.broadcast %cst_272 : f32 to vector<8x128xf32>
    %2526 = arith.mulf %2525, %2524 : vector<8x128xf32>
    %2527 = arith.maximumf %2524, %2526 : vector<8x128xf32>
    %c203_273 = arith.constant 203 : index
    %2528 = memref.load %arg1[%c203_273] : memref<490xf32, #tpu.memory_space<smem>>
    %2529 = vector.broadcast %2528 : f32 to vector<8x128xf32>
    %2530 = arith.mulf %2529, %2317 : vector<8x128xf32>
    %c204_274 = arith.constant 204 : index
    %2531 = memref.load %arg1[%c204_274] : memref<490xf32, #tpu.memory_space<smem>>
    %2532 = vector.broadcast %2531 : f32 to vector<8x128xf32>
    %2533 = arith.mulf %2532, %2347 : vector<8x128xf32>
    %2534 = arith.addf %2530, %2533 : vector<8x128xf32>
    %c205_275 = arith.constant 205 : index
    %2535 = memref.load %arg1[%c205_275] : memref<490xf32, #tpu.memory_space<smem>>
    %2536 = vector.broadcast %2535 : f32 to vector<8x128xf32>
    %2537 = arith.mulf %2536, %2377 : vector<8x128xf32>
    %2538 = arith.addf %2534, %2537 : vector<8x128xf32>
    %c206_276 = arith.constant 206 : index
    %2539 = memref.load %arg1[%c206_276] : memref<490xf32, #tpu.memory_space<smem>>
    %2540 = vector.broadcast %2539 : f32 to vector<8x128xf32>
    %2541 = arith.mulf %2540, %2407 : vector<8x128xf32>
    %2542 = arith.addf %2538, %2541 : vector<8x128xf32>
    %c207_277 = arith.constant 207 : index
    %2543 = memref.load %arg1[%c207_277] : memref<490xf32, #tpu.memory_space<smem>>
    %2544 = vector.broadcast %2543 : f32 to vector<8x128xf32>
    %2545 = arith.mulf %2544, %2437 : vector<8x128xf32>
    %2546 = arith.addf %2542, %2545 : vector<8x128xf32>
    %c208_278 = arith.constant 208 : index
    %2547 = memref.load %arg1[%c208_278] : memref<490xf32, #tpu.memory_space<smem>>
    %2548 = vector.broadcast %2547 : f32 to vector<8x128xf32>
    %2549 = arith.mulf %2548, %2467 : vector<8x128xf32>
    %2550 = arith.addf %2546, %2549 : vector<8x128xf32>
    %c209_279 = arith.constant 209 : index
    %2551 = memref.load %arg1[%c209_279] : memref<490xf32, #tpu.memory_space<smem>>
    %2552 = vector.broadcast %2551 : f32 to vector<8x128xf32>
    %2553 = arith.mulf %2552, %2497 : vector<8x128xf32>
    %2554 = arith.addf %2550, %2553 : vector<8x128xf32>
    %cst_280 = arith.constant 0.00999999977 : f32
    %2555 = vector.broadcast %cst_280 : f32 to vector<8x128xf32>
    %2556 = arith.mulf %2555, %2554 : vector<8x128xf32>
    %2557 = arith.maximumf %2554, %2556 : vector<8x128xf32>
    %c210_281 = arith.constant 210 : index
    %2558 = memref.load %arg1[%c210_281] : memref<490xf32, #tpu.memory_space<smem>>
    %2559 = vector.broadcast %2558 : f32 to vector<8x128xf32>
    %2560 = arith.mulf %2559, %2317 : vector<8x128xf32>
    %c211_282 = arith.constant 211 : index
    %2561 = memref.load %arg1[%c211_282] : memref<490xf32, #tpu.memory_space<smem>>
    %2562 = vector.broadcast %2561 : f32 to vector<8x128xf32>
    %2563 = arith.mulf %2562, %2347 : vector<8x128xf32>
    %2564 = arith.addf %2560, %2563 : vector<8x128xf32>
    %c212_283 = arith.constant 212 : index
    %2565 = memref.load %arg1[%c212_283] : memref<490xf32, #tpu.memory_space<smem>>
    %2566 = vector.broadcast %2565 : f32 to vector<8x128xf32>
    %2567 = arith.mulf %2566, %2377 : vector<8x128xf32>
    %2568 = arith.addf %2564, %2567 : vector<8x128xf32>
    %c213_284 = arith.constant 213 : index
    %2569 = memref.load %arg1[%c213_284] : memref<490xf32, #tpu.memory_space<smem>>
    %2570 = vector.broadcast %2569 : f32 to vector<8x128xf32>
    %2571 = arith.mulf %2570, %2407 : vector<8x128xf32>
    %2572 = arith.addf %2568, %2571 : vector<8x128xf32>
    %c214_285 = arith.constant 214 : index
    %2573 = memref.load %arg1[%c214_285] : memref<490xf32, #tpu.memory_space<smem>>
    %2574 = vector.broadcast %2573 : f32 to vector<8x128xf32>
    %2575 = arith.mulf %2574, %2437 : vector<8x128xf32>
    %2576 = arith.addf %2572, %2575 : vector<8x128xf32>
    %c215_286 = arith.constant 215 : index
    %2577 = memref.load %arg1[%c215_286] : memref<490xf32, #tpu.memory_space<smem>>
    %2578 = vector.broadcast %2577 : f32 to vector<8x128xf32>
    %2579 = arith.mulf %2578, %2467 : vector<8x128xf32>
    %2580 = arith.addf %2576, %2579 : vector<8x128xf32>
    %c216_287 = arith.constant 216 : index
    %2581 = memref.load %arg1[%c216_287] : memref<490xf32, #tpu.memory_space<smem>>
    %2582 = vector.broadcast %2581 : f32 to vector<8x128xf32>
    %2583 = arith.mulf %2582, %2497 : vector<8x128xf32>
    %2584 = arith.addf %2580, %2583 : vector<8x128xf32>
    %cst_288 = arith.constant 0.00999999977 : f32
    %2585 = vector.broadcast %cst_288 : f32 to vector<8x128xf32>
    %2586 = arith.mulf %2585, %2584 : vector<8x128xf32>
    %2587 = arith.maximumf %2584, %2586 : vector<8x128xf32>
    %c217_289 = arith.constant 217 : index
    %2588 = memref.load %arg1[%c217_289] : memref<490xf32, #tpu.memory_space<smem>>
    %2589 = vector.broadcast %2588 : f32 to vector<8x128xf32>
    %2590 = arith.mulf %2589, %2317 : vector<8x128xf32>
    %c218_290 = arith.constant 218 : index
    %2591 = memref.load %arg1[%c218_290] : memref<490xf32, #tpu.memory_space<smem>>
    %2592 = vector.broadcast %2591 : f32 to vector<8x128xf32>
    %2593 = arith.mulf %2592, %2347 : vector<8x128xf32>
    %2594 = arith.addf %2590, %2593 : vector<8x128xf32>
    %c219_291 = arith.constant 219 : index
    %2595 = memref.load %arg1[%c219_291] : memref<490xf32, #tpu.memory_space<smem>>
    %2596 = vector.broadcast %2595 : f32 to vector<8x128xf32>
    %2597 = arith.mulf %2596, %2377 : vector<8x128xf32>
    %2598 = arith.addf %2594, %2597 : vector<8x128xf32>
    %c220_292 = arith.constant 220 : index
    %2599 = memref.load %arg1[%c220_292] : memref<490xf32, #tpu.memory_space<smem>>
    %2600 = vector.broadcast %2599 : f32 to vector<8x128xf32>
    %2601 = arith.mulf %2600, %2407 : vector<8x128xf32>
    %2602 = arith.addf %2598, %2601 : vector<8x128xf32>
    %c221_293 = arith.constant 221 : index
    %2603 = memref.load %arg1[%c221_293] : memref<490xf32, #tpu.memory_space<smem>>
    %2604 = vector.broadcast %2603 : f32 to vector<8x128xf32>
    %2605 = arith.mulf %2604, %2437 : vector<8x128xf32>
    %2606 = arith.addf %2602, %2605 : vector<8x128xf32>
    %c222_294 = arith.constant 222 : index
    %2607 = memref.load %arg1[%c222_294] : memref<490xf32, #tpu.memory_space<smem>>
    %2608 = vector.broadcast %2607 : f32 to vector<8x128xf32>
    %2609 = arith.mulf %2608, %2467 : vector<8x128xf32>
    %2610 = arith.addf %2606, %2609 : vector<8x128xf32>
    %c223_295 = arith.constant 223 : index
    %2611 = memref.load %arg1[%c223_295] : memref<490xf32, #tpu.memory_space<smem>>
    %2612 = vector.broadcast %2611 : f32 to vector<8x128xf32>
    %2613 = arith.mulf %2612, %2497 : vector<8x128xf32>
    %2614 = arith.addf %2610, %2613 : vector<8x128xf32>
    %cst_296 = arith.constant 0.00999999977 : f32
    %2615 = vector.broadcast %cst_296 : f32 to vector<8x128xf32>
    %2616 = arith.mulf %2615, %2614 : vector<8x128xf32>
    %2617 = arith.maximumf %2614, %2616 : vector<8x128xf32>
    %c224_297 = arith.constant 224 : index
    %2618 = memref.load %arg1[%c224_297] : memref<490xf32, #tpu.memory_space<smem>>
    %2619 = vector.broadcast %2618 : f32 to vector<8x128xf32>
    %2620 = arith.mulf %2619, %2317 : vector<8x128xf32>
    %c225_298 = arith.constant 225 : index
    %2621 = memref.load %arg1[%c225_298] : memref<490xf32, #tpu.memory_space<smem>>
    %2622 = vector.broadcast %2621 : f32 to vector<8x128xf32>
    %2623 = arith.mulf %2622, %2347 : vector<8x128xf32>
    %2624 = arith.addf %2620, %2623 : vector<8x128xf32>
    %c226_299 = arith.constant 226 : index
    %2625 = memref.load %arg1[%c226_299] : memref<490xf32, #tpu.memory_space<smem>>
    %2626 = vector.broadcast %2625 : f32 to vector<8x128xf32>
    %2627 = arith.mulf %2626, %2377 : vector<8x128xf32>
    %2628 = arith.addf %2624, %2627 : vector<8x128xf32>
    %c227_300 = arith.constant 227 : index
    %2629 = memref.load %arg1[%c227_300] : memref<490xf32, #tpu.memory_space<smem>>
    %2630 = vector.broadcast %2629 : f32 to vector<8x128xf32>
    %2631 = arith.mulf %2630, %2407 : vector<8x128xf32>
    %2632 = arith.addf %2628, %2631 : vector<8x128xf32>
    %c228_301 = arith.constant 228 : index
    %2633 = memref.load %arg1[%c228_301] : memref<490xf32, #tpu.memory_space<smem>>
    %2634 = vector.broadcast %2633 : f32 to vector<8x128xf32>
    %2635 = arith.mulf %2634, %2437 : vector<8x128xf32>
    %2636 = arith.addf %2632, %2635 : vector<8x128xf32>
    %c229_302 = arith.constant 229 : index
    %2637 = memref.load %arg1[%c229_302] : memref<490xf32, #tpu.memory_space<smem>>
    %2638 = vector.broadcast %2637 : f32 to vector<8x128xf32>
    %2639 = arith.mulf %2638, %2467 : vector<8x128xf32>
    %2640 = arith.addf %2636, %2639 : vector<8x128xf32>
    %c230_303 = arith.constant 230 : index
    %2641 = memref.load %arg1[%c230_303] : memref<490xf32, #tpu.memory_space<smem>>
    %2642 = vector.broadcast %2641 : f32 to vector<8x128xf32>
    %2643 = arith.mulf %2642, %2497 : vector<8x128xf32>
    %2644 = arith.addf %2640, %2643 : vector<8x128xf32>
    %cst_304 = arith.constant 0.00999999977 : f32
    %2645 = vector.broadcast %cst_304 : f32 to vector<8x128xf32>
    %2646 = arith.mulf %2645, %2644 : vector<8x128xf32>
    %2647 = arith.maximumf %2644, %2646 : vector<8x128xf32>
    %c231_305 = arith.constant 231 : index
    %2648 = memref.load %arg1[%c231_305] : memref<490xf32, #tpu.memory_space<smem>>
    %2649 = vector.broadcast %2648 : f32 to vector<8x128xf32>
    %2650 = arith.mulf %2649, %2317 : vector<8x128xf32>
    %c232_306 = arith.constant 232 : index
    %2651 = memref.load %arg1[%c232_306] : memref<490xf32, #tpu.memory_space<smem>>
    %2652 = vector.broadcast %2651 : f32 to vector<8x128xf32>
    %2653 = arith.mulf %2652, %2347 : vector<8x128xf32>
    %2654 = arith.addf %2650, %2653 : vector<8x128xf32>
    %c233_307 = arith.constant 233 : index
    %2655 = memref.load %arg1[%c233_307] : memref<490xf32, #tpu.memory_space<smem>>
    %2656 = vector.broadcast %2655 : f32 to vector<8x128xf32>
    %2657 = arith.mulf %2656, %2377 : vector<8x128xf32>
    %2658 = arith.addf %2654, %2657 : vector<8x128xf32>
    %c234_308 = arith.constant 234 : index
    %2659 = memref.load %arg1[%c234_308] : memref<490xf32, #tpu.memory_space<smem>>
    %2660 = vector.broadcast %2659 : f32 to vector<8x128xf32>
    %2661 = arith.mulf %2660, %2407 : vector<8x128xf32>
    %2662 = arith.addf %2658, %2661 : vector<8x128xf32>
    %c235_309 = arith.constant 235 : index
    %2663 = memref.load %arg1[%c235_309] : memref<490xf32, #tpu.memory_space<smem>>
    %2664 = vector.broadcast %2663 : f32 to vector<8x128xf32>
    %2665 = arith.mulf %2664, %2437 : vector<8x128xf32>
    %2666 = arith.addf %2662, %2665 : vector<8x128xf32>
    %c236_310 = arith.constant 236 : index
    %2667 = memref.load %arg1[%c236_310] : memref<490xf32, #tpu.memory_space<smem>>
    %2668 = vector.broadcast %2667 : f32 to vector<8x128xf32>
    %2669 = arith.mulf %2668, %2467 : vector<8x128xf32>
    %2670 = arith.addf %2666, %2669 : vector<8x128xf32>
    %c237_311 = arith.constant 237 : index
    %2671 = memref.load %arg1[%c237_311] : memref<490xf32, #tpu.memory_space<smem>>
    %2672 = vector.broadcast %2671 : f32 to vector<8x128xf32>
    %2673 = arith.mulf %2672, %2497 : vector<8x128xf32>
    %2674 = arith.addf %2670, %2673 : vector<8x128xf32>
    %cst_312 = arith.constant 0.00999999977 : f32
    %2675 = vector.broadcast %cst_312 : f32 to vector<8x128xf32>
    %2676 = arith.mulf %2675, %2674 : vector<8x128xf32>
    %2677 = arith.maximumf %2674, %2676 : vector<8x128xf32>
    %c238_313 = arith.constant 238 : index
    %2678 = memref.load %arg1[%c238_313] : memref<490xf32, #tpu.memory_space<smem>>
    %2679 = vector.broadcast %2678 : f32 to vector<8x128xf32>
    %2680 = arith.mulf %2679, %2317 : vector<8x128xf32>
    %c239_314 = arith.constant 239 : index
    %2681 = memref.load %arg1[%c239_314] : memref<490xf32, #tpu.memory_space<smem>>
    %2682 = vector.broadcast %2681 : f32 to vector<8x128xf32>
    %2683 = arith.mulf %2682, %2347 : vector<8x128xf32>
    %2684 = arith.addf %2680, %2683 : vector<8x128xf32>
    %c240_315 = arith.constant 240 : index
    %2685 = memref.load %arg1[%c240_315] : memref<490xf32, #tpu.memory_space<smem>>
    %2686 = vector.broadcast %2685 : f32 to vector<8x128xf32>
    %2687 = arith.mulf %2686, %2377 : vector<8x128xf32>
    %2688 = arith.addf %2684, %2687 : vector<8x128xf32>
    %c241_316 = arith.constant 241 : index
    %2689 = memref.load %arg1[%c241_316] : memref<490xf32, #tpu.memory_space<smem>>
    %2690 = vector.broadcast %2689 : f32 to vector<8x128xf32>
    %2691 = arith.mulf %2690, %2407 : vector<8x128xf32>
    %2692 = arith.addf %2688, %2691 : vector<8x128xf32>
    %c242_317 = arith.constant 242 : index
    %2693 = memref.load %arg1[%c242_317] : memref<490xf32, #tpu.memory_space<smem>>
    %2694 = vector.broadcast %2693 : f32 to vector<8x128xf32>
    %2695 = arith.mulf %2694, %2437 : vector<8x128xf32>
    %2696 = arith.addf %2692, %2695 : vector<8x128xf32>
    %c243_318 = arith.constant 243 : index
    %2697 = memref.load %arg1[%c243_318] : memref<490xf32, #tpu.memory_space<smem>>
    %2698 = vector.broadcast %2697 : f32 to vector<8x128xf32>
    %2699 = arith.mulf %2698, %2467 : vector<8x128xf32>
    %2700 = arith.addf %2696, %2699 : vector<8x128xf32>
    %c244_319 = arith.constant 244 : index
    %2701 = memref.load %arg1[%c244_319] : memref<490xf32, #tpu.memory_space<smem>>
    %2702 = vector.broadcast %2701 : f32 to vector<8x128xf32>
    %2703 = arith.mulf %2702, %2497 : vector<8x128xf32>
    %2704 = arith.addf %2700, %2703 : vector<8x128xf32>
    %cst_320 = arith.constant 0.00999999977 : f32
    %2705 = vector.broadcast %cst_320 : f32 to vector<8x128xf32>
    %2706 = arith.mulf %2705, %2704 : vector<8x128xf32>
    %2707 = arith.maximumf %2704, %2706 : vector<8x128xf32>
    %c245_321 = arith.constant 245 : index
    %2708 = memref.load %arg1[%c245_321] : memref<490xf32, #tpu.memory_space<smem>>
    %2709 = vector.broadcast %2708 : f32 to vector<8x128xf32>
    %2710 = arith.mulf %2709, %2527 : vector<8x128xf32>
    %c246_322 = arith.constant 246 : index
    %2711 = memref.load %arg1[%c246_322] : memref<490xf32, #tpu.memory_space<smem>>
    %2712 = vector.broadcast %2711 : f32 to vector<8x128xf32>
    %2713 = arith.mulf %2712, %2557 : vector<8x128xf32>
    %2714 = arith.addf %2710, %2713 : vector<8x128xf32>
    %c247_323 = arith.constant 247 : index
    %2715 = memref.load %arg1[%c247_323] : memref<490xf32, #tpu.memory_space<smem>>
    %2716 = vector.broadcast %2715 : f32 to vector<8x128xf32>
    %2717 = arith.mulf %2716, %2587 : vector<8x128xf32>
    %2718 = arith.addf %2714, %2717 : vector<8x128xf32>
    %c248_324 = arith.constant 248 : index
    %2719 = memref.load %arg1[%c248_324] : memref<490xf32, #tpu.memory_space<smem>>
    %2720 = vector.broadcast %2719 : f32 to vector<8x128xf32>
    %2721 = arith.mulf %2720, %2617 : vector<8x128xf32>
    %2722 = arith.addf %2718, %2721 : vector<8x128xf32>
    %c249_325 = arith.constant 249 : index
    %2723 = memref.load %arg1[%c249_325] : memref<490xf32, #tpu.memory_space<smem>>
    %2724 = vector.broadcast %2723 : f32 to vector<8x128xf32>
    %2725 = arith.mulf %2724, %2647 : vector<8x128xf32>
    %2726 = arith.addf %2722, %2725 : vector<8x128xf32>
    %c250_326 = arith.constant 250 : index
    %2727 = memref.load %arg1[%c250_326] : memref<490xf32, #tpu.memory_space<smem>>
    %2728 = vector.broadcast %2727 : f32 to vector<8x128xf32>
    %2729 = arith.mulf %2728, %2677 : vector<8x128xf32>
    %2730 = arith.addf %2726, %2729 : vector<8x128xf32>
    %c251_327 = arith.constant 251 : index
    %2731 = memref.load %arg1[%c251_327] : memref<490xf32, #tpu.memory_space<smem>>
    %2732 = vector.broadcast %2731 : f32 to vector<8x128xf32>
    %2733 = arith.mulf %2732, %2707 : vector<8x128xf32>
    %2734 = arith.addf %2730, %2733 : vector<8x128xf32>
    %cst_328 = arith.constant 0.00999999977 : f32
    %2735 = vector.broadcast %cst_328 : f32 to vector<8x128xf32>
    %2736 = arith.mulf %2735, %2734 : vector<8x128xf32>
    %2737 = arith.maximumf %2734, %2736 : vector<8x128xf32>
    %c252_329 = arith.constant 252 : index
    %2738 = memref.load %arg1[%c252_329] : memref<490xf32, #tpu.memory_space<smem>>
    %2739 = vector.broadcast %2738 : f32 to vector<8x128xf32>
    %2740 = arith.mulf %2739, %2527 : vector<8x128xf32>
    %c253_330 = arith.constant 253 : index
    %2741 = memref.load %arg1[%c253_330] : memref<490xf32, #tpu.memory_space<smem>>
    %2742 = vector.broadcast %2741 : f32 to vector<8x128xf32>
    %2743 = arith.mulf %2742, %2557 : vector<8x128xf32>
    %2744 = arith.addf %2740, %2743 : vector<8x128xf32>
    %c254_331 = arith.constant 254 : index
    %2745 = memref.load %arg1[%c254_331] : memref<490xf32, #tpu.memory_space<smem>>
    %2746 = vector.broadcast %2745 : f32 to vector<8x128xf32>
    %2747 = arith.mulf %2746, %2587 : vector<8x128xf32>
    %2748 = arith.addf %2744, %2747 : vector<8x128xf32>
    %c255_332 = arith.constant 255 : index
    %2749 = memref.load %arg1[%c255_332] : memref<490xf32, #tpu.memory_space<smem>>
    %2750 = vector.broadcast %2749 : f32 to vector<8x128xf32>
    %2751 = arith.mulf %2750, %2617 : vector<8x128xf32>
    %2752 = arith.addf %2748, %2751 : vector<8x128xf32>
    %c256_333 = arith.constant 256 : index
    %2753 = memref.load %arg1[%c256_333] : memref<490xf32, #tpu.memory_space<smem>>
    %2754 = vector.broadcast %2753 : f32 to vector<8x128xf32>
    %2755 = arith.mulf %2754, %2647 : vector<8x128xf32>
    %2756 = arith.addf %2752, %2755 : vector<8x128xf32>
    %c257_334 = arith.constant 257 : index
    %2757 = memref.load %arg1[%c257_334] : memref<490xf32, #tpu.memory_space<smem>>
    %2758 = vector.broadcast %2757 : f32 to vector<8x128xf32>
    %2759 = arith.mulf %2758, %2677 : vector<8x128xf32>
    %2760 = arith.addf %2756, %2759 : vector<8x128xf32>
    %c258_335 = arith.constant 258 : index
    %2761 = memref.load %arg1[%c258_335] : memref<490xf32, #tpu.memory_space<smem>>
    %2762 = vector.broadcast %2761 : f32 to vector<8x128xf32>
    %2763 = arith.mulf %2762, %2707 : vector<8x128xf32>
    %2764 = arith.addf %2760, %2763 : vector<8x128xf32>
    %cst_336 = arith.constant 0.00999999977 : f32
    %2765 = vector.broadcast %cst_336 : f32 to vector<8x128xf32>
    %2766 = arith.mulf %2765, %2764 : vector<8x128xf32>
    %2767 = arith.maximumf %2764, %2766 : vector<8x128xf32>
    %c259_337 = arith.constant 259 : index
    %2768 = memref.load %arg1[%c259_337] : memref<490xf32, #tpu.memory_space<smem>>
    %2769 = vector.broadcast %2768 : f32 to vector<8x128xf32>
    %2770 = arith.mulf %2769, %2527 : vector<8x128xf32>
    %c260_338 = arith.constant 260 : index
    %2771 = memref.load %arg1[%c260_338] : memref<490xf32, #tpu.memory_space<smem>>
    %2772 = vector.broadcast %2771 : f32 to vector<8x128xf32>
    %2773 = arith.mulf %2772, %2557 : vector<8x128xf32>
    %2774 = arith.addf %2770, %2773 : vector<8x128xf32>
    %c261_339 = arith.constant 261 : index
    %2775 = memref.load %arg1[%c261_339] : memref<490xf32, #tpu.memory_space<smem>>
    %2776 = vector.broadcast %2775 : f32 to vector<8x128xf32>
    %2777 = arith.mulf %2776, %2587 : vector<8x128xf32>
    %2778 = arith.addf %2774, %2777 : vector<8x128xf32>
    %c262_340 = arith.constant 262 : index
    %2779 = memref.load %arg1[%c262_340] : memref<490xf32, #tpu.memory_space<smem>>
    %2780 = vector.broadcast %2779 : f32 to vector<8x128xf32>
    %2781 = arith.mulf %2780, %2617 : vector<8x128xf32>
    %2782 = arith.addf %2778, %2781 : vector<8x128xf32>
    %c263_341 = arith.constant 263 : index
    %2783 = memref.load %arg1[%c263_341] : memref<490xf32, #tpu.memory_space<smem>>
    %2784 = vector.broadcast %2783 : f32 to vector<8x128xf32>
    %2785 = arith.mulf %2784, %2647 : vector<8x128xf32>
    %2786 = arith.addf %2782, %2785 : vector<8x128xf32>
    %c264_342 = arith.constant 264 : index
    %2787 = memref.load %arg1[%c264_342] : memref<490xf32, #tpu.memory_space<smem>>
    %2788 = vector.broadcast %2787 : f32 to vector<8x128xf32>
    %2789 = arith.mulf %2788, %2677 : vector<8x128xf32>
    %2790 = arith.addf %2786, %2789 : vector<8x128xf32>
    %c265_343 = arith.constant 265 : index
    %2791 = memref.load %arg1[%c265_343] : memref<490xf32, #tpu.memory_space<smem>>
    %2792 = vector.broadcast %2791 : f32 to vector<8x128xf32>
    %2793 = arith.mulf %2792, %2707 : vector<8x128xf32>
    %2794 = arith.addf %2790, %2793 : vector<8x128xf32>
    %cst_344 = arith.constant 0.00999999977 : f32
    %2795 = vector.broadcast %cst_344 : f32 to vector<8x128xf32>
    %2796 = arith.mulf %2795, %2794 : vector<8x128xf32>
    %2797 = arith.maximumf %2794, %2796 : vector<8x128xf32>
    %c266_345 = arith.constant 266 : index
    %2798 = memref.load %arg1[%c266_345] : memref<490xf32, #tpu.memory_space<smem>>
    %2799 = vector.broadcast %2798 : f32 to vector<8x128xf32>
    %2800 = arith.mulf %2799, %2527 : vector<8x128xf32>
    %c267_346 = arith.constant 267 : index
    %2801 = memref.load %arg1[%c267_346] : memref<490xf32, #tpu.memory_space<smem>>
    %2802 = vector.broadcast %2801 : f32 to vector<8x128xf32>
    %2803 = arith.mulf %2802, %2557 : vector<8x128xf32>
    %2804 = arith.addf %2800, %2803 : vector<8x128xf32>
    %c268_347 = arith.constant 268 : index
    %2805 = memref.load %arg1[%c268_347] : memref<490xf32, #tpu.memory_space<smem>>
    %2806 = vector.broadcast %2805 : f32 to vector<8x128xf32>
    %2807 = arith.mulf %2806, %2587 : vector<8x128xf32>
    %2808 = arith.addf %2804, %2807 : vector<8x128xf32>
    %c269_348 = arith.constant 269 : index
    %2809 = memref.load %arg1[%c269_348] : memref<490xf32, #tpu.memory_space<smem>>
    %2810 = vector.broadcast %2809 : f32 to vector<8x128xf32>
    %2811 = arith.mulf %2810, %2617 : vector<8x128xf32>
    %2812 = arith.addf %2808, %2811 : vector<8x128xf32>
    %c270_349 = arith.constant 270 : index
    %2813 = memref.load %arg1[%c270_349] : memref<490xf32, #tpu.memory_space<smem>>
    %2814 = vector.broadcast %2813 : f32 to vector<8x128xf32>
    %2815 = arith.mulf %2814, %2647 : vector<8x128xf32>
    %2816 = arith.addf %2812, %2815 : vector<8x128xf32>
    %c271_350 = arith.constant 271 : index
    %2817 = memref.load %arg1[%c271_350] : memref<490xf32, #tpu.memory_space<smem>>
    %2818 = vector.broadcast %2817 : f32 to vector<8x128xf32>
    %2819 = arith.mulf %2818, %2677 : vector<8x128xf32>
    %2820 = arith.addf %2816, %2819 : vector<8x128xf32>
    %c272_351 = arith.constant 272 : index
    %2821 = memref.load %arg1[%c272_351] : memref<490xf32, #tpu.memory_space<smem>>
    %2822 = vector.broadcast %2821 : f32 to vector<8x128xf32>
    %2823 = arith.mulf %2822, %2707 : vector<8x128xf32>
    %2824 = arith.addf %2820, %2823 : vector<8x128xf32>
    %cst_352 = arith.constant 0.00999999977 : f32
    %2825 = vector.broadcast %cst_352 : f32 to vector<8x128xf32>
    %2826 = arith.mulf %2825, %2824 : vector<8x128xf32>
    %2827 = arith.maximumf %2824, %2826 : vector<8x128xf32>
    %c273_353 = arith.constant 273 : index
    %2828 = memref.load %arg1[%c273_353] : memref<490xf32, #tpu.memory_space<smem>>
    %2829 = vector.broadcast %2828 : f32 to vector<8x128xf32>
    %2830 = arith.mulf %2829, %2527 : vector<8x128xf32>
    %c274_354 = arith.constant 274 : index
    %2831 = memref.load %arg1[%c274_354] : memref<490xf32, #tpu.memory_space<smem>>
    %2832 = vector.broadcast %2831 : f32 to vector<8x128xf32>
    %2833 = arith.mulf %2832, %2557 : vector<8x128xf32>
    %2834 = arith.addf %2830, %2833 : vector<8x128xf32>
    %c275_355 = arith.constant 275 : index
    %2835 = memref.load %arg1[%c275_355] : memref<490xf32, #tpu.memory_space<smem>>
    %2836 = vector.broadcast %2835 : f32 to vector<8x128xf32>
    %2837 = arith.mulf %2836, %2587 : vector<8x128xf32>
    %2838 = arith.addf %2834, %2837 : vector<8x128xf32>
    %c276_356 = arith.constant 276 : index
    %2839 = memref.load %arg1[%c276_356] : memref<490xf32, #tpu.memory_space<smem>>
    %2840 = vector.broadcast %2839 : f32 to vector<8x128xf32>
    %2841 = arith.mulf %2840, %2617 : vector<8x128xf32>
    %2842 = arith.addf %2838, %2841 : vector<8x128xf32>
    %c277_357 = arith.constant 277 : index
    %2843 = memref.load %arg1[%c277_357] : memref<490xf32, #tpu.memory_space<smem>>
    %2844 = vector.broadcast %2843 : f32 to vector<8x128xf32>
    %2845 = arith.mulf %2844, %2647 : vector<8x128xf32>
    %2846 = arith.addf %2842, %2845 : vector<8x128xf32>
    %c278_358 = arith.constant 278 : index
    %2847 = memref.load %arg1[%c278_358] : memref<490xf32, #tpu.memory_space<smem>>
    %2848 = vector.broadcast %2847 : f32 to vector<8x128xf32>
    %2849 = arith.mulf %2848, %2677 : vector<8x128xf32>
    %2850 = arith.addf %2846, %2849 : vector<8x128xf32>
    %c279_359 = arith.constant 279 : index
    %2851 = memref.load %arg1[%c279_359] : memref<490xf32, #tpu.memory_space<smem>>
    %2852 = vector.broadcast %2851 : f32 to vector<8x128xf32>
    %2853 = arith.mulf %2852, %2707 : vector<8x128xf32>
    %2854 = arith.addf %2850, %2853 : vector<8x128xf32>
    %cst_360 = arith.constant 0.00999999977 : f32
    %2855 = vector.broadcast %cst_360 : f32 to vector<8x128xf32>
    %2856 = arith.mulf %2855, %2854 : vector<8x128xf32>
    %2857 = arith.maximumf %2854, %2856 : vector<8x128xf32>
    %c280_361 = arith.constant 280 : index
    %2858 = memref.load %arg1[%c280_361] : memref<490xf32, #tpu.memory_space<smem>>
    %2859 = vector.broadcast %2858 : f32 to vector<8x128xf32>
    %2860 = arith.mulf %2859, %2527 : vector<8x128xf32>
    %c281_362 = arith.constant 281 : index
    %2861 = memref.load %arg1[%c281_362] : memref<490xf32, #tpu.memory_space<smem>>
    %2862 = vector.broadcast %2861 : f32 to vector<8x128xf32>
    %2863 = arith.mulf %2862, %2557 : vector<8x128xf32>
    %2864 = arith.addf %2860, %2863 : vector<8x128xf32>
    %c282_363 = arith.constant 282 : index
    %2865 = memref.load %arg1[%c282_363] : memref<490xf32, #tpu.memory_space<smem>>
    %2866 = vector.broadcast %2865 : f32 to vector<8x128xf32>
    %2867 = arith.mulf %2866, %2587 : vector<8x128xf32>
    %2868 = arith.addf %2864, %2867 : vector<8x128xf32>
    %c283_364 = arith.constant 283 : index
    %2869 = memref.load %arg1[%c283_364] : memref<490xf32, #tpu.memory_space<smem>>
    %2870 = vector.broadcast %2869 : f32 to vector<8x128xf32>
    %2871 = arith.mulf %2870, %2617 : vector<8x128xf32>
    %2872 = arith.addf %2868, %2871 : vector<8x128xf32>
    %c284_365 = arith.constant 284 : index
    %2873 = memref.load %arg1[%c284_365] : memref<490xf32, #tpu.memory_space<smem>>
    %2874 = vector.broadcast %2873 : f32 to vector<8x128xf32>
    %2875 = arith.mulf %2874, %2647 : vector<8x128xf32>
    %2876 = arith.addf %2872, %2875 : vector<8x128xf32>
    %c285_366 = arith.constant 285 : index
    %2877 = memref.load %arg1[%c285_366] : memref<490xf32, #tpu.memory_space<smem>>
    %2878 = vector.broadcast %2877 : f32 to vector<8x128xf32>
    %2879 = arith.mulf %2878, %2677 : vector<8x128xf32>
    %2880 = arith.addf %2876, %2879 : vector<8x128xf32>
    %c286_367 = arith.constant 286 : index
    %2881 = memref.load %arg1[%c286_367] : memref<490xf32, #tpu.memory_space<smem>>
    %2882 = vector.broadcast %2881 : f32 to vector<8x128xf32>
    %2883 = arith.mulf %2882, %2707 : vector<8x128xf32>
    %2884 = arith.addf %2880, %2883 : vector<8x128xf32>
    %cst_368 = arith.constant 0.00999999977 : f32
    %2885 = vector.broadcast %cst_368 : f32 to vector<8x128xf32>
    %2886 = arith.mulf %2885, %2884 : vector<8x128xf32>
    %2887 = arith.maximumf %2884, %2886 : vector<8x128xf32>
    %c287_369 = arith.constant 287 : index
    %2888 = memref.load %arg1[%c287_369] : memref<490xf32, #tpu.memory_space<smem>>
    %2889 = vector.broadcast %2888 : f32 to vector<8x128xf32>
    %2890 = arith.mulf %2889, %2527 : vector<8x128xf32>
    %c288_370 = arith.constant 288 : index
    %2891 = memref.load %arg1[%c288_370] : memref<490xf32, #tpu.memory_space<smem>>
    %2892 = vector.broadcast %2891 : f32 to vector<8x128xf32>
    %2893 = arith.mulf %2892, %2557 : vector<8x128xf32>
    %2894 = arith.addf %2890, %2893 : vector<8x128xf32>
    %c289_371 = arith.constant 289 : index
    %2895 = memref.load %arg1[%c289_371] : memref<490xf32, #tpu.memory_space<smem>>
    %2896 = vector.broadcast %2895 : f32 to vector<8x128xf32>
    %2897 = arith.mulf %2896, %2587 : vector<8x128xf32>
    %2898 = arith.addf %2894, %2897 : vector<8x128xf32>
    %c290_372 = arith.constant 290 : index
    %2899 = memref.load %arg1[%c290_372] : memref<490xf32, #tpu.memory_space<smem>>
    %2900 = vector.broadcast %2899 : f32 to vector<8x128xf32>
    %2901 = arith.mulf %2900, %2617 : vector<8x128xf32>
    %2902 = arith.addf %2898, %2901 : vector<8x128xf32>
    %c291_373 = arith.constant 291 : index
    %2903 = memref.load %arg1[%c291_373] : memref<490xf32, #tpu.memory_space<smem>>
    %2904 = vector.broadcast %2903 : f32 to vector<8x128xf32>
    %2905 = arith.mulf %2904, %2647 : vector<8x128xf32>
    %2906 = arith.addf %2902, %2905 : vector<8x128xf32>
    %c292_374 = arith.constant 292 : index
    %2907 = memref.load %arg1[%c292_374] : memref<490xf32, #tpu.memory_space<smem>>
    %2908 = vector.broadcast %2907 : f32 to vector<8x128xf32>
    %2909 = arith.mulf %2908, %2677 : vector<8x128xf32>
    %2910 = arith.addf %2906, %2909 : vector<8x128xf32>
    %c293_375 = arith.constant 293 : index
    %2911 = memref.load %arg1[%c293_375] : memref<490xf32, #tpu.memory_space<smem>>
    %2912 = vector.broadcast %2911 : f32 to vector<8x128xf32>
    %2913 = arith.mulf %2912, %2707 : vector<8x128xf32>
    %2914 = arith.addf %2910, %2913 : vector<8x128xf32>
    %cst_376 = arith.constant 0.00999999977 : f32
    %2915 = vector.broadcast %cst_376 : f32 to vector<8x128xf32>
    %2916 = arith.mulf %2915, %2914 : vector<8x128xf32>
    %2917 = arith.maximumf %2914, %2916 : vector<8x128xf32>
    %c294_377 = arith.constant 294 : index
    %2918 = memref.load %arg1[%c294_377] : memref<490xf32, #tpu.memory_space<smem>>
    %2919 = vector.broadcast %2918 : f32 to vector<8x128xf32>
    %2920 = arith.mulf %2919, %2737 : vector<8x128xf32>
    %c295_378 = arith.constant 295 : index
    %2921 = memref.load %arg1[%c295_378] : memref<490xf32, #tpu.memory_space<smem>>
    %2922 = vector.broadcast %2921 : f32 to vector<8x128xf32>
    %2923 = arith.mulf %2922, %2767 : vector<8x128xf32>
    %2924 = arith.addf %2920, %2923 : vector<8x128xf32>
    %c296_379 = arith.constant 296 : index
    %2925 = memref.load %arg1[%c296_379] : memref<490xf32, #tpu.memory_space<smem>>
    %2926 = vector.broadcast %2925 : f32 to vector<8x128xf32>
    %2927 = arith.mulf %2926, %2797 : vector<8x128xf32>
    %2928 = arith.addf %2924, %2927 : vector<8x128xf32>
    %c297_380 = arith.constant 297 : index
    %2929 = memref.load %arg1[%c297_380] : memref<490xf32, #tpu.memory_space<smem>>
    %2930 = vector.broadcast %2929 : f32 to vector<8x128xf32>
    %2931 = arith.mulf %2930, %2827 : vector<8x128xf32>
    %2932 = arith.addf %2928, %2931 : vector<8x128xf32>
    %c298_381 = arith.constant 298 : index
    %2933 = memref.load %arg1[%c298_381] : memref<490xf32, #tpu.memory_space<smem>>
    %2934 = vector.broadcast %2933 : f32 to vector<8x128xf32>
    %2935 = arith.mulf %2934, %2857 : vector<8x128xf32>
    %2936 = arith.addf %2932, %2935 : vector<8x128xf32>
    %c299_382 = arith.constant 299 : index
    %2937 = memref.load %arg1[%c299_382] : memref<490xf32, #tpu.memory_space<smem>>
    %2938 = vector.broadcast %2937 : f32 to vector<8x128xf32>
    %2939 = arith.mulf %2938, %2887 : vector<8x128xf32>
    %2940 = arith.addf %2936, %2939 : vector<8x128xf32>
    %c300_383 = arith.constant 300 : index
    %2941 = memref.load %arg1[%c300_383] : memref<490xf32, #tpu.memory_space<smem>>
    %2942 = vector.broadcast %2941 : f32 to vector<8x128xf32>
    %2943 = arith.mulf %2942, %2917 : vector<8x128xf32>
    %2944 = arith.addf %2940, %2943 : vector<8x128xf32>
    %cst_384 = arith.constant 0.00999999977 : f32
    %2945 = vector.broadcast %cst_384 : f32 to vector<8x128xf32>
    %2946 = arith.mulf %2945, %2944 : vector<8x128xf32>
    %2947 = arith.maximumf %2944, %2946 : vector<8x128xf32>
    %c301_385 = arith.constant 301 : index
    %2948 = memref.load %arg1[%c301_385] : memref<490xf32, #tpu.memory_space<smem>>
    %2949 = vector.broadcast %2948 : f32 to vector<8x128xf32>
    %2950 = arith.mulf %2949, %2737 : vector<8x128xf32>
    %c302_386 = arith.constant 302 : index
    %2951 = memref.load %arg1[%c302_386] : memref<490xf32, #tpu.memory_space<smem>>
    %2952 = vector.broadcast %2951 : f32 to vector<8x128xf32>
    %2953 = arith.mulf %2952, %2767 : vector<8x128xf32>
    %2954 = arith.addf %2950, %2953 : vector<8x128xf32>
    %c303_387 = arith.constant 303 : index
    %2955 = memref.load %arg1[%c303_387] : memref<490xf32, #tpu.memory_space<smem>>
    %2956 = vector.broadcast %2955 : f32 to vector<8x128xf32>
    %2957 = arith.mulf %2956, %2797 : vector<8x128xf32>
    %2958 = arith.addf %2954, %2957 : vector<8x128xf32>
    %c304_388 = arith.constant 304 : index
    %2959 = memref.load %arg1[%c304_388] : memref<490xf32, #tpu.memory_space<smem>>
    %2960 = vector.broadcast %2959 : f32 to vector<8x128xf32>
    %2961 = arith.mulf %2960, %2827 : vector<8x128xf32>
    %2962 = arith.addf %2958, %2961 : vector<8x128xf32>
    %c305_389 = arith.constant 305 : index
    %2963 = memref.load %arg1[%c305_389] : memref<490xf32, #tpu.memory_space<smem>>
    %2964 = vector.broadcast %2963 : f32 to vector<8x128xf32>
    %2965 = arith.mulf %2964, %2857 : vector<8x128xf32>
    %2966 = arith.addf %2962, %2965 : vector<8x128xf32>
    %c306_390 = arith.constant 306 : index
    %2967 = memref.load %arg1[%c306_390] : memref<490xf32, #tpu.memory_space<smem>>
    %2968 = vector.broadcast %2967 : f32 to vector<8x128xf32>
    %2969 = arith.mulf %2968, %2887 : vector<8x128xf32>
    %2970 = arith.addf %2966, %2969 : vector<8x128xf32>
    %c307_391 = arith.constant 307 : index
    %2971 = memref.load %arg1[%c307_391] : memref<490xf32, #tpu.memory_space<smem>>
    %2972 = vector.broadcast %2971 : f32 to vector<8x128xf32>
    %2973 = arith.mulf %2972, %2917 : vector<8x128xf32>
    %2974 = arith.addf %2970, %2973 : vector<8x128xf32>
    %cst_392 = arith.constant 0.00999999977 : f32
    %2975 = vector.broadcast %cst_392 : f32 to vector<8x128xf32>
    %2976 = arith.mulf %2975, %2974 : vector<8x128xf32>
    %2977 = arith.maximumf %2974, %2976 : vector<8x128xf32>
    %c308_393 = arith.constant 308 : index
    %2978 = memref.load %arg1[%c308_393] : memref<490xf32, #tpu.memory_space<smem>>
    %2979 = vector.broadcast %2978 : f32 to vector<8x128xf32>
    %2980 = arith.mulf %2979, %2737 : vector<8x128xf32>
    %c309_394 = arith.constant 309 : index
    %2981 = memref.load %arg1[%c309_394] : memref<490xf32, #tpu.memory_space<smem>>
    %2982 = vector.broadcast %2981 : f32 to vector<8x128xf32>
    %2983 = arith.mulf %2982, %2767 : vector<8x128xf32>
    %2984 = arith.addf %2980, %2983 : vector<8x128xf32>
    %c310_395 = arith.constant 310 : index
    %2985 = memref.load %arg1[%c310_395] : memref<490xf32, #tpu.memory_space<smem>>
    %2986 = vector.broadcast %2985 : f32 to vector<8x128xf32>
    %2987 = arith.mulf %2986, %2797 : vector<8x128xf32>
    %2988 = arith.addf %2984, %2987 : vector<8x128xf32>
    %c311_396 = arith.constant 311 : index
    %2989 = memref.load %arg1[%c311_396] : memref<490xf32, #tpu.memory_space<smem>>
    %2990 = vector.broadcast %2989 : f32 to vector<8x128xf32>
    %2991 = arith.mulf %2990, %2827 : vector<8x128xf32>
    %2992 = arith.addf %2988, %2991 : vector<8x128xf32>
    %c312_397 = arith.constant 312 : index
    %2993 = memref.load %arg1[%c312_397] : memref<490xf32, #tpu.memory_space<smem>>
    %2994 = vector.broadcast %2993 : f32 to vector<8x128xf32>
    %2995 = arith.mulf %2994, %2857 : vector<8x128xf32>
    %2996 = arith.addf %2992, %2995 : vector<8x128xf32>
    %c313_398 = arith.constant 313 : index
    %2997 = memref.load %arg1[%c313_398] : memref<490xf32, #tpu.memory_space<smem>>
    %2998 = vector.broadcast %2997 : f32 to vector<8x128xf32>
    %2999 = arith.mulf %2998, %2887 : vector<8x128xf32>
    %3000 = arith.addf %2996, %2999 : vector<8x128xf32>
    %c314_399 = arith.constant 314 : index
    %3001 = memref.load %arg1[%c314_399] : memref<490xf32, #tpu.memory_space<smem>>
    %3002 = vector.broadcast %3001 : f32 to vector<8x128xf32>
    %3003 = arith.mulf %3002, %2917 : vector<8x128xf32>
    %3004 = arith.addf %3000, %3003 : vector<8x128xf32>
    %cst_400 = arith.constant 0.00999999977 : f32
    %3005 = vector.broadcast %cst_400 : f32 to vector<8x128xf32>
    %3006 = arith.mulf %3005, %3004 : vector<8x128xf32>
    %3007 = arith.maximumf %3004, %3006 : vector<8x128xf32>
    %c315_401 = arith.constant 315 : index
    %3008 = memref.load %arg1[%c315_401] : memref<490xf32, #tpu.memory_space<smem>>
    %3009 = vector.broadcast %3008 : f32 to vector<8x128xf32>
    %3010 = arith.mulf %3009, %2737 : vector<8x128xf32>
    %c316_402 = arith.constant 316 : index
    %3011 = memref.load %arg1[%c316_402] : memref<490xf32, #tpu.memory_space<smem>>
    %3012 = vector.broadcast %3011 : f32 to vector<8x128xf32>
    %3013 = arith.mulf %3012, %2767 : vector<8x128xf32>
    %3014 = arith.addf %3010, %3013 : vector<8x128xf32>
    %c317_403 = arith.constant 317 : index
    %3015 = memref.load %arg1[%c317_403] : memref<490xf32, #tpu.memory_space<smem>>
    %3016 = vector.broadcast %3015 : f32 to vector<8x128xf32>
    %3017 = arith.mulf %3016, %2797 : vector<8x128xf32>
    %3018 = arith.addf %3014, %3017 : vector<8x128xf32>
    %c318_404 = arith.constant 318 : index
    %3019 = memref.load %arg1[%c318_404] : memref<490xf32, #tpu.memory_space<smem>>
    %3020 = vector.broadcast %3019 : f32 to vector<8x128xf32>
    %3021 = arith.mulf %3020, %2827 : vector<8x128xf32>
    %3022 = arith.addf %3018, %3021 : vector<8x128xf32>
    %c319_405 = arith.constant 319 : index
    %3023 = memref.load %arg1[%c319_405] : memref<490xf32, #tpu.memory_space<smem>>
    %3024 = vector.broadcast %3023 : f32 to vector<8x128xf32>
    %3025 = arith.mulf %3024, %2857 : vector<8x128xf32>
    %3026 = arith.addf %3022, %3025 : vector<8x128xf32>
    %c320_406 = arith.constant 320 : index
    %3027 = memref.load %arg1[%c320_406] : memref<490xf32, #tpu.memory_space<smem>>
    %3028 = vector.broadcast %3027 : f32 to vector<8x128xf32>
    %3029 = arith.mulf %3028, %2887 : vector<8x128xf32>
    %3030 = arith.addf %3026, %3029 : vector<8x128xf32>
    %c321_407 = arith.constant 321 : index
    %3031 = memref.load %arg1[%c321_407] : memref<490xf32, #tpu.memory_space<smem>>
    %3032 = vector.broadcast %3031 : f32 to vector<8x128xf32>
    %3033 = arith.mulf %3032, %2917 : vector<8x128xf32>
    %3034 = arith.addf %3030, %3033 : vector<8x128xf32>
    %cst_408 = arith.constant 0.00999999977 : f32
    %3035 = vector.broadcast %cst_408 : f32 to vector<8x128xf32>
    %3036 = arith.mulf %3035, %3034 : vector<8x128xf32>
    %3037 = arith.maximumf %3034, %3036 : vector<8x128xf32>
    %c322_409 = arith.constant 322 : index
    %3038 = memref.load %arg1[%c322_409] : memref<490xf32, #tpu.memory_space<smem>>
    %3039 = vector.broadcast %3038 : f32 to vector<8x128xf32>
    %3040 = arith.mulf %3039, %2737 : vector<8x128xf32>
    %c323_410 = arith.constant 323 : index
    %3041 = memref.load %arg1[%c323_410] : memref<490xf32, #tpu.memory_space<smem>>
    %3042 = vector.broadcast %3041 : f32 to vector<8x128xf32>
    %3043 = arith.mulf %3042, %2767 : vector<8x128xf32>
    %3044 = arith.addf %3040, %3043 : vector<8x128xf32>
    %c324_411 = arith.constant 324 : index
    %3045 = memref.load %arg1[%c324_411] : memref<490xf32, #tpu.memory_space<smem>>
    %3046 = vector.broadcast %3045 : f32 to vector<8x128xf32>
    %3047 = arith.mulf %3046, %2797 : vector<8x128xf32>
    %3048 = arith.addf %3044, %3047 : vector<8x128xf32>
    %c325_412 = arith.constant 325 : index
    %3049 = memref.load %arg1[%c325_412] : memref<490xf32, #tpu.memory_space<smem>>
    %3050 = vector.broadcast %3049 : f32 to vector<8x128xf32>
    %3051 = arith.mulf %3050, %2827 : vector<8x128xf32>
    %3052 = arith.addf %3048, %3051 : vector<8x128xf32>
    %c326_413 = arith.constant 326 : index
    %3053 = memref.load %arg1[%c326_413] : memref<490xf32, #tpu.memory_space<smem>>
    %3054 = vector.broadcast %3053 : f32 to vector<8x128xf32>
    %3055 = arith.mulf %3054, %2857 : vector<8x128xf32>
    %3056 = arith.addf %3052, %3055 : vector<8x128xf32>
    %c327_414 = arith.constant 327 : index
    %3057 = memref.load %arg1[%c327_414] : memref<490xf32, #tpu.memory_space<smem>>
    %3058 = vector.broadcast %3057 : f32 to vector<8x128xf32>
    %3059 = arith.mulf %3058, %2887 : vector<8x128xf32>
    %3060 = arith.addf %3056, %3059 : vector<8x128xf32>
    %c328_415 = arith.constant 328 : index
    %3061 = memref.load %arg1[%c328_415] : memref<490xf32, #tpu.memory_space<smem>>
    %3062 = vector.broadcast %3061 : f32 to vector<8x128xf32>
    %3063 = arith.mulf %3062, %2917 : vector<8x128xf32>
    %3064 = arith.addf %3060, %3063 : vector<8x128xf32>
    %cst_416 = arith.constant 0.00999999977 : f32
    %3065 = vector.broadcast %cst_416 : f32 to vector<8x128xf32>
    %3066 = arith.mulf %3065, %3064 : vector<8x128xf32>
    %3067 = arith.maximumf %3064, %3066 : vector<8x128xf32>
    %c329_417 = arith.constant 329 : index
    %3068 = memref.load %arg1[%c329_417] : memref<490xf32, #tpu.memory_space<smem>>
    %3069 = vector.broadcast %3068 : f32 to vector<8x128xf32>
    %3070 = arith.mulf %3069, %2737 : vector<8x128xf32>
    %c330_418 = arith.constant 330 : index
    %3071 = memref.load %arg1[%c330_418] : memref<490xf32, #tpu.memory_space<smem>>
    %3072 = vector.broadcast %3071 : f32 to vector<8x128xf32>
    %3073 = arith.mulf %3072, %2767 : vector<8x128xf32>
    %3074 = arith.addf %3070, %3073 : vector<8x128xf32>
    %c331_419 = arith.constant 331 : index
    %3075 = memref.load %arg1[%c331_419] : memref<490xf32, #tpu.memory_space<smem>>
    %3076 = vector.broadcast %3075 : f32 to vector<8x128xf32>
    %3077 = arith.mulf %3076, %2797 : vector<8x128xf32>
    %3078 = arith.addf %3074, %3077 : vector<8x128xf32>
    %c332_420 = arith.constant 332 : index
    %3079 = memref.load %arg1[%c332_420] : memref<490xf32, #tpu.memory_space<smem>>
    %3080 = vector.broadcast %3079 : f32 to vector<8x128xf32>
    %3081 = arith.mulf %3080, %2827 : vector<8x128xf32>
    %3082 = arith.addf %3078, %3081 : vector<8x128xf32>
    %c333_421 = arith.constant 333 : index
    %3083 = memref.load %arg1[%c333_421] : memref<490xf32, #tpu.memory_space<smem>>
    %3084 = vector.broadcast %3083 : f32 to vector<8x128xf32>
    %3085 = arith.mulf %3084, %2857 : vector<8x128xf32>
    %3086 = arith.addf %3082, %3085 : vector<8x128xf32>
    %c334_422 = arith.constant 334 : index
    %3087 = memref.load %arg1[%c334_422] : memref<490xf32, #tpu.memory_space<smem>>
    %3088 = vector.broadcast %3087 : f32 to vector<8x128xf32>
    %3089 = arith.mulf %3088, %2887 : vector<8x128xf32>
    %3090 = arith.addf %3086, %3089 : vector<8x128xf32>
    %c335_423 = arith.constant 335 : index
    %3091 = memref.load %arg1[%c335_423] : memref<490xf32, #tpu.memory_space<smem>>
    %3092 = vector.broadcast %3091 : f32 to vector<8x128xf32>
    %3093 = arith.mulf %3092, %2917 : vector<8x128xf32>
    %3094 = arith.addf %3090, %3093 : vector<8x128xf32>
    %cst_424 = arith.constant 0.00999999977 : f32
    %3095 = vector.broadcast %cst_424 : f32 to vector<8x128xf32>
    %3096 = arith.mulf %3095, %3094 : vector<8x128xf32>
    %3097 = arith.maximumf %3094, %3096 : vector<8x128xf32>
    %c336_425 = arith.constant 336 : index
    %3098 = memref.load %arg1[%c336_425] : memref<490xf32, #tpu.memory_space<smem>>
    %3099 = vector.broadcast %3098 : f32 to vector<8x128xf32>
    %3100 = arith.mulf %3099, %2737 : vector<8x128xf32>
    %c337_426 = arith.constant 337 : index
    %3101 = memref.load %arg1[%c337_426] : memref<490xf32, #tpu.memory_space<smem>>
    %3102 = vector.broadcast %3101 : f32 to vector<8x128xf32>
    %3103 = arith.mulf %3102, %2767 : vector<8x128xf32>
    %3104 = arith.addf %3100, %3103 : vector<8x128xf32>
    %c338_427 = arith.constant 338 : index
    %3105 = memref.load %arg1[%c338_427] : memref<490xf32, #tpu.memory_space<smem>>
    %3106 = vector.broadcast %3105 : f32 to vector<8x128xf32>
    %3107 = arith.mulf %3106, %2797 : vector<8x128xf32>
    %3108 = arith.addf %3104, %3107 : vector<8x128xf32>
    %c339_428 = arith.constant 339 : index
    %3109 = memref.load %arg1[%c339_428] : memref<490xf32, #tpu.memory_space<smem>>
    %3110 = vector.broadcast %3109 : f32 to vector<8x128xf32>
    %3111 = arith.mulf %3110, %2827 : vector<8x128xf32>
    %3112 = arith.addf %3108, %3111 : vector<8x128xf32>
    %c340_429 = arith.constant 340 : index
    %3113 = memref.load %arg1[%c340_429] : memref<490xf32, #tpu.memory_space<smem>>
    %3114 = vector.broadcast %3113 : f32 to vector<8x128xf32>
    %3115 = arith.mulf %3114, %2857 : vector<8x128xf32>
    %3116 = arith.addf %3112, %3115 : vector<8x128xf32>
    %c341_430 = arith.constant 341 : index
    %3117 = memref.load %arg1[%c341_430] : memref<490xf32, #tpu.memory_space<smem>>
    %3118 = vector.broadcast %3117 : f32 to vector<8x128xf32>
    %3119 = arith.mulf %3118, %2887 : vector<8x128xf32>
    %3120 = arith.addf %3116, %3119 : vector<8x128xf32>
    %c342_431 = arith.constant 342 : index
    %3121 = memref.load %arg1[%c342_431] : memref<490xf32, #tpu.memory_space<smem>>
    %3122 = vector.broadcast %3121 : f32 to vector<8x128xf32>
    %3123 = arith.mulf %3122, %2917 : vector<8x128xf32>
    %3124 = arith.addf %3120, %3123 : vector<8x128xf32>
    %cst_432 = arith.constant 0.00999999977 : f32
    %3125 = vector.broadcast %cst_432 : f32 to vector<8x128xf32>
    %3126 = arith.mulf %3125, %3124 : vector<8x128xf32>
    %3127 = arith.maximumf %3124, %3126 : vector<8x128xf32>
    %c343_433 = arith.constant 343 : index
    %3128 = memref.load %arg1[%c343_433] : memref<490xf32, #tpu.memory_space<smem>>
    %3129 = vector.broadcast %3128 : f32 to vector<8x128xf32>
    %3130 = arith.mulf %3129, %2947 : vector<8x128xf32>
    %c344_434 = arith.constant 344 : index
    %3131 = memref.load %arg1[%c344_434] : memref<490xf32, #tpu.memory_space<smem>>
    %3132 = vector.broadcast %3131 : f32 to vector<8x128xf32>
    %3133 = arith.mulf %3132, %2977 : vector<8x128xf32>
    %3134 = arith.addf %3130, %3133 : vector<8x128xf32>
    %c345_435 = arith.constant 345 : index
    %3135 = memref.load %arg1[%c345_435] : memref<490xf32, #tpu.memory_space<smem>>
    %3136 = vector.broadcast %3135 : f32 to vector<8x128xf32>
    %3137 = arith.mulf %3136, %3007 : vector<8x128xf32>
    %3138 = arith.addf %3134, %3137 : vector<8x128xf32>
    %c346_436 = arith.constant 346 : index
    %3139 = memref.load %arg1[%c346_436] : memref<490xf32, #tpu.memory_space<smem>>
    %3140 = vector.broadcast %3139 : f32 to vector<8x128xf32>
    %3141 = arith.mulf %3140, %3037 : vector<8x128xf32>
    %3142 = arith.addf %3138, %3141 : vector<8x128xf32>
    %c347_437 = arith.constant 347 : index
    %3143 = memref.load %arg1[%c347_437] : memref<490xf32, #tpu.memory_space<smem>>
    %3144 = vector.broadcast %3143 : f32 to vector<8x128xf32>
    %3145 = arith.mulf %3144, %3067 : vector<8x128xf32>
    %3146 = arith.addf %3142, %3145 : vector<8x128xf32>
    %c348_438 = arith.constant 348 : index
    %3147 = memref.load %arg1[%c348_438] : memref<490xf32, #tpu.memory_space<smem>>
    %3148 = vector.broadcast %3147 : f32 to vector<8x128xf32>
    %3149 = arith.mulf %3148, %3097 : vector<8x128xf32>
    %3150 = arith.addf %3146, %3149 : vector<8x128xf32>
    %c349_439 = arith.constant 349 : index
    %3151 = memref.load %arg1[%c349_439] : memref<490xf32, #tpu.memory_space<smem>>
    %3152 = vector.broadcast %3151 : f32 to vector<8x128xf32>
    %3153 = arith.mulf %3152, %3127 : vector<8x128xf32>
    %3154 = arith.addf %3150, %3153 : vector<8x128xf32>
    %cst_440 = arith.constant 0.00999999977 : f32
    %3155 = vector.broadcast %cst_440 : f32 to vector<8x128xf32>
    %3156 = arith.mulf %3155, %3154 : vector<8x128xf32>
    %3157 = arith.maximumf %3154, %3156 : vector<8x128xf32>
    %c350_441 = arith.constant 350 : index
    %3158 = memref.load %arg1[%c350_441] : memref<490xf32, #tpu.memory_space<smem>>
    %3159 = vector.broadcast %3158 : f32 to vector<8x128xf32>
    %3160 = arith.mulf %3159, %2947 : vector<8x128xf32>
    %c351_442 = arith.constant 351 : index
    %3161 = memref.load %arg1[%c351_442] : memref<490xf32, #tpu.memory_space<smem>>
    %3162 = vector.broadcast %3161 : f32 to vector<8x128xf32>
    %3163 = arith.mulf %3162, %2977 : vector<8x128xf32>
    %3164 = arith.addf %3160, %3163 : vector<8x128xf32>
    %c352_443 = arith.constant 352 : index
    %3165 = memref.load %arg1[%c352_443] : memref<490xf32, #tpu.memory_space<smem>>
    %3166 = vector.broadcast %3165 : f32 to vector<8x128xf32>
    %3167 = arith.mulf %3166, %3007 : vector<8x128xf32>
    %3168 = arith.addf %3164, %3167 : vector<8x128xf32>
    %c353_444 = arith.constant 353 : index
    %3169 = memref.load %arg1[%c353_444] : memref<490xf32, #tpu.memory_space<smem>>
    %3170 = vector.broadcast %3169 : f32 to vector<8x128xf32>
    %3171 = arith.mulf %3170, %3037 : vector<8x128xf32>
    %3172 = arith.addf %3168, %3171 : vector<8x128xf32>
    %c354_445 = arith.constant 354 : index
    %3173 = memref.load %arg1[%c354_445] : memref<490xf32, #tpu.memory_space<smem>>
    %3174 = vector.broadcast %3173 : f32 to vector<8x128xf32>
    %3175 = arith.mulf %3174, %3067 : vector<8x128xf32>
    %3176 = arith.addf %3172, %3175 : vector<8x128xf32>
    %c355_446 = arith.constant 355 : index
    %3177 = memref.load %arg1[%c355_446] : memref<490xf32, #tpu.memory_space<smem>>
    %3178 = vector.broadcast %3177 : f32 to vector<8x128xf32>
    %3179 = arith.mulf %3178, %3097 : vector<8x128xf32>
    %3180 = arith.addf %3176, %3179 : vector<8x128xf32>
    %c356_447 = arith.constant 356 : index
    %3181 = memref.load %arg1[%c356_447] : memref<490xf32, #tpu.memory_space<smem>>
    %3182 = vector.broadcast %3181 : f32 to vector<8x128xf32>
    %3183 = arith.mulf %3182, %3127 : vector<8x128xf32>
    %3184 = arith.addf %3180, %3183 : vector<8x128xf32>
    %cst_448 = arith.constant 0.00999999977 : f32
    %3185 = vector.broadcast %cst_448 : f32 to vector<8x128xf32>
    %3186 = arith.mulf %3185, %3184 : vector<8x128xf32>
    %3187 = arith.maximumf %3184, %3186 : vector<8x128xf32>
    %c357_449 = arith.constant 357 : index
    %3188 = memref.load %arg1[%c357_449] : memref<490xf32, #tpu.memory_space<smem>>
    %3189 = vector.broadcast %3188 : f32 to vector<8x128xf32>
    %3190 = arith.mulf %3189, %2947 : vector<8x128xf32>
    %c358_450 = arith.constant 358 : index
    %3191 = memref.load %arg1[%c358_450] : memref<490xf32, #tpu.memory_space<smem>>
    %3192 = vector.broadcast %3191 : f32 to vector<8x128xf32>
    %3193 = arith.mulf %3192, %2977 : vector<8x128xf32>
    %3194 = arith.addf %3190, %3193 : vector<8x128xf32>
    %c359_451 = arith.constant 359 : index
    %3195 = memref.load %arg1[%c359_451] : memref<490xf32, #tpu.memory_space<smem>>
    %3196 = vector.broadcast %3195 : f32 to vector<8x128xf32>
    %3197 = arith.mulf %3196, %3007 : vector<8x128xf32>
    %3198 = arith.addf %3194, %3197 : vector<8x128xf32>
    %c360_452 = arith.constant 360 : index
    %3199 = memref.load %arg1[%c360_452] : memref<490xf32, #tpu.memory_space<smem>>
    %3200 = vector.broadcast %3199 : f32 to vector<8x128xf32>
    %3201 = arith.mulf %3200, %3037 : vector<8x128xf32>
    %3202 = arith.addf %3198, %3201 : vector<8x128xf32>
    %c361_453 = arith.constant 361 : index
    %3203 = memref.load %arg1[%c361_453] : memref<490xf32, #tpu.memory_space<smem>>
    %3204 = vector.broadcast %3203 : f32 to vector<8x128xf32>
    %3205 = arith.mulf %3204, %3067 : vector<8x128xf32>
    %3206 = arith.addf %3202, %3205 : vector<8x128xf32>
    %c362_454 = arith.constant 362 : index
    %3207 = memref.load %arg1[%c362_454] : memref<490xf32, #tpu.memory_space<smem>>
    %3208 = vector.broadcast %3207 : f32 to vector<8x128xf32>
    %3209 = arith.mulf %3208, %3097 : vector<8x128xf32>
    %3210 = arith.addf %3206, %3209 : vector<8x128xf32>
    %c363_455 = arith.constant 363 : index
    %3211 = memref.load %arg1[%c363_455] : memref<490xf32, #tpu.memory_space<smem>>
    %3212 = vector.broadcast %3211 : f32 to vector<8x128xf32>
    %3213 = arith.mulf %3212, %3127 : vector<8x128xf32>
    %3214 = arith.addf %3210, %3213 : vector<8x128xf32>
    %cst_456 = arith.constant 0.00999999977 : f32
    %3215 = vector.broadcast %cst_456 : f32 to vector<8x128xf32>
    %3216 = arith.mulf %3215, %3214 : vector<8x128xf32>
    %3217 = arith.maximumf %3214, %3216 : vector<8x128xf32>
    %c364_457 = arith.constant 364 : index
    %3218 = memref.load %arg1[%c364_457] : memref<490xf32, #tpu.memory_space<smem>>
    %3219 = vector.broadcast %3218 : f32 to vector<8x128xf32>
    %3220 = arith.mulf %3219, %2947 : vector<8x128xf32>
    %c365_458 = arith.constant 365 : index
    %3221 = memref.load %arg1[%c365_458] : memref<490xf32, #tpu.memory_space<smem>>
    %3222 = vector.broadcast %3221 : f32 to vector<8x128xf32>
    %3223 = arith.mulf %3222, %2977 : vector<8x128xf32>
    %3224 = arith.addf %3220, %3223 : vector<8x128xf32>
    %c366_459 = arith.constant 366 : index
    %3225 = memref.load %arg1[%c366_459] : memref<490xf32, #tpu.memory_space<smem>>
    %3226 = vector.broadcast %3225 : f32 to vector<8x128xf32>
    %3227 = arith.mulf %3226, %3007 : vector<8x128xf32>
    %3228 = arith.addf %3224, %3227 : vector<8x128xf32>
    %c367_460 = arith.constant 367 : index
    %3229 = memref.load %arg1[%c367_460] : memref<490xf32, #tpu.memory_space<smem>>
    %3230 = vector.broadcast %3229 : f32 to vector<8x128xf32>
    %3231 = arith.mulf %3230, %3037 : vector<8x128xf32>
    %3232 = arith.addf %3228, %3231 : vector<8x128xf32>
    %c368_461 = arith.constant 368 : index
    %3233 = memref.load %arg1[%c368_461] : memref<490xf32, #tpu.memory_space<smem>>
    %3234 = vector.broadcast %3233 : f32 to vector<8x128xf32>
    %3235 = arith.mulf %3234, %3067 : vector<8x128xf32>
    %3236 = arith.addf %3232, %3235 : vector<8x128xf32>
    %c369_462 = arith.constant 369 : index
    %3237 = memref.load %arg1[%c369_462] : memref<490xf32, #tpu.memory_space<smem>>
    %3238 = vector.broadcast %3237 : f32 to vector<8x128xf32>
    %3239 = arith.mulf %3238, %3097 : vector<8x128xf32>
    %3240 = arith.addf %3236, %3239 : vector<8x128xf32>
    %c370_463 = arith.constant 370 : index
    %3241 = memref.load %arg1[%c370_463] : memref<490xf32, #tpu.memory_space<smem>>
    %3242 = vector.broadcast %3241 : f32 to vector<8x128xf32>
    %3243 = arith.mulf %3242, %3127 : vector<8x128xf32>
    %3244 = arith.addf %3240, %3243 : vector<8x128xf32>
    %cst_464 = arith.constant 0.00999999977 : f32
    %3245 = vector.broadcast %cst_464 : f32 to vector<8x128xf32>
    %3246 = arith.mulf %3245, %3244 : vector<8x128xf32>
    %3247 = arith.maximumf %3244, %3246 : vector<8x128xf32>
    %c371_465 = arith.constant 371 : index
    %3248 = memref.load %arg1[%c371_465] : memref<490xf32, #tpu.memory_space<smem>>
    %3249 = vector.broadcast %3248 : f32 to vector<8x128xf32>
    %3250 = arith.mulf %3249, %2947 : vector<8x128xf32>
    %c372_466 = arith.constant 372 : index
    %3251 = memref.load %arg1[%c372_466] : memref<490xf32, #tpu.memory_space<smem>>
    %3252 = vector.broadcast %3251 : f32 to vector<8x128xf32>
    %3253 = arith.mulf %3252, %2977 : vector<8x128xf32>
    %3254 = arith.addf %3250, %3253 : vector<8x128xf32>
    %c373_467 = arith.constant 373 : index
    %3255 = memref.load %arg1[%c373_467] : memref<490xf32, #tpu.memory_space<smem>>
    %3256 = vector.broadcast %3255 : f32 to vector<8x128xf32>
    %3257 = arith.mulf %3256, %3007 : vector<8x128xf32>
    %3258 = arith.addf %3254, %3257 : vector<8x128xf32>
    %c374_468 = arith.constant 374 : index
    %3259 = memref.load %arg1[%c374_468] : memref<490xf32, #tpu.memory_space<smem>>
    %3260 = vector.broadcast %3259 : f32 to vector<8x128xf32>
    %3261 = arith.mulf %3260, %3037 : vector<8x128xf32>
    %3262 = arith.addf %3258, %3261 : vector<8x128xf32>
    %c375_469 = arith.constant 375 : index
    %3263 = memref.load %arg1[%c375_469] : memref<490xf32, #tpu.memory_space<smem>>
    %3264 = vector.broadcast %3263 : f32 to vector<8x128xf32>
    %3265 = arith.mulf %3264, %3067 : vector<8x128xf32>
    %3266 = arith.addf %3262, %3265 : vector<8x128xf32>
    %c376_470 = arith.constant 376 : index
    %3267 = memref.load %arg1[%c376_470] : memref<490xf32, #tpu.memory_space<smem>>
    %3268 = vector.broadcast %3267 : f32 to vector<8x128xf32>
    %3269 = arith.mulf %3268, %3097 : vector<8x128xf32>
    %3270 = arith.addf %3266, %3269 : vector<8x128xf32>
    %c377_471 = arith.constant 377 : index
    %3271 = memref.load %arg1[%c377_471] : memref<490xf32, #tpu.memory_space<smem>>
    %3272 = vector.broadcast %3271 : f32 to vector<8x128xf32>
    %3273 = arith.mulf %3272, %3127 : vector<8x128xf32>
    %3274 = arith.addf %3270, %3273 : vector<8x128xf32>
    %cst_472 = arith.constant 0.00999999977 : f32
    %3275 = vector.broadcast %cst_472 : f32 to vector<8x128xf32>
    %3276 = arith.mulf %3275, %3274 : vector<8x128xf32>
    %3277 = arith.maximumf %3274, %3276 : vector<8x128xf32>
    %c378_473 = arith.constant 378 : index
    %3278 = memref.load %arg1[%c378_473] : memref<490xf32, #tpu.memory_space<smem>>
    %3279 = vector.broadcast %3278 : f32 to vector<8x128xf32>
    %3280 = arith.mulf %3279, %2947 : vector<8x128xf32>
    %c379_474 = arith.constant 379 : index
    %3281 = memref.load %arg1[%c379_474] : memref<490xf32, #tpu.memory_space<smem>>
    %3282 = vector.broadcast %3281 : f32 to vector<8x128xf32>
    %3283 = arith.mulf %3282, %2977 : vector<8x128xf32>
    %3284 = arith.addf %3280, %3283 : vector<8x128xf32>
    %c380_475 = arith.constant 380 : index
    %3285 = memref.load %arg1[%c380_475] : memref<490xf32, #tpu.memory_space<smem>>
    %3286 = vector.broadcast %3285 : f32 to vector<8x128xf32>
    %3287 = arith.mulf %3286, %3007 : vector<8x128xf32>
    %3288 = arith.addf %3284, %3287 : vector<8x128xf32>
    %c381_476 = arith.constant 381 : index
    %3289 = memref.load %arg1[%c381_476] : memref<490xf32, #tpu.memory_space<smem>>
    %3290 = vector.broadcast %3289 : f32 to vector<8x128xf32>
    %3291 = arith.mulf %3290, %3037 : vector<8x128xf32>
    %3292 = arith.addf %3288, %3291 : vector<8x128xf32>
    %c382_477 = arith.constant 382 : index
    %3293 = memref.load %arg1[%c382_477] : memref<490xf32, #tpu.memory_space<smem>>
    %3294 = vector.broadcast %3293 : f32 to vector<8x128xf32>
    %3295 = arith.mulf %3294, %3067 : vector<8x128xf32>
    %3296 = arith.addf %3292, %3295 : vector<8x128xf32>
    %c383_478 = arith.constant 383 : index
    %3297 = memref.load %arg1[%c383_478] : memref<490xf32, #tpu.memory_space<smem>>
    %3298 = vector.broadcast %3297 : f32 to vector<8x128xf32>
    %3299 = arith.mulf %3298, %3097 : vector<8x128xf32>
    %3300 = arith.addf %3296, %3299 : vector<8x128xf32>
    %c384_479 = arith.constant 384 : index
    %3301 = memref.load %arg1[%c384_479] : memref<490xf32, #tpu.memory_space<smem>>
    %3302 = vector.broadcast %3301 : f32 to vector<8x128xf32>
    %3303 = arith.mulf %3302, %3127 : vector<8x128xf32>
    %3304 = arith.addf %3300, %3303 : vector<8x128xf32>
    %cst_480 = arith.constant 0.00999999977 : f32
    %3305 = vector.broadcast %cst_480 : f32 to vector<8x128xf32>
    %3306 = arith.mulf %3305, %3304 : vector<8x128xf32>
    %3307 = arith.maximumf %3304, %3306 : vector<8x128xf32>
    %c385_481 = arith.constant 385 : index
    %3308 = memref.load %arg1[%c385_481] : memref<490xf32, #tpu.memory_space<smem>>
    %3309 = vector.broadcast %3308 : f32 to vector<8x128xf32>
    %3310 = arith.mulf %3309, %2947 : vector<8x128xf32>
    %c386_482 = arith.constant 386 : index
    %3311 = memref.load %arg1[%c386_482] : memref<490xf32, #tpu.memory_space<smem>>
    %3312 = vector.broadcast %3311 : f32 to vector<8x128xf32>
    %3313 = arith.mulf %3312, %2977 : vector<8x128xf32>
    %3314 = arith.addf %3310, %3313 : vector<8x128xf32>
    %c387_483 = arith.constant 387 : index
    %3315 = memref.load %arg1[%c387_483] : memref<490xf32, #tpu.memory_space<smem>>
    %3316 = vector.broadcast %3315 : f32 to vector<8x128xf32>
    %3317 = arith.mulf %3316, %3007 : vector<8x128xf32>
    %3318 = arith.addf %3314, %3317 : vector<8x128xf32>
    %c388_484 = arith.constant 388 : index
    %3319 = memref.load %arg1[%c388_484] : memref<490xf32, #tpu.memory_space<smem>>
    %3320 = vector.broadcast %3319 : f32 to vector<8x128xf32>
    %3321 = arith.mulf %3320, %3037 : vector<8x128xf32>
    %3322 = arith.addf %3318, %3321 : vector<8x128xf32>
    %c389_485 = arith.constant 389 : index
    %3323 = memref.load %arg1[%c389_485] : memref<490xf32, #tpu.memory_space<smem>>
    %3324 = vector.broadcast %3323 : f32 to vector<8x128xf32>
    %3325 = arith.mulf %3324, %3067 : vector<8x128xf32>
    %3326 = arith.addf %3322, %3325 : vector<8x128xf32>
    %c390_486 = arith.constant 390 : index
    %3327 = memref.load %arg1[%c390_486] : memref<490xf32, #tpu.memory_space<smem>>
    %3328 = vector.broadcast %3327 : f32 to vector<8x128xf32>
    %3329 = arith.mulf %3328, %3097 : vector<8x128xf32>
    %3330 = arith.addf %3326, %3329 : vector<8x128xf32>
    %c391_487 = arith.constant 391 : index
    %3331 = memref.load %arg1[%c391_487] : memref<490xf32, #tpu.memory_space<smem>>
    %3332 = vector.broadcast %3331 : f32 to vector<8x128xf32>
    %3333 = arith.mulf %3332, %3127 : vector<8x128xf32>
    %3334 = arith.addf %3330, %3333 : vector<8x128xf32>
    %cst_488 = arith.constant 0.00999999977 : f32
    %3335 = vector.broadcast %cst_488 : f32 to vector<8x128xf32>
    %3336 = arith.mulf %3335, %3334 : vector<8x128xf32>
    %3337 = arith.maximumf %3334, %3336 : vector<8x128xf32>
    %c392_489 = arith.constant 392 : index
    %3338 = memref.load %arg1[%c392_489] : memref<490xf32, #tpu.memory_space<smem>>
    %3339 = vector.broadcast %3338 : f32 to vector<8x128xf32>
    %3340 = arith.mulf %3339, %3157 : vector<8x128xf32>
    %c393_490 = arith.constant 393 : index
    %3341 = memref.load %arg1[%c393_490] : memref<490xf32, #tpu.memory_space<smem>>
    %3342 = vector.broadcast %3341 : f32 to vector<8x128xf32>
    %3343 = arith.mulf %3342, %3187 : vector<8x128xf32>
    %3344 = arith.addf %3340, %3343 : vector<8x128xf32>
    %c394_491 = arith.constant 394 : index
    %3345 = memref.load %arg1[%c394_491] : memref<490xf32, #tpu.memory_space<smem>>
    %3346 = vector.broadcast %3345 : f32 to vector<8x128xf32>
    %3347 = arith.mulf %3346, %3217 : vector<8x128xf32>
    %3348 = arith.addf %3344, %3347 : vector<8x128xf32>
    %c395_492 = arith.constant 395 : index
    %3349 = memref.load %arg1[%c395_492] : memref<490xf32, #tpu.memory_space<smem>>
    %3350 = vector.broadcast %3349 : f32 to vector<8x128xf32>
    %3351 = arith.mulf %3350, %3247 : vector<8x128xf32>
    %3352 = arith.addf %3348, %3351 : vector<8x128xf32>
    %c396_493 = arith.constant 396 : index
    %3353 = memref.load %arg1[%c396_493] : memref<490xf32, #tpu.memory_space<smem>>
    %3354 = vector.broadcast %3353 : f32 to vector<8x128xf32>
    %3355 = arith.mulf %3354, %3277 : vector<8x128xf32>
    %3356 = arith.addf %3352, %3355 : vector<8x128xf32>
    %c397_494 = arith.constant 397 : index
    %3357 = memref.load %arg1[%c397_494] : memref<490xf32, #tpu.memory_space<smem>>
    %3358 = vector.broadcast %3357 : f32 to vector<8x128xf32>
    %3359 = arith.mulf %3358, %3307 : vector<8x128xf32>
    %3360 = arith.addf %3356, %3359 : vector<8x128xf32>
    %c398_495 = arith.constant 398 : index
    %3361 = memref.load %arg1[%c398_495] : memref<490xf32, #tpu.memory_space<smem>>
    %3362 = vector.broadcast %3361 : f32 to vector<8x128xf32>
    %3363 = arith.mulf %3362, %3337 : vector<8x128xf32>
    %3364 = arith.addf %3360, %3363 : vector<8x128xf32>
    %cst_496 = arith.constant 0.00999999977 : f32
    %3365 = vector.broadcast %cst_496 : f32 to vector<8x128xf32>
    %3366 = arith.mulf %3365, %3364 : vector<8x128xf32>
    %3367 = arith.maximumf %3364, %3366 : vector<8x128xf32>
    %c399_497 = arith.constant 399 : index
    %3368 = memref.load %arg1[%c399_497] : memref<490xf32, #tpu.memory_space<smem>>
    %3369 = vector.broadcast %3368 : f32 to vector<8x128xf32>
    %3370 = arith.mulf %3369, %3157 : vector<8x128xf32>
    %c400_498 = arith.constant 400 : index
    %3371 = memref.load %arg1[%c400_498] : memref<490xf32, #tpu.memory_space<smem>>
    %3372 = vector.broadcast %3371 : f32 to vector<8x128xf32>
    %3373 = arith.mulf %3372, %3187 : vector<8x128xf32>
    %3374 = arith.addf %3370, %3373 : vector<8x128xf32>
    %c401_499 = arith.constant 401 : index
    %3375 = memref.load %arg1[%c401_499] : memref<490xf32, #tpu.memory_space<smem>>
    %3376 = vector.broadcast %3375 : f32 to vector<8x128xf32>
    %3377 = arith.mulf %3376, %3217 : vector<8x128xf32>
    %3378 = arith.addf %3374, %3377 : vector<8x128xf32>
    %c402_500 = arith.constant 402 : index
    %3379 = memref.load %arg1[%c402_500] : memref<490xf32, #tpu.memory_space<smem>>
    %3380 = vector.broadcast %3379 : f32 to vector<8x128xf32>
    %3381 = arith.mulf %3380, %3247 : vector<8x128xf32>
    %3382 = arith.addf %3378, %3381 : vector<8x128xf32>
    %c403_501 = arith.constant 403 : index
    %3383 = memref.load %arg1[%c403_501] : memref<490xf32, #tpu.memory_space<smem>>
    %3384 = vector.broadcast %3383 : f32 to vector<8x128xf32>
    %3385 = arith.mulf %3384, %3277 : vector<8x128xf32>
    %3386 = arith.addf %3382, %3385 : vector<8x128xf32>
    %c404_502 = arith.constant 404 : index
    %3387 = memref.load %arg1[%c404_502] : memref<490xf32, #tpu.memory_space<smem>>
    %3388 = vector.broadcast %3387 : f32 to vector<8x128xf32>
    %3389 = arith.mulf %3388, %3307 : vector<8x128xf32>
    %3390 = arith.addf %3386, %3389 : vector<8x128xf32>
    %c405_503 = arith.constant 405 : index
    %3391 = memref.load %arg1[%c405_503] : memref<490xf32, #tpu.memory_space<smem>>
    %3392 = vector.broadcast %3391 : f32 to vector<8x128xf32>
    %3393 = arith.mulf %3392, %3337 : vector<8x128xf32>
    %3394 = arith.addf %3390, %3393 : vector<8x128xf32>
    %cst_504 = arith.constant 0.00999999977 : f32
    %3395 = vector.broadcast %cst_504 : f32 to vector<8x128xf32>
    %3396 = arith.mulf %3395, %3394 : vector<8x128xf32>
    %3397 = arith.maximumf %3394, %3396 : vector<8x128xf32>
    %c406_505 = arith.constant 406 : index
    %3398 = memref.load %arg1[%c406_505] : memref<490xf32, #tpu.memory_space<smem>>
    %3399 = vector.broadcast %3398 : f32 to vector<8x128xf32>
    %3400 = arith.mulf %3399, %3157 : vector<8x128xf32>
    %c407_506 = arith.constant 407 : index
    %3401 = memref.load %arg1[%c407_506] : memref<490xf32, #tpu.memory_space<smem>>
    %3402 = vector.broadcast %3401 : f32 to vector<8x128xf32>
    %3403 = arith.mulf %3402, %3187 : vector<8x128xf32>
    %3404 = arith.addf %3400, %3403 : vector<8x128xf32>
    %c408_507 = arith.constant 408 : index
    %3405 = memref.load %arg1[%c408_507] : memref<490xf32, #tpu.memory_space<smem>>
    %3406 = vector.broadcast %3405 : f32 to vector<8x128xf32>
    %3407 = arith.mulf %3406, %3217 : vector<8x128xf32>
    %3408 = arith.addf %3404, %3407 : vector<8x128xf32>
    %c409_508 = arith.constant 409 : index
    %3409 = memref.load %arg1[%c409_508] : memref<490xf32, #tpu.memory_space<smem>>
    %3410 = vector.broadcast %3409 : f32 to vector<8x128xf32>
    %3411 = arith.mulf %3410, %3247 : vector<8x128xf32>
    %3412 = arith.addf %3408, %3411 : vector<8x128xf32>
    %c410_509 = arith.constant 410 : index
    %3413 = memref.load %arg1[%c410_509] : memref<490xf32, #tpu.memory_space<smem>>
    %3414 = vector.broadcast %3413 : f32 to vector<8x128xf32>
    %3415 = arith.mulf %3414, %3277 : vector<8x128xf32>
    %3416 = arith.addf %3412, %3415 : vector<8x128xf32>
    %c411_510 = arith.constant 411 : index
    %3417 = memref.load %arg1[%c411_510] : memref<490xf32, #tpu.memory_space<smem>>
    %3418 = vector.broadcast %3417 : f32 to vector<8x128xf32>
    %3419 = arith.mulf %3418, %3307 : vector<8x128xf32>
    %3420 = arith.addf %3416, %3419 : vector<8x128xf32>
    %c412_511 = arith.constant 412 : index
    %3421 = memref.load %arg1[%c412_511] : memref<490xf32, #tpu.memory_space<smem>>
    %3422 = vector.broadcast %3421 : f32 to vector<8x128xf32>
    %3423 = arith.mulf %3422, %3337 : vector<8x128xf32>
    %3424 = arith.addf %3420, %3423 : vector<8x128xf32>
    %cst_512 = arith.constant 0.00999999977 : f32
    %3425 = vector.broadcast %cst_512 : f32 to vector<8x128xf32>
    %3426 = arith.mulf %3425, %3424 : vector<8x128xf32>
    %3427 = arith.maximumf %3424, %3426 : vector<8x128xf32>
    %c413_513 = arith.constant 413 : index
    %3428 = memref.load %arg1[%c413_513] : memref<490xf32, #tpu.memory_space<smem>>
    %3429 = vector.broadcast %3428 : f32 to vector<8x128xf32>
    %3430 = arith.mulf %3429, %3157 : vector<8x128xf32>
    %c414_514 = arith.constant 414 : index
    %3431 = memref.load %arg1[%c414_514] : memref<490xf32, #tpu.memory_space<smem>>
    %3432 = vector.broadcast %3431 : f32 to vector<8x128xf32>
    %3433 = arith.mulf %3432, %3187 : vector<8x128xf32>
    %3434 = arith.addf %3430, %3433 : vector<8x128xf32>
    %c415_515 = arith.constant 415 : index
    %3435 = memref.load %arg1[%c415_515] : memref<490xf32, #tpu.memory_space<smem>>
    %3436 = vector.broadcast %3435 : f32 to vector<8x128xf32>
    %3437 = arith.mulf %3436, %3217 : vector<8x128xf32>
    %3438 = arith.addf %3434, %3437 : vector<8x128xf32>
    %c416_516 = arith.constant 416 : index
    %3439 = memref.load %arg1[%c416_516] : memref<490xf32, #tpu.memory_space<smem>>
    %3440 = vector.broadcast %3439 : f32 to vector<8x128xf32>
    %3441 = arith.mulf %3440, %3247 : vector<8x128xf32>
    %3442 = arith.addf %3438, %3441 : vector<8x128xf32>
    %c417_517 = arith.constant 417 : index
    %3443 = memref.load %arg1[%c417_517] : memref<490xf32, #tpu.memory_space<smem>>
    %3444 = vector.broadcast %3443 : f32 to vector<8x128xf32>
    %3445 = arith.mulf %3444, %3277 : vector<8x128xf32>
    %3446 = arith.addf %3442, %3445 : vector<8x128xf32>
    %c418_518 = arith.constant 418 : index
    %3447 = memref.load %arg1[%c418_518] : memref<490xf32, #tpu.memory_space<smem>>
    %3448 = vector.broadcast %3447 : f32 to vector<8x128xf32>
    %3449 = arith.mulf %3448, %3307 : vector<8x128xf32>
    %3450 = arith.addf %3446, %3449 : vector<8x128xf32>
    %c419_519 = arith.constant 419 : index
    %3451 = memref.load %arg1[%c419_519] : memref<490xf32, #tpu.memory_space<smem>>
    %3452 = vector.broadcast %3451 : f32 to vector<8x128xf32>
    %3453 = arith.mulf %3452, %3337 : vector<8x128xf32>
    %3454 = arith.addf %3450, %3453 : vector<8x128xf32>
    %cst_520 = arith.constant 0.00999999977 : f32
    %3455 = vector.broadcast %cst_520 : f32 to vector<8x128xf32>
    %3456 = arith.mulf %3455, %3454 : vector<8x128xf32>
    %3457 = arith.maximumf %3454, %3456 : vector<8x128xf32>
    %c420_521 = arith.constant 420 : index
    %3458 = memref.load %arg1[%c420_521] : memref<490xf32, #tpu.memory_space<smem>>
    %3459 = vector.broadcast %3458 : f32 to vector<8x128xf32>
    %3460 = arith.mulf %3459, %3157 : vector<8x128xf32>
    %c421_522 = arith.constant 421 : index
    %3461 = memref.load %arg1[%c421_522] : memref<490xf32, #tpu.memory_space<smem>>
    %3462 = vector.broadcast %3461 : f32 to vector<8x128xf32>
    %3463 = arith.mulf %3462, %3187 : vector<8x128xf32>
    %3464 = arith.addf %3460, %3463 : vector<8x128xf32>
    %c422_523 = arith.constant 422 : index
    %3465 = memref.load %arg1[%c422_523] : memref<490xf32, #tpu.memory_space<smem>>
    %3466 = vector.broadcast %3465 : f32 to vector<8x128xf32>
    %3467 = arith.mulf %3466, %3217 : vector<8x128xf32>
    %3468 = arith.addf %3464, %3467 : vector<8x128xf32>
    %c423_524 = arith.constant 423 : index
    %3469 = memref.load %arg1[%c423_524] : memref<490xf32, #tpu.memory_space<smem>>
    %3470 = vector.broadcast %3469 : f32 to vector<8x128xf32>
    %3471 = arith.mulf %3470, %3247 : vector<8x128xf32>
    %3472 = arith.addf %3468, %3471 : vector<8x128xf32>
    %c424_525 = arith.constant 424 : index
    %3473 = memref.load %arg1[%c424_525] : memref<490xf32, #tpu.memory_space<smem>>
    %3474 = vector.broadcast %3473 : f32 to vector<8x128xf32>
    %3475 = arith.mulf %3474, %3277 : vector<8x128xf32>
    %3476 = arith.addf %3472, %3475 : vector<8x128xf32>
    %c425_526 = arith.constant 425 : index
    %3477 = memref.load %arg1[%c425_526] : memref<490xf32, #tpu.memory_space<smem>>
    %3478 = vector.broadcast %3477 : f32 to vector<8x128xf32>
    %3479 = arith.mulf %3478, %3307 : vector<8x128xf32>
    %3480 = arith.addf %3476, %3479 : vector<8x128xf32>
    %c426_527 = arith.constant 426 : index
    %3481 = memref.load %arg1[%c426_527] : memref<490xf32, #tpu.memory_space<smem>>
    %3482 = vector.broadcast %3481 : f32 to vector<8x128xf32>
    %3483 = arith.mulf %3482, %3337 : vector<8x128xf32>
    %3484 = arith.addf %3480, %3483 : vector<8x128xf32>
    %cst_528 = arith.constant 0.00999999977 : f32
    %3485 = vector.broadcast %cst_528 : f32 to vector<8x128xf32>
    %3486 = arith.mulf %3485, %3484 : vector<8x128xf32>
    %3487 = arith.maximumf %3484, %3486 : vector<8x128xf32>
    %c427_529 = arith.constant 427 : index
    %3488 = memref.load %arg1[%c427_529] : memref<490xf32, #tpu.memory_space<smem>>
    %3489 = vector.broadcast %3488 : f32 to vector<8x128xf32>
    %3490 = arith.mulf %3489, %3157 : vector<8x128xf32>
    %c428_530 = arith.constant 428 : index
    %3491 = memref.load %arg1[%c428_530] : memref<490xf32, #tpu.memory_space<smem>>
    %3492 = vector.broadcast %3491 : f32 to vector<8x128xf32>
    %3493 = arith.mulf %3492, %3187 : vector<8x128xf32>
    %3494 = arith.addf %3490, %3493 : vector<8x128xf32>
    %c429_531 = arith.constant 429 : index
    %3495 = memref.load %arg1[%c429_531] : memref<490xf32, #tpu.memory_space<smem>>
    %3496 = vector.broadcast %3495 : f32 to vector<8x128xf32>
    %3497 = arith.mulf %3496, %3217 : vector<8x128xf32>
    %3498 = arith.addf %3494, %3497 : vector<8x128xf32>
    %c430_532 = arith.constant 430 : index
    %3499 = memref.load %arg1[%c430_532] : memref<490xf32, #tpu.memory_space<smem>>
    %3500 = vector.broadcast %3499 : f32 to vector<8x128xf32>
    %3501 = arith.mulf %3500, %3247 : vector<8x128xf32>
    %3502 = arith.addf %3498, %3501 : vector<8x128xf32>
    %c431_533 = arith.constant 431 : index
    %3503 = memref.load %arg1[%c431_533] : memref<490xf32, #tpu.memory_space<smem>>
    %3504 = vector.broadcast %3503 : f32 to vector<8x128xf32>
    %3505 = arith.mulf %3504, %3277 : vector<8x128xf32>
    %3506 = arith.addf %3502, %3505 : vector<8x128xf32>
    %c432_534 = arith.constant 432 : index
    %3507 = memref.load %arg1[%c432_534] : memref<490xf32, #tpu.memory_space<smem>>
    %3508 = vector.broadcast %3507 : f32 to vector<8x128xf32>
    %3509 = arith.mulf %3508, %3307 : vector<8x128xf32>
    %3510 = arith.addf %3506, %3509 : vector<8x128xf32>
    %c433_535 = arith.constant 433 : index
    %3511 = memref.load %arg1[%c433_535] : memref<490xf32, #tpu.memory_space<smem>>
    %3512 = vector.broadcast %3511 : f32 to vector<8x128xf32>
    %3513 = arith.mulf %3512, %3337 : vector<8x128xf32>
    %3514 = arith.addf %3510, %3513 : vector<8x128xf32>
    %cst_536 = arith.constant 0.00999999977 : f32
    %3515 = vector.broadcast %cst_536 : f32 to vector<8x128xf32>
    %3516 = arith.mulf %3515, %3514 : vector<8x128xf32>
    %3517 = arith.maximumf %3514, %3516 : vector<8x128xf32>
    %c434_537 = arith.constant 434 : index
    %3518 = memref.load %arg1[%c434_537] : memref<490xf32, #tpu.memory_space<smem>>
    %3519 = vector.broadcast %3518 : f32 to vector<8x128xf32>
    %3520 = arith.mulf %3519, %3157 : vector<8x128xf32>
    %c435_538 = arith.constant 435 : index
    %3521 = memref.load %arg1[%c435_538] : memref<490xf32, #tpu.memory_space<smem>>
    %3522 = vector.broadcast %3521 : f32 to vector<8x128xf32>
    %3523 = arith.mulf %3522, %3187 : vector<8x128xf32>
    %3524 = arith.addf %3520, %3523 : vector<8x128xf32>
    %c436_539 = arith.constant 436 : index
    %3525 = memref.load %arg1[%c436_539] : memref<490xf32, #tpu.memory_space<smem>>
    %3526 = vector.broadcast %3525 : f32 to vector<8x128xf32>
    %3527 = arith.mulf %3526, %3217 : vector<8x128xf32>
    %3528 = arith.addf %3524, %3527 : vector<8x128xf32>
    %c437_540 = arith.constant 437 : index
    %3529 = memref.load %arg1[%c437_540] : memref<490xf32, #tpu.memory_space<smem>>
    %3530 = vector.broadcast %3529 : f32 to vector<8x128xf32>
    %3531 = arith.mulf %3530, %3247 : vector<8x128xf32>
    %3532 = arith.addf %3528, %3531 : vector<8x128xf32>
    %c438_541 = arith.constant 438 : index
    %3533 = memref.load %arg1[%c438_541] : memref<490xf32, #tpu.memory_space<smem>>
    %3534 = vector.broadcast %3533 : f32 to vector<8x128xf32>
    %3535 = arith.mulf %3534, %3277 : vector<8x128xf32>
    %3536 = arith.addf %3532, %3535 : vector<8x128xf32>
    %c439_542 = arith.constant 439 : index
    %3537 = memref.load %arg1[%c439_542] : memref<490xf32, #tpu.memory_space<smem>>
    %3538 = vector.broadcast %3537 : f32 to vector<8x128xf32>
    %3539 = arith.mulf %3538, %3307 : vector<8x128xf32>
    %3540 = arith.addf %3536, %3539 : vector<8x128xf32>
    %c440_543 = arith.constant 440 : index
    %3541 = memref.load %arg1[%c440_543] : memref<490xf32, #tpu.memory_space<smem>>
    %3542 = vector.broadcast %3541 : f32 to vector<8x128xf32>
    %3543 = arith.mulf %3542, %3337 : vector<8x128xf32>
    %3544 = arith.addf %3540, %3543 : vector<8x128xf32>
    %cst_544 = arith.constant 0.00999999977 : f32
    %3545 = vector.broadcast %cst_544 : f32 to vector<8x128xf32>
    %3546 = arith.mulf %3545, %3544 : vector<8x128xf32>
    %3547 = arith.maximumf %3544, %3546 : vector<8x128xf32>
    %c441_545 = arith.constant 441 : index
    %3548 = memref.load %arg1[%c441_545] : memref<490xf32, #tpu.memory_space<smem>>
    %3549 = vector.broadcast %3548 : f32 to vector<8x128xf32>
    %3550 = arith.mulf %3549, %3367 : vector<8x128xf32>
    %c442_546 = arith.constant 442 : index
    %3551 = memref.load %arg1[%c442_546] : memref<490xf32, #tpu.memory_space<smem>>
    %3552 = vector.broadcast %3551 : f32 to vector<8x128xf32>
    %3553 = arith.mulf %3552, %3397 : vector<8x128xf32>
    %3554 = arith.addf %3550, %3553 : vector<8x128xf32>
    %c443_547 = arith.constant 443 : index
    %3555 = memref.load %arg1[%c443_547] : memref<490xf32, #tpu.memory_space<smem>>
    %3556 = vector.broadcast %3555 : f32 to vector<8x128xf32>
    %3557 = arith.mulf %3556, %3427 : vector<8x128xf32>
    %3558 = arith.addf %3554, %3557 : vector<8x128xf32>
    %c444_548 = arith.constant 444 : index
    %3559 = memref.load %arg1[%c444_548] : memref<490xf32, #tpu.memory_space<smem>>
    %3560 = vector.broadcast %3559 : f32 to vector<8x128xf32>
    %3561 = arith.mulf %3560, %3457 : vector<8x128xf32>
    %3562 = arith.addf %3558, %3561 : vector<8x128xf32>
    %c445_549 = arith.constant 445 : index
    %3563 = memref.load %arg1[%c445_549] : memref<490xf32, #tpu.memory_space<smem>>
    %3564 = vector.broadcast %3563 : f32 to vector<8x128xf32>
    %3565 = arith.mulf %3564, %3487 : vector<8x128xf32>
    %3566 = arith.addf %3562, %3565 : vector<8x128xf32>
    %c446_550 = arith.constant 446 : index
    %3567 = memref.load %arg1[%c446_550] : memref<490xf32, #tpu.memory_space<smem>>
    %3568 = vector.broadcast %3567 : f32 to vector<8x128xf32>
    %3569 = arith.mulf %3568, %3517 : vector<8x128xf32>
    %3570 = arith.addf %3566, %3569 : vector<8x128xf32>
    %c447_551 = arith.constant 447 : index
    %3571 = memref.load %arg1[%c447_551] : memref<490xf32, #tpu.memory_space<smem>>
    %3572 = vector.broadcast %3571 : f32 to vector<8x128xf32>
    %3573 = arith.mulf %3572, %3547 : vector<8x128xf32>
    %3574 = arith.addf %3570, %3573 : vector<8x128xf32>
    %cst_552 = arith.constant 0.00999999977 : f32
    %3575 = vector.broadcast %cst_552 : f32 to vector<8x128xf32>
    %3576 = arith.mulf %3575, %3574 : vector<8x128xf32>
    %3577 = arith.maximumf %3574, %3576 : vector<8x128xf32>
    %c0_553 = arith.constant 0 : index
    %c16_554 = arith.constant 16 : index
    %c0_555 = arith.constant 0 : index
    %3578 = vector.load %arg3[%c0_553, %c16_554, %c0_555] : memref<1x24x128xf32, #tpu.memory_space<vmem>>, vector<1x8x128xf32>
    %3579 = vector.shape_cast %3578 : vector<1x8x128xf32> to vector<8x128xf32>
    %3580 = vector.shape_cast %3577 : vector<8x128xf32> to vector<1x8x128xf32>
    tpu.vector_store %arg3[%c0_553, %c16_554, %c0_555], %3580 {strides = array<i32>} : memref<1x24x128xf32, #tpu.memory_space<vmem>>, vector<1x8x128xf32>,
    return
  }
  func.func @transform_0(%arg0: i32, %arg1: memref<490xf32, #tpu.memory_space<smem>>) -> (i32, i32, i32) {
    %c0_i32 = arith.constant 0 : i32
    %c0_i32_0 = arith.constant 0 : i32
    %c0_i32_1 = arith.constant 0 : i32
    return %c0_i32, %arg0, %c0_i32_0 : i32, i32, i32
  }
  func.func @transform_1(%arg0: i32, %arg1: memref<490xf32, #tpu.memory_space<smem>>) -> (i32, i32, i32) {
    %c0_i32 = arith.constant 0 : i32
    %c0_i32_0 = arith.constant 0 : i32
    %c0_i32_1 = arith.constant 0 : i32
    return %c0_i32, %arg0, %c0_i32_0 : i32, i32, i32
  }
}

</mosaic_0001>

<llo_original>
// kernel: tpu_custom_call.1
$region0: #{tpu_custom_call.1}
  #allocation0 [shape = 'u32[]', space=smem, size = 0x4, offset = 0x4, fixed_abs, tag = 'smem constant byte address 0x4 - core index']
  #allocation1 [shape = 'u32[72,128]{1,0:T(1,128)}', space=vmem, size = 0x9000, scoped, tag = 'internal scratch']
  #allocation2 [shape = 's32[1]{0}', space=sflag, size = 0x4, scoped, tag = 'scoped memory for tpu_custom_call.1']
  #allocation3 [shape = 'u8[2048]{0}', space=smem, size = 0x800, scoped, tag = 'prefetched SMEM operand 0']
  #allocation8 [shape = 's32[]', space=sflag, size = 0x4, offset = 0, fixed_abs, tag = 'sflag constant byte address 0x0 - dummy sync flag']
  %s0 = inlined_call_operand.hbm [shape: f32[490], index: 0, kind: input, shape index: {}]
  %s1 = inlined_call_operand.hbm [shape: f32[2,48,128], index: 1, kind: input, shape index: {}]
  %s2 = inlined_call_operand.hbm [shape: f32[1,48,128], index: 2, kind: output, shape index: {}]
  %s3 = sld [smem:[#allocation0]]
  $region41: #{tpu_custom_call.1} parent=0
    _
  %s5 = ssub.s32 1, %s3
  %s6 = scalar_select 0, %s5, %s3
  %s8 = sshll.u32 %s0, 4
  %s9 = int_to_ptr.hbm [resolvable:$true] %s8
  %11 = dma.hbm_to_smem %s9, 64, [#allocation3], [#allocation2]
  %13 = dma.done [#allocation2], 64
  %14 = sfence
  $region1: #{tpu_custom_call.1} parent=0
    #allocation4 [shape = 'u8[49152]{0}', space=vmem, size = 0xc000, scoped, tag = 'input window, operand 1']
    #allocation5 [shape = 's32[2]{0}', space=sflag, size = 0x8, scoped, tag = 'scoped memory for tpu_custom_call.1']
    #allocation6 [shape = 's32[2]{0}', space=sflag, size = 0x8, scoped, tag = 'scoped memory for tpu_custom_call.1']
    #allocation7 [shape = 'u8[24576]{0}', space=vmem, size = 0x6000, scoped, tag = 'output window, operand 0']
    %15 = vsyncpa [#allocation5], 0
    %s16 = scalar_lea.sflag [#allocation5], 1
    %17 = vsyncpa %s16, 0
    %18 = vsyncpa [#allocation6], 0
    %s19 = scalar_lea.sflag [#allocation6], 1
    %20 = vsyncpa %s19, 0
    loop: start=0, step=1, limit=4
    $region2: #{tpu_custom_call.1} parent=1 // loop_pre_header
      _
    $region3: #{tpu_custom_call.1} parent=1 // loop_header
      %s22 = sphi 0, %s26
      %p23 = scmp.ge.s32.totalorder %s22, 4
      %s32 = sphi 0, %s34
      %s35 = sphi 0, %s32
      %s36 = sphi 0, %s35
      %s52 = sphi 0, %s36
      %s58 = sphi 0, %s60
      %s61 = sphi 0, %s58
      %s62 = sphi 0, %s61
      %s78 = sphi 0, %s62
    $region4: #{tpu_custom_call.1} parent=1 // loop_header_branch
      %25 = sbr.rel (%p23) target = $region8
    $region5: #{tpu_custom_call.1} parent=1 // loop_body
      %s27 = ssub.s32 %s22, 1
      %s28 = ssub.s32 %s22, 2
      %s29 = sadd.s32 %s22, 1
      %s30 = ssub.s32 %s22, %s29
      %p31 = scmp.eq.s32.totalorder %s30, 0
      %s33 = sadd.s32 %s32, 1
      %s34 = scalar_select %p31, %s32, %s33
      %p37 = pneg %p31
      %p38 = scmp.eq.s32.totalorder %s22, 1
      %p39 = por %p37, %p38
      %p40 = scmp.ne.s32.totalorder %s32, %s35
      %p41 = scmp.eq.s32.totalorder %s22, 0
      %p42 = por %p40, %p41
      %p43 = scmp.ne.s32.totalorder %s32, %s35
      %p44 = scmp.eq.s32.totalorder %s27, 1
      %p45 = por %p43, %p44
      %p46 = scmp.ne.s32.totalorder %s35, %s36
      %p47 = scmp.eq.s32.totalorder %s27, 0
      %p48 = por %p46, %p47
      %p49 = scmp.ne.s32.totalorder %s35, %s36
      %p50 = scmp.eq.s32.totalorder %s28, 1
      %p51 = por %p49, %p50
      %p53 = scmp.ne.s32.totalorder %s36, %s52
      %p54 = scmp.eq.s32.totalorder %s28, 0
      %p55 = por %p53, %p54
      %s56 = ssub.s32 %s22, %s29
      %p57 = scmp.eq.s32.totalorder %s56, 0
      %s59 = sadd.s32 %s58, 1
      %s60 = scalar_select %p57, %s58, %s59
      %p63 = pneg %p57
      %p64 = scmp.eq.s32.totalorder %s22, 1
      %p65 = por %p63, %p64
      %p66 = scmp.ne.s32.totalorder %s58, %s61
      %p67 = scmp.eq.s32.totalorder %s22, 0
      %p68 = por %p66, %p67
      %p69 = scmp.ne.s32.totalorder %s58, %s61
      %p70 = scmp.eq.s32.totalorder %s27, 1
      %p71 = por %p69, %p70
      %p72 = scmp.ne.s32.totalorder %s61, %s62
      %p73 = scmp.eq.s32.totalorder %s27, 0
      %p74 = por %p72, %p73
      %p75 = scmp.ne.s32.totalorder %s61, %s62
      %p76 = scmp.eq.s32.totalorder %s28, 1
      %p77 = por %p75, %p76
      %p79 = scmp.ne.s32.totalorder %s62, %s78
      %p80 = scmp.eq.s32.totalorder %s28, 0
      %p81 = por %p79, %p80
      %p82 = scmp.le.s32.totalorder 1, %s22
      %p83 = scmp.lt.s32.totalorder %s22, 3
      %p84 = pnand %p82, %p83
      %p85 = pneg %p84
      // Predicated region
      $region9: #{tpu_custom_call.1} parent=5 // pred_check
        _
      $region10: #{tpu_custom_call.1} parent=5 // pred_check_branch
        %87 = sbr.rel (%p84) target = $region12
      $region11: #{tpu_custom_call.1} parent=5 // pred_region
        %s88 = ssub.s32 %s22, 1
      $region12: #{tpu_custom_call.1} parent=5 // pred_fallthru
        _
      %p89 = scmp.lt.s32.totalorder %s22, 2
      // Predicated region
      $region13: #{tpu_custom_call.1} parent=5 // pred_check
        %p90 = pneg %p89
      $region14: #{tpu_custom_call.1} parent=5 // pred_check_branch
        %92 = sbr.rel (%p90) target = $region16
      $region15: #{tpu_custom_call.1} parent=5 // pred_region
        // Predicated region
        $region17: #{tpu_custom_call.1} parent=15 // pred_check
          %p93 = pneg %p42
        $region18: #{tpu_custom_call.1} parent=15 // pred_check_branch
          %95 = sbr.rel (%p93) target = $region20
        $region19: #{tpu_custom_call.1} parent=15 // pred_region
          #allocation9 [shape = 'u32[6]{0}', space=smem, size = 0x18, scoped, tag = 'DMA stride descriptor']
          %s96 = sand.u32 %s32, 1
          %s97 = scalar_lea.sflag [#allocation5], %s96
          %s98 = sand.u32 %s32, 1
          %s99 = smul.addr %s98, 48
          %s100 = scalar_lea.vmem [#allocation4], %s99
          %s101 = smul.u32 3, %s22
          %103 = vsyncadd %s97, 0
          %s104 = smul.addr %s101, 8
          %s105 = scalar_lea.hbm %s1, %s104
          %s107 = sshll.u32 1, 14
          %s108 = sxor.u32 4294967295, %s107
          %s110 = sld [smem:[#allocation0]]
          %s111 = sadd.s32 2, %s110
          %s113 = sshll.u32 7, 26
          %s114 = sxor.u32 4294967295, %s113
          %s115 = sand.u32 0, %s114
          %s116 = sshll.u32 %s111, 26
          %s117 = sor.u32 %s115, %s116
          %s118 = sshll.u32 %s105, 4
          %s119 = int_to_ptr.hbm [resolvable:$true] %s118
          %s120 = sshll.u32 %s100, 4
          %s121 = int_to_ptr.vmem [resolvable:$true] %s120
          %127 = sst [smem:[#allocation9]] 768
          %s128 = scalar_lea.smem [#allocation9], 1
          %129 = sst [smem:[%s128]] 384
          %s130 = scalar_lea.smem [#allocation9], 2
          %131 = sst [smem:[%s130]] 3
          %s132 = scalar_lea.smem [#allocation9], 3
          %133 = sst [smem:[%s132]] 128
          %s134 = scalar_lea.smem [#allocation9], 4
          %135 = sst [smem:[%s134]] 128
          %s136 = scalar_lea.smem [#allocation9], 5
          %137 = sst [smem:[%s136]] 8
          %139 = dma.general %s119, 768, %s121, %s97, [#allocation8], [#allocation9], %s117, 0
        $region20: #{tpu_custom_call.1} parent=15 // pred_fallthru
          _
      $region16: #{tpu_custom_call.1} parent=5 // pred_fallthru
        _
      %p140 = scmp.le.s32.totalorder 1, %s22
      %p141 = scmp.lt.s32.totalorder %s22, 3
      %p142 = pnand %p140, %p141
      %p143 = pneg %p142
      // Predicated region
      $region21: #{tpu_custom_call.1} parent=5 // pred_check
        _
      $region22: #{tpu_custom_call.1} parent=5 // pred_check_branch
        %145 = sbr.rel (%p142) target = $region24
      $region23: #{tpu_custom_call.1} parent=5 // pred_region
        %s146 = ssub.s32 %s22, 1
        %s147 = sand.u32 %s35, 1
        %s148 = scalar_lea.sflag [#allocation5], %s147
        %s149 = sand.u32 %s35, 1
        %s150 = smul.addr %s149, 48
        %s151 = scalar_lea.vmem [#allocation4], %s150
        // Predicated region
        $region25: #{tpu_custom_call.1} parent=23 // pred_check
          %p152 = pneg %p48
        $region26: #{tpu_custom_call.1} parent=23 // pred_check_branch
          %154 = sbr.rel (%p152) target = $region28
        $region27: #{tpu_custom_call.1} parent=23 // pred_region
          %156 = dma.done %s148, 768
        $region28: #{tpu_custom_call.1} parent=23 // pred_fallthru
          _
        %s157 = sand.u32 %s35, 1
        %s158 = scalar_lea.sflag [#allocation5], %s157
        %s159 = sand.u32 %s35, 1
        %s160 = smul.addr %s159, 48
        %s161 = scalar_lea.vmem [#allocation4], %s160
        %p162 = pneg %p48
        %p163 = pneg %p45
        %p164 = pneg %p74
        %p165 = pneg %p71
        %s166 = sand.u32 %s61, 1
        %s167 = scalar_lea.sflag [#allocation6], %s166
        %s168 = sand.u32 %s61, 1
        %s169 = smul.addr %s168, 24
        %s170 = scalar_lea.vmem [#allocation7], %s169
        %s171 = smul.u32 3, %s27
        %s172 = smul.u32 3, %s27
        %v173 = vld [vmem:[%s151] sm:$0xff]
        %v174 = vld [vmem:[%s151 + $0x8] sm:$0xff]
        %s175 = sadd.s32 0, 24
        %s176 = scalar_lea.vmem %s151, %s175 [#allocation4]
        %v177 = vld [vmem:[%s176] sm:$0xff]
        %v178 = vld [vmem:[%s176 + $0x8] sm:$0xff]
        %s179 = sld [smem:[#allocation3]]
        %v180 = vstv %s179
        %v181 = vmul.f32 %v180, %v173
        %v182 = vmul.f32 %v180, %v174
        %s183 = sld [smem:[#allocation3 + $0x1]]
        %v184 = vstv %s183
        %v185 = vmul.f32 %v184, %v177
        %v186 = vmul.f32 %v184, %v178
        %v187 = vadd.f32 %v181, %v185
        %v188 = vadd.f32 %v182, %v186
        %v189 = vmul.f32 %v187, 0.01
        %v190 = vmul.f32 %v188, 0.01
        %v191 = vmax.f32 %v187, %v189
        %v192 = vmax.f32 %v188, %v190
        %s193 = sld [smem:[#allocation3 + $0x7]]
        %v194 = vstv %s193
        %v195 = vmul.f32 %v194, %v173
        %v196 = vmul.f32 %v194, %v174
        %s197 = sld [smem:[#allocation3 + $0x8]]
        %v198 = vstv %s197
        %v199 = vmul.f32 %v198, %v177
        %v200 = vmul.f32 %v198, %v178
        %v201 = vadd.f32 %v195, %v199
        %v202 = vadd.f32 %v196, %v200
        %v203 = vmul.f32 %v201, 0.01
        %v204 = vmul.f32 %v202, 0.01
        %v205 = vmax.f32 %v201, %v203
        %v206 = vmax.f32 %v202, %v204
        %s207 = sld [smem:[#allocation3 + $0xe]]
        %v208 = vstv %s207
        %v209 = vmul.f32 %v208, %v173
        %v210 = vmul.f32 %v208, %v174
        %s211 = sld [smem:[#allocation3 + $0xf]]
        %v212 = vstv %s211
        %v213 = vmul.f32 %v212, %v177
        %v214 = vmul.f32 %v212, %v178
        %v215 = vadd.f32 %v209, %v213
        %v216 = vadd.f32 %v210, %v214
        %v217 = vmul.f32 %v215, 0.01
        %v218 = vmul.f32 %v216, 0.01
        %v219 = vmax.f32 %v215, %v217
        %v220 = vmax.f32 %v216, %v218
        %s221 = sld [smem:[#allocation3 + $0x15]]
        %v222 = vstv %s221
        %v223 = vmul.f32 %v222, %v173
        %v224 = vmul.f32 %v222, %v174
        %s225 = sld [smem:[#allocation3 + $0x16]]
        %v226 = vstv %s225
        %v227 = vmul.f32 %v226, %v177
        %v228 = vmul.f32 %v226, %v178
        %v229 = vadd.f32 %v223, %v227
        %v230 = vadd.f32 %v224, %v228
        %v231 = vmul.f32 %v229, 0.01
        %v232 = vmul.f32 %v230, 0.01
        %v233 = vmax.f32 %v229, %v231
        %v234 = vmax.f32 %v230, %v232
        %s235 = sld [smem:[#allocation3 + $0x1c]]
        %v236 = vstv %s235
        %v237 = vmul.f32 %v236, %v173
        %v238 = vmul.f32 %v236, %v174
        %s239 = sld [smem:[#allocation3 + $0x1d]]
        %v240 = vstv %s239
        %v241 = vmul.f32 %v240, %v177
        %v242 = vmul.f32 %v240, %v178
        %v243 = vadd.f32 %v237, %v241
        %v244 = vadd.f32 %v238, %v242
        %v245 = vmul.f32 %v243, 0.01
        %v246 = vmul.f32 %v244, 0.01
        %v247 = vmax.f32 %v243, %v245
        %v248 = vmax.f32 %v244, %v246
        %s249 = sld [smem:[#allocation3 + $0x23]]
        %v250 = vstv %s249
        %v251 = vmul.f32 %v250, %v173
        %v252 = vmul.f32 %v250, %v174
        %s253 = sld [smem:[#allocation3 + $0x24]]
        %v254 = vstv %s253
        %v255 = vmul.f32 %v254, %v177
        %v256 = vmul.f32 %v254, %v178
        %v257 = vadd.f32 %v251, %v255
        %v258 = vadd.f32 %v252, %v256
        %v259 = vmul.f32 %v257, 0.01
        %v260 = vmul.f32 %v258, 0.01
        %v261 = vmax.f32 %v257, %v259
        %v262 = vmax.f32 %v258, %v260
        %s263 = sld [smem:[#allocation3 + $0x2a]]
        %v264 = vstv %s263
        %v265 = vmul.f32 %v264, %v173
        %v266 = vmul.f32 %v264, %v174
        %s267 = sld [smem:[#allocation3 + $0x2b]]
        %v268 = vstv %s267
        %v269 = vmul.f32 %v268, %v177
        %v270 = vmul.f32 %v268, %v178
        %v271 = vadd.f32 %v265, %v269
        %v272 = vadd.f32 %v266, %v270
        %v273 = vmul.f32 %v271, 0.01
        %v274 = vmul.f32 %v272, 0.01
        %v275 = vmax.f32 %v271, %v273
        %v276 = vmax.f32 %v272, %v274
        %s277 = sld [smem:[#allocation3 + $0x31]]
        %v278 = vstv %s277
        %v279 = vmul.f32 %v278, %v191
        %v280 = vmul.f32 %v278, %v192
        %s281 = sld [smem:[#allocation3 + $0x32]]
        %v282 = vstv %s281
        %v283 = vmul.f32 %v282, %v205
        %v284 = vmul.f32 %v282, %v206
        %v285 = vadd.f32 %v279, %v283
        %v286 = vadd.f32 %v280, %v284
        %s287 = sld [smem:[#allocation3 + $0x33]]
        %v288 = vstv %s287
        %v289 = vmul.f32 %v288, %v219
        %v290 = vmul.f32 %v288, %v220
        %v291 = vadd.f32 %v285, %v289
        %v292 = vadd.f32 %v286, %v290
        %s293 = sld [smem:[#allocation3 + $0x34]]
        %v294 = vstv %s293
        %v295 = vmul.f32 %v294, %v233
        %v296 = vmul.f32 %v294, %v234
        %v297 = vadd.f32 %v291, %v295
        %v298 = vadd.f32 %v292, %v296
        %s299 = sld [smem:[#allocation3 + $0x35]]
        %v300 = vstv %s299
        %v301 = vmul.f32 %v300, %v247
        %v302 = vmul.f32 %v300, %v248
        %v303 = vadd.f32 %v297, %v301
        %v304 = vadd.f32 %v298, %v302
        %s305 = sld [smem:[#allocation3 + $0x36]]
        %v306 = vstv %s305
        %v307 = vmul.f32 %v306, %v261
        %v308 = vmul.f32 %v306, %v262
        %v309 = vadd.f32 %v303, %v307
        %v310 = vadd.f32 %v304, %v308
        %s311 = sld [smem:[#allocation3 + $0x37]]
        %v312 = vstv %s311
        %v313 = vmul.f32 %v312, %v275
        %v314 = vmul.f32 %v312, %v276
        %v315 = vadd.f32 %v309, %v313
        %v316 = vadd.f32 %v310, %v314
        %v317 = vmul.f32 %v315, 0.01
        %v318 = vmul.f32 %v316, 0.01
        %v319 = vmax.f32 %v315, %v317
        %v320 = vmax.f32 %v316, %v318
        %s321 = sld [smem:[#allocation3 + $0x38]]
        %v322 = vstv %s321
        %v323 = vmul.f32 %v322, %v191
        %v324 = vmul.f32 %v322, %v192
        %s325 = sld [smem:[#allocation3 + $0x39]]
        %v326 = vstv %s325
        %v327 = vmul.f32 %v326, %v205
        %v328 = vmul.f32 %v326, %v206
        %v329 = vadd.f32 %v323, %v327
        %v330 = vadd.f32 %v324, %v328
        %s331 = sld [smem:[#allocation3 + $0x3a]]
        %v332 = vstv %s331
        %v333 = vmul.f32 %v332, %v219
        %v334 = vmul.f32 %v332, %v220
        %v335 = vadd.f32 %v329, %v333
        %v336 = vadd.f32 %v330, %v334
        %s337 = sld [smem:[#allocation3 + $0x3b]]
        %v338 = vstv %s337
        %v339 = vmul.f32 %v338, %v233
        %v340 = vmul.f32 %v338, %v234
        %v341 = vadd.f32 %v335, %v339
        %v342 = vadd.f32 %v336, %v340
        %s343 = sld [smem:[#allocation3 + $0x3c]]
        %v344 = vstv %s343
        %v345 = vmul.f32 %v344, %v247
        %v346 = vmul.f32 %v344, %v248
        %v347 = vadd.f32 %v341, %v345
        %v348 = vadd.f32 %v342, %v346
        %s349 = sld [smem:[#allocation3 + $0x3d]]
        %v350 = vstv %s349
        %v351 = vmul.f32 %v350, %v261
        %v352 = vmul.f32 %v350, %v262
        %v353 = vadd.f32 %v347, %v351
        %v354 = vadd.f32 %v348, %v352
        %s355 = sld [smem:[#allocation3 + $0x3e]]
        %v356 = vstv %s355
        %v357 = vmul.f32 %v356, %v275
        %v358 = vmul.f32 %v356, %v276
        %v359 = vadd.f32 %v353, %v357
        %v360 = vadd.f32 %v354, %v358
        %v361 = vmul.f32 %v359, 0.01
        %v362 = vmul.f32 %v360, 0.01
        %v363 = vmax.f32 %v359, %v361
        %v364 = vmax.f32 %v360, %v362
        %s365 = sld [smem:[#allocation3 + $0x3f]]
        %v366 = vstv %s365
        %v367 = vmul.f32 %v366, %v191
        %v368 = vmul.f32 %v366, %v192
        %s369 = sld [smem:[#allocation3 + $0x40]]
        %v370 = vstv %s369
        %v371 = vmul.f32 %v370, %v205
        %v372 = vmul.f32 %v370, %v206
        %v373 = vadd.f32 %v367, %v371
        %v374 = vadd.f32 %v368, %v372
        %s375 = sld [smem:[#allocation3 + $0x41]]
        %v376 = vstv %s375
        %v377 = vmul.f32 %v376, %v219
        %v378 = vmul.f32 %v376, %v220
        %v379 = vadd.f32 %v373, %v377
        %v380 = vadd.f32 %v374, %v378
        %s381 = sld [smem:[#allocation3 + $0x42]]
        %v382 = vstv %s381
        %v383 = vmul.f32 %v382, %v233
        %v384 = vmul.f32 %v382, %v234
        %v385 = vadd.f32 %v379, %v383
        %v386 = vadd.f32 %v380, %v384
        %s387 = sld [smem:[#allocation3 + $0x43]]
        %v388 = vstv %s387
        %v389 = vmul.f32 %v388, %v247
        %v390 = vmul.f32 %v388, %v248
        %v391 = vadd.f32 %v385, %v389
        %v392 = vadd.f32 %v386, %v390
        %s393 = sld [smem:[#allocation3 + $0x44]]
        %v394 = vstv %s393
        %v395 = vmul.f32 %v394, %v261
        %v396 = vmul.f32 %v394, %v262
        %v397 = vadd.f32 %v391, %v395
        %v398 = vadd.f32 %v392, %v396
        %s399 = sld [smem:[#allocation3 + $0x45]]
        %v400 = vstv %s399
        %v401 = vmul.f32 %v400, %v275
        %v402 = vmul.f32 %v400, %v276
        %v403 = vadd.f32 %v397, %v401
        %v404 = vadd.f32 %v398, %v402
        %v405 = vmul.f32 %v403, 0.01
        %v406 = vmul.f32 %v404, 0.01
        %v407 = vmax.f32 %v403, %v405
        %v408 = vmax.f32 %v404, %v406
        %s409 = sld [smem:[#allocation3 + $0x46]]
        %v410 = vstv %s409
        %v411 = vmul.f32 %v410, %v191
        %v412 = vmul.f32 %v410, %v192
        %s413 = sld [smem:[#allocation3 + $0x47]]
        %v414 = vstv %s413
        %v415 = vmul.f32 %v414, %v205
        %v416 = vmul.f32 %v414, %v206
        %v417 = vadd.f32 %v411, %v415
        %v418 = vadd.f32 %v412, %v416
        %s419 = sld [smem:[#allocation3 + $0x48]]
        %v420 = vstv %s419
        %v421 = vmul.f32 %v420, %v219
        %v422 = vmul.f32 %v420, %v220
        %v423 = vadd.f32 %v417, %v421
        %v424 = vadd.f32 %v418, %v422
        %s425 = sld [smem:[#allocation3 + $0x49]]
        %v426 = vstv %s425
        %v427 = vmul.f32 %v426, %v233
        %v428 = vmul.f32 %v426, %v234
        %v429 = vadd.f32 %v423, %v427
        %v430 = vadd.f32 %v424, %v428
        %s431 = sld [smem:[#allocation3 + $0x4a]]
        %v432 = vstv %s431
        %v433 = vmul.f32 %v432, %v247
        %v434 = vmul.f32 %v432, %v248
        %v435 = vadd.f32 %v429, %v433
        %v436 = vadd.f32 %v430, %v434
        %s437 = sld [smem:[#allocation3 + $0x4b]]
        %v438 = vstv %s437
        %v439 = vmul.f32 %v438, %v261
        %v440 = vmul.f32 %v438, %v262
        %v441 = vadd.f32 %v435, %v439
        %v442 = vadd.f32 %v436, %v440
        %s443 = sld [smem:[#allocation3 + $0x4c]]
        %v444 = vstv %s443
        %v445 = vmul.f32 %v444, %v275
        %v446 = vmul.f32 %v444, %v276
        %v447 = vadd.f32 %v441, %v445
        %v448 = vadd.f32 %v442, %v446
        %v449 = vmul.f32 %v447, 0.01
        %v450 = vmul.f32 %v448, 0.01
        %v451 = vmax.f32 %v447, %v449
        %v452 = vmax.f32 %v448, %v450
        %s453 = sld [smem:[#allocation3 + $0x4d]]
        %v454 = vstv %s453
        %v455 = vmul.f32 %v454, %v191
        %v456 = vmul.f32 %v454, %v192
        %s457 = sld [smem:[#allocation3 + $0x4e]]
        %v458 = vstv %s457
        %v459 = vmul.f32 %v458, %v205
        %v460 = vmul.f32 %v458, %v206
        %v461 = vadd.f32 %v455, %v459
        %v462 = vadd.f32 %v456, %v460
        %s463 = sld [smem:[#allocation3 + $0x4f]]
        %v464 = vstv %s463
        %v465 = vmul.f32 %v464, %v219
        %v466 = vmul.f32 %v464, %v220
        %v467 = vadd.f32 %v461, %v465
        %v468 = vadd.f32 %v462, %v466
        %s469 = sld [smem:[#allocation3 + $0x50]]
        %v470 = vstv %s469
        %v471 = vmul.f32 %v470, %v233
        %v472 = vmul.f32 %v470, %v234
        %v473 = vadd.f32 %v467, %v471
        %v474 = vadd.f32 %v468, %v472
        %s475 = sld [smem:[#allocation3 + $0x51]]
        %v476 = vstv %s475
        %v477 = vmul.f32 %v476, %v247
        %v478 = vmul.f32 %v476, %v248
        %v479 = vadd.f32 %v473, %v477
        %v480 = vadd.f32 %v474, %v478
        %s481 = sld [smem:[#allocation3 + $0x52]]
        %v482 = vstv %s481
        %v483 = vmul.f32 %v482, %v261
        %v484 = vmul.f32 %v482, %v262
        %v485 = vadd.f32 %v479, %v483
        %v486 = vadd.f32 %v480, %v484
        %s487 = sld [smem:[#allocation3 + $0x53]]
        %v488 = vstv %s487
        %v489 = vmul.f32 %v488, %v275
        %v490 = vmul.f32 %v488, %v276
        %v491 = vadd.f32 %v485, %v489
        %v492 = vadd.f32 %v486, %v490
        %v493 = vmul.f32 %v491, 0.01
        %v494 = vmul.f32 %v492, 0.01
        %v495 = vmax.f32 %v491, %v493
        %v496 = vmax.f32 %v492, %v494
        %s497 = sld [smem:[#allocation3 + $0x54]]
        %v498 = vstv %s497
        %v499 = vmul.f32 %v498, %v191
        %v500 = vmul.f32 %v498, %v192
        %s501 = sld [smem:[#allocation3 + $0x55]]
        %v502 = vstv %s501
        %v503 = vmul.f32 %v502, %v205
        %v504 = vmul.f32 %v502, %v206
        %v505 = vadd.f32 %v499, %v503
        %v506 = vadd.f32 %v500, %v504
        %s507 = sld [smem:[#allocation3 + $0x56]]
        %v508 = vstv %s507
        %v509 = vmul.f32 %v508, %v219
        %v510 = vmul.f32 %v508, %v220
        %v511 = vadd.f32 %v505, %v509
        %v512 = vadd.f32 %v506, %v510
        %s513 = sld [smem:[#allocation3 + $0x57]]
        %v514 = vstv %s513
        %v515 = vmul.f32 %v514, %v233
        %v516 = vmul.f32 %v514, %v234
        %v517 = vadd.f32 %v511, %v515
        %v518 = vadd.f32 %v512, %v516
        %s519 = sld [smem:[#allocation3 + $0x58]]
        %v520 = vstv %s519
        %v521 = vmul.f32 %v520, %v247
        %v522 = vmul.f32 %v520, %v248
        %v523 = vadd.f32 %v517, %v521
        %v524 = vadd.f32 %v518, %v522
        %s525 = sld [smem:[#allocation3 + $0x59]]
        %v526 = vstv %s525
        %v527 = vmul.f32 %v526, %v261
        %v528 = vmul.f32 %v526, %v262
        %v529 = vadd.f32 %v523, %v527
        %v530 = vadd.f32 %v524, %v528
        %s531 = sld [smem:[#allocation3 + $0x5a]]
        %v532 = vstv %s531
        %v533 = vmul.f32 %v532, %v275
        %v534 = vmul.f32 %v532, %v276
        %v535 = vadd.f32 %v529, %v533
        %v536 = vadd.f32 %v530, %v534
        %v537 = vmul.f32 %v535, 0.01
        %v538 = vmul.f32 %v536, 0.01
        %v539 = vmax.f32 %v535, %v537
        %v540 = vmax.f32 %v536, %v538
        %s541 = sld [smem:[#allocation3 + $0x5b]]
        %v542 = vstv %s541
        %v543 = vmul.f32 %v542, %v191
        %v544 = vmul.f32 %v542, %v192
        %s545 = sld [smem:[#allocation3 + $0x5c]]
        %v546 = vstv %s545
        %v547 = vmul.f32 %v546, %v205
        %v548 = vmul.f32 %v546, %v206
        %v549 = vadd.f32 %v543, %v547
        %v550 = vadd.f32 %v544, %v548
        %s551 = sld [smem:[#allocation3 + $0x5d]]
        %v552 = vstv %s551
        %v553 = vmul.f32 %v552, %v219
        %v554 = vmul.f32 %v552, %v220
        %v555 = vadd.f32 %v549, %v553
        %v556 = vadd.f32 %v550, %v554
        %s557 = sld [smem:[#allocation3 + $0x5e]]
        %v558 = vstv %s557
        %v559 = vmul.f32 %v558, %v233
        %v560 = vmul.f32 %v558, %v234
        %v561 = vadd.f32 %v555, %v559
        %v562 = vadd.f32 %v556, %v560
        %s563 = sld [smem:[#allocation3 + $0x5f]]
        %v564 = vstv %s563
        %v565 = vmul.f32 %v564, %v247
        %v566 = vmul.f32 %v564, %v248
        %v567 = vadd.f32 %v561, %v565
        %v568 = vadd.f32 %v562, %v566
        %s569 = sld [smem:[#allocation3 + $0x60]]
        %v570 = vstv %s569
        %v571 = vmul.f32 %v570, %v261
        %v572 = vmul.f32 %v570, %v262
        %v573 = vadd.f32 %v567, %v571
        %v574 = vadd.f32 %v568, %v572
        %s575 = sld [smem:[#allocation3 + $0x61]]
        %v576 = vstv %s575
        %v577 = vmul.f32 %v576, %v275
        %v578 = vmul.f32 %v576, %v276
        %v579 = vadd.f32 %v573, %v577
        %v580 = vadd.f32 %v574, %v578
        %v581 = vmul.f32 %v579, 0.01
        %v582 = vmul.f32 %v580, 0.01
        %v583 = vmax.f32 %v579, %v581
        %v584 = vmax.f32 %v580, %v582
        %s585 = sld [smem:[#allocation3 + $0x62]]
        %v586 = vstv %s585
        %v587 = vmul.f32 %v586, %v319
        %v588 = vmul.f32 %v586, %v320
        %s589 = sld [smem:[#allocation3 + $0x63]]
        %v590 = vstv %s589
        %v591 = vmul.f32 %v590, %v363
        %v592 = vmul.f32 %v590, %v364
        %v593 = vadd.f32 %v587, %v591
        %v594 = vadd.f32 %v588, %v592
        %s595 = sld [smem:[#allocation3 + $0x64]]
        %v596 = vstv %s595
        %v597 = vmul.f32 %v596, %v407
        %v598 = vmul.f32 %v596, %v408
        %v599 = vadd.f32 %v593, %v597
        %v600 = vadd.f32 %v594, %v598
        %s601 = sld [smem:[#allocation3 + $0x65]]
        %v602 = vstv %s601
        %v603 = vmul.f32 %v602, %v451
        %v604 = vmul.f32 %v602, %v452
        %v605 = vadd.f32 %v599, %v603
        %v606 = vadd.f32 %v600, %v604
        %s607 = sld [smem:[#allocation3 + $0x66]]
        %v608 = vstv %s607
        %v609 = vmul.f32 %v608, %v495
        %v610 = vmul.f32 %v608, %v496
        %v611 = vadd.f32 %v605, %v609
        %v612 = vadd.f32 %v606, %v610
        %s613 = sld [smem:[#allocation3 + $0x67]]
        %v614 = vstv %s613
        %v615 = vmul.f32 %v614, %v539
        %v616 = vmul.f32 %v614, %v540
        %v617 = vadd.f32 %v611, %v615
        %v618 = vadd.f32 %v612, %v616
        %s619 = sld [smem:[#allocation3 + $0x68]]
        %v620 = vstv %s619
        %v621 = vmul.f32 %v620, %v583
        %v622 = vmul.f32 %v620, %v584
        %v623 = vadd.f32 %v617, %v621
        %v624 = vadd.f32 %v618, %v622
        %v625 = vmul.f32 %v623, 0.01
        %v626 = vmul.f32 %v624, 0.01
        %v627 = vmax.f32 %v623, %v625
        %v628 = vmax.f32 %v624, %v626
        %s629 = sld [smem:[#allocation3 + $0x69]]
        %v630 = vstv %s629
        %v631 = vmul.f32 %v630, %v319
        %v632 = vmul.f32 %v630, %v320
        %s633 = sld [smem:[#allocation3 + $0x6a]]
        %v634 = vstv %s633
        %v635 = vmul.f32 %v634, %v363
        %v636 = vmul.f32 %v634, %v364
        %v637 = vadd.f32 %v631, %v635
        %v638 = vadd.f32 %v632, %v636
        %s639 = sld [smem:[#allocation3 + $0x6b]]
        %v640 = vstv %s639
        %v641 = vmul.f32 %v640, %v407
        %v642 = vmul.f32 %v640, %v408
        %v643 = vadd.f32 %v637, %v641
        %v644 = vadd.f32 %v638, %v642
        %s645 = sld [smem:[#allocation3 + $0x6c]]
        %v646 = vstv %s645
        %v647 = vmul.f32 %v646, %v451
        %v648 = vmul.f32 %v646, %v452
        %v649 = vadd.f32 %v643, %v647
        %v650 = vadd.f32 %v644, %v648
        %s651 = sld [smem:[#allocation3 + $0x6d]]
        %v652 = vstv %s651
        %v653 = vmul.f32 %v652, %v495
        %v654 = vmul.f32 %v652, %v496
        %v655 = vadd.f32 %v649, %v653
        %v656 = vadd.f32 %v650, %v654
        %s657 = sld [smem:[#allocation3 + $0x6e]]
        %v658 = vstv %s657
        %v659 = vmul.f32 %v658, %v539
        %v660 = vmul.f32 %v658, %v540
        %v661 = vadd.f32 %v655, %v659
        %v662 = vadd.f32 %v656, %v660
        %s663 = sld [smem:[#allocation3 + $0x6f]]
        %v664 = vstv %s663
        %v665 = vmul.f32 %v664, %v583
        %v666 = vmul.f32 %v664, %v584
        %v667 = vadd.f32 %v661, %v665
        %v668 = vadd.f32 %v662, %v666
        %v669 = vmul.f32 %v667, 0.01
        %v670 = vmul.f32 %v668, 0.01
        %v671 = vmax.f32 %v667, %v669
        %v672 = vmax.f32 %v668, %v670
        %s673 = sld [smem:[#allocation3 + $0x70]]
        %v674 = vstv %s673
        %v675 = vmul.f32 %v674, %v319
        %v676 = vmul.f32 %v674, %v320
        %s677 = sld [smem:[#allocation3 + $0x71]]
        %v678 = vstv %s677
        %v679 = vmul.f32 %v678, %v363
        %v680 = vmul.f32 %v678, %v364
        %v681 = vadd.f32 %v675, %v679
        %v682 = vadd.f32 %v676, %v680
        %s683 = sld [smem:[#allocation3 + $0x72]]
        %v684 = vstv %s683
        %v685 = vmul.f32 %v684, %v407
        %v686 = vmul.f32 %v684, %v408
        %v687 = vadd.f32 %v681, %v685
        %v688 = vadd.f32 %v682, %v686
        %s689 = sld [smem:[#allocation3 + $0x73]]
        %v690 = vstv %s689
        %v691 = vmul.f32 %v690, %v451
        %v692 = vmul.f32 %v690, %v452
        %v693 = vadd.f32 %v687, %v691
        %v694 = vadd.f32 %v688, %v692
        %s695 = sld [smem:[#allocation3 + $0x74]]
        %v696 = vstv %s695
        %v697 = vmul.f32 %v696, %v495
        %v698 = vmul.f32 %v696, %v496
        %v699 = vadd.f32 %v693, %v697
        %v700 = vadd.f32 %v694, %v698
        %s701 = sld [smem:[#allocation3 + $0x75]]
        %v702 = vstv %s701
        %v703 = vmul.f32 %v702, %v539
        %v704 = vmul.f32 %v702, %v540
        %v705 = vadd.f32 %v699, %v703
        %v706 = vadd.f32 %v700, %v704
        %s707 = sld [smem:[#allocation3 + $0x76]]
        %v708 = vstv %s707
        %v709 = vmul.f32 %v708, %v583
        %v710 = vmul.f32 %v708, %v584
        %v711 = vadd.f32 %v705, %v709
        %v712 = vadd.f32 %v706, %v710
        %v713 = vmul.f32 %v711, 0.01
        %v714 = vmul.f32 %v712, 0.01
        %v715 = vmax.f32 %v711, %v713
        %v716 = vmax.f32 %v712, %v714
        %s717 = sld [smem:[#allocation3 + $0x77]]
        %v718 = vstv %s717
        %v719 = vmul.f32 %v718, %v319
        %v720 = vmul.f32 %v718, %v320
        %s721 = sld [smem:[#allocation3 + $0x78]]
        %v722 = vstv %s721
        %v723 = vmul.f32 %v722, %v363
        %v724 = vmul.f32 %v722, %v364
        %v725 = vadd.f32 %v719, %v723
        %v726 = vadd.f32 %v720, %v724
        %s727 = sld [smem:[#allocation3 + $0x79]]
        %v728 = vstv %s727
        %v729 = vmul.f32 %v728, %v407
        %v730 = vmul.f32 %v728, %v408
        %v731 = vadd.f32 %v725, %v729
        %v732 = vadd.f32 %v726, %v730
        %s733 = sld [smem:[#allocation3 + $0x7a]]
        %v734 = vstv %s733
        %v735 = vmul.f32 %v734, %v451
        %v736 = vmul.f32 %v734, %v452
        %v737 = vadd.f32 %v731, %v735
        %v738 = vadd.f32 %v732, %v736
        %s739 = sld [smem:[#allocation3 + $0x7b]]
        %v740 = vstv %s739
        %v741 = vmul.f32 %v740, %v495
        %v742 = vmul.f32 %v740, %v496
        %v743 = vadd.f32 %v737, %v741
        %v744 = vadd.f32 %v738, %v742
        %s745 = sld [smem:[#allocation3 + $0x7c]]
        %v746 = vstv %s745
        %v747 = vmul.f32 %v746, %v539
        %v748 = vmul.f32 %v746, %v540
        %v749 = vadd.f32 %v743, %v747
        %v750 = vadd.f32 %v744, %v748
        %s751 = sld [smem:[#allocation3 + $0x7d]]
        %v752 = vstv %s751
        %v753 = vmul.f32 %v752, %v583
        %v754 = vmul.f32 %v752, %v584
        %v755 = vadd.f32 %v749, %v753
        %v756 = vadd.f32 %v750, %v754
        %v757 = vmul.f32 %v755, 0.01
        %v758 = vmul.f32 %v756, 0.01
        %v759 = vmax.f32 %v755, %v757
        %v760 = vmax.f32 %v756, %v758
        %s761 = sld [smem:[#allocation3 + $0x7e]]
        %v762 = vstv %s761
        %v763 = vmul.f32 %v762, %v319
        %v764 = vmul.f32 %v762, %v320
        %s765 = sld [smem:[#allocation3 + $0x7f]]
        %v766 = vstv %s765
        %v767 = vmul.f32 %v766, %v363
        %v768 = vmul.f32 %v766, %v364
        %v769 = vadd.f32 %v763, %v767
        %v770 = vadd.f32 %v764, %v768
        %s771 = sld [smem:[#allocation3 + $0x80]]
        %v772 = vstv %s771
        %v773 = vmul.f32 %v772, %v407
        %v774 = vmul.f32 %v772, %v408
        %v775 = vadd.f32 %v769, %v773
        %v776 = vadd.f32 %v770, %v774
        %s777 = sld [smem:[#allocation3 + $0x81]]
        %v778 = vstv %s777
        %v779 = vmul.f32 %v778, %v451
        %v780 = vmul.f32 %v778, %v452
        %v781 = vadd.f32 %v775, %v779
        %v782 = vadd.f32 %v776, %v780
        %s783 = sld [smem:[#allocation3 + $0x82]]
        %v784 = vstv %s783
        %v785 = vmul.f32 %v784, %v495
        %v786 = vmul.f32 %v784, %v496
        %v787 = vadd.f32 %v781, %v785
        %v788 = vadd.f32 %v782, %v786
        %s789 = sld [smem:[#allocation3 + $0x83]]
        %v790 = vstv %s789
        %v791 = vmul.f32 %v790, %v539
        %v792 = vmul.f32 %v790, %v540
        %v793 = vadd.f32 %v787, %v791
        %v794 = vadd.f32 %v788, %v792
        %s795 = sld [smem:[#allocation3 + $0x84]]
        %v796 = vstv %s795
        %v797 = vmul.f32 %v796, %v583
        %v798 = vmul.f32 %v796, %v584
        %v799 = vadd.f32 %v793, %v797
        %v800 = vadd.f32 %v794, %v798
        %v801 = vmul.f32 %v799, 0.01
        %v802 = vmul.f32 %v800, 0.01
        %v803 = vmax.f32 %v799, %v801
        %v804 = vmax.f32 %v800, %v802
        %s805 = sld [smem:[#allocation3 + $0x85]]
        %v806 = vstv %s805
        %v807 = vmul.f32 %v806, %v319
        %v808 = vmul.f32 %v806, %v320
        %s809 = sld [smem:[#allocation3 + $0x86]]
        %v810 = vstv %s809
        %v811 = vmul.f32 %v810, %v363
        %v812 = vmul.f32 %v810, %v364
        %v813 = vadd.f32 %v807, %v811
        %v814 = vadd.f32 %v808, %v812
        %s815 = sld [smem:[#allocation3 + $0x87]]
        %v816 = vstv %s815
        %v817 = vmul.f32 %v816, %v407
        %v818 = vmul.f32 %v816, %v408
        %v819 = vadd.f32 %v813, %v817
        %v820 = vadd.f32 %v814, %v818
        %s821 = sld [smem:[#allocation3 + $0x88]]
        %v822 = vstv %s821
        %v823 = vmul.f32 %v822, %v451
        %v824 = vmul.f32 %v822, %v452
        %v825 = vadd.f32 %v819, %v823
        %v826 = vadd.f32 %v820, %v824
        %s827 = sld [smem:[#allocation3 + $0x89]]
        %v828 = vstv %s827
        %v829 = vmul.f32 %v828, %v495
        %v830 = vmul.f32 %v828, %v496
        %v831 = vadd.f32 %v825, %v829
        %v832 = vadd.f32 %v826, %v830
        %s833 = sld [smem:[#allocation3 + $0x8a]]
        %v834 = vstv %s833
        %v835 = vmul.f32 %v834, %v539
        %v836 = vmul.f32 %v834, %v540
        %v837 = vadd.f32 %v831, %v835
        %v838 = vadd.f32 %v832, %v836
        %s839 = sld [smem:[#allocation3 + $0x8b]]
        %v840 = vstv %s839
        %v841 = vmul.f32 %v840, %v583
        %v842 = vmul.f32 %v840, %v584
        %v843 = vadd.f32 %v837, %v841
        %v844 = vadd.f32 %v838, %v842
        %v845 = vmul.f32 %v843, 0.01
        %v846 = vmul.f32 %v844, 0.01
        %v847 = vmax.f32 %v843, %v845
        %v848 = vmax.f32 %v844, %v846
        %s849 = sld [smem:[#allocation3 + $0x8c]]
        %v850 = vstv %s849
        %v851 = vmul.f32 %v850, %v319
        %v852 = vmul.f32 %v850, %v320
        %s853 = sld [smem:[#allocation3 + $0x8d]]
        %v854 = vstv %s853
        %v855 = vmul.f32 %v854, %v363
        %v856 = vmul.f32 %v854, %v364
        %v857 = vadd.f32 %v851, %v855
        %v858 = vadd.f32 %v852, %v856
        %s859 = sld [smem:[#allocation3 + $0x8e]]
        %v860 = vstv %s859
        %v861 = vmul.f32 %v860, %v407
        %v862 = vmul.f32 %v860, %v408
        %v863 = vadd.f32 %v857, %v861
        %v864 = vadd.f32 %v858, %v862
        %s865 = sld [smem:[#allocation3 + $0x8f]]
        %v866 = vstv %s865
        %v867 = vmul.f32 %v866, %v451
        %v868 = vmul.f32 %v866, %v452
        %v869 = vadd.f32 %v863, %v867
        %v870 = vadd.f32 %v864, %v868
        %s871 = sld [smem:[#allocation3 + $0x90]]
        %v872 = vstv %s871
        %v873 = vmul.f32 %v872, %v495
        %v874 = vmul.f32 %v872, %v496
        %v875 = vadd.f32 %v869, %v873
        %v876 = vadd.f32 %v870, %v874
        %s877 = sld [smem:[#allocation3 + $0x91]]
        %v878 = vstv %s877
        %v879 = vmul.f32 %v878, %v539
        %v880 = vmul.f32 %v878, %v540
        %v881 = vadd.f32 %v875, %v879
        %v882 = vadd.f32 %v876, %v880
        %s883 = sld [smem:[#allocation3 + $0x92]]
        %v884 = vstv %s883
        %v885 = vmul.f32 %v884, %v583
        %v886 = vmul.f32 %v884, %v584
        %v887 = vadd.f32 %v881, %v885
        %v888 = vadd.f32 %v882, %v886
        %v889 = vmul.f32 %v887, 0.01
        %v890 = vmul.f32 %v888, 0.01
        %v891 = vmax.f32 %v887, %v889
        %v892 = vmax.f32 %v888, %v890
        %s893 = sld [smem:[#allocation3 + $0x93]]
        %v894 = vstv %s893
        %v895 = vmul.f32 %v894, %v627
        %v896 = vmul.f32 %v894, %v628
        %s897 = sld [smem:[#allocation3 + $0x94]]
        %v898 = vstv %s897
        %v899 = vmul.f32 %v898, %v671
        %v900 = vmul.f32 %v898, %v672
        %v901 = vadd.f32 %v895, %v899
        %v902 = vadd.f32 %v896, %v900
        %s903 = sld [smem:[#allocation3 + $0x95]]
        %v904 = vstv %s903
        %v905 = vmul.f32 %v904, %v715
        %v906 = vmul.f32 %v904, %v716
        %v907 = vadd.f32 %v901, %v905
        %v908 = vadd.f32 %v902, %v906
        %s909 = sld [smem:[#allocation3 + $0x96]]
        %v910 = vstv %s909
        %v911 = vmul.f32 %v910, %v759
        %v912 = vmul.f32 %v910, %v760
        %v913 = vadd.f32 %v907, %v911
        %v914 = vadd.f32 %v908, %v912
        %s915 = sld [smem:[#allocation3 + $0x97]]
        %v916 = vstv %s915
        %v917 = vmul.f32 %v916, %v803
        %v918 = vmul.f32 %v916, %v804
        %v919 = vadd.f32 %v913, %v917
        %v920 = vadd.f32 %v914, %v918
        %s921 = sld [smem:[#allocation3 + $0x98]]
        %v922 = vstv %s921
        %v923 = vmul.f32 %v922, %v847
        %v924 = vmul.f32 %v922, %v848
        %v925 = vadd.f32 %v919, %v923
        %v926 = vadd.f32 %v920, %v924
        %s927 = sld [smem:[#allocation3 + $0x99]]
        %v928 = vstv %s927
        %v929 = vmul.f32 %v928, %v891
        %v930 = vmul.f32 %v928, %v892
        %v931 = vadd.f32 %v925, %v929
        %v932 = vadd.f32 %v926, %v930
        %v933 = vmul.f32 %v931, 0.01
        %v934 = vmul.f32 %v932, 0.01
        %v935 = vmax.f32 %v931, %v933
        %v936 = vmax.f32 %v932, %v934
        %s937 = sld [smem:[#allocation3 + $0x9a]]
        %v938 = vstv %s937
        %v939 = vmul.f32 %v938, %v627
        %v940 = vmul.f32 %v938, %v628
        %s941 = sld [smem:[#allocation3 + $0x9b]]
        %v942 = vstv %s941
        %v943 = vmul.f32 %v942, %v671
        %v944 = vmul.f32 %v942, %v672
        %v945 = vadd.f32 %v939, %v943
        %v946 = vadd.f32 %v940, %v944
        %s947 = sld [smem:[#allocation3 + $0x9c]]
        %v948 = vstv %s947
        %v949 = vmul.f32 %v948, %v715
        %v950 = vmul.f32 %v948, %v716
        %v951 = vadd.f32 %v945, %v949
        %v952 = vadd.f32 %v946, %v950
        %s953 = sld [smem:[#allocation3 + $0x9d]]
        %v954 = vstv %s953
        %v955 = vmul.f32 %v954, %v759
        %v956 = vmul.f32 %v954, %v760
        %v957 = vadd.f32 %v951, %v955
        %v958 = vadd.f32 %v952, %v956
        %s959 = sld [smem:[#allocation3 + $0x9e]]
        %v960 = vstv %s959
        %v961 = vmul.f32 %v960, %v803
        %v962 = vmul.f32 %v960, %v804
        %v963 = vadd.f32 %v957, %v961
        %v964 = vadd.f32 %v958, %v962
        %s965 = sld [smem:[#allocation3 + $0x9f]]
        %v966 = vstv %s965
        %v967 = vmul.f32 %v966, %v847
        %v968 = vmul.f32 %v966, %v848
        %v969 = vadd.f32 %v963, %v967
        %v970 = vadd.f32 %v964, %v968
        %s971 = sld [smem:[#allocation3 + $0xa0]]
        %v972 = vstv %s971
        %v973 = vmul.f32 %v972, %v891
        %v974 = vmul.f32 %v972, %v892
        %v975 = vadd.f32 %v969, %v973
        %v976 = vadd.f32 %v970, %v974
        %v977 = vmul.f32 %v975, 0.01
        %v978 = vmul.f32 %v976, 0.01
        %v979 = vmax.f32 %v975, %v977
        %v980 = vmax.f32 %v976, %v978
        %s981 = sld [smem:[#allocation3 + $0xa1]]
        %v982 = vstv %s981
        %v983 = vmul.f32 %v982, %v627
        %v984 = vmul.f32 %v982, %v628
        %s985 = sld [smem:[#allocation3 + $0xa2]]
        %v986 = vstv %s985
        %v987 = vmul.f32 %v986, %v671
        %v988 = vmul.f32 %v986, %v672
        %v989 = vadd.f32 %v983, %v987
        %v990 = vadd.f32 %v984, %v988
        %s991 = sld [smem:[#allocation3 + $0xa3]]
        %v992 = vstv %s991
        %v993 = vmul.f32 %v992, %v715
        %v994 = vmul.f32 %v992, %v716
        %v995 = vadd.f32 %v989, %v993
        %v996 = vadd.f32 %v990, %v994
        %s997 = sld [smem:[#allocation3 + $0xa4]]
        %v998 = vstv %s997
        %v999 = vmul.f32 %v998, %v759
        %v1000 = vmul.f32 %v998, %v760
        %v1001 = vadd.f32 %v995, %v999
        %v1002 = vadd.f32 %v996, %v1000
        %s1003 = sld [smem:[#allocation3 + $0xa5]]
        %v1004 = vstv %s1003
        %v1005 = vmul.f32 %v1004, %v803
        %v1006 = vmul.f32 %v1004, %v804
        %v1007 = vadd.f32 %v1001, %v1005
        %v1008 = vadd.f32 %v1002, %v1006
        %s1009 = sld [smem:[#allocation3 + $0xa6]]
        %v1010 = vstv %s1009
        %v1011 = vmul.f32 %v1010, %v847
        %v1012 = vmul.f32 %v1010, %v848
        %v1013 = vadd.f32 %v1007, %v1011
        %v1014 = vadd.f32 %v1008, %v1012
        %s1015 = sld [smem:[#allocation3 + $0xa7]]
        %v1016 = vstv %s1015
        %v1017 = vmul.f32 %v1016, %v891
        %v1018 = vmul.f32 %v1016, %v892
        %v1019 = vadd.f32 %v1013, %v1017
        %v1020 = vadd.f32 %v1014, %v1018
        %v1021 = vmul.f32 %v1019, 0.01
        %v1022 = vmul.f32 %v1020, 0.01
        %v1023 = vmax.f32 %v1019, %v1021
        %v1024 = vmax.f32 %v1020, %v1022
        %s1025 = sld [smem:[#allocation3 + $0xa8]]
        %v1026 = vstv %s1025
        %v1027 = vmul.f32 %v1026, %v627
        %v1028 = vmul.f32 %v1026, %v628
        %s1029 = sld [smem:[#allocation3 + $0xa9]]
        %v1030 = vstv %s1029
        %v1031 = vmul.f32 %v1030, %v671
        %v1032 = vmul.f32 %v1030, %v672
        %v1033 = vadd.f32 %v1027, %v1031
        %v1034 = vadd.f32 %v1028, %v1032
        %s1035 = sld [smem:[#allocation3 + $0xaa]]
        %v1036 = vstv %s1035
        %v1037 = vmul.f32 %v1036, %v715
        %v1038 = vmul.f32 %v1036, %v716
        %v1039 = vadd.f32 %v1033, %v1037
        %v1040 = vadd.f32 %v1034, %v1038
        %s1041 = sld [smem:[#allocation3 + $0xab]]
        %v1042 = vstv %s1041
        %v1043 = vmul.f32 %v1042, %v759
        %v1044 = vmul.f32 %v1042, %v760
        %v1045 = vadd.f32 %v1039, %v1043
        %v1046 = vadd.f32 %v1040, %v1044
        %s1047 = sld [smem:[#allocation3 + $0xac]]
        %v1048 = vstv %s1047
        %v1049 = vmul.f32 %v1048, %v803
        %v1050 = vmul.f32 %v1048, %v804
        %v1051 = vadd.f32 %v1045, %v1049
        %v1052 = vadd.f32 %v1046, %v1050
        %s1053 = sld [smem:[#allocation3 + $0xad]]
        %v1054 = vstv %s1053
        %v1055 = vmul.f32 %v1054, %v847
        %v1056 = vmul.f32 %v1054, %v848
        %v1057 = vadd.f32 %v1051, %v1055
        %v1058 = vadd.f32 %v1052, %v1056
        %s1059 = sld [smem:[#allocation3 + $0xae]]
        %v1060 = vstv %s1059
        %v1061 = vmul.f32 %v1060, %v891
        %v1062 = vmul.f32 %v1060, %v892
        %v1063 = vadd.f32 %v1057, %v1061
        %v1064 = vadd.f32 %v1058, %v1062
        %v1065 = vmul.f32 %v1063, 0.01
        %v1066 = vmul.f32 %v1064, 0.01
        %v1067 = vmax.f32 %v1063, %v1065
        %v1068 = vmax.f32 %v1064, %v1066
        %s1069 = sld [smem:[#allocation3 + $0xaf]]
        %v1070 = vstv %s1069
        %v1071 = vmul.f32 %v1070, %v627
        %v1072 = vmul.f32 %v1070, %v628
        %s1073 = sld [smem:[#allocation3 + $0xb0]]
        %v1074 = vstv %s1073
        %v1075 = vmul.f32 %v1074, %v671
        %v1076 = vmul.f32 %v1074, %v672
        %v1077 = vadd.f32 %v1071, %v1075
        %v1078 = vadd.f32 %v1072, %v1076
        %s1079 = sld [smem:[#allocation3 + $0xb1]]
        %v1080 = vstv %s1079
        %v1081 = vmul.f32 %v1080, %v715
        %v1082 = vmul.f32 %v1080, %v716
        %v1083 = vadd.f32 %v1077, %v1081
        %v1084 = vadd.f32 %v1078, %v1082
        %s1085 = sld [smem:[#allocation3 + $0xb2]]
        %v1086 = vstv %s1085
        %v1087 = vmul.f32 %v1086, %v759
        %v1088 = vmul.f32 %v1086, %v760
        %v1089 = vadd.f32 %v1083, %v1087
        %v1090 = vadd.f32 %v1084, %v1088
        %s1091 = sld [smem:[#allocation3 + $0xb3]]
        %v1092 = vstv %s1091
        %v1093 = vmul.f32 %v1092, %v803
        %v1094 = vmul.f32 %v1092, %v804
        %v1095 = vadd.f32 %v1089, %v1093
        %v1096 = vadd.f32 %v1090, %v1094
        %s1097 = sld [smem:[#allocation3 + $0xb4]]
        %v1098 = vstv %s1097
        %v1099 = vmul.f32 %v1098, %v847
        %v1100 = vmul.f32 %v1098, %v848
        %v1101 = vadd.f32 %v1095, %v1099
        %v1102 = vadd.f32 %v1096, %v1100
        %s1103 = sld [smem:[#allocation3 + $0xb5]]
        %v1104 = vstv %s1103
        %v1105 = vmul.f32 %v1104, %v891
        %v1106 = vmul.f32 %v1104, %v892
        %v1107 = vadd.f32 %v1101, %v1105
        %v1108 = vadd.f32 %v1102, %v1106
        %v1109 = vmul.f32 %v1107, 0.01
        %v1110 = vmul.f32 %v1108, 0.01
        %v1111 = vmax.f32 %v1107, %v1109
        %v1112 = vmax.f32 %v1108, %v1110
        %s1113 = sld [smem:[#allocation3 + $0xb6]]
        %v1114 = vstv %s1113
        %v1115 = vmul.f32 %v1114, %v627
        %v1116 = vmul.f32 %v1114, %v628
        %s1117 = sld [smem:[#allocation3 + $0xb7]]
        %v1118 = vstv %s1117
        %v1119 = vmul.f32 %v1118, %v671
        %v1120 = vmul.f32 %v1118, %v672
        %v1121 = vadd.f32 %v1115, %v1119
        %v1122 = vadd.f32 %v1116, %v1120
        %s1123 = sld [smem:[#allocation3 + $0xb8]]
        %v1124 = vstv %s1123
        %v1125 = vmul.f32 %v1124, %v715
        %v1126 = vmul.f32 %v1124, %v716
        %v1127 = vadd.f32 %v1121, %v1125
        %v1128 = vadd.f32 %v1122, %v1126
        %s1129 = sld [smem:[#allocation3 + $0xb9]]
        %v1130 = vstv %s1129
        %v1131 = vmul.f32 %v1130, %v759
        %v1132 = vmul.f32 %v1130, %v760
        %v1133 = vadd.f32 %v1127, %v1131
        %v1134 = vadd.f32 %v1128, %v1132
        %s1135 = sld [smem:[#allocation3 + $0xba]]
        %v1136 = vstv %s1135
        %v1137 = vmul.f32 %v1136, %v803
        %v1138 = vmul.f32 %v1136, %v804
        %v1139 = vadd.f32 %v1133, %v1137
        %v1140 = vadd.f32 %v1134, %v1138
        %s1141 = sld [smem:[#allocation3 + $0xbb]]
        %v1142 = vstv %s1141
        %v1143 = vmul.f32 %v1142, %v847
        %v1144 = vmul.f32 %v1142, %v848
        %v1145 = vadd.f32 %v1139, %v1143
        %v1146 = vadd.f32 %v1140, %v1144
        %s1147 = sld [smem:[#allocation3 + $0xbc]]
        %v1148 = vstv %s1147
        %v1149 = vmul.f32 %v1148, %v891
        %v1150 = vmul.f32 %v1148, %v892
        %v1151 = vadd.f32 %v1145, %v1149
        %v1152 = vadd.f32 %v1146, %v1150
        %v1153 = vmul.f32 %v1151, 0.01
        %v1154 = vmul.f32 %v1152, 0.01
        %v1155 = vmax.f32 %v1151, %v1153
        %v1156 = vmax.f32 %v1152, %v1154
        %s1157 = sld [smem:[#allocation3 + $0xbd]]
        %v1158 = vstv %s1157
        %v1159 = vmul.f32 %v1158, %v627
        %v1160 = vmul.f32 %v1158, %v628
        %s1161 = sld [smem:[#allocation3 + $0xbe]]
        %v1162 = vstv %s1161
        %v1163 = vmul.f32 %v1162, %v671
        %v1164 = vmul.f32 %v1162, %v672
        %v1165 = vadd.f32 %v1159, %v1163
        %v1166 = vadd.f32 %v1160, %v1164
        %s1167 = sld [smem:[#allocation3 + $0xbf]]
        %v1168 = vstv %s1167
        %v1169 = vmul.f32 %v1168, %v715
        %v1170 = vmul.f32 %v1168, %v716
        %v1171 = vadd.f32 %v1165, %v1169
        %v1172 = vadd.f32 %v1166, %v1170
        %s1173 = sld [smem:[#allocation3 + $0xc0]]
        %v1174 = vstv %s1173
        %v1175 = vmul.f32 %v1174, %v759
        %v1176 = vmul.f32 %v1174, %v760
        %v1177 = vadd.f32 %v1171, %v1175
        %v1178 = vadd.f32 %v1172, %v1176
        %s1179 = sld [smem:[#allocation3 + $0xc1]]
        %v1180 = vstv %s1179
        %v1181 = vmul.f32 %v1180, %v803
        %v1182 = vmul.f32 %v1180, %v804
        %v1183 = vadd.f32 %v1177, %v1181
        %v1184 = vadd.f32 %v1178, %v1182
        %s1185 = sld [smem:[#allocation3 + $0xc2]]
        %v1186 = vstv %s1185
        %v1187 = vmul.f32 %v1186, %v847
        %v1188 = vmul.f32 %v1186, %v848
        %v1189 = vadd.f32 %v1183, %v1187
        %v1190 = vadd.f32 %v1184, %v1188
        %s1191 = sld [smem:[#allocation3 + $0xc3]]
        %v1192 = vstv %s1191
        %v1193 = vmul.f32 %v1192, %v891
        %v1194 = vmul.f32 %v1192, %v892
        %v1195 = vadd.f32 %v1189, %v1193
        %v1196 = vadd.f32 %v1190, %v1194
        %v1197 = vmul.f32 %v1195, 0.01
        %v1198 = vmul.f32 %v1196, 0.01
        %v1199 = vmax.f32 %v1195, %v1197
        %v1200 = vmax.f32 %v1196, %v1198
        %s1201 = sld [smem:[#allocation3 + $0xc4]]
        %v1202 = vstv %s1201
        %v1203 = vmul.f32 %v1202, %v935
        %v1204 = vmul.f32 %v1202, %v936
        %s1205 = sld [smem:[#allocation3 + $0xc5]]
        %v1206 = vstv %s1205
        %v1207 = vmul.f32 %v1206, %v979
        %v1208 = vmul.f32 %v1206, %v980
        %v1209 = vadd.f32 %v1203, %v1207
        %v1210 = vadd.f32 %v1204, %v1208
        %s1211 = sld [smem:[#allocation3 + $0xc6]]
        %v1212 = vstv %s1211
        %v1213 = vmul.f32 %v1212, %v1023
        %v1214 = vmul.f32 %v1212, %v1024
        %v1215 = vadd.f32 %v1209, %v1213
        %v1216 = vadd.f32 %v1210, %v1214
        %s1217 = sld [smem:[#allocation3 + $0xc7]]
        %v1218 = vstv %s1217
        %v1219 = vmul.f32 %v1218, %v1067
        %v1220 = vmul.f32 %v1218, %v1068
        %v1221 = vadd.f32 %v1215, %v1219
        %v1222 = vadd.f32 %v1216, %v1220
        %s1223 = sld [smem:[#allocation3 + $0xc8]]
        %v1224 = vstv %s1223
        %v1225 = vmul.f32 %v1224, %v1111
        %v1226 = vmul.f32 %v1224, %v1112
        %v1227 = vadd.f32 %v1221, %v1225
        %v1228 = vadd.f32 %v1222, %v1226
        %s1229 = sld [smem:[#allocation3 + $0xc9]]
        %v1230 = vstv %s1229
        %v1231 = vmul.f32 %v1230, %v1155
        %v1232 = vmul.f32 %v1230, %v1156
        %v1233 = vadd.f32 %v1227, %v1231
        %v1234 = vadd.f32 %v1228, %v1232
        %s1235 = sld [smem:[#allocation3 + $0xca]]
        %v1236 = vstv %s1235
        %v1237 = vmul.f32 %v1236, %v1199
        %v1238 = vmul.f32 %v1236, %v1200
        %v1239 = vadd.f32 %v1233, %v1237
        %v1240 = vadd.f32 %v1234, %v1238
        %v1241 = vmul.f32 %v1239, 0.01
        %v1242 = vmul.f32 %v1240, 0.01
        %v1243 = vmax.f32 %v1239, %v1241
        %v1244 = vmax.f32 %v1240, %v1242
        %s1245 = sld [smem:[#allocation3 + $0xcb]]
        %v1246 = vstv %s1245
        %v1247 = vmul.f32 %v1246, %v935
        %v1248 = vmul.f32 %v1246, %v936
        %s1249 = sld [smem:[#allocation3 + $0xcc]]
        %v1250 = vstv %s1249
        %v1251 = vmul.f32 %v1250, %v979
        %v1252 = vmul.f32 %v1250, %v980
        %v1253 = vadd.f32 %v1247, %v1251
        %v1254 = vadd.f32 %v1248, %v1252
        %s1255 = sld [smem:[#allocation3 + $0xcd]]
        %v1256 = vstv %s1255
        %v1257 = vmul.f32 %v1256, %v1023
        %v1258 = vmul.f32 %v1256, %v1024
        %v1259 = vadd.f32 %v1253, %v1257
        %v1260 = vadd.f32 %v1254, %v1258
        %s1261 = sld [smem:[#allocation3 + $0xce]]
        %v1262 = vstv %s1261
        %v1263 = vmul.f32 %v1262, %v1067
        %v1264 = vmul.f32 %v1262, %v1068
        %v1265 = vadd.f32 %v1259, %v1263
        %v1266 = vadd.f32 %v1260, %v1264
        %s1267 = sld [smem:[#allocation3 + $0xcf]]
        %v1268 = vstv %s1267
        %v1269 = vmul.f32 %v1268, %v1111
        %v1270 = vmul.f32 %v1268, %v1112
        %v1271 = vadd.f32 %v1265, %v1269
        %v1272 = vadd.f32 %v1266, %v1270
        %s1273 = sld [smem:[#allocation3 + $0xd0]]
        %v1274 = vstv %s1273
        %v1275 = vmul.f32 %v1274, %v1155
        %v1276 = vmul.f32 %v1274, %v1156
        %v1277 = vadd.f32 %v1271, %v1275
        %v1278 = vadd.f32 %v1272, %v1276
        %s1279 = sld [smem:[#allocation3 + $0xd1]]
        %v1280 = vstv %s1279
        %v1281 = vmul.f32 %v1280, %v1199
        %v1282 = vmul.f32 %v1280, %v1200
        %v1283 = vadd.f32 %v1277, %v1281
        %v1284 = vadd.f32 %v1278, %v1282
        %v1285 = vmul.f32 %v1283, 0.01
        %v1286 = vmul.f32 %v1284, 0.01
        %v1287 = vmax.f32 %v1283, %v1285
        %v1288 = vmax.f32 %v1284, %v1286
        %s1289 = sld [smem:[#allocation3 + $0xd2]]
        %v1290 = vstv %s1289
        %v1291 = vmul.f32 %v1290, %v935
        %v1292 = vmul.f32 %v1290, %v936
        %s1293 = sld [smem:[#allocation3 + $0xd3]]
        %v1294 = vstv %s1293
        %v1295 = vmul.f32 %v1294, %v979
        %v1296 = vmul.f32 %v1294, %v980
        %v1297 = vadd.f32 %v1291, %v1295
        %v1298 = vadd.f32 %v1292, %v1296
        %s1299 = sld [smem:[#allocation3 + $0xd4]]
        %v1300 = vstv %s1299
        %v1301 = vmul.f32 %v1300, %v1023
        %v1302 = vmul.f32 %v1300, %v1024
        %v1303 = vadd.f32 %v1297, %v1301
        %v1304 = vadd.f32 %v1298, %v1302
        %s1305 = sld [smem:[#allocation3 + $0xd5]]
        %v1306 = vstv %s1305
        %v1307 = vmul.f32 %v1306, %v1067
        %v1308 = vmul.f32 %v1306, %v1068
        %v1309 = vadd.f32 %v1303, %v1307
        %v1310 = vadd.f32 %v1304, %v1308
        %s1311 = sld [smem:[#allocation3 + $0xd6]]
        %v1312 = vstv %s1311
        %v1313 = vmul.f32 %v1312, %v1111
        %v1314 = vmul.f32 %v1312, %v1112
        %v1315 = vadd.f32 %v1309, %v1313
        %v1316 = vadd.f32 %v1310, %v1314
        %s1317 = sld [smem:[#allocation3 + $0xd7]]
        %v1318 = vstv %s1317
        %v1319 = vmul.f32 %v1318, %v1155
        %v1320 = vmul.f32 %v1318, %v1156
        %v1321 = vadd.f32 %v1315, %v1319
        %v1322 = vadd.f32 %v1316, %v1320
        %s1323 = sld [smem:[#allocation3 + $0xd8]]
        %v1324 = vstv %s1323
        %v1325 = vmul.f32 %v1324, %v1199
        %v1326 = vmul.f32 %v1324, %v1200
        %v1327 = vadd.f32 %v1321, %v1325
        %v1328 = vadd.f32 %v1322, %v1326
        %v1329 = vmul.f32 %v1327, 0.01
        %v1330 = vmul.f32 %v1328, 0.01
        %v1331 = vmax.f32 %v1327, %v1329
        %v1332 = vmax.f32 %v1328, %v1330
        %s1333 = sld [smem:[#allocation3 + $0xd9]]
        %v1334 = vstv %s1333
        %v1335 = vmul.f32 %v1334, %v935
        %v1336 = vmul.f32 %v1334, %v936
        %s1337 = sld [smem:[#allocation3 + $0xda]]
        %v1338 = vstv %s1337
        %v1339 = vmul.f32 %v1338, %v979
        %v1340 = vmul.f32 %v1338, %v980
        %v1341 = vadd.f32 %v1335, %v1339
        %v1342 = vadd.f32 %v1336, %v1340
        %s1343 = sld [smem:[#allocation3 + $0xdb]]
        %v1344 = vstv %s1343
        %v1345 = vmul.f32 %v1344, %v1023
        %v1346 = vmul.f32 %v1344, %v1024
        %v1347 = vadd.f32 %v1341, %v1345
        %v1348 = vadd.f32 %v1342, %v1346
        %s1349 = sld [smem:[#allocation3 + $0xdc]]
        %v1350 = vstv %s1349
        %v1351 = vmul.f32 %v1350, %v1067
        %v1352 = vmul.f32 %v1350, %v1068
        %v1353 = vadd.f32 %v1347, %v1351
        %v1354 = vadd.f32 %v1348, %v1352
        %s1355 = sld [smem:[#allocation3 + $0xdd]]
        %v1356 = vstv %s1355
        %v1357 = vmul.f32 %v1356, %v1111
        %v1358 = vmul.f32 %v1356, %v1112
        %v1359 = vadd.f32 %v1353, %v1357
        %v1360 = vadd.f32 %v1354, %v1358
        %s1361 = sld [smem:[#allocation3 + $0xde]]
        %v1362 = vstv %s1361
        %v1363 = vmul.f32 %v1362, %v1155
        %v1364 = vmul.f32 %v1362, %v1156
        %v1365 = vadd.f32 %v1359, %v1363
        %v1366 = vadd.f32 %v1360, %v1364
        %s1367 = sld [smem:[#allocation3 + $0xdf]]
        %v1368 = vstv %s1367
        %v1369 = vmul.f32 %v1368, %v1199
        %v1370 = vmul.f32 %v1368, %v1200
        %v1371 = vadd.f32 %v1365, %v1369
        %v1372 = vadd.f32 %v1366, %v1370
        %v1373 = vmul.f32 %v1371, 0.01
        %v1374 = vmul.f32 %v1372, 0.01
        %v1375 = vmax.f32 %v1371, %v1373
        %v1376 = vmax.f32 %v1372, %v1374
        %s1377 = sld [smem:[#allocation3 + $0xe0]]
        %v1378 = vstv %s1377
        %v1379 = vmul.f32 %v1378, %v935
        %v1380 = vmul.f32 %v1378, %v936
        %s1381 = sld [smem:[#allocation3 + $0xe1]]
        %v1382 = vstv %s1381
        %v1383 = vmul.f32 %v1382, %v979
        %v1384 = vmul.f32 %v1382, %v980
        %v1385 = vadd.f32 %v1379, %v1383
        %v1386 = vadd.f32 %v1380, %v1384
        %s1387 = sld [smem:[#allocation3 + $0xe2]]
        %v1388 = vstv %s1387
        %v1389 = vmul.f32 %v1388, %v1023
        %v1390 = vmul.f32 %v1388, %v1024
        %v1391 = vadd.f32 %v1385, %v1389
        %v1392 = vadd.f32 %v1386, %v1390
        %s1393 = sld [smem:[#allocation3 + $0xe3]]
        %v1394 = vstv %s1393
        %v1395 = vmul.f32 %v1394, %v1067
        %v1396 = vmul.f32 %v1394, %v1068
        %v1397 = vadd.f32 %v1391, %v1395
        %v1398 = vadd.f32 %v1392, %v1396
        %s1399 = sld [smem:[#allocation3 + $0xe4]]
        %v1400 = vstv %s1399
        %v1401 = vmul.f32 %v1400, %v1111
        %v1402 = vmul.f32 %v1400, %v1112
        %v1403 = vadd.f32 %v1397, %v1401
        %v1404 = vadd.f32 %v1398, %v1402
        %s1405 = sld [smem:[#allocation3 + $0xe5]]
        %v1406 = vstv %s1405
        %v1407 = vmul.f32 %v1406, %v1155
        %v1408 = vmul.f32 %v1406, %v1156
        %v1409 = vadd.f32 %v1403, %v1407
        %v1410 = vadd.f32 %v1404, %v1408
        %s1411 = sld [smem:[#allocation3 + $0xe6]]
        %v1412 = vstv %s1411
        %v1413 = vmul.f32 %v1412, %v1199
        %v1414 = vmul.f32 %v1412, %v1200
        %v1415 = vadd.f32 %v1409, %v1413
        %v1416 = vadd.f32 %v1410, %v1414
        %v1417 = vmul.f32 %v1415, 0.01
        %v1418 = vmul.f32 %v1416, 0.01
        %v1419 = vmax.f32 %v1415, %v1417
        %v1420 = vmax.f32 %v1416, %v1418
        %s1421 = sld [smem:[#allocation3 + $0xe7]]
        %v1422 = vstv %s1421
        %v1423 = vmul.f32 %v1422, %v935
        %v1424 = vmul.f32 %v1422, %v936
        %s1425 = sld [smem:[#allocation3 + $0xe8]]
        %v1426 = vstv %s1425
        %v1427 = vmul.f32 %v1426, %v979
        %v1428 = vmul.f32 %v1426, %v980
        %v1429 = vadd.f32 %v1423, %v1427
        %v1430 = vadd.f32 %v1424, %v1428
        %s1431 = sld [smem:[#allocation3 + $0xe9]]
        %v1432 = vstv %s1431
        %v1433 = vmul.f32 %v1432, %v1023
        %v1434 = vmul.f32 %v1432, %v1024
        %v1435 = vadd.f32 %v1429, %v1433
        %v1436 = vadd.f32 %v1430, %v1434
        %s1437 = sld [smem:[#allocation3 + $0xea]]
        %v1438 = vstv %s1437
        %v1439 = vmul.f32 %v1438, %v1067
        %v1440 = vmul.f32 %v1438, %v1068
        %v1441 = vadd.f32 %v1435, %v1439
        %v1442 = vadd.f32 %v1436, %v1440
        %s1443 = sld [smem:[#allocation3 + $0xeb]]
        %v1444 = vstv %s1443
        %v1445 = vmul.f32 %v1444, %v1111
        %v1446 = vmul.f32 %v1444, %v1112
        %v1447 = vadd.f32 %v1441, %v1445
        %v1448 = vadd.f32 %v1442, %v1446
        %s1449 = sld [smem:[#allocation3 + $0xec]]
        %v1450 = vstv %s1449
        %v1451 = vmul.f32 %v1450, %v1155
        %v1452 = vmul.f32 %v1450, %v1156
        %v1453 = vadd.f32 %v1447, %v1451
        %v1454 = vadd.f32 %v1448, %v1452
        %s1455 = sld [smem:[#allocation3 + $0xed]]
        %v1456 = vstv %s1455
        %v1457 = vmul.f32 %v1456, %v1199
        %v1458 = vmul.f32 %v1456, %v1200
        %v1459 = vadd.f32 %v1453, %v1457
        %v1460 = vadd.f32 %v1454, %v1458
        %v1461 = vmul.f32 %v1459, 0.01
        %v1462 = vmul.f32 %v1460, 0.01
        %v1463 = vmax.f32 %v1459, %v1461
        %v1464 = vmax.f32 %v1460, %v1462
        %s1465 = sld [smem:[#allocation3 + $0xee]]
        %v1466 = vstv %s1465
        %v1467 = vmul.f32 %v1466, %v935
        %v1468 = vmul.f32 %v1466, %v936
        %s1469 = sld [smem:[#allocation3 + $0xef]]
        %v1470 = vstv %s1469
        %v1471 = vmul.f32 %v1470, %v979
        %v1472 = vmul.f32 %v1470, %v980
        %v1473 = vadd.f32 %v1467, %v1471
        %v1474 = vadd.f32 %v1468, %v1472
        %s1475 = sld [smem:[#allocation3 + $0xf0]]
        %v1476 = vstv %s1475
        %v1477 = vmul.f32 %v1476, %v1023
        %v1478 = vmul.f32 %v1476, %v1024
        %v1479 = vadd.f32 %v1473, %v1477
        %v1480 = vadd.f32 %v1474, %v1478
        %s1481 = sld [smem:[#allocation3 + $0xf1]]
        %v1482 = vstv %s1481
        %v1483 = vmul.f32 %v1482, %v1067
        %v1484 = vmul.f32 %v1482, %v1068
        %v1485 = vadd.f32 %v1479, %v1483
        %v1486 = vadd.f32 %v1480, %v1484
        %s1487 = sld [smem:[#allocation3 + $0xf2]]
        %v1488 = vstv %s1487
        %v1489 = vmul.f32 %v1488, %v1111
        %v1490 = vmul.f32 %v1488, %v1112
        %v1491 = vadd.f32 %v1485, %v1489
        %v1492 = vadd.f32 %v1486, %v1490
        %s1493 = sld [smem:[#allocation3 + $0xf3]]
        %v1494 = vstv %s1493
        %v1495 = vmul.f32 %v1494, %v1155
        %v1496 = vmul.f32 %v1494, %v1156
        %v1497 = vadd.f32 %v1491, %v1495
        %v1498 = vadd.f32 %v1492, %v1496
        %s1499 = sld [smem:[#allocation3 + $0xf4]]
        %v1500 = vstv %s1499
        %v1501 = vmul.f32 %v1500, %v1199
        %v1502 = vmul.f32 %v1500, %v1200
        %v1503 = vadd.f32 %v1497, %v1501
        %v1504 = vadd.f32 %v1498, %v1502
        %v1505 = vmul.f32 %v1503, 0.01
        %v1506 = vmul.f32 %v1504, 0.01
        %v1507 = vmax.f32 %v1503, %v1505
        %v1508 = vmax.f32 %v1504, %v1506
        %s1509 = sld [smem:[#allocation3 + $0xf5]]
        %v1510 = vstv %s1509
        %v1511 = vmul.f32 %v1510, %v1243
        %v1512 = vmul.f32 %v1510, %v1244
        %s1513 = sld [smem:[#allocation3 + $0xf6]]
        %v1514 = vstv %s1513
        %v1515 = vmul.f32 %v1514, %v1287
        %v1516 = vmul.f32 %v1514, %v1288
        %v1517 = vadd.f32 %v1511, %v1515
        %v1518 = vadd.f32 %v1512, %v1516
        %s1519 = sld [smem:[#allocation3 + $0xf7]]
        %v1520 = vstv %s1519
        %v1521 = vmul.f32 %v1520, %v1331
        %v1522 = vmul.f32 %v1520, %v1332
        %v1523 = vadd.f32 %v1517, %v1521
        %v1524 = vadd.f32 %v1518, %v1522
        %s1525 = sld [smem:[#allocation3 + $0xf8]]
        %v1526 = vstv %s1525
        %v1527 = vmul.f32 %v1526, %v1375
        %v1528 = vmul.f32 %v1526, %v1376
        %v1529 = vadd.f32 %v1523, %v1527
        %v1530 = vadd.f32 %v1524, %v1528
        %s1531 = sld [smem:[#allocation3 + $0xf9]]
        %v1532 = vstv %s1531
        %v1533 = vmul.f32 %v1532, %v1419
        %v1534 = vmul.f32 %v1532, %v1420
        %v1535 = vadd.f32 %v1529, %v1533
        %v1536 = vadd.f32 %v1530, %v1534
        %s1537 = sld [smem:[#allocation3 + $0xfa]]
        %v1538 = vstv %s1537
        %v1539 = vmul.f32 %v1538, %v1463
        %v1540 = vmul.f32 %v1538, %v1464
        %v1541 = vadd.f32 %v1535, %v1539
        %v1542 = vadd.f32 %v1536, %v1540
        %s1543 = sld [smem:[#allocation3 + $0xfb]]
        %v1544 = vstv %s1543
        %v1545 = vmul.f32 %v1544, %v1507
        %v1546 = vmul.f32 %v1544, %v1508
        %v1547 = vadd.f32 %v1541, %v1545
        %v1548 = vadd.f32 %v1542, %v1546
        %v1549 = vmul.f32 %v1547, 0.01
        %v1550 = vmul.f32 %v1548, 0.01
        %v1551 = vmax.f32 %v1547, %v1549
        %v1552 = vmax.f32 %v1548, %v1550
        %s1553 = sld [smem:[#allocation3 + $0xfc]]
        %v1554 = vstv %s1553
        %v1555 = vmul.f32 %v1554, %v1243
        %v1556 = vmul.f32 %v1554, %v1244
        %s1557 = sld [smem:[#allocation3 + $0xfd]]
        %v1558 = vstv %s1557
        %v1559 = vmul.f32 %v1558, %v1287
        %v1560 = vmul.f32 %v1558, %v1288
        %v1561 = vadd.f32 %v1555, %v1559
        %v1562 = vadd.f32 %v1556, %v1560
        %s1563 = sld [smem:[#allocation3 + $0xfe]]
        %v1564 = vstv %s1563
        %v1565 = vmul.f32 %v1564, %v1331
        %v1566 = vmul.f32 %v1564, %v1332
        %v1567 = vadd.f32 %v1561, %v1565
        %v1568 = vadd.f32 %v1562, %v1566
        %s1569 = sld [smem:[#allocation3 + $0xff]]
        %v1570 = vstv %s1569
        %v1571 = vmul.f32 %v1570, %v1375
        %v1572 = vmul.f32 %v1570, %v1376
        %v1573 = vadd.f32 %v1567, %v1571
        %v1574 = vadd.f32 %v1568, %v1572
        %s1575 = sld [smem:[#allocation3 + $0x100]]
        %v1576 = vstv %s1575
        %v1577 = vmul.f32 %v1576, %v1419
        %v1578 = vmul.f32 %v1576, %v1420
        %v1579 = vadd.f32 %v1573, %v1577
        %v1580 = vadd.f32 %v1574, %v1578
        %s1581 = sld [smem:[#allocation3 + $0x101]]
        %v1582 = vstv %s1581
        %v1583 = vmul.f32 %v1582, %v1463
        %v1584 = vmul.f32 %v1582, %v1464
        %v1585 = vadd.f32 %v1579, %v1583
        %v1586 = vadd.f32 %v1580, %v1584
        %s1587 = sld [smem:[#allocation3 + $0x102]]
        %v1588 = vstv %s1587
        %v1589 = vmul.f32 %v1588, %v1507
        %v1590 = vmul.f32 %v1588, %v1508
        %v1591 = vadd.f32 %v1585, %v1589
        %v1592 = vadd.f32 %v1586, %v1590
        %v1593 = vmul.f32 %v1591, 0.01
        %v1594 = vmul.f32 %v1592, 0.01
        %v1595 = vmax.f32 %v1591, %v1593
        %v1596 = vmax.f32 %v1592, %v1594
        %s1597 = sld [smem:[#allocation3 + $0x103]]
        %v1598 = vstv %s1597
        %v1599 = vmul.f32 %v1598, %v1243
        %v1600 = vmul.f32 %v1598, %v1244
        %s1601 = sld [smem:[#allocation3 + $0x104]]
        %v1602 = vstv %s1601
        %v1603 = vmul.f32 %v1602, %v1287
        %v1604 = vmul.f32 %v1602, %v1288
        %v1605 = vadd.f32 %v1599, %v1603
        %v1606 = vadd.f32 %v1600, %v1604
        %s1607 = sld [smem:[#allocation3 + $0x105]]
        %v1608 = vstv %s1607
        %v1609 = vmul.f32 %v1608, %v1331
        %v1610 = vmul.f32 %v1608, %v1332
        %v1611 = vadd.f32 %v1605, %v1609
        %v1612 = vadd.f32 %v1606, %v1610
        %s1613 = sld [smem:[#allocation3 + $0x106]]
        %v1614 = vstv %s1613
        %v1615 = vmul.f32 %v1614, %v1375
        %v1616 = vmul.f32 %v1614, %v1376
        %v1617 = vadd.f32 %v1611, %v1615
        %v1618 = vadd.f32 %v1612, %v1616
        %s1619 = sld [smem:[#allocation3 + $0x107]]
        %v1620 = vstv %s1619
        %v1621 = vmul.f32 %v1620, %v1419
        %v1622 = vmul.f32 %v1620, %v1420
        %v1623 = vadd.f32 %v1617, %v1621
        %v1624 = vadd.f32 %v1618, %v1622
        %s1625 = sld [smem:[#allocation3 + $0x108]]
        %v1626 = vstv %s1625
        %v1627 = vmul.f32 %v1626, %v1463
        %v1628 = vmul.f32 %v1626, %v1464
        %v1629 = vadd.f32 %v1623, %v1627
        %v1630 = vadd.f32 %v1624, %v1628
        %s1631 = sld [smem:[#allocation3 + $0x109]]
        %v1632 = vstv %s1631
        %v1633 = vmul.f32 %v1632, %v1507
        %v1634 = vmul.f32 %v1632, %v1508
        %v1635 = vadd.f32 %v1629, %v1633
        %v1636 = vadd.f32 %v1630, %v1634
        %v1637 = vmul.f32 %v1635, 0.01
        %v1638 = vmul.f32 %v1636, 0.01
        %v1639 = vmax.f32 %v1635, %v1637
        %v1640 = vmax.f32 %v1636, %v1638
        %s1641 = sld [smem:[#allocation3 + $0x10a]]
        %v1642 = vstv %s1641
        %v1643 = vmul.f32 %v1642, %v1243
        %v1644 = vmul.f32 %v1642, %v1244
        %s1645 = sld [smem:[#allocation3 + $0x10b]]
        %v1646 = vstv %s1645
        %v1647 = vmul.f32 %v1646, %v1287
        %v1648 = vmul.f32 %v1646, %v1288
        %v1649 = vadd.f32 %v1643, %v1647
        %v1650 = vadd.f32 %v1644, %v1648
        %s1651 = sld [smem:[#allocation3 + $0x10c]]
        %v1652 = vstv %s1651
        %v1653 = vmul.f32 %v1652, %v1331
        %v1654 = vmul.f32 %v1652, %v1332
        %v1655 = vadd.f32 %v1649, %v1653
        %v1656 = vadd.f32 %v1650, %v1654
        %s1657 = sld [smem:[#allocation3 + $0x10d]]
        %v1658 = vstv %s1657
        %v1659 = vmul.f32 %v1658, %v1375
        %v1660 = vmul.f32 %v1658, %v1376
        %v1661 = vadd.f32 %v1655, %v1659
        %v1662 = vadd.f32 %v1656, %v1660
        %s1663 = sld [smem:[#allocation3 + $0x10e]]
        %v1664 = vstv %s1663
        %v1665 = vmul.f32 %v1664, %v1419
        %v1666 = vmul.f32 %v1664, %v1420
        %v1667 = vadd.f32 %v1661, %v1665
        %v1668 = vadd.f32 %v1662, %v1666
        %s1669 = sld [smem:[#allocation3 + $0x10f]]
        %v1670 = vstv %s1669
        %v1671 = vmul.f32 %v1670, %v1463
        %v1672 = vmul.f32 %v1670, %v1464
        %v1673 = vadd.f32 %v1667, %v1671
        %v1674 = vadd.f32 %v1668, %v1672
        %s1675 = sld [smem:[#allocation3 + $0x110]]
        %v1676 = vstv %s1675
        %v1677 = vmul.f32 %v1676, %v1507
        %v1678 = vmul.f32 %v1676, %v1508
        %v1679 = vadd.f32 %v1673, %v1677
        %v1680 = vadd.f32 %v1674, %v1678
        %v1681 = vmul.f32 %v1679, 0.01
        %v1682 = vmul.f32 %v1680, 0.01
        %v1683 = vmax.f32 %v1679, %v1681
        %v1684 = vmax.f32 %v1680, %v1682
        %s1685 = sld [smem:[#allocation3 + $0x111]]
        %v1686 = vstv %s1685
        %v1687 = vmul.f32 %v1686, %v1243
        %v1688 = vmul.f32 %v1686, %v1244
        %s1689 = sld [smem:[#allocation3 + $0x112]]
        %v1690 = vstv %s1689
        %v1691 = vmul.f32 %v1690, %v1287
        %v1692 = vmul.f32 %v1690, %v1288
        %v1693 = vadd.f32 %v1687, %v1691
        %v1694 = vadd.f32 %v1688, %v1692
        %s1695 = sld [smem:[#allocation3 + $0x113]]
        %v1696 = vstv %s1695
        %v1697 = vmul.f32 %v1696, %v1331
        %v1698 = vmul.f32 %v1696, %v1332
        %v1699 = vadd.f32 %v1693, %v1697
        %v1700 = vadd.f32 %v1694, %v1698
        %s1701 = sld [smem:[#allocation3 + $0x114]]
        %v1702 = vstv %s1701
        %v1703 = vmul.f32 %v1702, %v1375
        %v1704 = vmul.f32 %v1702, %v1376
        %v1705 = vadd.f32 %v1699, %v1703
        %v1706 = vadd.f32 %v1700, %v1704
        %s1707 = sld [smem:[#allocation3 + $0x115]]
        %v1708 = vstv %s1707
        %v1709 = vmul.f32 %v1708, %v1419
        %v1710 = vmul.f32 %v1708, %v1420
        %v1711 = vadd.f32 %v1705, %v1709
        %v1712 = vadd.f32 %v1706, %v1710
        %s1713 = sld [smem:[#allocation3 + $0x116]]
        %v1714 = vstv %s1713
        %v1715 = vmul.f32 %v1714, %v1463
        %v1716 = vmul.f32 %v1714, %v1464
        %v1717 = vadd.f32 %v1711, %v1715
        %v1718 = vadd.f32 %v1712, %v1716
        %s1719 = sld [smem:[#allocation3 + $0x117]]
        %v1720 = vstv %s1719
        %v1721 = vmul.f32 %v1720, %v1507
        %v1722 = vmul.f32 %v1720, %v1508
        %v1723 = vadd.f32 %v1717, %v1721
        %v1724 = vadd.f32 %v1718, %v1722
        %v1725 = vmul.f32 %v1723, 0.01
        %v1726 = vmul.f32 %v1724, 0.01
        %v1727 = vmax.f32 %v1723, %v1725
        %v1728 = vmax.f32 %v1724, %v1726
        %s1729 = sld [smem:[#allocation3 + $0x118]]
        %v1730 = vstv %s1729
        %v1731 = vmul.f32 %v1730, %v1243
        %v1732 = vmul.f32 %v1730, %v1244
        %s1733 = sld [smem:[#allocation3 + $0x119]]
        %v1734 = vstv %s1733
        %v1735 = vmul.f32 %v1734, %v1287
        %v1736 = vmul.f32 %v1734, %v1288
        %v1737 = vadd.f32 %v1731, %v1735
        %v1738 = vadd.f32 %v1732, %v1736
        %s1739 = sld [smem:[#allocation3 + $0x11a]]
        %v1740 = vstv %s1739
        %v1741 = vmul.f32 %v1740, %v1331
        %v1742 = vmul.f32 %v1740, %v1332
        %v1743 = vadd.f32 %v1737, %v1741
        %v1744 = vadd.f32 %v1738, %v1742
        %s1745 = sld [smem:[#allocation3 + $0x11b]]
        %v1746 = vstv %s1745
        %v1747 = vmul.f32 %v1746, %v1375
        %v1748 = vmul.f32 %v1746, %v1376
        %v1749 = vadd.f32 %v1743, %v1747
        %v1750 = vadd.f32 %v1744, %v1748
        %s1751 = sld [smem:[#allocation3 + $0x11c]]
        %v1752 = vstv %s1751
        %v1753 = vmul.f32 %v1752, %v1419
        %v1754 = vmul.f32 %v1752, %v1420
        %v1755 = vadd.f32 %v1749, %v1753
        %v1756 = vadd.f32 %v1750, %v1754
        %s1757 = sld [smem:[#allocation3 + $0x11d]]
        %v1758 = vstv %s1757
        %v1759 = vmul.f32 %v1758, %v1463
        %v1760 = vmul.f32 %v1758, %v1464
        %v1761 = vadd.f32 %v1755, %v1759
        %v1762 = vadd.f32 %v1756, %v1760
        %s1763 = sld [smem:[#allocation3 + $0x11e]]
        %v1764 = vstv %s1763
        %v1765 = vmul.f32 %v1764, %v1507
        %v1766 = vmul.f32 %v1764, %v1508
        %v1767 = vadd.f32 %v1761, %v1765
        %v1768 = vadd.f32 %v1762, %v1766
        %v1769 = vmul.f32 %v1767, 0.01
        %v1770 = vmul.f32 %v1768, 0.01
        %v1771 = vmax.f32 %v1767, %v1769
        %v1772 = vmax.f32 %v1768, %v1770
        %s1773 = sld [smem:[#allocation3 + $0x11f]]
        %v1774 = vstv %s1773
        %v1775 = vmul.f32 %v1774, %v1243
        %v1776 = vmul.f32 %v1774, %v1244
        %s1777 = sld [smem:[#allocation3 + $0x120]]
        %v1778 = vstv %s1777
        %v1779 = vmul.f32 %v1778, %v1287
        %v1780 = vmul.f32 %v1778, %v1288
        %v1781 = vadd.f32 %v1775, %v1779
        %v1782 = vadd.f32 %v1776, %v1780
        %s1783 = sld [smem:[#allocation3 + $0x121]]
        %v1784 = vstv %s1783
        %v1785 = vmul.f32 %v1784, %v1331
        %v1786 = vmul.f32 %v1784, %v1332
        %v1787 = vadd.f32 %v1781, %v1785
        %v1788 = vadd.f32 %v1782, %v1786
        %s1789 = sld [smem:[#allocation3 + $0x122]]
        %v1790 = vstv %s1789
        %v1791 = vmul.f32 %v1790, %v1375
        %v1792 = vmul.f32 %v1790, %v1376
        %v1793 = vadd.f32 %v1787, %v1791
        %v1794 = vadd.f32 %v1788, %v1792
        %s1795 = sld [smem:[#allocation3 + $0x123]]
        %v1796 = vstv %s1795
        %v1797 = vmul.f32 %v1796, %v1419
        %v1798 = vmul.f32 %v1796, %v1420
        %v1799 = vadd.f32 %v1793, %v1797
        %v1800 = vadd.f32 %v1794, %v1798
        %s1801 = sld [smem:[#allocation3 + $0x124]]
        %v1802 = vstv %s1801
        %v1803 = vmul.f32 %v1802, %v1463
        %v1804 = vmul.f32 %v1802, %v1464
        %v1805 = vadd.f32 %v1799, %v1803
        %v1806 = vadd.f32 %v1800, %v1804
        %s1807 = sld [smem:[#allocation3 + $0x125]]
        %v1808 = vstv %s1807
        %v1809 = vmul.f32 %v1808, %v1507
        %v1810 = vmul.f32 %v1808, %v1508
        %v1811 = vadd.f32 %v1805, %v1809
        %v1812 = vadd.f32 %v1806, %v1810
        %v1813 = vmul.f32 %v1811, 0.01
        %v1814 = vmul.f32 %v1812, 0.01
        %v1815 = vmax.f32 %v1811, %v1813
        %v1816 = vmax.f32 %v1812, %v1814
        %s1817 = sld [smem:[#allocation3 + $0x126]]
        %v1818 = vstv %s1817
        %v1819 = vmul.f32 %v1818, %v1551
        %v1820 = vmul.f32 %v1818, %v1552
        %s1821 = sld [smem:[#allocation3 + $0x127]]
        %v1822 = vstv %s1821
        %v1823 = vmul.f32 %v1822, %v1595
        %v1824 = vmul.f32 %v1822, %v1596
        %v1825 = vadd.f32 %v1819, %v1823
        %v1826 = vadd.f32 %v1820, %v1824
        %s1827 = sld [smem:[#allocation3 + $0x128]]
        %v1828 = vstv %s1827
        %v1829 = vmul.f32 %v1828, %v1639
        %v1830 = vmul.f32 %v1828, %v1640
        %v1831 = vadd.f32 %v1825, %v1829
        %v1832 = vadd.f32 %v1826, %v1830
        %s1833 = sld [smem:[#allocation3 + $0x129]]
        %v1834 = vstv %s1833
        %v1835 = vmul.f32 %v1834, %v1683
        %v1836 = vmul.f32 %v1834, %v1684
        %v1837 = vadd.f32 %v1831, %v1835
        %v1838 = vadd.f32 %v1832, %v1836
        %s1839 = sld [smem:[#allocation3 + $0x12a]]
        %v1840 = vstv %s1839
        %v1841 = vmul.f32 %v1840, %v1727
        %v1842 = vmul.f32 %v1840, %v1728
        %v1843 = vadd.f32 %v1837, %v1841
        %v1844 = vadd.f32 %v1838, %v1842
        %s1845 = sld [smem:[#allocation3 + $0x12b]]
        %v1846 = vstv %s1845
        %v1847 = vmul.f32 %v1846, %v1771
        %v1848 = vmul.f32 %v1846, %v1772
        %v1849 = vadd.f32 %v1843, %v1847
        %v1850 = vadd.f32 %v1844, %v1848
        %s1851 = sld [smem:[#allocation3 + $0x12c]]
        %v1852 = vstv %s1851
        %v1853 = vmul.f32 %v1852, %v1815
        %v1854 = vmul.f32 %v1852, %v1816
        %v1855 = vadd.f32 %v1849, %v1853
        %v1856 = vadd.f32 %v1850, %v1854
        %v1857 = vmul.f32 %v1855, 0.01
        %v1858 = vmul.f32 %v1856, 0.01
        %v1859 = vmax.f32 %v1855, %v1857
        %v1860 = vmax.f32 %v1856, %v1858
        %s1861 = sld [smem:[#allocation3 + $0x12d]]
        %v1862 = vstv %s1861
        %v1863 = vmul.f32 %v1862, %v1551
        %v1864 = vmul.f32 %v1862, %v1552
        %s1865 = sld [smem:[#allocation3 + $0x12e]]
        %v1866 = vstv %s1865
        %v1867 = vmul.f32 %v1866, %v1595
        %v1868 = vmul.f32 %v1866, %v1596
        %v1869 = vadd.f32 %v1863, %v1867
        %v1870 = vadd.f32 %v1864, %v1868
        %s1871 = sld [smem:[#allocation3 + $0x12f]]
        %v1872 = vstv %s1871
        %v1873 = vmul.f32 %v1872, %v1639
        %v1874 = vmul.f32 %v1872, %v1640
        %v1875 = vadd.f32 %v1869, %v1873
        %v1876 = vadd.f32 %v1870, %v1874
        %s1877 = sld [smem:[#allocation3 + $0x130]]
        %v1878 = vstv %s1877
        %v1879 = vmul.f32 %v1878, %v1683
        %v1880 = vmul.f32 %v1878, %v1684
        %v1881 = vadd.f32 %v1875, %v1879
        %v1882 = vadd.f32 %v1876, %v1880
        %s1883 = sld [smem:[#allocation3 + $0x131]]
        %v1884 = vstv %s1883
        %v1885 = vmul.f32 %v1884, %v1727
        %v1886 = vmul.f32 %v1884, %v1728
        %v1887 = vadd.f32 %v1881, %v1885
        %v1888 = vadd.f32 %v1882, %v1886
        %s1889 = sld [smem:[#allocation3 + $0x132]]
        %v1890 = vstv %s1889
        %v1891 = vmul.f32 %v1890, %v1771
        %v1892 = vmul.f32 %v1890, %v1772
        %v1893 = vadd.f32 %v1887, %v1891
        %v1894 = vadd.f32 %v1888, %v1892
        %s1895 = sld [smem:[#allocation3 + $0x133]]
        %v1896 = vstv %s1895
        %v1897 = vmul.f32 %v1896, %v1815
        %v1898 = vmul.f32 %v1896, %v1816
        %v1899 = vadd.f32 %v1893, %v1897
        %v1900 = vadd.f32 %v1894, %v1898
        %v1901 = vmul.f32 %v1899, 0.01
        %v1902 = vmul.f32 %v1900, 0.01
        %v1903 = vmax.f32 %v1899, %v1901
        %v1904 = vmax.f32 %v1900, %v1902
        %s1905 = sld [smem:[#allocation3 + $0x134]]
        %v1906 = vstv %s1905
        %v1907 = vmul.f32 %v1906, %v1551
        %v1908 = vmul.f32 %v1906, %v1552
        %s1909 = sld [smem:[#allocation3 + $0x135]]
        %v1910 = vstv %s1909
        %v1911 = vmul.f32 %v1910, %v1595
        %v1912 = vmul.f32 %v1910, %v1596
        %v1913 = vadd.f32 %v1907, %v1911
        %v1914 = vadd.f32 %v1908, %v1912
        %s1915 = sld [smem:[#allocation3 + $0x136]]
        %v1916 = vstv %s1915
        %v1917 = vmul.f32 %v1916, %v1639
        %v1918 = vmul.f32 %v1916, %v1640
        %v1919 = vadd.f32 %v1913, %v1917
        %v1920 = vadd.f32 %v1914, %v1918
        %s1921 = sld [smem:[#allocation3 + $0x137]]
        %v1922 = vstv %s1921
        %v1923 = vmul.f32 %v1922, %v1683
        %v1924 = vmul.f32 %v1922, %v1684
        %v1925 = vadd.f32 %v1919, %v1923
        %v1926 = vadd.f32 %v1920, %v1924
        %s1927 = sld [smem:[#allocation3 + $0x138]]
        %v1928 = vstv %s1927
        %v1929 = vmul.f32 %v1928, %v1727
        %v1930 = vmul.f32 %v1928, %v1728
        %v1931 = vadd.f32 %v1925, %v1929
        %v1932 = vadd.f32 %v1926, %v1930
        %s1933 = sld [smem:[#allocation3 + $0x139]]
        %v1934 = vstv %s1933
        %v1935 = vmul.f32 %v1934, %v1771
        %v1936 = vmul.f32 %v1934, %v1772
        %v1937 = vadd.f32 %v1931, %v1935
        %v1938 = vadd.f32 %v1932, %v1936
        %s1939 = sld [smem:[#allocation3 + $0x13a]]
        %v1940 = vstv %s1939
        %v1941 = vmul.f32 %v1940, %v1815
        %v1942 = vmul.f32 %v1940, %v1816
        %v1943 = vadd.f32 %v1937, %v1941
        %v1944 = vadd.f32 %v1938, %v1942
        %v1945 = vmul.f32 %v1943, 0.01
        %v1946 = vmul.f32 %v1944, 0.01
        %v1947 = vmax.f32 %v1943, %v1945
        %v1948 = vmax.f32 %v1944, %v1946
        %s1949 = sld [smem:[#allocation3 + $0x13b]]
        %v1950 = vstv %s1949
        %v1951 = vmul.f32 %v1950, %v1551
        %v1952 = vmul.f32 %v1950, %v1552
        %s1953 = sld [smem:[#allocation3 + $0x13c]]
        %v1954 = vstv %s1953
        %v1955 = vmul.f32 %v1954, %v1595
        %v1956 = vmul.f32 %v1954, %v1596
        %v1957 = vadd.f32 %v1951, %v1955
        %v1958 = vadd.f32 %v1952, %v1956
        %s1959 = sld [smem:[#allocation3 + $0x13d]]
        %v1960 = vstv %s1959
        %v1961 = vmul.f32 %v1960, %v1639
        %v1962 = vmul.f32 %v1960, %v1640
        %v1963 = vadd.f32 %v1957, %v1961
        %v1964 = vadd.f32 %v1958, %v1962
        %s1965 = sld [smem:[#allocation3 + $0x13e]]
        %v1966 = vstv %s1965
        %v1967 = vmul.f32 %v1966, %v1683
        %v1968 = vmul.f32 %v1966, %v1684
        %v1969 = vadd.f32 %v1963, %v1967
        %v1970 = vadd.f32 %v1964, %v1968
        %s1971 = sld [smem:[#allocation3 + $0x13f]]
        %v1972 = vstv %s1971
        %v1973 = vmul.f32 %v1972, %v1727
        %v1974 = vmul.f32 %v1972, %v1728
        %v1975 = vadd.f32 %v1969, %v1973
        %v1976 = vadd.f32 %v1970, %v1974
        %s1977 = sld [smem:[#allocation3 + $0x140]]
        %v1978 = vstv %s1977
        %v1979 = vmul.f32 %v1978, %v1771
        %v1980 = vmul.f32 %v1978, %v1772
        %v1981 = vadd.f32 %v1975, %v1979
        %v1982 = vadd.f32 %v1976, %v1980
        %s1983 = sld [smem:[#allocation3 + $0x141]]
        %v1984 = vstv %s1983
        %v1985 = vmul.f32 %v1984, %v1815
        %v1986 = vmul.f32 %v1984, %v1816
        %v1987 = vadd.f32 %v1981, %v1985
        %v1988 = vadd.f32 %v1982, %v1986
        %v1989 = vmul.f32 %v1987, 0.01
        %v1990 = vmul.f32 %v1988, 0.01
        %v1991 = vmax.f32 %v1987, %v1989
        %v1992 = vmax.f32 %v1988, %v1990
        %s1993 = sld [smem:[#allocation3 + $0x142]]
        %v1994 = vstv %s1993
        %v1995 = vmul.f32 %v1994, %v1551
        %v1996 = vmul.f32 %v1994, %v1552
        %s1997 = sld [smem:[#allocation3 + $0x143]]
        %v1998 = vstv %s1997
        %v1999 = vmul.f32 %v1998, %v1595
        %v2000 = vmul.f32 %v1998, %v1596
        %v2001 = vadd.f32 %v1995, %v1999
        %v2002 = vadd.f32 %v1996, %v2000
        %s2003 = sld [smem:[#allocation3 + $0x144]]
        %v2004 = vstv %s2003
        %v2005 = vmul.f32 %v2004, %v1639
        %v2006 = vmul.f32 %v2004, %v1640
        %v2007 = vadd.f32 %v2001, %v2005
        %v2008 = vadd.f32 %v2002, %v2006
        %s2009 = sld [smem:[#allocation3 + $0x145]]
        %v2010 = vstv %s2009
        %v2011 = vmul.f32 %v2010, %v1683
        %v2012 = vmul.f32 %v2010, %v1684
        %v2013 = vadd.f32 %v2007, %v2011
        %v2014 = vadd.f32 %v2008, %v2012
        %s2015 = sld [smem:[#allocation3 + $0x146]]
        %v2016 = vstv %s2015
        %v2017 = vmul.f32 %v2016, %v1727
        %v2018 = vmul.f32 %v2016, %v1728
        %v2019 = vadd.f32 %v2013, %v2017
        %v2020 = vadd.f32 %v2014, %v2018
        %s2021 = sld [smem:[#allocation3 + $0x147]]
        %v2022 = vstv %s2021
        %v2023 = vmul.f32 %v2022, %v1771
        %v2024 = vmul.f32 %v2022, %v1772
        %v2025 = vadd.f32 %v2019, %v2023
        %v2026 = vadd.f32 %v2020, %v2024
        %s2027 = sld [smem:[#allocation3 + $0x148]]
        %v2028 = vstv %s2027
        %v2029 = vmul.f32 %v2028, %v1815
        %v2030 = vmul.f32 %v2028, %v1816
        %v2031 = vadd.f32 %v2025, %v2029
        %v2032 = vadd.f32 %v2026, %v2030
        %v2033 = vmul.f32 %v2031, 0.01
        %v2034 = vmul.f32 %v2032, 0.01
        %v2035 = vmax.f32 %v2031, %v2033
        %v2036 = vmax.f32 %v2032, %v2034
        %s2037 = sld [smem:[#allocation3 + $0x149]]
        %v2038 = vstv %s2037
        %v2039 = vmul.f32 %v2038, %v1551
        %v2040 = vmul.f32 %v2038, %v1552
        %s2041 = sld [smem:[#allocation3 + $0x14a]]
        %v2042 = vstv %s2041
        %v2043 = vmul.f32 %v2042, %v1595
        %v2044 = vmul.f32 %v2042, %v1596
        %v2045 = vadd.f32 %v2039, %v2043
        %v2046 = vadd.f32 %v2040, %v2044
        %s2047 = sld [smem:[#allocation3 + $0x14b]]
        %v2048 = vstv %s2047
        %v2049 = vmul.f32 %v2048, %v1639
        %v2050 = vmul.f32 %v2048, %v1640
        %v2051 = vadd.f32 %v2045, %v2049
        %v2052 = vadd.f32 %v2046, %v2050
        %s2053 = sld [smem:[#allocation3 + $0x14c]]
        %v2054 = vstv %s2053
        %v2055 = vmul.f32 %v2054, %v1683
        %v2056 = vmul.f32 %v2054, %v1684
        %v2057 = vadd.f32 %v2051, %v2055
        %v2058 = vadd.f32 %v2052, %v2056
        %s2059 = sld [smem:[#allocation3 + $0x14d]]
        %v2060 = vstv %s2059
        %v2061 = vmul.f32 %v2060, %v1727
        %v2062 = vmul.f32 %v2060, %v1728
        %v2063 = vadd.f32 %v2057, %v2061
        %v2064 = vadd.f32 %v2058, %v2062
        %s2065 = sld [smem:[#allocation3 + $0x14e]]
        %v2066 = vstv %s2065
        %v2067 = vmul.f32 %v2066, %v1771
        %v2068 = vmul.f32 %v2066, %v1772
        %v2069 = vadd.f32 %v2063, %v2067
        %v2070 = vadd.f32 %v2064, %v2068
        %s2071 = sld [smem:[#allocation3 + $0x14f]]
        %v2072 = vstv %s2071
        %v2073 = vmul.f32 %v2072, %v1815
        %v2074 = vmul.f32 %v2072, %v1816
        %v2075 = vadd.f32 %v2069, %v2073
        %v2076 = vadd.f32 %v2070, %v2074
        %v2077 = vmul.f32 %v2075, 0.01
        %v2078 = vmul.f32 %v2076, 0.01
        %v2079 = vmax.f32 %v2075, %v2077
        %v2080 = vmax.f32 %v2076, %v2078
        %s2081 = sld [smem:[#allocation3 + $0x150]]
        %v2082 = vstv %s2081
        %v2083 = vmul.f32 %v2082, %v1551
        %v2084 = vmul.f32 %v2082, %v1552
        %s2085 = sld [smem:[#allocation3 + $0x151]]
        %v2086 = vstv %s2085
        %v2087 = vmul.f32 %v2086, %v1595
        %v2088 = vmul.f32 %v2086, %v1596
        %v2089 = vadd.f32 %v2083, %v2087
        %v2090 = vadd.f32 %v2084, %v2088
        %s2091 = sld [smem:[#allocation3 + $0x152]]
        %v2092 = vstv %s2091
        %v2093 = vmul.f32 %v2092, %v1639
        %v2094 = vmul.f32 %v2092, %v1640
        %v2095 = vadd.f32 %v2089, %v2093
        %v2096 = vadd.f32 %v2090, %v2094
        %s2097 = sld [smem:[#allocation3 + $0x153]]
        %v2098 = vstv %s2097
        %v2099 = vmul.f32 %v2098, %v1683
        %v2100 = vmul.f32 %v2098, %v1684
        %v2101 = vadd.f32 %v2095, %v2099
        %v2102 = vadd.f32 %v2096, %v2100
        %s2103 = sld [smem:[#allocation3 + $0x154]]
        %v2104 = vstv %s2103
        %v2105 = vmul.f32 %v2104, %v1727
        %v2106 = vmul.f32 %v2104, %v1728
        %v2107 = vadd.f32 %v2101, %v2105
        %v2108 = vadd.f32 %v2102, %v2106
        %s2109 = sld [smem:[#allocation3 + $0x155]]
        %v2110 = vstv %s2109
        %v2111 = vmul.f32 %v2110, %v1771
        %v2112 = vmul.f32 %v2110, %v1772
        %v2113 = vadd.f32 %v2107, %v2111
        %v2114 = vadd.f32 %v2108, %v2112
        %s2115 = sld [smem:[#allocation3 + $0x156]]
        %v2116 = vstv %s2115
        %v2117 = vmul.f32 %v2116, %v1815
        %v2118 = vmul.f32 %v2116, %v1816
        %v2119 = vadd.f32 %v2113, %v2117
        %v2120 = vadd.f32 %v2114, %v2118
        %v2121 = vmul.f32 %v2119, 0.01
        %v2122 = vmul.f32 %v2120, 0.01
        %v2123 = vmax.f32 %v2119, %v2121
        %v2124 = vmax.f32 %v2120, %v2122
        %s2125 = sld [smem:[#allocation3 + $0x157]]
        %v2126 = vstv %s2125
        %v2127 = vmul.f32 %v2126, %v1859
        %v2128 = vmul.f32 %v2126, %v1860
        %s2129 = sld [smem:[#allocation3 + $0x158]]
        %v2130 = vstv %s2129
        %v2131 = vmul.f32 %v2130, %v1903
        %v2132 = vmul.f32 %v2130, %v1904
        %v2133 = vadd.f32 %v2127, %v2131
        %v2134 = vadd.f32 %v2128, %v2132
        %s2135 = sld [smem:[#allocation3 + $0x159]]
        %v2136 = vstv %s2135
        %v2137 = vmul.f32 %v2136, %v1947
        %v2138 = vmul.f32 %v2136, %v1948
        %v2139 = vadd.f32 %v2133, %v2137
        %v2140 = vadd.f32 %v2134, %v2138
        %s2141 = sld [smem:[#allocation3 + $0x15a]]
        %v2142 = vstv %s2141
        %v2143 = vmul.f32 %v2142, %v1991
        %v2144 = vmul.f32 %v2142, %v1992
        %v2145 = vadd.f32 %v2139, %v2143
        %v2146 = vadd.f32 %v2140, %v2144
        %s2147 = sld [smem:[#allocation3 + $0x15b]]
        %v2148 = vstv %s2147
        %v2149 = vmul.f32 %v2148, %v2035
        %v2150 = vmul.f32 %v2148, %v2036
        %v2151 = vadd.f32 %v2145, %v2149
        %v2152 = vadd.f32 %v2146, %v2150
        %s2153 = sld [smem:[#allocation3 + $0x15c]]
        %v2154 = vstv %s2153
        %v2155 = vmul.f32 %v2154, %v2079
        %v2156 = vmul.f32 %v2154, %v2080
        %v2157 = vadd.f32 %v2151, %v2155
        %v2158 = vadd.f32 %v2152, %v2156
        %s2159 = sld [smem:[#allocation3 + $0x15d]]
        %v2160 = vstv %s2159
        %v2161 = vmul.f32 %v2160, %v2123
        %v2162 = vmul.f32 %v2160, %v2124
        %v2163 = vadd.f32 %v2157, %v2161
        %v2164 = vadd.f32 %v2158, %v2162
        %v2165 = vmul.f32 %v2163, 0.01
        %v2166 = vmul.f32 %v2164, 0.01
        %v2167 = vmax.f32 %v2163, %v2165
        %v2168 = vmax.f32 %v2164, %v2166
        %s2169 = sld [smem:[#allocation3 + $0x15e]]
        %v2170 = vstv %s2169
        %v2171 = vmul.f32 %v2170, %v1859
        %v2172 = vmul.f32 %v2170, %v1860
        %s2173 = sld [smem:[#allocation3 + $0x15f]]
        %v2174 = vstv %s2173
        %v2175 = vmul.f32 %v2174, %v1903
        %v2176 = vmul.f32 %v2174, %v1904
        %v2177 = vadd.f32 %v2171, %v2175
        %v2178 = vadd.f32 %v2172, %v2176
        %s2179 = sld [smem:[#allocation3 + $0x160]]
        %v2180 = vstv %s2179
        %v2181 = vmul.f32 %v2180, %v1947
        %v2182 = vmul.f32 %v2180, %v1948
        %v2183 = vadd.f32 %v2177, %v2181
        %v2184 = vadd.f32 %v2178, %v2182
        %s2185 = sld [smem:[#allocation3 + $0x161]]
        %v2186 = vstv %s2185
        %v2187 = vmul.f32 %v2186, %v1991
        %v2188 = vmul.f32 %v2186, %v1992
        %v2189 = vadd.f32 %v2183, %v2187
        %v2190 = vadd.f32 %v2184, %v2188
        %s2191 = sld [smem:[#allocation3 + $0x162]]
        %v2192 = vstv %s2191
        %v2193 = vmul.f32 %v2192, %v2035
        %v2194 = vmul.f32 %v2192, %v2036
        %v2195 = vadd.f32 %v2189, %v2193
        %v2196 = vadd.f32 %v2190, %v2194
        %s2197 = sld [smem:[#allocation3 + $0x163]]
        %v2198 = vstv %s2197
        %v2199 = vmul.f32 %v2198, %v2079
        %v2200 = vmul.f32 %v2198, %v2080
        %v2201 = vadd.f32 %v2195, %v2199
        %v2202 = vadd.f32 %v2196, %v2200
        %s2203 = sld [smem:[#allocation3 + $0x164]]
        %v2204 = vstv %s2203
        %v2205 = vmul.f32 %v2204, %v2123
        %v2206 = vmul.f32 %v2204, %v2124
        %v2207 = vadd.f32 %v2201, %v2205
        %v2208 = vadd.f32 %v2202, %v2206
        %v2209 = vmul.f32 %v2207, 0.01
        %v2210 = vmul.f32 %v2208, 0.01
        %v2211 = vmax.f32 %v2207, %v2209
        %v2212 = vmax.f32 %v2208, %v2210
        %s2213 = sld [smem:[#allocation3 + $0x165]]
        %v2214 = vstv %s2213
        %v2215 = vmul.f32 %v2214, %v1859
        %v2216 = vmul.f32 %v2214, %v1860
        %s2217 = sld [smem:[#allocation3 + $0x166]]
        %v2218 = vstv %s2217
        %v2219 = vmul.f32 %v2218, %v1903
        %v2220 = vmul.f32 %v2218, %v1904
        %v2221 = vadd.f32 %v2215, %v2219
        %v2222 = vadd.f32 %v2216, %v2220
        %s2223 = sld [smem:[#allocation3 + $0x167]]
        %v2224 = vstv %s2223
        %v2225 = vmul.f32 %v2224, %v1947
        %v2226 = vmul.f32 %v2224, %v1948
        %v2227 = vadd.f32 %v2221, %v2225
        %v2228 = vadd.f32 %v2222, %v2226
        %s2229 = sld [smem:[#allocation3 + $0x168]]
        %v2230 = vstv %s2229
        %v2231 = vmul.f32 %v2230, %v1991
        %v2232 = vmul.f32 %v2230, %v1992
        %v2233 = vadd.f32 %v2227, %v2231
        %v2234 = vadd.f32 %v2228, %v2232
        %s2235 = sld [smem:[#allocation3 + $0x169]]
        %v2236 = vstv %s2235
        %v2237 = vmul.f32 %v2236, %v2035
        %v2238 = vmul.f32 %v2236, %v2036
        %v2239 = vadd.f32 %v2233, %v2237
        %v2240 = vadd.f32 %v2234, %v2238
        %s2241 = sld [smem:[#allocation3 + $0x16a]]
        %v2242 = vstv %s2241
        %v2243 = vmul.f32 %v2242, %v2079
        %v2244 = vmul.f32 %v2242, %v2080
        %v2245 = vadd.f32 %v2239, %v2243
        %v2246 = vadd.f32 %v2240, %v2244
        %s2247 = sld [smem:[#allocation3 + $0x16b]]
        %v2248 = vstv %s2247
        %v2249 = vmul.f32 %v2248, %v2123
        %v2250 = vmul.f32 %v2248, %v2124
        %v2251 = vadd.f32 %v2245, %v2249
        %v2252 = vadd.f32 %v2246, %v2250
        %v2253 = vmul.f32 %v2251, 0.01
        %v2254 = vmul.f32 %v2252, 0.01
        %v2255 = vmax.f32 %v2251, %v2253
        %v2256 = vmax.f32 %v2252, %v2254
        %s2257 = sld [smem:[#allocation3 + $0x16c]]
        %v2258 = vstv %s2257
        %v2259 = vmul.f32 %v2258, %v1859
        %v2260 = vmul.f32 %v2258, %v1860
        %s2261 = sld [smem:[#allocation3 + $0x16d]]
        %v2262 = vstv %s2261
        %v2263 = vmul.f32 %v2262, %v1903
        %v2264 = vmul.f32 %v2262, %v1904
        %v2265 = vadd.f32 %v2259, %v2263
        %v2266 = vadd.f32 %v2260, %v2264
        %s2267 = sld [smem:[#allocation3 + $0x16e]]
        %v2268 = vstv %s2267
        %v2269 = vmul.f32 %v2268, %v1947
        %v2270 = vmul.f32 %v2268, %v1948
        %v2271 = vadd.f32 %v2265, %v2269
        %v2272 = vadd.f32 %v2266, %v2270
        %s2273 = sld [smem:[#allocation3 + $0x16f]]
        %v2274 = vstv %s2273
        %v2275 = vmul.f32 %v2274, %v1991
        %v2276 = vmul.f32 %v2274, %v1992
        %v2277 = vadd.f32 %v2271, %v2275
        %v2278 = vadd.f32 %v2272, %v2276
        %s2279 = sld [smem:[#allocation3 + $0x170]]
        %v2280 = vstv %s2279
        %v2281 = vmul.f32 %v2280, %v2035
        %v2282 = vmul.f32 %v2280, %v2036
        %v2283 = vadd.f32 %v2277, %v2281
        %v2284 = vadd.f32 %v2278, %v2282
        %s2285 = sld [smem:[#allocation3 + $0x171]]
        %v2286 = vstv %s2285
        %v2287 = vmul.f32 %v2286, %v2079
        %v2288 = vmul.f32 %v2286, %v2080
        %v2289 = vadd.f32 %v2283, %v2287
        %v2290 = vadd.f32 %v2284, %v2288
        %s2291 = sld [smem:[#allocation3 + $0x172]]
        %v2292 = vstv %s2291
        %v2293 = vmul.f32 %v2292, %v2123
        %v2294 = vmul.f32 %v2292, %v2124
        %v2295 = vadd.f32 %v2289, %v2293
        %v2296 = vadd.f32 %v2290, %v2294
        %v2297 = vmul.f32 %v2295, 0.01
        %v2298 = vmul.f32 %v2296, 0.01
        %v2299 = vmax.f32 %v2295, %v2297
        %v2300 = vmax.f32 %v2296, %v2298
        %s2301 = sld [smem:[#allocation3 + $0x173]]
        %v2302 = vstv %s2301
        %v2303 = vmul.f32 %v2302, %v1859
        %v2304 = vmul.f32 %v2302, %v1860
        %s2305 = sld [smem:[#allocation3 + $0x174]]
        %v2306 = vstv %s2305
        %v2307 = vmul.f32 %v2306, %v1903
        %v2308 = vmul.f32 %v2306, %v1904
        %v2309 = vadd.f32 %v2303, %v2307
        %v2310 = vadd.f32 %v2304, %v2308
        %s2311 = sld [smem:[#allocation3 + $0x175]]
        %v2312 = vstv %s2311
        %v2313 = vmul.f32 %v2312, %v1947
        %v2314 = vmul.f32 %v2312, %v1948
        %v2315 = vadd.f32 %v2309, %v2313
        %v2316 = vadd.f32 %v2310, %v2314
        %s2317 = sld [smem:[#allocation3 + $0x176]]
        %v2318 = vstv %s2317
        %v2319 = vmul.f32 %v2318, %v1991
        %v2320 = vmul.f32 %v2318, %v1992
        %v2321 = vadd.f32 %v2315, %v2319
        %v2322 = vadd.f32 %v2316, %v2320
        %s2323 = sld [smem:[#allocation3 + $0x177]]
        %v2324 = vstv %s2323
        %v2325 = vmul.f32 %v2324, %v2035
        %v2326 = vmul.f32 %v2324, %v2036
        %v2327 = vadd.f32 %v2321, %v2325
        %v2328 = vadd.f32 %v2322, %v2326
        %s2329 = sld [smem:[#allocation3 + $0x178]]
        %v2330 = vstv %s2329
        %v2331 = vmul.f32 %v2330, %v2079
        %v2332 = vmul.f32 %v2330, %v2080
        %v2333 = vadd.f32 %v2327, %v2331
        %v2334 = vadd.f32 %v2328, %v2332
        %s2335 = sld [smem:[#allocation3 + $0x179]]
        %v2336 = vstv %s2335
        %v2337 = vmul.f32 %v2336, %v2123
        %v2338 = vmul.f32 %v2336, %v2124
        %v2339 = vadd.f32 %v2333, %v2337
        %v2340 = vadd.f32 %v2334, %v2338
        %v2341 = vmul.f32 %v2339, 0.01
        %v2342 = vmul.f32 %v2340, 0.01
        %v2343 = vmax.f32 %v2339, %v2341
        %v2344 = vmax.f32 %v2340, %v2342
        %s2345 = sld [smem:[#allocation3 + $0x17a]]
        %v2346 = vstv %s2345
        %v2347 = vmul.f32 %v2346, %v1859
        %v2348 = vmul.f32 %v2346, %v1860
        %s2349 = sld [smem:[#allocation3 + $0x17b]]
        %v2350 = vstv %s2349
        %v2351 = vmul.f32 %v2350, %v1903
        %v2352 = vmul.f32 %v2350, %v1904
        %v2353 = vadd.f32 %v2347, %v2351
        %v2354 = vadd.f32 %v2348, %v2352
        %s2355 = sld [smem:[#allocation3 + $0x17c]]
        %v2356 = vstv %s2355
        %v2357 = vmul.f32 %v2356, %v1947
        %v2358 = vmul.f32 %v2356, %v1948
        %v2359 = vadd.f32 %v2353, %v2357
        %v2360 = vadd.f32 %v2354, %v2358
        %s2361 = sld [smem:[#allocation3 + $0x17d]]
        %v2362 = vstv %s2361
        %v2363 = vmul.f32 %v2362, %v1991
        %v2364 = vmul.f32 %v2362, %v1992
        %v2365 = vadd.f32 %v2359, %v2363
        %v2366 = vadd.f32 %v2360, %v2364
        %s2367 = sld [smem:[#allocation3 + $0x17e]]
        %v2368 = vstv %s2367
        %v2369 = vmul.f32 %v2368, %v2035
        %v2370 = vmul.f32 %v2368, %v2036
        %v2371 = vadd.f32 %v2365, %v2369
        %v2372 = vadd.f32 %v2366, %v2370
        %s2373 = sld [smem:[#allocation3 + $0x17f]]
        %v2374 = vstv %s2373
        %v2375 = vmul.f32 %v2374, %v2079
        %v2376 = vmul.f32 %v2374, %v2080
        %v2377 = vadd.f32 %v2371, %v2375
        %v2378 = vadd.f32 %v2372, %v2376
        %s2379 = sld [smem:[#allocation3 + $0x180]]
        %v2380 = vstv %s2379
        %v2381 = vmul.f32 %v2380, %v2123
        %v2382 = vmul.f32 %v2380, %v2124
        %v2383 = vadd.f32 %v2377, %v2381
        %v2384 = vadd.f32 %v2378, %v2382
        %v2385 = vmul.f32 %v2383, 0.01
        %v2386 = vmul.f32 %v2384, 0.01
        %v2387 = vmax.f32 %v2383, %v2385
        %v2388 = vmax.f32 %v2384, %v2386
        %s2389 = sld [smem:[#allocation3 + $0x181]]
        %v2390 = vstv %s2389
        %v2391 = vmul.f32 %v2390, %v1859
        %v2392 = vmul.f32 %v2390, %v1860
        %s2393 = sld [smem:[#allocation3 + $0x182]]
        %v2394 = vstv %s2393
        %v2395 = vmul.f32 %v2394, %v1903
        %v2396 = vmul.f32 %v2394, %v1904
        %v2397 = vadd.f32 %v2391, %v2395
        %v2398 = vadd.f32 %v2392, %v2396
        %s2399 = sld [smem:[#allocation3 + $0x183]]
        %v2400 = vstv %s2399
        %v2401 = vmul.f32 %v2400, %v1947
        %v2402 = vmul.f32 %v2400, %v1948
        %v2403 = vadd.f32 %v2397, %v2401
        %v2404 = vadd.f32 %v2398, %v2402
        %s2405 = sld [smem:[#allocation3 + $0x184]]
        %v2406 = vstv %s2405
        %v2407 = vmul.f32 %v2406, %v1991
        %v2408 = vmul.f32 %v2406, %v1992
        %v2409 = vadd.f32 %v2403, %v2407
        %v2410 = vadd.f32 %v2404, %v2408
        %s2411 = sld [smem:[#allocation3 + $0x185]]
        %v2412 = vstv %s2411
        %v2413 = vmul.f32 %v2412, %v2035
        %v2414 = vmul.f32 %v2412, %v2036
        %v2415 = vadd.f32 %v2409, %v2413
        %v2416 = vadd.f32 %v2410, %v2414
        %s2417 = sld [smem:[#allocation3 + $0x186]]
        %v2418 = vstv %s2417
        %v2419 = vmul.f32 %v2418, %v2079
        %v2420 = vmul.f32 %v2418, %v2080
        %v2421 = vadd.f32 %v2415, %v2419
        %v2422 = vadd.f32 %v2416, %v2420
        %s2423 = sld [smem:[#allocation3 + $0x187]]
        %v2424 = vstv %s2423
        %v2425 = vmul.f32 %v2424, %v2123
        %v2426 = vmul.f32 %v2424, %v2124
        %v2427 = vadd.f32 %v2421, %v2425
        %v2428 = vadd.f32 %v2422, %v2426
        %v2429 = vmul.f32 %v2427, 0.01
        %v2430 = vmul.f32 %v2428, 0.01
        %v2431 = vmax.f32 %v2427, %v2429
        %v2432 = vmax.f32 %v2428, %v2430
        %s2433 = sld [smem:[#allocation3 + $0x188]]
        %v2434 = vstv %s2433
        %v2435 = vmul.f32 %v2434, %v2167
        %v2436 = vmul.f32 %v2434, %v2168
        %s2437 = sld [smem:[#allocation3 + $0x189]]
        %v2438 = vstv %s2437
        %v2439 = vmul.f32 %v2438, %v2211
        %v2440 = vmul.f32 %v2438, %v2212
        %v2441 = vadd.f32 %v2435, %v2439
        %v2442 = vadd.f32 %v2436, %v2440
        %s2443 = sld [smem:[#allocation3 + $0x18a]]
        %v2444 = vstv %s2443
        %v2445 = vmul.f32 %v2444, %v2255
        %v2446 = vmul.f32 %v2444, %v2256
        %v2447 = vadd.f32 %v2441, %v2445
        %v2448 = vadd.f32 %v2442, %v2446
        %s2449 = sld [smem:[#allocation3 + $0x18b]]
        %v2450 = vstv %s2449
        %v2451 = vmul.f32 %v2450, %v2299
        %v2452 = vmul.f32 %v2450, %v2300
        %v2453 = vadd.f32 %v2447, %v2451
        %v2454 = vadd.f32 %v2448, %v2452
        %s2455 = sld [smem:[#allocation3 + $0x18c]]
        %v2456 = vstv %s2455
        %v2457 = vmul.f32 %v2456, %v2343
        %v2458 = vmul.f32 %v2456, %v2344
        %v2459 = vadd.f32 %v2453, %v2457
        %v2460 = vadd.f32 %v2454, %v2458
        %s2461 = sld [smem:[#allocation3 + $0x18d]]
        %v2462 = vstv %s2461
        %v2463 = vmul.f32 %v2462, %v2387
        %v2464 = vmul.f32 %v2462, %v2388
        %v2465 = vadd.f32 %v2459, %v2463
        %v2466 = vadd.f32 %v2460, %v2464
        %s2467 = sld [smem:[#allocation3 + $0x18e]]
        %v2468 = vstv %s2467
        %v2469 = vmul.f32 %v2468, %v2431
        %v2470 = vmul.f32 %v2468, %v2432
        %v2471 = vadd.f32 %v2465, %v2469
        %v2472 = vadd.f32 %v2466, %v2470
        %v2473 = vmul.f32 %v2471, 0.01
        %v2474 = vmul.f32 %v2472, 0.01
        %v2475 = vmax.f32 %v2471, %v2473
        %v2476 = vmax.f32 %v2472, %v2474
        %s2477 = sld [smem:[#allocation3 + $0x18f]]
        %v2478 = vstv %s2477
        %v2479 = vmul.f32 %v2478, %v2167
        %v2480 = vmul.f32 %v2478, %v2168
        %s2481 = sld [smem:[#allocation3 + $0x190]]
        %v2482 = vstv %s2481
        %v2483 = vmul.f32 %v2482, %v2211
        %v2484 = vmul.f32 %v2482, %v2212
        %v2485 = vadd.f32 %v2479, %v2483
        %v2486 = vadd.f32 %v2480, %v2484
        %s2487 = sld [smem:[#allocation3 + $0x191]]
        %v2488 = vstv %s2487
        %v2489 = vmul.f32 %v2488, %v2255
        %v2490 = vmul.f32 %v2488, %v2256
        %v2491 = vadd.f32 %v2485, %v2489
        %v2492 = vadd.f32 %v2486, %v2490
        %s2493 = sld [smem:[#allocation3 + $0x192]]
        %v2494 = vstv %s2493
        %v2495 = vmul.f32 %v2494, %v2299
        %v2496 = vmul.f32 %v2494, %v2300
        %v2497 = vadd.f32 %v2491, %v2495
        %v2498 = vadd.f32 %v2492, %v2496
        %s2499 = sld [smem:[#allocation3 + $0x193]]
        %v2500 = vstv %s2499
        %v2501 = vmul.f32 %v2500, %v2343
        %v2502 = vmul.f32 %v2500, %v2344
        %v2503 = vadd.f32 %v2497, %v2501
        %v2504 = vadd.f32 %v2498, %v2502
        %s2505 = sld [smem:[#allocation3 + $0x194]]
        %v2506 = vstv %s2505
        %v2507 = vmul.f32 %v2506, %v2387
        %v2508 = vmul.f32 %v2506, %v2388
        %v2509 = vadd.f32 %v2503, %v2507
        %v2510 = vadd.f32 %v2504, %v2508
        %s2511 = sld [smem:[#allocation3 + $0x195]]
        %v2512 = vstv %s2511
        %v2513 = vmul.f32 %v2512, %v2431
        %v2514 = vmul.f32 %v2512, %v2432
        %v2515 = vadd.f32 %v2509, %v2513
        %v2516 = vadd.f32 %v2510, %v2514
        %v2517 = vmul.f32 %v2515, 0.01
        %v2518 = vmul.f32 %v2516, 0.01
        %v2519 = vmax.f32 %v2515, %v2517
        %v2520 = vmax.f32 %v2516, %v2518
        %s2521 = sld [smem:[#allocation3 + $0x196]]
        %v2522 = vstv %s2521
        %v2523 = vmul.f32 %v2522, %v2167
        %v2524 = vmul.f32 %v2522, %v2168
        %s2525 = sld [smem:[#allocation3 + $0x197]]
        %v2526 = vstv %s2525
        %v2527 = vmul.f32 %v2526, %v2211
        %v2528 = vmul.f32 %v2526, %v2212
        %v2529 = vadd.f32 %v2523, %v2527
        %v2530 = vadd.f32 %v2524, %v2528
        %s2531 = sld [smem:[#allocation3 + $0x198]]
        %v2532 = vstv %s2531
        %v2533 = vmul.f32 %v2532, %v2255
        %v2534 = vmul.f32 %v2532, %v2256
        %v2535 = vadd.f32 %v2529, %v2533
        %v2536 = vadd.f32 %v2530, %v2534
        %s2537 = sld [smem:[#allocation3 + $0x199]]
        %v2538 = vstv %s2537
        %v2539 = vmul.f32 %v2538, %v2299
        %v2540 = vmul.f32 %v2538, %v2300
        %v2541 = vadd.f32 %v2535, %v2539
        %v2542 = vadd.f32 %v2536, %v2540
        %s2543 = sld [smem:[#allocation3 + $0x19a]]
        %v2544 = vstv %s2543
        %v2545 = vmul.f32 %v2544, %v2343
        %v2546 = vmul.f32 %v2544, %v2344
        %v2547 = vadd.f32 %v2541, %v2545
        %v2548 = vadd.f32 %v2542, %v2546
        %s2549 = sld [smem:[#allocation3 + $0x19b]]
        %v2550 = vstv %s2549
        %v2551 = vmul.f32 %v2550, %v2387
        %v2552 = vmul.f32 %v2550, %v2388
        %v2553 = vadd.f32 %v2547, %v2551
        %v2554 = vadd.f32 %v2548, %v2552
        %s2555 = sld [smem:[#allocation3 + $0x19c]]
        %v2556 = vstv %s2555
        %v2557 = vmul.f32 %v2556, %v2431
        %v2558 = vmul.f32 %v2556, %v2432
        %v2559 = vadd.f32 %v2553, %v2557
        %v2560 = vadd.f32 %v2554, %v2558
        %v2561 = vmul.f32 %v2559, 0.01
        %v2562 = vmul.f32 %v2560, 0.01
        %v2563 = vmax.f32 %v2559, %v2561
        %v2564 = vmax.f32 %v2560, %v2562
        %s2565 = sld [smem:[#allocation3 + $0x19d]]
        %v2566 = vstv %s2565
        %v2567 = vmul.f32 %v2566, %v2167
        %v2568 = vmul.f32 %v2566, %v2168
        %s2569 = sld [smem:[#allocation3 + $0x19e]]
        %v2570 = vstv %s2569
        %v2571 = vmul.f32 %v2570, %v2211
        %v2572 = vmul.f32 %v2570, %v2212
        %v2573 = vadd.f32 %v2567, %v2571
        %v2574 = vadd.f32 %v2568, %v2572
        %s2575 = sld [smem:[#allocation3 + $0x19f]]
        %v2576 = vstv %s2575
        %v2577 = vmul.f32 %v2576, %v2255
        %v2578 = vmul.f32 %v2576, %v2256
        %v2579 = vadd.f32 %v2573, %v2577
        %v2580 = vadd.f32 %v2574, %v2578
        %s2581 = sld [smem:[#allocation3 + $0x1a0]]
        %v2582 = vstv %s2581
        %v2583 = vmul.f32 %v2582, %v2299
        %v2584 = vmul.f32 %v2582, %v2300
        %v2585 = vadd.f32 %v2579, %v2583
        %v2586 = vadd.f32 %v2580, %v2584
        %s2587 = sld [smem:[#allocation3 + $0x1a1]]
        %v2588 = vstv %s2587
        %v2589 = vmul.f32 %v2588, %v2343
        %v2590 = vmul.f32 %v2588, %v2344
        %v2591 = vadd.f32 %v2585, %v2589
        %v2592 = vadd.f32 %v2586, %v2590
        %s2593 = sld [smem:[#allocation3 + $0x1a2]]
        %v2594 = vstv %s2593
        %v2595 = vmul.f32 %v2594, %v2387
        %v2596 = vmul.f32 %v2594, %v2388
        %v2597 = vadd.f32 %v2591, %v2595
        %v2598 = vadd.f32 %v2592, %v2596
        %s2599 = sld [smem:[#allocation3 + $0x1a3]]
        %v2600 = vstv %s2599
        %v2601 = vmul.f32 %v2600, %v2431
        %v2602 = vmul.f32 %v2600, %v2432
        %v2603 = vadd.f32 %v2597, %v2601
        %v2604 = vadd.f32 %v2598, %v2602
        %v2605 = vmul.f32 %v2603, 0.01
        %v2606 = vmul.f32 %v2604, 0.01
        %v2607 = vmax.f32 %v2603, %v2605
        %v2608 = vmax.f32 %v2604, %v2606
        %s2609 = sld [smem:[#allocation3 + $0x1a4]]
        %v2610 = vstv %s2609
        %v2611 = vmul.f32 %v2610, %v2167
        %v2612 = vmul.f32 %v2610, %v2168
        %s2613 = sld [smem:[#allocation3 + $0x1a5]]
        %v2614 = vstv %s2613
        %v2615 = vmul.f32 %v2614, %v2211
        %v2616 = vmul.f32 %v2614, %v2212
        %v2617 = vadd.f32 %v2611, %v2615
        %v2618 = vadd.f32 %v2612, %v2616
        %s2619 = sld [smem:[#allocation3 + $0x1a6]]
        %v2620 = vstv %s2619
        %v2621 = vmul.f32 %v2620, %v2255
        %v2622 = vmul.f32 %v2620, %v2256
        %v2623 = vadd.f32 %v2617, %v2621
        %v2624 = vadd.f32 %v2618, %v2622
        %s2625 = sld [smem:[#allocation3 + $0x1a7]]
        %v2626 = vstv %s2625
        %v2627 = vmul.f32 %v2626, %v2299
        %v2628 = vmul.f32 %v2626, %v2300
        %v2629 = vadd.f32 %v2623, %v2627
        %v2630 = vadd.f32 %v2624, %v2628
        %s2631 = sld [smem:[#allocation3 + $0x1a8]]
        %v2632 = vstv %s2631
        %v2633 = vmul.f32 %v2632, %v2343
        %v2634 = vmul.f32 %v2632, %v2344
        %v2635 = vadd.f32 %v2629, %v2633
        %v2636 = vadd.f32 %v2630, %v2634
        %s2637 = sld [smem:[#allocation3 + $0x1a9]]
        %v2638 = vstv %s2637
        %v2639 = vmul.f32 %v2638, %v2387
        %v2640 = vmul.f32 %v2638, %v2388
        %v2641 = vadd.f32 %v2635, %v2639
        %v2642 = vadd.f32 %v2636, %v2640
        %s2643 = sld [smem:[#allocation3 + $0x1aa]]
        %v2644 = vstv %s2643
        %v2645 = vmul.f32 %v2644, %v2431
        %v2646 = vmul.f32 %v2644, %v2432
        %v2647 = vadd.f32 %v2641, %v2645
        %v2648 = vadd.f32 %v2642, %v2646
        %v2649 = vmul.f32 %v2647, 0.01
        %v2650 = vmul.f32 %v2648, 0.01
        %v2651 = vmax.f32 %v2647, %v2649
        %v2652 = vmax.f32 %v2648, %v2650
        %s2653 = sld [smem:[#allocation3 + $0x1ab]]
        %v2654 = vstv %s2653
        %v2655 = vmul.f32 %v2654, %v2167
        %v2656 = vmul.f32 %v2654, %v2168
        %s2657 = sld [smem:[#allocation3 + $0x1ac]]
        %v2658 = vstv %s2657
        %v2659 = vmul.f32 %v2658, %v2211
        %v2660 = vmul.f32 %v2658, %v2212
        %v2661 = vadd.f32 %v2655, %v2659
        %v2662 = vadd.f32 %v2656, %v2660
        %s2663 = sld [smem:[#allocation3 + $0x1ad]]
        %v2664 = vstv %s2663
        %v2665 = vmul.f32 %v2664, %v2255
        %v2666 = vmul.f32 %v2664, %v2256
        %v2667 = vadd.f32 %v2661, %v2665
        %v2668 = vadd.f32 %v2662, %v2666
        %s2669 = sld [smem:[#allocation3 + $0x1ae]]
        %v2670 = vstv %s2669
        %v2671 = vmul.f32 %v2670, %v2299
        %v2672 = vmul.f32 %v2670, %v2300
        %v2673 = vadd.f32 %v2667, %v2671
        %v2674 = vadd.f32 %v2668, %v2672
        %s2675 = sld [smem:[#allocation3 + $0x1af]]
        %v2676 = vstv %s2675
        %v2677 = vmul.f32 %v2676, %v2343
        %v2678 = vmul.f32 %v2676, %v2344
        %v2679 = vadd.f32 %v2673, %v2677
        %v2680 = vadd.f32 %v2674, %v2678
        %s2681 = sld [smem:[#allocation3 + $0x1b0]]
        %v2682 = vstv %s2681
        %v2683 = vmul.f32 %v2682, %v2387
        %v2684 = vmul.f32 %v2682, %v2388
        %v2685 = vadd.f32 %v2679, %v2683
        %v2686 = vadd.f32 %v2680, %v2684
        %s2687 = sld [smem:[#allocation3 + $0x1b1]]
        %v2688 = vstv %s2687
        %v2689 = vmul.f32 %v2688, %v2431
        %v2690 = vmul.f32 %v2688, %v2432
        %v2691 = vadd.f32 %v2685, %v2689
        %v2692 = vadd.f32 %v2686, %v2690
        %v2693 = vmul.f32 %v2691, 0.01
        %v2694 = vmul.f32 %v2692, 0.01
        %v2695 = vmax.f32 %v2691, %v2693
        %v2696 = vmax.f32 %v2692, %v2694
        %s2697 = sld [smem:[#allocation3 + $0x1b2]]
        %v2698 = vstv %s2697
        %v2699 = vmul.f32 %v2698, %v2167
        %v2700 = vmul.f32 %v2698, %v2168
        %s2701 = sld [smem:[#allocation3 + $0x1b3]]
        %v2702 = vstv %s2701
        %v2703 = vmul.f32 %v2702, %v2211
        %v2704 = vmul.f32 %v2702, %v2212
        %v2705 = vadd.f32 %v2699, %v2703
        %v2706 = vadd.f32 %v2700, %v2704
        %s2707 = sld [smem:[#allocation3 + $0x1b4]]
        %v2708 = vstv %s2707
        %v2709 = vmul.f32 %v2708, %v2255
        %v2710 = vmul.f32 %v2708, %v2256
        %v2711 = vadd.f32 %v2705, %v2709
        %v2712 = vadd.f32 %v2706, %v2710
        %s2713 = sld [smem:[#allocation3 + $0x1b5]]
        %v2714 = vstv %s2713
        %v2715 = vmul.f32 %v2714, %v2299
        %v2716 = vmul.f32 %v2714, %v2300
        %v2717 = vadd.f32 %v2711, %v2715
        %v2718 = vadd.f32 %v2712, %v2716
        %s2719 = sld [smem:[#allocation3 + $0x1b6]]
        %v2720 = vstv %s2719
        %v2721 = vmul.f32 %v2720, %v2343
        %v2722 = vmul.f32 %v2720, %v2344
        %v2723 = vadd.f32 %v2717, %v2721
        %v2724 = vadd.f32 %v2718, %v2722
        %s2725 = sld [smem:[#allocation3 + $0x1b7]]
        %v2726 = vstv %s2725
        %v2727 = vmul.f32 %v2726, %v2387
        %v2728 = vmul.f32 %v2726, %v2388
        %v2729 = vadd.f32 %v2723, %v2727
        %v2730 = vadd.f32 %v2724, %v2728
        %s2731 = sld [smem:[#allocation3 + $0x1b8]]
        %v2732 = vstv %s2731
        %v2733 = vmul.f32 %v2732, %v2431
        %v2734 = vmul.f32 %v2732, %v2432
        %v2735 = vadd.f32 %v2729, %v2733
        %v2736 = vadd.f32 %v2730, %v2734
        %v2737 = vmul.f32 %v2735, 0.01
        %v2738 = vmul.f32 %v2736, 0.01
        %v2739 = vmax.f32 %v2735, %v2737
        %v2740 = vmax.f32 %v2736, %v2738
        %s2741 = sld [smem:[#allocation3 + $0x1b9]]
        %v2742 = vstv %s2741
        %v2743 = vmul.f32 %v2742, %v2475
        %v2744 = vmul.f32 %v2742, %v2476
        %s2745 = sld [smem:[#allocation3 + $0x1ba]]
        %v2746 = vstv %s2745
        %v2747 = vmul.f32 %v2746, %v2519
        %v2748 = vmul.f32 %v2746, %v2520
        %v2749 = vadd.f32 %v2743, %v2747
        %v2750 = vadd.f32 %v2744, %v2748
        %s2751 = sld [smem:[#allocation3 + $0x1bb]]
        %v2752 = vstv %s2751
        %v2753 = vmul.f32 %v2752, %v2563
        %v2754 = vmul.f32 %v2752, %v2564
        %v2755 = vadd.f32 %v2749, %v2753
        %v2756 = vadd.f32 %v2750, %v2754
        %s2757 = sld [smem:[#allocation3 + $0x1bc]]
        %v2758 = vstv %s2757
        %v2759 = vmul.f32 %v2758, %v2607
        %v2760 = vmul.f32 %v2758, %v2608
        %v2761 = vadd.f32 %v2755, %v2759
        %v2762 = vadd.f32 %v2756, %v2760
        %s2763 = sld [smem:[#allocation3 + $0x1bd]]
        %v2764 = vstv %s2763
        %v2765 = vmul.f32 %v2764, %v2651
        %v2766 = vmul.f32 %v2764, %v2652
        %v2767 = vadd.f32 %v2761, %v2765
        %v2768 = vadd.f32 %v2762, %v2766
        %s2769 = sld [smem:[#allocation3 + $0x1be]]
        %v2770 = vstv %s2769
        %v2771 = vmul.f32 %v2770, %v2695
        %v2772 = vmul.f32 %v2770, %v2696
        %v2773 = vadd.f32 %v2767, %v2771
        %v2774 = vadd.f32 %v2768, %v2772
        %s2775 = sld [smem:[#allocation3 + $0x1bf]]
        %v2776 = vstv %s2775
        %v2777 = vmul.f32 %v2776, %v2739
        %v2778 = vmul.f32 %v2776, %v2740
        %v2779 = vadd.f32 %v2773, %v2777
        %v2780 = vadd.f32 %v2774, %v2778
        %v2781 = vmul.f32 %v2779, 0.01
        %v2782 = vmul.f32 %v2780, 0.01
        %v2783 = vmax.f32 %v2779, %v2781
        %v2784 = vmax.f32 %v2780, %v2782
        %2785 = vst [vmem:[%s170] sm:$0xff] %v2783
        %2786 = vst [vmem:[%s170 + $0x8] sm:$0xff] %v2784
        %v2787 = vld [vmem:[%s151 + $0x10] sm:$0xff]
        %s2788 = scalar_lea.vmem %s151, 24 [#allocation4]
        %v2789 = vld [vmem:[%s2788 + $0x10] sm:$0xff]
        %s2790 = sld [smem:[#allocation3]]
        %v2791 = vstv %s2790
        %v2792 = vmul.f32 %v2791, %v2787
        %s2793 = sld [smem:[#allocation3 + $0x1]]
        %v2794 = vstv %s2793
        %v2795 = vmul.f32 %v2794, %v2789
        %v2796 = vadd.f32 %v2792, %v2795
        %v2797 = vmul.f32 %v2796, 0.01
        %v2798 = vmax.f32 %v2796, %v2797
        %s2799 = sld [smem:[#allocation3 + $0x7]]
        %v2800 = vstv %s2799
        %v2801 = vmul.f32 %v2800, %v2787
        %s2802 = sld [smem:[#allocation3 + $0x8]]
        %v2803 = vstv %s2802
        %v2804 = vmul.f32 %v2803, %v2789
        %v2805 = vadd.f32 %v2801, %v2804
        %v2806 = vmul.f32 %v2805, 0.01
        %v2807 = vmax.f32 %v2805, %v2806
        %s2808 = sld [smem:[#allocation3 + $0xe]]
        %v2809 = vstv %s2808
        %v2810 = vmul.f32 %v2809, %v2787
        %s2811 = sld [smem:[#allocation3 + $0xf]]
        %v2812 = vstv %s2811
        %v2813 = vmul.f32 %v2812, %v2789
        %v2814 = vadd.f32 %v2810, %v2813
        %v2815 = vmul.f32 %v2814, 0.01
        %v2816 = vmax.f32 %v2814, %v2815
        %s2817 = sld [smem:[#allocation3 + $0x15]]
        %v2818 = vstv %s2817
        %v2819 = vmul.f32 %v2818, %v2787
        %s2820 = sld [smem:[#allocation3 + $0x16]]
        %v2821 = vstv %s2820
        %v2822 = vmul.f32 %v2821, %v2789
        %v2823 = vadd.f32 %v2819, %v2822
        %v2824 = vmul.f32 %v2823, 0.01
        %v2825 = vmax.f32 %v2823, %v2824
        %s2826 = sld [smem:[#allocation3 + $0x1c]]
        %v2827 = vstv %s2826
        %v2828 = vmul.f32 %v2827, %v2787
        %s2829 = sld [smem:[#allocation3 + $0x1d]]
        %v2830 = vstv %s2829
        %v2831 = vmul.f32 %v2830, %v2789
        %v2832 = vadd.f32 %v2828, %v2831
        %v2833 = vmul.f32 %v2832, 0.01
        %v2834 = vmax.f32 %v2832, %v2833
        %s2835 = sld [smem:[#allocation3 + $0x23]]
        %v2836 = vstv %s2835
        %v2837 = vmul.f32 %v2836, %v2787
        %s2838 = sld [smem:[#allocation3 + $0x24]]
        %v2839 = vstv %s2838
        %v2840 = vmul.f32 %v2839, %v2789
        %v2841 = vadd.f32 %v2837, %v2840
        %v2842 = vmul.f32 %v2841, 0.01
        %v2843 = vmax.f32 %v2841, %v2842
        %s2844 = sld [smem:[#allocation3 + $0x2a]]
        %v2845 = vstv %s2844
        %v2846 = vmul.f32 %v2845, %v2787
        %s2847 = sld [smem:[#allocation3 + $0x2b]]
        %v2848 = vstv %s2847
        %v2849 = vmul.f32 %v2848, %v2789
        %v2850 = vadd.f32 %v2846, %v2849
        %v2851 = vmul.f32 %v2850, 0.01
        %v2852 = vmax.f32 %v2850, %v2851
        %s2853 = sld [smem:[#allocation3 + $0x31]]
        %v2854 = vstv %s2853
        %v2855 = vmul.f32 %v2854, %v2798
        %s2856 = sld [smem:[#allocation3 + $0x32]]
        %v2857 = vstv %s2856
        %v2858 = vmul.f32 %v2857, %v2807
        %v2859 = vadd.f32 %v2855, %v2858
        %s2860 = sld [smem:[#allocation3 + $0x33]]
        %v2861 = vstv %s2860
        %v2862 = vmul.f32 %v2861, %v2816
        %v2863 = vadd.f32 %v2859, %v2862
        %s2864 = sld [smem:[#allocation3 + $0x34]]
        %v2865 = vstv %s2864
        %v2866 = vmul.f32 %v2865, %v2825
        %v2867 = vadd.f32 %v2863, %v2866
        %s2868 = sld [smem:[#allocation3 + $0x35]]
        %v2869 = vstv %s2868
        %v2870 = vmul.f32 %v2869, %v2834
        %v2871 = vadd.f32 %v2867, %v2870
        %s2872 = sld [smem:[#allocation3 + $0x36]]
        %v2873 = vstv %s2872
        %v2874 = vmul.f32 %v2873, %v2843
        %v2875 = vadd.f32 %v2871, %v2874
        %s2876 = sld [smem:[#allocation3 + $0x37]]
        %v2877 = vstv %s2876
        %v2878 = vmul.f32 %v2877, %v2852
        %v2879 = vadd.f32 %v2875, %v2878
        %v2880 = vmul.f32 %v2879, 0.01
        %v2881 = vmax.f32 %v2879, %v2880
        %s2882 = sld [smem:[#allocation3 + $0x38]]
        %v2883 = vstv %s2882
        %v2884 = vmul.f32 %v2883, %v2798
        %s2885 = sld [smem:[#allocation3 + $0x39]]
        %v2886 = vstv %s2885
        %v2887 = vmul.f32 %v2886, %v2807
        %v2888 = vadd.f32 %v2884, %v2887
        %s2889 = sld [smem:[#allocation3 + $0x3a]]
        %v2890 = vstv %s2889
        %v2891 = vmul.f32 %v2890, %v2816
        %v2892 = vadd.f32 %v2888, %v2891
        %s2893 = sld [smem:[#allocation3 + $0x3b]]
        %v2894 = vstv %s2893
        %v2895 = vmul.f32 %v2894, %v2825
        %v2896 = vadd.f32 %v2892, %v2895
        %s2897 = sld [smem:[#allocation3 + $0x3c]]
        %v2898 = vstv %s2897
        %v2899 = vmul.f32 %v2898, %v2834
        %v2900 = vadd.f32 %v2896, %v2899
        %s2901 = sld [smem:[#allocation3 + $0x3d]]
        %v2902 = vstv %s2901
        %v2903 = vmul.f32 %v2902, %v2843
        %v2904 = vadd.f32 %v2900, %v2903
        %s2905 = sld [smem:[#allocation3 + $0x3e]]
        %v2906 = vstv %s2905
        %v2907 = vmul.f32 %v2906, %v2852
        %v2908 = vadd.f32 %v2904, %v2907
        %v2909 = vmul.f32 %v2908, 0.01
        %v2910 = vmax.f32 %v2908, %v2909
        %s2911 = sld [smem:[#allocation3 + $0x3f]]
        %v2912 = vstv %s2911
        %v2913 = vmul.f32 %v2912, %v2798
        %s2914 = sld [smem:[#allocation3 + $0x40]]
        %v2915 = vstv %s2914
        %v2916 = vmul.f32 %v2915, %v2807
        %v2917 = vadd.f32 %v2913, %v2916
        %s2918 = sld [smem:[#allocation3 + $0x41]]
        %v2919 = vstv %s2918
        %v2920 = vmul.f32 %v2919, %v2816
        %v2921 = vadd.f32 %v2917, %v2920
        %s2922 = sld [smem:[#allocation3 + $0x42]]
        %v2923 = vstv %s2922
        %v2924 = vmul.f32 %v2923, %v2825
        %v2925 = vadd.f32 %v2921, %v2924
        %s2926 = sld [smem:[#allocation3 + $0x43]]
        %v2927 = vstv %s2926
        %v2928 = vmul.f32 %v2927, %v2834
        %v2929 = vadd.f32 %v2925, %v2928
        %s2930 = sld [smem:[#allocation3 + $0x44]]
        %v2931 = vstv %s2930
        %v2932 = vmul.f32 %v2931, %v2843
        %v2933 = vadd.f32 %v2929, %v2932
        %s2934 = sld [smem:[#allocation3 + $0x45]]
        %v2935 = vstv %s2934
        %v2936 = vmul.f32 %v2935, %v2852
        %v2937 = vadd.f32 %v2933, %v2936
        %v2938 = vmul.f32 %v2937, 0.01
        %v2939 = vmax.f32 %v2937, %v2938
        %s2940 = sld [smem:[#allocation3 + $0x46]]
        %v2941 = vstv %s2940
        %v2942 = vmul.f32 %v2941, %v2798
        %s2943 = sld [smem:[#allocation3 + $0x47]]
        %v2944 = vstv %s2943
        %v2945 = vmul.f32 %v2944, %v2807
        %v2946 = vadd.f32 %v2942, %v2945
        %s2947 = sld [smem:[#allocation3 + $0x48]]
        %v2948 = vstv %s2947
        %v2949 = vmul.f32 %v2948, %v2816
        %v2950 = vadd.f32 %v2946, %v2949
        %s2951 = sld [smem:[#allocation3 + $0x49]]
        %v2952 = vstv %s2951
        %v2953 = vmul.f32 %v2952, %v2825
        %v2954 = vadd.f32 %v2950, %v2953
        %s2955 = sld [smem:[#allocation3 + $0x4a]]
        %v2956 = vstv %s2955
        %v2957 = vmul.f32 %v2956, %v2834
        %v2958 = vadd.f32 %v2954, %v2957
        %s2959 = sld [smem:[#allocation3 + $0x4b]]
        %v2960 = vstv %s2959
        %v2961 = vmul.f32 %v2960, %v2843
        %v2962 = vadd.f32 %v2958, %v2961
        %s2963 = sld [smem:[#allocation3 + $0x4c]]
        %v2964 = vstv %s2963
        %v2965 = vmul.f32 %v2964, %v2852
        %v2966 = vadd.f32 %v2962, %v2965
        %v2967 = vmul.f32 %v2966, 0.01
        %v2968 = vmax.f32 %v2966, %v2967
        %s2969 = sld [smem:[#allocation3 + $0x4d]]
        %v2970 = vstv %s2969
        %v2971 = vmul.f32 %v2970, %v2798
        %s2972 = sld [smem:[#allocation3 + $0x4e]]
        %v2973 = vstv %s2972
        %v2974 = vmul.f32 %v2973, %v2807
        %v2975 = vadd.f32 %v2971, %v2974
        %s2976 = sld [smem:[#allocation3 + $0x4f]]
        %v2977 = vstv %s2976
        %v2978 = vmul.f32 %v2977, %v2816
        %v2979 = vadd.f32 %v2975, %v2978
        %s2980 = sld [smem:[#allocation3 + $0x50]]
        %v2981 = vstv %s2980
        %v2982 = vmul.f32 %v2981, %v2825
        %v2983 = vadd.f32 %v2979, %v2982
        %s2984 = sld [smem:[#allocation3 + $0x51]]
        %v2985 = vstv %s2984
        %v2986 = vmul.f32 %v2985, %v2834
        %v2987 = vadd.f32 %v2983, %v2986
        %s2988 = sld [smem:[#allocation3 + $0x52]]
        %v2989 = vstv %s2988
        %v2990 = vmul.f32 %v2989, %v2843
        %v2991 = vadd.f32 %v2987, %v2990
        %s2992 = sld [smem:[#allocation3 + $0x53]]
        %v2993 = vstv %s2992
        %v2994 = vmul.f32 %v2993, %v2852
        %v2995 = vadd.f32 %v2991, %v2994
        %v2996 = vmul.f32 %v2995, 0.01
        %v2997 = vmax.f32 %v2995, %v2996
        %s2998 = sld [smem:[#allocation3 + $0x54]]
        %v2999 = vstv %s2998
        %v3000 = vmul.f32 %v2999, %v2798
        %s3001 = sld [smem:[#allocation3 + $0x55]]
        %v3002 = vstv %s3001
        %v3003 = vmul.f32 %v3002, %v2807
        %v3004 = vadd.f32 %v3000, %v3003
        %s3005 = sld [smem:[#allocation3 + $0x56]]
        %v3006 = vstv %s3005
        %v3007 = vmul.f32 %v3006, %v2816
        %v3008 = vadd.f32 %v3004, %v3007
        %s3009 = sld [smem:[#allocation3 + $0x57]]
        %v3010 = vstv %s3009
        %v3011 = vmul.f32 %v3010, %v2825
        %v3012 = vadd.f32 %v3008, %v3011
        %s3013 = sld [smem:[#allocation3 + $0x58]]
        %v3014 = vstv %s3013
        %v3015 = vmul.f32 %v3014, %v2834
        %v3016 = vadd.f32 %v3012, %v3015
        %s3017 = sld [smem:[#allocation3 + $0x59]]
        %v3018 = vstv %s3017
        %v3019 = vmul.f32 %v3018, %v2843
        %v3020 = vadd.f32 %v3016, %v3019
        %s3021 = sld [smem:[#allocation3 + $0x5a]]
        %v3022 = vstv %s3021
        %v3023 = vmul.f32 %v3022, %v2852
        %v3024 = vadd.f32 %v3020, %v3023
        %v3025 = vmul.f32 %v3024, 0.01
        %v3026 = vmax.f32 %v3024, %v3025
        %s3027 = sld [smem:[#allocation3 + $0x5b]]
        %v3028 = vstv %s3027
        %v3029 = vmul.f32 %v3028, %v2798
        %s3030 = sld [smem:[#allocation3 + $0x5c]]
        %v3031 = vstv %s3030
        %v3032 = vmul.f32 %v3031, %v2807
        %v3033 = vadd.f32 %v3029, %v3032
        %s3034 = sld [smem:[#allocation3 + $0x5d]]
        %v3035 = vstv %s3034
        %v3036 = vmul.f32 %v3035, %v2816
        %v3037 = vadd.f32 %v3033, %v3036
        %s3038 = sld [smem:[#allocation3 + $0x5e]]
        %v3039 = vstv %s3038
        %v3040 = vmul.f32 %v3039, %v2825
        %v3041 = vadd.f32 %v3037, %v3040
        %s3042 = sld [smem:[#allocation3 + $0x5f]]
        %v3043 = vstv %s3042
        %v3044 = vmul.f32 %v3043, %v2834
        %v3045 = vadd.f32 %v3041, %v3044
        %s3046 = sld [smem:[#allocation3 + $0x60]]
        %v3047 = vstv %s3046
        %v3048 = vmul.f32 %v3047, %v2843
        %v3049 = vadd.f32 %v3045, %v3048
        %s3050 = sld [smem:[#allocation3 + $0x61]]
        %v3051 = vstv %s3050
        %v3052 = vmul.f32 %v3051, %v2852
        %v3053 = vadd.f32 %v3049, %v3052
        %v3054 = vmul.f32 %v3053, 0.01
        %v3055 = vmax.f32 %v3053, %v3054
        %s3056 = sld [smem:[#allocation3 + $0x62]]
        %v3057 = vstv %s3056
        %v3058 = vmul.f32 %v3057, %v2881
        %s3059 = sld [smem:[#allocation3 + $0x63]]
        %v3060 = vstv %s3059
        %v3061 = vmul.f32 %v3060, %v2910
        %v3062 = vadd.f32 %v3058, %v3061
        %s3063 = sld [smem:[#allocation3 + $0x64]]
        %v3064 = vstv %s3063
        %v3065 = vmul.f32 %v3064, %v2939
        %v3066 = vadd.f32 %v3062, %v3065
        %s3067 = sld [smem:[#allocation3 + $0x65]]
        %v3068 = vstv %s3067
        %v3069 = vmul.f32 %v3068, %v2968
        %v3070 = vadd.f32 %v3066, %v3069
        %s3071 = sld [smem:[#allocation3 + $0x66]]
        %v3072 = vstv %s3071
        %v3073 = vmul.f32 %v3072, %v2997
        %v3074 = vadd.f32 %v3070, %v3073
        %s3075 = sld [smem:[#allocation3 + $0x67]]
        %v3076 = vstv %s3075
        %v3077 = vmul.f32 %v3076, %v3026
        %v3078 = vadd.f32 %v3074, %v3077
        %s3079 = sld [smem:[#allocation3 + $0x68]]
        %v3080 = vstv %s3079
        %v3081 = vmul.f32 %v3080, %v3055
        %v3082 = vadd.f32 %v3078, %v3081
        %v3083 = vmul.f32 %v3082, 0.01
        %v3084 = vmax.f32 %v3082, %v3083
        %s3085 = sld [smem:[#allocation3 + $0x69]]
        %v3086 = vstv %s3085
        %v3087 = vmul.f32 %v3086, %v2881
        %s3088 = sld [smem:[#allocation3 + $0x6a]]
        %v3089 = vstv %s3088
        %v3090 = vmul.f32 %v3089, %v2910
        %v3091 = vadd.f32 %v3087, %v3090
        %s3092 = sld [smem:[#allocation3 + $0x6b]]
        %v3093 = vstv %s3092
        %v3094 = vmul.f32 %v3093, %v2939
        %v3095 = vadd.f32 %v3091, %v3094
        %s3096 = sld [smem:[#allocation3 + $0x6c]]
        %v3097 = vstv %s3096
        %v3098 = vmul.f32 %v3097, %v2968
        %v3099 = vadd.f32 %v3095, %v3098
        %s3100 = sld [smem:[#allocation3 + $0x6d]]
        %v3101 = vstv %s3100
        %v3102 = vmul.f32 %v3101, %v2997
        %v3103 = vadd.f32 %v3099, %v3102
        %s3104 = sld [smem:[#allocation3 + $0x6e]]
        %v3105 = vstv %s3104
        %v3106 = vmul.f32 %v3105, %v3026
        %v3107 = vadd.f32 %v3103, %v3106
        %s3108 = sld [smem:[#allocation3 + $0x6f]]
        %v3109 = vstv %s3108
        %v3110 = vmul.f32 %v3109, %v3055
        %v3111 = vadd.f32 %v3107, %v3110
        %v3112 = vmul.f32 %v3111, 0.01
        %v3113 = vmax.f32 %v3111, %v3112
        %s3114 = sld [smem:[#allocation3 + $0x70]]
        %v3115 = vstv %s3114
        %v3116 = vmul.f32 %v3115, %v2881
        %s3117 = sld [smem:[#allocation3 + $0x71]]
        %v3118 = vstv %s3117
        %v3119 = vmul.f32 %v3118, %v2910
        %v3120 = vadd.f32 %v3116, %v3119
        %s3121 = sld [smem:[#allocation3 + $0x72]]
        %v3122 = vstv %s3121
        %v3123 = vmul.f32 %v3122, %v2939
        %v3124 = vadd.f32 %v3120, %v3123
        %s3125 = sld [smem:[#allocation3 + $0x73]]
        %v3126 = vstv %s3125
        %v3127 = vmul.f32 %v3126, %v2968
        %v3128 = vadd.f32 %v3124, %v3127
        %s3129 = sld [smem:[#allocation3 + $0x74]]
        %v3130 = vstv %s3129
        %v3131 = vmul.f32 %v3130, %v2997
        %v3132 = vadd.f32 %v3128, %v3131
        %s3133 = sld [smem:[#allocation3 + $0x75]]
        %v3134 = vstv %s3133
        %v3135 = vmul.f32 %v3134, %v3026
        %v3136 = vadd.f32 %v3132, %v3135
        %s3137 = sld [smem:[#allocation3 + $0x76]]
        %v3138 = vstv %s3137
        %v3139 = vmul.f32 %v3138, %v3055
        %v3140 = vadd.f32 %v3136, %v3139
        %v3141 = vmul.f32 %v3140, 0.01
        %v3142 = vmax.f32 %v3140, %v3141
        %s3143 = sld [smem:[#allocation3 + $0x77]]
        %v3144 = vstv %s3143
        %v3145 = vmul.f32 %v3144, %v2881
        %s3146 = sld [smem:[#allocation3 + $0x78]]
        %v3147 = vstv %s3146
        %v3148 = vmul.f32 %v3147, %v2910
        %v3149 = vadd.f32 %v3145, %v3148
        %s3150 = sld [smem:[#allocation3 + $0x79]]
        %v3151 = vstv %s3150
        %v3152 = vmul.f32 %v3151, %v2939
        %v3153 = vadd.f32 %v3149, %v3152
        %s3154 = sld [smem:[#allocation3 + $0x7a]]
        %v3155 = vstv %s3154
        %v3156 = vmul.f32 %v3155, %v2968
        %v3157 = vadd.f32 %v3153, %v3156
        %s3158 = sld [smem:[#allocation3 + $0x7b]]
        %v3159 = vstv %s3158
        %v3160 = vmul.f32 %v3159, %v2997
        %v3161 = vadd.f32 %v3157, %v3160
        %s3162 = sld [smem:[#allocation3 + $0x7c]]
        %v3163 = vstv %s3162
        %v3164 = vmul.f32 %v3163, %v3026
        %v3165 = vadd.f32 %v3161, %v3164
        %s3166 = sld [smem:[#allocation3 + $0x7d]]
        %v3167 = vstv %s3166
        %v3168 = vmul.f32 %v3167, %v3055
        %v3169 = vadd.f32 %v3165, %v3168
        %v3170 = vmul.f32 %v3169, 0.01
        %v3171 = vmax.f32 %v3169, %v3170
        %s3172 = sld [smem:[#allocation3 + $0x7e]]
        %v3173 = vstv %s3172
        %v3174 = vmul.f32 %v3173, %v2881
        %s3175 = sld [smem:[#allocation3 + $0x7f]]
        %v3176 = vstv %s3175
        %v3177 = vmul.f32 %v3176, %v2910
        %v3178 = vadd.f32 %v3174, %v3177
        %s3179 = sld [smem:[#allocation3 + $0x80]]
        %v3180 = vstv %s3179
        %v3181 = vmul.f32 %v3180, %v2939
        %v3182 = vadd.f32 %v3178, %v3181
        %s3183 = sld [smem:[#allocation3 + $0x81]]
        %v3184 = vstv %s3183
        %v3185 = vmul.f32 %v3184, %v2968
        %v3186 = vadd.f32 %v3182, %v3185
        %s3187 = sld [smem:[#allocation3 + $0x82]]
        %v3188 = vstv %s3187
        %v3189 = vmul.f32 %v3188, %v2997
        %v3190 = vadd.f32 %v3186, %v3189
        %s3191 = sld [smem:[#allocation3 + $0x83]]
        %v3192 = vstv %s3191
        %v3193 = vmul.f32 %v3192, %v3026
        %v3194 = vadd.f32 %v3190, %v3193
        %s3195 = sld [smem:[#allocation3 + $0x84]]
        %v3196 = vstv %s3195
        %v3197 = vmul.f32 %v3196, %v3055
        %v3198 = vadd.f32 %v3194, %v3197
        %v3199 = vmul.f32 %v3198, 0.01
        %v3200 = vmax.f32 %v3198, %v3199
        %s3201 = sld [smem:[#allocation3 + $0x85]]
        %v3202 = vstv %s3201
        %v3203 = vmul.f32 %v3202, %v2881
        %s3204 = sld [smem:[#allocation3 + $0x86]]
        %v3205 = vstv %s3204
        %v3206 = vmul.f32 %v3205, %v2910
        %v3207 = vadd.f32 %v3203, %v3206
        %s3208 = sld [smem:[#allocation3 + $0x87]]
        %v3209 = vstv %s3208
        %v3210 = vmul.f32 %v3209, %v2939
        %v3211 = vadd.f32 %v3207, %v3210
        %s3212 = sld [smem:[#allocation3 + $0x88]]
        %v3213 = vstv %s3212
        %v3214 = vmul.f32 %v3213, %v2968
        %v3215 = vadd.f32 %v3211, %v3214
        %s3216 = sld [smem:[#allocation3 + $0x89]]
        %v3217 = vstv %s3216
        %v3218 = vmul.f32 %v3217, %v2997
        %v3219 = vadd.f32 %v3215, %v3218
        %s3220 = sld [smem:[#allocation3 + $0x8a]]
        %v3221 = vstv %s3220
        %v3222 = vmul.f32 %v3221, %v3026
        %v3223 = vadd.f32 %v3219, %v3222
        %s3224 = sld [smem:[#allocation3 + $0x8b]]
        %v3225 = vstv %s3224
        %v3226 = vmul.f32 %v3225, %v3055
        %v3227 = vadd.f32 %v3223, %v3226
        %v3228 = vmul.f32 %v3227, 0.01
        %v3229 = vmax.f32 %v3227, %v3228
        %s3230 = sld [smem:[#allocation3 + $0x8c]]
        %v3231 = vstv %s3230
        %v3232 = vmul.f32 %v3231, %v2881
        %s3233 = sld [smem:[#allocation3 + $0x8d]]
        %v3234 = vstv %s3233
        %v3235 = vmul.f32 %v3234, %v2910
        %v3236 = vadd.f32 %v3232, %v3235
        %s3237 = sld [smem:[#allocation3 + $0x8e]]
        %v3238 = vstv %s3237
        %v3239 = vmul.f32 %v3238, %v2939
        %v3240 = vadd.f32 %v3236, %v3239
        %s3241 = sld [smem:[#allocation3 + $0x8f]]
        %v3242 = vstv %s3241
        %v3243 = vmul.f32 %v3242, %v2968
        %v3244 = vadd.f32 %v3240, %v3243
        %s3245 = sld [smem:[#allocation3 + $0x90]]
        %v3246 = vstv %s3245
        %v3247 = vmul.f32 %v3246, %v2997
        %v3248 = vadd.f32 %v3244, %v3247
        %s3249 = sld [smem:[#allocation3 + $0x91]]
        %v3250 = vstv %s3249
        %v3251 = vmul.f32 %v3250, %v3026
        %v3252 = vadd.f32 %v3248, %v3251
        %s3253 = sld [smem:[#allocation3 + $0x92]]
        %v3254 = vstv %s3253
        %v3255 = vmul.f32 %v3254, %v3055
        %v3256 = vadd.f32 %v3252, %v3255
        %v3257 = vmul.f32 %v3256, 0.01
        %v3258 = vmax.f32 %v3256, %v3257
        %s3259 = sld [smem:[#allocation3 + $0x93]]
        %v3260 = vstv %s3259
        %v3261 = vmul.f32 %v3260, %v3084
        %s3262 = sld [smem:[#allocation3 + $0x94]]
        %v3263 = vstv %s3262
        %v3264 = vmul.f32 %v3263, %v3113
        %v3265 = vadd.f32 %v3261, %v3264
        %s3266 = sld [smem:[#allocation3 + $0x95]]
        %v3267 = vstv %s3266
        %v3268 = vmul.f32 %v3267, %v3142
        %v3269 = vadd.f32 %v3265, %v3268
        %s3270 = sld [smem:[#allocation3 + $0x96]]
        %v3271 = vstv %s3270
        %v3272 = vmul.f32 %v3271, %v3171
        %v3273 = vadd.f32 %v3269, %v3272
        %s3274 = sld [smem:[#allocation3 + $0x97]]
        %v3275 = vstv %s3274
        %v3276 = vmul.f32 %v3275, %v3200
        %v3277 = vadd.f32 %v3273, %v3276
        %s3278 = sld [smem:[#allocation3 + $0x98]]
        %v3279 = vstv %s3278
        %v3280 = vmul.f32 %v3279, %v3229
        %v3281 = vadd.f32 %v3277, %v3280
        %s3282 = sld [smem:[#allocation3 + $0x99]]
        %v3283 = vstv %s3282
        %v3284 = vmul.f32 %v3283, %v3258
        %v3285 = vadd.f32 %v3281, %v3284
        %v3286 = vmul.f32 %v3285, 0.01
        %v3287 = vmax.f32 %v3285, %v3286
        %s3288 = sld [smem:[#allocation3 + $0x9a]]
        %v3289 = vstv %s3288
        %v3290 = vmul.f32 %v3289, %v3084
        %s3291 = sld [smem:[#allocation3 + $0x9b]]
        %v3292 = vstv %s3291
        %v3293 = vmul.f32 %v3292, %v3113
        %v3294 = vadd.f32 %v3290, %v3293
        %s3295 = sld [smem:[#allocation3 + $0x9c]]
        %v3296 = vstv %s3295
        %v3297 = vmul.f32 %v3296, %v3142
        %v3298 = vadd.f32 %v3294, %v3297
        %s3299 = sld [smem:[#allocation3 + $0x9d]]
        %v3300 = vstv %s3299
        %v3301 = vmul.f32 %v3300, %v3171
        %v3302 = vadd.f32 %v3298, %v3301
        %s3303 = sld [smem:[#allocation3 + $0x9e]]
        %v3304 = vstv %s3303
        %v3305 = vmul.f32 %v3304, %v3200
        %v3306 = vadd.f32 %v3302, %v3305
        %s3307 = sld [smem:[#allocation3 + $0x9f]]
        %v3308 = vstv %s3307
        %v3309 = vmul.f32 %v3308, %v3229
        %v3310 = vadd.f32 %v3306, %v3309
        %s3311 = sld [smem:[#allocation3 + $0xa0]]
        %v3312 = vstv %s3311
        %v3313 = vmul.f32 %v3312, %v3258
        %v3314 = vadd.f32 %v3310, %v3313
        %v3315 = vmul.f32 %v3314, 0.01
        %v3316 = vmax.f32 %v3314, %v3315
        %s3317 = sld [smem:[#allocation3 + $0xa1]]
        %v3318 = vstv %s3317
        %v3319 = vmul.f32 %v3318, %v3084
        %s3320 = sld [smem:[#allocation3 + $0xa2]]
        %v3321 = vstv %s3320
        %v3322 = vmul.f32 %v3321, %v3113
        %v3323 = vadd.f32 %v3319, %v3322
        %s3324 = sld [smem:[#allocation3 + $0xa3]]
        %v3325 = vstv %s3324
        %v3326 = vmul.f32 %v3325, %v3142
        %v3327 = vadd.f32 %v3323, %v3326
        %s3328 = sld [smem:[#allocation3 + $0xa4]]
        %v3329 = vstv %s3328
        %v3330 = vmul.f32 %v3329, %v3171
        %v3331 = vadd.f32 %v3327, %v3330
        %s3332 = sld [smem:[#allocation3 + $0xa5]]
        %v3333 = vstv %s3332
        %v3334 = vmul.f32 %v3333, %v3200
        %v3335 = vadd.f32 %v3331, %v3334
        %s3336 = sld [smem:[#allocation3 + $0xa6]]
        %v3337 = vstv %s3336
        %v3338 = vmul.f32 %v3337, %v3229
        %v3339 = vadd.f32 %v3335, %v3338
        %s3340 = sld [smem:[#allocation3 + $0xa7]]
        %v3341 = vstv %s3340
        %v3342 = vmul.f32 %v3341, %v3258
        %v3343 = vadd.f32 %v3339, %v3342
        %v3344 = vmul.f32 %v3343, 0.01
        %v3345 = vmax.f32 %v3343, %v3344
        %s3346 = sld [smem:[#allocation3 + $0xa8]]
        %v3347 = vstv %s3346
        %v3348 = vmul.f32 %v3347, %v3084
        %s3349 = sld [smem:[#allocation3 + $0xa9]]
        %v3350 = vstv %s3349
        %v3351 = vmul.f32 %v3350, %v3113
        %v3352 = vadd.f32 %v3348, %v3351
        %s3353 = sld [smem:[#allocation3 + $0xaa]]
        %v3354 = vstv %s3353
        %v3355 = vmul.f32 %v3354, %v3142
        %v3356 = vadd.f32 %v3352, %v3355
        %s3357 = sld [smem:[#allocation3 + $0xab]]
        %v3358 = vstv %s3357
        %v3359 = vmul.f32 %v3358, %v3171
        %v3360 = vadd.f32 %v3356, %v3359
        %s3361 = sld [smem:[#allocation3 + $0xac]]
        %v3362 = vstv %s3361
        %v3363 = vmul.f32 %v3362, %v3200
        %v3364 = vadd.f32 %v3360, %v3363
        %s3365 = sld [smem:[#allocation3 + $0xad]]
        %v3366 = vstv %s3365
        %v3367 = vmul.f32 %v3366, %v3229
        %v3368 = vadd.f32 %v3364, %v3367
        %s3369 = sld [smem:[#allocation3 + $0xae]]
        %v3370 = vstv %s3369
        %v3371 = vmul.f32 %v3370, %v3258
        %v3372 = vadd.f32 %v3368, %v3371
        %v3373 = vmul.f32 %v3372, 0.01
        %v3374 = vmax.f32 %v3372, %v3373
        %s3375 = sld [smem:[#allocation3 + $0xaf]]
        %v3376 = vstv %s3375
        %v3377 = vmul.f32 %v3376, %v3084
        %s3378 = sld [smem:[#allocation3 + $0xb0]]
        %v3379 = vstv %s3378
        %v3380 = vmul.f32 %v3379, %v3113
        %v3381 = vadd.f32 %v3377, %v3380
        %s3382 = sld [smem:[#allocation3 + $0xb1]]
        %v3383 = vstv %s3382
        %v3384 = vmul.f32 %v3383, %v3142
        %v3385 = vadd.f32 %v3381, %v3384
        %s3386 = sld [smem:[#allocation3 + $0xb2]]
        %v3387 = vstv %s3386
        %v3388 = vmul.f32 %v3387, %v3171
        %v3389 = vadd.f32 %v3385, %v3388
        %s3390 = sld [smem:[#allocation3 + $0xb3]]
        %v3391 = vstv %s3390
        %v3392 = vmul.f32 %v3391, %v3200
        %v3393 = vadd.f32 %v3389, %v3392
        %s3394 = sld [smem:[#allocation3 + $0xb4]]
        %v3395 = vstv %s3394
        %v3396 = vmul.f32 %v3395, %v3229
        %v3397 = vadd.f32 %v3393, %v3396
        %s3398 = sld [smem:[#allocation3 + $0xb5]]
        %v3399 = vstv %s3398
        %v3400 = vmul.f32 %v3399, %v3258
        %v3401 = vadd.f32 %v3397, %v3400
        %v3402 = vmul.f32 %v3401, 0.01
        %v3403 = vmax.f32 %v3401, %v3402
        %s3404 = sld [smem:[#allocation3 + $0xb6]]
        %v3405 = vstv %s3404
        %v3406 = vmul.f32 %v3405, %v3084
        %s3407 = sld [smem:[#allocation3 + $0xb7]]
        %v3408 = vstv %s3407
        %v3409 = vmul.f32 %v3408, %v3113
        %v3410 = vadd.f32 %v3406, %v3409
        %s3411 = sld [smem:[#allocation3 + $0xb8]]
        %v3412 = vstv %s3411
        %v3413 = vmul.f32 %v3412, %v3142
        %v3414 = vadd.f32 %v3410, %v3413
        %s3415 = sld [smem:[#allocation3 + $0xb9]]
        %v3416 = vstv %s3415
        %v3417 = vmul.f32 %v3416, %v3171
        %v3418 = vadd.f32 %v3414, %v3417
        %s3419 = sld [smem:[#allocation3 + $0xba]]
        %v3420 = vstv %s3419
        %v3421 = vmul.f32 %v3420, %v3200
        %v3422 = vadd.f32 %v3418, %v3421
        %s3423 = sld [smem:[#allocation3 + $0xbb]]
        %v3424 = vstv %s3423
        %v3425 = vmul.f32 %v3424, %v3229
        %v3426 = vadd.f32 %v3422, %v3425
        %s3427 = sld [smem:[#allocation3 + $0xbc]]
        %v3428 = vstv %s3427
        %v3429 = vmul.f32 %v3428, %v3258
        %v3430 = vadd.f32 %v3426, %v3429
        %v3431 = vmul.f32 %v3430, 0.01
        %v3432 = vmax.f32 %v3430, %v3431
        %s3433 = sld [smem:[#allocation3 + $0xbd]]
        %v3434 = vstv %s3433
        %v3435 = vmul.f32 %v3434, %v3084
        %s3436 = sld [smem:[#allocation3 + $0xbe]]
        %v3437 = vstv %s3436
        %v3438 = vmul.f32 %v3437, %v3113
        %v3439 = vadd.f32 %v3435, %v3438
        %s3440 = sld [smem:[#allocation3 + $0xbf]]
        %v3441 = vstv %s3440
        %v3442 = vmul.f32 %v3441, %v3142
        %v3443 = vadd.f32 %v3439, %v3442
        %s3444 = sld [smem:[#allocation3 + $0xc0]]
        %v3445 = vstv %s3444
        %v3446 = vmul.f32 %v3445, %v3171
        %v3447 = vadd.f32 %v3443, %v3446
        %s3448 = sld [smem:[#allocation3 + $0xc1]]
        %v3449 = vstv %s3448
        %v3450 = vmul.f32 %v3449, %v3200
        %v3451 = vadd.f32 %v3447, %v3450
        %s3452 = sld [smem:[#allocation3 + $0xc2]]
        %v3453 = vstv %s3452
        %v3454 = vmul.f32 %v3453, %v3229
        %v3455 = vadd.f32 %v3451, %v3454
        %s3456 = sld [smem:[#allocation3 + $0xc3]]
        %v3457 = vstv %s3456
        %v3458 = vmul.f32 %v3457, %v3258
        %v3459 = vadd.f32 %v3455, %v3458
        %v3460 = vmul.f32 %v3459, 0.01
        %v3461 = vmax.f32 %v3459, %v3460
        %s3462 = sld [smem:[#allocation3 + $0xc4]]
        %v3463 = vstv %s3462
        %v3464 = vmul.f32 %v3463, %v3287
        %s3465 = sld [smem:[#allocation3 + $0xc5]]
        %v3466 = vstv %s3465
        %v3467 = vmul.f32 %v3466, %v3316
        %v3468 = vadd.f32 %v3464, %v3467
        %s3469 = sld [smem:[#allocation3 + $0xc6]]
        %v3470 = vstv %s3469
        %v3471 = vmul.f32 %v3470, %v3345
        %v3472 = vadd.f32 %v3468, %v3471
        %s3473 = sld [smem:[#allocation3 + $0xc7]]
        %v3474 = vstv %s3473
        %v3475 = vmul.f32 %v3474, %v3374
        %v3476 = vadd.f32 %v3472, %v3475
        %s3477 = sld [smem:[#allocation3 + $0xc8]]
        %v3478 = vstv %s3477
        %v3479 = vmul.f32 %v3478, %v3403
        %v3480 = vadd.f32 %v3476, %v3479
        %s3481 = sld [smem:[#allocation3 + $0xc9]]
        %v3482 = vstv %s3481
        %v3483 = vmul.f32 %v3482, %v3432
        %v3484 = vadd.f32 %v3480, %v3483
        %s3485 = sld [smem:[#allocation3 + $0xca]]
        %v3486 = vstv %s3485
        %v3487 = vmul.f32 %v3486, %v3461
        %v3488 = vadd.f32 %v3484, %v3487
        %v3489 = vmul.f32 %v3488, 0.01
        %v3490 = vmax.f32 %v3488, %v3489
        %s3491 = sld [smem:[#allocation3 + $0xcb]]
        %v3492 = vstv %s3491
        %v3493 = vmul.f32 %v3492, %v3287
        %s3494 = sld [smem:[#allocation3 + $0xcc]]
        %v3495 = vstv %s3494
        %v3496 = vmul.f32 %v3495, %v3316
        %v3497 = vadd.f32 %v3493, %v3496
        %s3498 = sld [smem:[#allocation3 + $0xcd]]
        %v3499 = vstv %s3498
        %v3500 = vmul.f32 %v3499, %v3345
        %v3501 = vadd.f32 %v3497, %v3500
        %s3502 = sld [smem:[#allocation3 + $0xce]]
        %v3503 = vstv %s3502
        %v3504 = vmul.f32 %v3503, %v3374
        %v3505 = vadd.f32 %v3501, %v3504
        %s3506 = sld [smem:[#allocation3 + $0xcf]]
        %v3507 = vstv %s3506
        %v3508 = vmul.f32 %v3507, %v3403
        %v3509 = vadd.f32 %v3505, %v3508
        %s3510 = sld [smem:[#allocation3 + $0xd0]]
        %v3511 = vstv %s3510
        %v3512 = vmul.f32 %v3511, %v3432
        %v3513 = vadd.f32 %v3509, %v3512
        %s3514 = sld [smem:[#allocation3 + $0xd1]]
        %v3515 = vstv %s3514
        %v3516 = vmul.f32 %v3515, %v3461
        %v3517 = vadd.f32 %v3513, %v3516
        %v3518 = vmul.f32 %v3517, 0.01
        %v3519 = vmax.f32 %v3517, %v3518
        %s3520 = sld [smem:[#allocation3 + $0xd2]]
        %v3521 = vstv %s3520
        %v3522 = vmul.f32 %v3521, %v3287
        %s3523 = sld [smem:[#allocation3 + $0xd3]]
        %v3524 = vstv %s3523
        %v3525 = vmul.f32 %v3524, %v3316
        %v3526 = vadd.f32 %v3522, %v3525
        %s3527 = sld [smem:[#allocation3 + $0xd4]]
        %v3528 = vstv %s3527
        %v3529 = vmul.f32 %v3528, %v3345
        %v3530 = vadd.f32 %v3526, %v3529
        %s3531 = sld [smem:[#allocation3 + $0xd5]]
        %v3532 = vstv %s3531
        %v3533 = vmul.f32 %v3532, %v3374
        %v3534 = vadd.f32 %v3530, %v3533
        %s3535 = sld [smem:[#allocation3 + $0xd6]]
        %v3536 = vstv %s3535
        %v3537 = vmul.f32 %v3536, %v3403
        %v3538 = vadd.f32 %v3534, %v3537
        %s3539 = sld [smem:[#allocation3 + $0xd7]]
        %v3540 = vstv %s3539
        %v3541 = vmul.f32 %v3540, %v3432
        %v3542 = vadd.f32 %v3538, %v3541
        %s3543 = sld [smem:[#allocation3 + $0xd8]]
        %v3544 = vstv %s3543
        %v3545 = vmul.f32 %v3544, %v3461
        %v3546 = vadd.f32 %v3542, %v3545
        %v3547 = vmul.f32 %v3546, 0.01
        %v3548 = vmax.f32 %v3546, %v3547
        %s3549 = sld [smem:[#allocation3 + $0xd9]]
        %v3550 = vstv %s3549
        %v3551 = vmul.f32 %v3550, %v3287
        %s3552 = sld [smem:[#allocation3 + $0xda]]
        %v3553 = vstv %s3552
        %v3554 = vmul.f32 %v3553, %v3316
        %v3555 = vadd.f32 %v3551, %v3554
        %s3556 = sld [smem:[#allocation3 + $0xdb]]
        %v3557 = vstv %s3556
        %v3558 = vmul.f32 %v3557, %v3345
        %v3559 = vadd.f32 %v3555, %v3558
        %s3560 = sld [smem:[#allocation3 + $0xdc]]
        %v3561 = vstv %s3560
        %v3562 = vmul.f32 %v3561, %v3374
        %v3563 = vadd.f32 %v3559, %v3562
        %s3564 = sld [smem:[#allocation3 + $0xdd]]
        %v3565 = vstv %s3564
        %v3566 = vmul.f32 %v3565, %v3403
        %v3567 = vadd.f32 %v3563, %v3566
        %s3568 = sld [smem:[#allocation3 + $0xde]]
        %v3569 = vstv %s3568
        %v3570 = vmul.f32 %v3569, %v3432
        %v3571 = vadd.f32 %v3567, %v3570
        %s3572 = sld [smem:[#allocation3 + $0xdf]]
        %v3573 = vstv %s3572
        %v3574 = vmul.f32 %v3573, %v3461
        %v3575 = vadd.f32 %v3571, %v3574
        %v3576 = vmul.f32 %v3575, 0.01
        %v3577 = vmax.f32 %v3575, %v3576
        %s3578 = sld [smem:[#allocation3 + $0xe0]]
        %v3579 = vstv %s3578
        %v3580 = vmul.f32 %v3579, %v3287
        %s3581 = sld [smem:[#allocation3 + $0xe1]]
        %v3582 = vstv %s3581
        %v3583 = vmul.f32 %v3582, %v3316
        %v3584 = vadd.f32 %v3580, %v3583
        %s3585 = sld [smem:[#allocation3 + $0xe2]]
        %v3586 = vstv %s3585
        %v3587 = vmul.f32 %v3586, %v3345
        %v3588 = vadd.f32 %v3584, %v3587
        %s3589 = sld [smem:[#allocation3 + $0xe3]]
        %v3590 = vstv %s3589
        %v3591 = vmul.f32 %v3590, %v3374
        %v3592 = vadd.f32 %v3588, %v3591
        %s3593 = sld [smem:[#allocation3 + $0xe4]]
        %v3594 = vstv %s3593
        %v3595 = vmul.f32 %v3594, %v3403
        %v3596 = vadd.f32 %v3592, %v3595
        %s3597 = sld [smem:[#allocation3 + $0xe5]]
        %v3598 = vstv %s3597
        %v3599 = vmul.f32 %v3598, %v3432
        %v3600 = vadd.f32 %v3596, %v3599
        %s3601 = sld [smem:[#allocation3 + $0xe6]]
        %v3602 = vstv %s3601
        %v3603 = vmul.f32 %v3602, %v3461
        %v3604 = vadd.f32 %v3600, %v3603
        %v3605 = vmul.f32 %v3604, 0.01
        %v3606 = vmax.f32 %v3604, %v3605
        %s3607 = sld [smem:[#allocation3 + $0xe7]]
        %v3608 = vstv %s3607
        %v3609 = vmul.f32 %v3608, %v3287
        %s3610 = sld [smem:[#allocation3 + $0xe8]]
        %v3611 = vstv %s3610
        %v3612 = vmul.f32 %v3611, %v3316
        %v3613 = vadd.f32 %v3609, %v3612
        %s3614 = sld [smem:[#allocation3 + $0xe9]]
        %v3615 = vstv %s3614
        %v3616 = vmul.f32 %v3615, %v3345
        %v3617 = vadd.f32 %v3613, %v3616
        %s3618 = sld [smem:[#allocation3 + $0xea]]
        %v3619 = vstv %s3618
        %v3620 = vmul.f32 %v3619, %v3374
        %v3621 = vadd.f32 %v3617, %v3620
        %s3622 = sld [smem:[#allocation3 + $0xeb]]
        %v3623 = vstv %s3622
        %v3624 = vmul.f32 %v3623, %v3403
        %v3625 = vadd.f32 %v3621, %v3624
        %s3626 = sld [smem:[#allocation3 + $0xec]]
        %v3627 = vstv %s3626
        %v3628 = vmul.f32 %v3627, %v3432
        %v3629 = vadd.f32 %v3625, %v3628
        %s3630 = sld [smem:[#allocation3 + $0xed]]
        %v3631 = vstv %s3630
        %v3632 = vmul.f32 %v3631, %v3461
        %v3633 = vadd.f32 %v3629, %v3632
        %v3634 = vmul.f32 %v3633, 0.01
        %v3635 = vmax.f32 %v3633, %v3634
        %s3636 = sld [smem:[#allocation3 + $0xee]]
        %v3637 = vstv %s3636
        %v3638 = vmul.f32 %v3637, %v3287
        %s3639 = sld [smem:[#allocation3 + $0xef]]
        %v3640 = vstv %s3639
        %v3641 = vmul.f32 %v3640, %v3316
        %v3642 = vadd.f32 %v3638, %v3641
        %s3643 = sld [smem:[#allocation3 + $0xf0]]
        %v3644 = vstv %s3643
        %v3645 = vmul.f32 %v3644, %v3345
        %v3646 = vadd.f32 %v3642, %v3645
        %s3647 = sld [smem:[#allocation3 + $0xf1]]
        %v3648 = vstv %s3647
        %v3649 = vmul.f32 %v3648, %v3374
        %v3650 = vadd.f32 %v3646, %v3649
        %s3651 = sld [smem:[#allocation3 + $0xf2]]
        %v3652 = vstv %s3651
        %v3653 = vmul.f32 %v3652, %v3403
        %v3654 = vadd.f32 %v3650, %v3653
        %s3655 = sld [smem:[#allocation3 + $0xf3]]
        %v3656 = vstv %s3655
        %v3657 = vmul.f32 %v3656, %v3432
        %v3658 = vadd.f32 %v3654, %v3657
        %s3659 = sld [smem:[#allocation3 + $0xf4]]
        %v3660 = vstv %s3659
        %v3661 = vmul.f32 %v3660, %v3461
        %v3662 = vadd.f32 %v3658, %v3661
        %v3663 = vmul.f32 %v3662, 0.01
        %v3664 = vmax.f32 %v3662, %v3663
        %s3665 = sld [smem:[#allocation3 + $0xf5]]
        %v3666 = vstv %s3665
        %v3667 = vmul.f32 %v3666, %v3490
        %s3668 = sld [smem:[#allocation3 + $0xf6]]
        %v3669 = vstv %s3668
        %v3670 = vmul.f32 %v3669, %v3519
        %v3671 = vadd.f32 %v3667, %v3670
        %s3672 = sld [smem:[#allocation3 + $0xf7]]
        %v3673 = vstv %s3672
        %v3674 = vmul.f32 %v3673, %v3548
        %v3675 = vadd.f32 %v3671, %v3674
        %s3676 = sld [smem:[#allocation3 + $0xf8]]
        %v3677 = vstv %s3676
        %v3678 = vmul.f32 %v3677, %v3577
        %v3679 = vadd.f32 %v3675, %v3678
        %s3680 = sld [smem:[#allocation3 + $0xf9]]
        %v3681 = vstv %s3680
        %v3682 = vmul.f32 %v3681, %v3606
        %v3683 = vadd.f32 %v3679, %v3682
        %s3684 = sld [smem:[#allocation3 + $0xfa]]
        %v3685 = vstv %s3684
        %v3686 = vmul.f32 %v3685, %v3635
        %v3687 = vadd.f32 %v3683, %v3686
        %s3688 = sld [smem:[#allocation3 + $0xfb]]
        %v3689 = vstv %s3688
        %v3690 = vmul.f32 %v3689, %v3664
        %v3691 = vadd.f32 %v3687, %v3690
        %v3692 = vmul.f32 %v3691, 0.01
        %v3693 = vmax.f32 %v3691, %v3692
        %s3694 = sld [smem:[#allocation3 + $0xfc]]
        %v3695 = vstv %s3694
        %v3696 = vmul.f32 %v3695, %v3490
        %s3697 = sld [smem:[#allocation3 + $0xfd]]
        %v3698 = vstv %s3697
        %v3699 = vmul.f32 %v3698, %v3519
        %v3700 = vadd.f32 %v3696, %v3699
        %s3701 = sld [smem:[#allocation3 + $0xfe]]
        %v3702 = vstv %s3701
        %v3703 = vmul.f32 %v3702, %v3548
        %v3704 = vadd.f32 %v3700, %v3703
        %s3705 = sld [smem:[#allocation3 + $0xff]]
        %v3706 = vstv %s3705
        %v3707 = vmul.f32 %v3706, %v3577
        %v3708 = vadd.f32 %v3704, %v3707
        %s3709 = sld [smem:[#allocation3 + $0x100]]
        %v3710 = vstv %s3709
        %v3711 = vmul.f32 %v3710, %v3606
        %v3712 = vadd.f32 %v3708, %v3711
        %s3713 = sld [smem:[#allocation3 + $0x101]]
        %v3714 = vstv %s3713
        %v3715 = vmul.f32 %v3714, %v3635
        %v3716 = vadd.f32 %v3712, %v3715
        %s3717 = sld [smem:[#allocation3 + $0x102]]
        %v3718 = vstv %s3717
        %v3719 = vmul.f32 %v3718, %v3664
        %v3720 = vadd.f32 %v3716, %v3719
        %v3721 = vmul.f32 %v3720, 0.01
        %v3722 = vmax.f32 %v3720, %v3721
        %s3723 = sld [smem:[#allocation3 + $0x103]]
        %v3724 = vstv %s3723
        %v3725 = vmul.f32 %v3724, %v3490
        %s3726 = sld [smem:[#allocation3 + $0x104]]
        %v3727 = vstv %s3726
        %v3728 = vmul.f32 %v3727, %v3519
        %v3729 = vadd.f32 %v3725, %v3728
        %s3730 = sld [smem:[#allocation3 + $0x105]]
        %v3731 = vstv %s3730
        %v3732 = vmul.f32 %v3731, %v3548
        %v3733 = vadd.f32 %v3729, %v3732
        %s3734 = sld [smem:[#allocation3 + $0x106]]
        %v3735 = vstv %s3734
        %v3736 = vmul.f32 %v3735, %v3577
        %v3737 = vadd.f32 %v3733, %v3736
        %s3738 = sld [smem:[#allocation3 + $0x107]]
        %v3739 = vstv %s3738
        %v3740 = vmul.f32 %v3739, %v3606
        %v3741 = vadd.f32 %v3737, %v3740
        %s3742 = sld [smem:[#allocation3 + $0x108]]
        %v3743 = vstv %s3742
        %v3744 = vmul.f32 %v3743, %v3635
        %v3745 = vadd.f32 %v3741, %v3744
        %s3746 = sld [smem:[#allocation3 + $0x109]]
        %v3747 = vstv %s3746
        %v3748 = vmul.f32 %v3747, %v3664
        %v3749 = vadd.f32 %v3745, %v3748
        %v3750 = vmul.f32 %v3749, 0.01
        %v3751 = vmax.f32 %v3749, %v3750
        %s3752 = sld [smem:[#allocation3 + $0x10a]]
        %v3753 = vstv %s3752
        %v3754 = vmul.f32 %v3753, %v3490
        %s3755 = sld [smem:[#allocation3 + $0x10b]]
        %v3756 = vstv %s3755
        %v3757 = vmul.f32 %v3756, %v3519
        %v3758 = vadd.f32 %v3754, %v3757
        %s3759 = sld [smem:[#allocation3 + $0x10c]]
        %v3760 = vstv %s3759
        %v3761 = vmul.f32 %v3760, %v3548
        %v3762 = vadd.f32 %v3758, %v3761
        %s3763 = sld [smem:[#allocation3 + $0x10d]]
        %v3764 = vstv %s3763
        %v3765 = vmul.f32 %v3764, %v3577
        %v3766 = vadd.f32 %v3762, %v3765
        %s3767 = sld [smem:[#allocation3 + $0x10e]]
        %v3768 = vstv %s3767
        %v3769 = vmul.f32 %v3768, %v3606
        %v3770 = vadd.f32 %v3766, %v3769
        %s3771 = sld [smem:[#allocation3 + $0x10f]]
        %v3772 = vstv %s3771
        %v3773 = vmul.f32 %v3772, %v3635
        %v3774 = vadd.f32 %v3770, %v3773
        %s3775 = sld [smem:[#allocation3 + $0x110]]
        %v3776 = vstv %s3775
        %v3777 = vmul.f32 %v3776, %v3664
        %v3778 = vadd.f32 %v3774, %v3777
        %v3779 = vmul.f32 %v3778, 0.01
        %v3780 = vmax.f32 %v3778, %v3779
        %s3781 = sld [smem:[#allocation3 + $0x111]]
        %v3782 = vstv %s3781
        %v3783 = vmul.f32 %v3782, %v3490
        %s3784 = sld [smem:[#allocation3 + $0x112]]
        %v3785 = vstv %s3784
        %v3786 = vmul.f32 %v3785, %v3519
        %v3787 = vadd.f32 %v3783, %v3786
        %s3788 = sld [smem:[#allocation3 + $0x113]]
        %v3789 = vstv %s3788
        %v3790 = vmul.f32 %v3789, %v3548
        %v3791 = vadd.f32 %v3787, %v3790
        %s3792 = sld [smem:[#allocation3 + $0x114]]
        %v3793 = vstv %s3792
        %v3794 = vmul.f32 %v3793, %v3577
        %v3795 = vadd.f32 %v3791, %v3794
        %s3796 = sld [smem:[#allocation3 + $0x115]]
        %v3797 = vstv %s3796
        %v3798 = vmul.f32 %v3797, %v3606
        %v3799 = vadd.f32 %v3795, %v3798
        %s3800 = sld [smem:[#allocation3 + $0x116]]
        %v3801 = vstv %s3800
        %v3802 = vmul.f32 %v3801, %v3635
        %v3803 = vadd.f32 %v3799, %v3802
        %s3804 = sld [smem:[#allocation3 + $0x117]]
        %v3805 = vstv %s3804
        %v3806 = vmul.f32 %v3805, %v3664
        %v3807 = vadd.f32 %v3803, %v3806
        %v3808 = vmul.f32 %v3807, 0.01
        %v3809 = vmax.f32 %v3807, %v3808
        %s3810 = sld [smem:[#allocation3 + $0x118]]
        %v3811 = vstv %s3810
        %v3812 = vmul.f32 %v3811, %v3490
        %s3813 = sld [smem:[#allocation3 + $0x119]]
        %v3814 = vstv %s3813
        %v3815 = vmul.f32 %v3814, %v3519
        %v3816 = vadd.f32 %v3812, %v3815
        %s3817 = sld [smem:[#allocation3 + $0x11a]]
        %v3818 = vstv %s3817
        %v3819 = vmul.f32 %v3818, %v3548
        %v3820 = vadd.f32 %v3816, %v3819
        %s3821 = sld [smem:[#allocation3 + $0x11b]]
        %v3822 = vstv %s3821
        %v3823 = vmul.f32 %v3822, %v3577
        %v3824 = vadd.f32 %v3820, %v3823
        %s3825 = sld [smem:[#allocation3 + $0x11c]]
        %v3826 = vstv %s3825
        %v3827 = vmul.f32 %v3826, %v3606
        %v3828 = vadd.f32 %v3824, %v3827
        %s3829 = sld [smem:[#allocation3 + $0x11d]]
        %v3830 = vstv %s3829
        %v3831 = vmul.f32 %v3830, %v3635
        %v3832 = vadd.f32 %v3828, %v3831
        %s3833 = sld [smem:[#allocation3 + $0x11e]]
        %v3834 = vstv %s3833
        %v3835 = vmul.f32 %v3834, %v3664
        %v3836 = vadd.f32 %v3832, %v3835
        %v3837 = vmul.f32 %v3836, 0.01
        %v3838 = vmax.f32 %v3836, %v3837
        %s3839 = sld [smem:[#allocation3 + $0x11f]]
        %v3840 = vstv %s3839
        %v3841 = vmul.f32 %v3840, %v3490
        %s3842 = sld [smem:[#allocation3 + $0x120]]
        %v3843 = vstv %s3842
        %v3844 = vmul.f32 %v3843, %v3519
        %v3845 = vadd.f32 %v3841, %v3844
        %s3846 = sld [smem:[#allocation3 + $0x121]]
        %v3847 = vstv %s3846
        %v3848 = vmul.f32 %v3847, %v3548
        %v3849 = vadd.f32 %v3845, %v3848
        %s3850 = sld [smem:[#allocation3 + $0x122]]
        %v3851 = vstv %s3850
        %v3852 = vmul.f32 %v3851, %v3577
        %v3853 = vadd.f32 %v3849, %v3852
        %s3854 = sld [smem:[#allocation3 + $0x123]]
        %v3855 = vstv %s3854
        %v3856 = vmul.f32 %v3855, %v3606
        %v3857 = vadd.f32 %v3853, %v3856
        %s3858 = sld [smem:[#allocation3 + $0x124]]
        %v3859 = vstv %s3858
        %v3860 = vmul.f32 %v3859, %v3635
        %v3861 = vadd.f32 %v3857, %v3860
        %s3862 = sld [smem:[#allocation3 + $0x125]]
        %v3863 = vstv %s3862
        %v3864 = vmul.f32 %v3863, %v3664
        %v3865 = vadd.f32 %v3861, %v3864
        %v3866 = vmul.f32 %v3865, 0.01
        %v3867 = vmax.f32 %v3865, %v3866
        %s3868 = sld [smem:[#allocation3 + $0x126]]
        %v3869 = vstv %s3868
        %v3870 = vmul.f32 %v3869, %v3693
        %s3871 = sld [smem:[#allocation3 + $0x127]]
        %v3872 = vstv %s3871
        %v3873 = vmul.f32 %v3872, %v3722
        %v3874 = vadd.f32 %v3870, %v3873
        %s3875 = sld [smem:[#allocation3 + $0x128]]
        %v3876 = vstv %s3875
        %v3877 = vmul.f32 %v3876, %v3751
        %v3878 = vadd.f32 %v3874, %v3877
        %s3879 = sld [smem:[#allocation3 + $0x129]]
        %v3880 = vstv %s3879
        %v3881 = vmul.f32 %v3880, %v3780
        %v3882 = vadd.f32 %v3878, %v3881
        %s3883 = sld [smem:[#allocation3 + $0x12a]]
        %v3884 = vstv %s3883
        %v3885 = vmul.f32 %v3884, %v3809
        %v3886 = vadd.f32 %v3882, %v3885
        %s3887 = sld [smem:[#allocation3 + $0x12b]]
        %v3888 = vstv %s3887
        %v3889 = vmul.f32 %v3888, %v3838
        %v3890 = vadd.f32 %v3886, %v3889
        %s3891 = sld [smem:[#allocation3 + $0x12c]]
        %v3892 = vstv %s3891
        %v3893 = vmul.f32 %v3892, %v3867
        %v3894 = vadd.f32 %v3890, %v3893
        %v3895 = vmul.f32 %v3894, 0.01
        %v3896 = vmax.f32 %v3894, %v3895
        %s3897 = sld [smem:[#allocation3 + $0x12d]]
        %v3898 = vstv %s3897
        %v3899 = vmul.f32 %v3898, %v3693
        %s3900 = sld [smem:[#allocation3 + $0x12e]]
        %v3901 = vstv %s3900
        %v3902 = vmul.f32 %v3901, %v3722
        %v3903 = vadd.f32 %v3899, %v3902
        %s3904 = sld [smem:[#allocation3 + $0x12f]]
        %v3905 = vstv %s3904
        %v3906 = vmul.f32 %v3905, %v3751
        %v3907 = vadd.f32 %v3903, %v3906
        %s3908 = sld [smem:[#allocation3 + $0x130]]
        %v3909 = vstv %s3908
        %v3910 = vmul.f32 %v3909, %v3780
        %v3911 = vadd.f32 %v3907, %v3910
        %s3912 = sld [smem:[#allocation3 + $0x131]]
        %v3913 = vstv %s3912
        %v3914 = vmul.f32 %v3913, %v3809
        %v3915 = vadd.f32 %v3911, %v3914
        %s3916 = sld [smem:[#allocation3 + $0x132]]
        %v3917 = vstv %s3916
        %v3918 = vmul.f32 %v3917, %v3838
        %v3919 = vadd.f32 %v3915, %v3918
        %s3920 = sld [smem:[#allocation3 + $0x133]]
        %v3921 = vstv %s3920
        %v3922 = vmul.f32 %v3921, %v3867
        %v3923 = vadd.f32 %v3919, %v3922
        %v3924 = vmul.f32 %v3923, 0.01
        %v3925 = vmax.f32 %v3923, %v3924
        %s3926 = sld [smem:[#allocation3 + $0x134]]
        %v3927 = vstv %s3926
        %v3928 = vmul.f32 %v3927, %v3693
        %s3929 = sld [smem:[#allocation3 + $0x135]]
        %v3930 = vstv %s3929
        %v3931 = vmul.f32 %v3930, %v3722
        %v3932 = vadd.f32 %v3928, %v3931
        %s3933 = sld [smem:[#allocation3 + $0x136]]
        %v3934 = vstv %s3933
        %v3935 = vmul.f32 %v3934, %v3751
        %v3936 = vadd.f32 %v3932, %v3935
        %s3937 = sld [smem:[#allocation3 + $0x137]]
        %v3938 = vstv %s3937
        %v3939 = vmul.f32 %v3938, %v3780
        %v3940 = vadd.f32 %v3936, %v3939
        %s3941 = sld [smem:[#allocation3 + $0x138]]
        %v3942 = vstv %s3941
        %v3943 = vmul.f32 %v3942, %v3809
        %v3944 = vadd.f32 %v3940, %v3943
        %s3945 = sld [smem:[#allocation3 + $0x139]]
        %v3946 = vstv %s3945
        %v3947 = vmul.f32 %v3946, %v3838
        %v3948 = vadd.f32 %v3944, %v3947
        %s3949 = sld [smem:[#allocation3 + $0x13a]]
        %v3950 = vstv %s3949
        %v3951 = vmul.f32 %v3950, %v3867
        %v3952 = vadd.f32 %v3948, %v3951
        %v3953 = vmul.f32 %v3952, 0.01
        %v3954 = vmax.f32 %v3952, %v3953
        %s3955 = sld [smem:[#allocation3 + $0x13b]]
        %v3956 = vstv %s3955
        %v3957 = vmul.f32 %v3956, %v3693
        %s3958 = sld [smem:[#allocation3 + $0x13c]]
        %v3959 = vstv %s3958
        %v3960 = vmul.f32 %v3959, %v3722
        %v3961 = vadd.f32 %v3957, %v3960
        %s3962 = sld [smem:[#allocation3 + $0x13d]]
        %v3963 = vstv %s3962
        %v3964 = vmul.f32 %v3963, %v3751
        %v3965 = vadd.f32 %v3961, %v3964
        %s3966 = sld [smem:[#allocation3 + $0x13e]]
        %v3967 = vstv %s3966
        %v3968 = vmul.f32 %v3967, %v3780
        %v3969 = vadd.f32 %v3965, %v3968
        %s3970 = sld [smem:[#allocation3 + $0x13f]]
        %v3971 = vstv %s3970
        %v3972 = vmul.f32 %v3971, %v3809
        %v3973 = vadd.f32 %v3969, %v3972
        %s3974 = sld [smem:[#allocation3 + $0x140]]
        %v3975 = vstv %s3974
        %v3976 = vmul.f32 %v3975, %v3838
        %v3977 = vadd.f32 %v3973, %v3976
        %s3978 = sld [smem:[#allocation3 + $0x141]]
        %v3979 = vstv %s3978
        %v3980 = vmul.f32 %v3979, %v3867
        %v3981 = vadd.f32 %v3977, %v3980
        %v3982 = vmul.f32 %v3981, 0.01
        %v3983 = vmax.f32 %v3981, %v3982
        %s3984 = sld [smem:[#allocation3 + $0x142]]
        %v3985 = vstv %s3984
        %v3986 = vmul.f32 %v3985, %v3693
        %s3987 = sld [smem:[#allocation3 + $0x143]]
        %v3988 = vstv %s3987
        %v3989 = vmul.f32 %v3988, %v3722
        %v3990 = vadd.f32 %v3986, %v3989
        %s3991 = sld [smem:[#allocation3 + $0x144]]
        %v3992 = vstv %s3991
        %v3993 = vmul.f32 %v3992, %v3751
        %v3994 = vadd.f32 %v3990, %v3993
        %s3995 = sld [smem:[#allocation3 + $0x145]]
        %v3996 = vstv %s3995
        %v3997 = vmul.f32 %v3996, %v3780
        %v3998 = vadd.f32 %v3994, %v3997
        %s3999 = sld [smem:[#allocation3 + $0x146]]
        %v4000 = vstv %s3999
        %v4001 = vmul.f32 %v4000, %v3809
        %v4002 = vadd.f32 %v3998, %v4001
        %s4003 = sld [smem:[#allocation3 + $0x147]]
        %v4004 = vstv %s4003
        %v4005 = vmul.f32 %v4004, %v3838
        %v4006 = vadd.f32 %v4002, %v4005
        %s4007 = sld [smem:[#allocation3 + $0x148]]
        %v4008 = vstv %s4007
        %v4009 = vmul.f32 %v4008, %v3867
        %v4010 = vadd.f32 %v4006, %v4009
        %v4011 = vmul.f32 %v4010, 0.01
        %v4012 = vmax.f32 %v4010, %v4011
        %s4013 = sld [smem:[#allocation3 + $0x149]]
        %v4014 = vstv %s4013
        %v4015 = vmul.f32 %v4014, %v3693
        %s4016 = sld [smem:[#allocation3 + $0x14a]]
        %v4017 = vstv %s4016
        %v4018 = vmul.f32 %v4017, %v3722
        %v4019 = vadd.f32 %v4015, %v4018
        %s4020 = sld [smem:[#allocation3 + $0x14b]]
        %v4021 = vstv %s4020
        %v4022 = vmul.f32 %v4021, %v3751
        %v4023 = vadd.f32 %v4019, %v4022
        %s4024 = sld [smem:[#allocation3 + $0x14c]]
        %v4025 = vstv %s4024
        %v4026 = vmul.f32 %v4025, %v3780
        %v4027 = vadd.f32 %v4023, %v4026
        %s4028 = sld [smem:[#allocation3 + $0x14d]]
        %v4029 = vstv %s4028
        %v4030 = vmul.f32 %v4029, %v3809
        %v4031 = vadd.f32 %v4027, %v4030
        %s4032 = sld [smem:[#allocation3 + $0x14e]]
        %v4033 = vstv %s4032
        %v4034 = vmul.f32 %v4033, %v3838
        %v4035 = vadd.f32 %v4031, %v4034
        %s4036 = sld [smem:[#allocation3 + $0x14f]]
        %v4037 = vstv %s4036
        %v4038 = vmul.f32 %v4037, %v3867
        %v4039 = vadd.f32 %v4035, %v4038
        %v4040 = vmul.f32 %v4039, 0.01
        %v4041 = vmax.f32 %v4039, %v4040
        %s4042 = sld [smem:[#allocation3 + $0x150]]
        %v4043 = vstv %s4042
        %v4044 = vmul.f32 %v4043, %v3693
        %s4045 = sld [smem:[#allocation3 + $0x151]]
        %v4046 = vstv %s4045
        %v4047 = vmul.f32 %v4046, %v3722
        %v4048 = vadd.f32 %v4044, %v4047
        %s4049 = sld [smem:[#allocation3 + $0x152]]
        %v4050 = vstv %s4049
        %v4051 = vmul.f32 %v4050, %v3751
        %v4052 = vadd.f32 %v4048, %v4051
        %s4053 = sld [smem:[#allocation3 + $0x153]]
        %v4054 = vstv %s4053
        %v4055 = vmul.f32 %v4054, %v3780
        %v4056 = vadd.f32 %v4052, %v4055
        %s4057 = sld [smem:[#allocation3 + $0x154]]
        %v4058 = vstv %s4057
        %v4059 = vmul.f32 %v4058, %v3809
        %v4060 = vadd.f32 %v4056, %v4059
        %s4061 = sld [smem:[#allocation3 + $0x155]]
        %v4062 = vstv %s4061
        %v4063 = vmul.f32 %v4062, %v3838
        %v4064 = vadd.f32 %v4060, %v4063
        %s4065 = sld [smem:[#allocation3 + $0x156]]
        %v4066 = vstv %s4065
        %v4067 = vmul.f32 %v4066, %v3867
        %v4068 = vadd.f32 %v4064, %v4067
        %v4069 = vmul.f32 %v4068, 0.01
        %v4070 = vmax.f32 %v4068, %v4069
        %s4071 = sld [smem:[#allocation3 + $0x157]]
        %v4072 = vstv %s4071
        %v4073 = vmul.f32 %v4072, %v3896
        %s4074 = sld [smem:[#allocation3 + $0x158]]
        %v4075 = vstv %s4074
        %v4076 = vmul.f32 %v4075, %v3925
        %v4077 = vadd.f32 %v4073, %v4076
        %s4078 = sld [smem:[#allocation3 + $0x159]]
        %v4079 = vstv %s4078
        %v4080 = vmul.f32 %v4079, %v3954
        %v4081 = vadd.f32 %v4077, %v4080
        %s4082 = sld [smem:[#allocation3 + $0x15a]]
        %v4083 = vstv %s4082
        %v4084 = vmul.f32 %v4083, %v3983
        %v4085 = vadd.f32 %v4081, %v4084
        %s4086 = sld [smem:[#allocation3 + $0x15b]]
        %v4087 = vstv %s4086
        %v4088 = vmul.f32 %v4087, %v4012
        %v4089 = vadd.f32 %v4085, %v4088
        %s4090 = sld [smem:[#allocation3 + $0x15c]]
        %v4091 = vstv %s4090
        %v4092 = vmul.f32 %v4091, %v4041
        %v4093 = vadd.f32 %v4089, %v4092
        %s4094 = sld [smem:[#allocation3 + $0x15d]]
        %v4095 = vstv %s4094
        %v4096 = vmul.f32 %v4095, %v4070
        %v4097 = vadd.f32 %v4093, %v4096
        %v4098 = vmul.f32 %v4097, 0.01
        %v4099 = vmax.f32 %v4097, %v4098
        %s4100 = sld [smem:[#allocation3 + $0x15e]]
        %v4101 = vstv %s4100
        %v4102 = vmul.f32 %v4101, %v3896
        %s4103 = sld [smem:[#allocation3 + $0x15f]]
        %v4104 = vstv %s4103
        %v4105 = vmul.f32 %v4104, %v3925
        %v4106 = vadd.f32 %v4102, %v4105
        %s4107 = sld [smem:[#allocation3 + $0x160]]
        %v4108 = vstv %s4107
        %v4109 = vmul.f32 %v4108, %v3954
        %v4110 = vadd.f32 %v4106, %v4109
        %s4111 = sld [smem:[#allocation3 + $0x161]]
        %v4112 = vstv %s4111
        %v4113 = vmul.f32 %v4112, %v3983
        %v4114 = vadd.f32 %v4110, %v4113
        %s4115 = sld [smem:[#allocation3 + $0x162]]
        %v4116 = vstv %s4115
        %v4117 = vmul.f32 %v4116, %v4012
        %v4118 = vadd.f32 %v4114, %v4117
        %s4119 = sld [smem:[#allocation3 + $0x163]]
        %v4120 = vstv %s4119
        %v4121 = vmul.f32 %v4120, %v4041
        %v4122 = vadd.f32 %v4118, %v4121
        %s4123 = sld [smem:[#allocation3 + $0x164]]
        %v4124 = vstv %s4123
        %v4125 = vmul.f32 %v4124, %v4070
        %v4126 = vadd.f32 %v4122, %v4125
        %v4127 = vmul.f32 %v4126, 0.01
        %v4128 = vmax.f32 %v4126, %v4127
        %s4129 = sld [smem:[#allocation3 + $0x165]]
        %v4130 = vstv %s4129
        %v4131 = vmul.f32 %v4130, %v3896
        %s4132 = sld [smem:[#allocation3 + $0x166]]
        %v4133 = vstv %s4132
        %v4134 = vmul.f32 %v4133, %v3925
        %v4135 = vadd.f32 %v4131, %v4134
        %s4136 = sld [smem:[#allocation3 + $0x167]]
        %v4137 = vstv %s4136
        %v4138 = vmul.f32 %v4137, %v3954
        %v4139 = vadd.f32 %v4135, %v4138
        %s4140 = sld [smem:[#allocation3 + $0x168]]
        %v4141 = vstv %s4140
        %v4142 = vmul.f32 %v4141, %v3983
        %v4143 = vadd.f32 %v4139, %v4142
        %s4144 = sld [smem:[#allocation3 + $0x169]]
        %v4145 = vstv %s4144
        %v4146 = vmul.f32 %v4145, %v4012
        %v4147 = vadd.f32 %v4143, %v4146
        %s4148 = sld [smem:[#allocation3 + $0x16a]]
        %v4149 = vstv %s4148
        %v4150 = vmul.f32 %v4149, %v4041
        %v4151 = vadd.f32 %v4147, %v4150
        %s4152 = sld [smem:[#allocation3 + $0x16b]]
        %v4153 = vstv %s4152
        %v4154 = vmul.f32 %v4153, %v4070
        %v4155 = vadd.f32 %v4151, %v4154
        %v4156 = vmul.f32 %v4155, 0.01
        %v4157 = vmax.f32 %v4155, %v4156
        %s4158 = sld [smem:[#allocation3 + $0x16c]]
        %v4159 = vstv %s4158
        %v4160 = vmul.f32 %v4159, %v3896
        %s4161 = sld [smem:[#allocation3 + $0x16d]]
        %v4162 = vstv %s4161
        %v4163 = vmul.f32 %v4162, %v3925
        %v4164 = vadd.f32 %v4160, %v4163
        %s4165 = sld [smem:[#allocation3 + $0x16e]]
        %v4166 = vstv %s4165
        %v4167 = vmul.f32 %v4166, %v3954
        %v4168 = vadd.f32 %v4164, %v4167
        %s4169 = sld [smem:[#allocation3 + $0x16f]]
        %v4170 = vstv %s4169
        %v4171 = vmul.f32 %v4170, %v3983
        %v4172 = vadd.f32 %v4168, %v4171
        %s4173 = sld [smem:[#allocation3 + $0x170]]
        %v4174 = vstv %s4173
        %v4175 = vmul.f32 %v4174, %v4012
        %v4176 = vadd.f32 %v4172, %v4175
        %s4177 = sld [smem:[#allocation3 + $0x171]]
        %v4178 = vstv %s4177
        %v4179 = vmul.f32 %v4178, %v4041
        %v4180 = vadd.f32 %v4176, %v4179
        %s4181 = sld [smem:[#allocation3 + $0x172]]
        %v4182 = vstv %s4181
        %v4183 = vmul.f32 %v4182, %v4070
        %v4184 = vadd.f32 %v4180, %v4183
        %v4185 = vmul.f32 %v4184, 0.01
        %v4186 = vmax.f32 %v4184, %v4185
        %s4187 = sld [smem:[#allocation3 + $0x173]]
        %v4188 = vstv %s4187
        %v4189 = vmul.f32 %v4188, %v3896
        %s4190 = sld [smem:[#allocation3 + $0x174]]
        %v4191 = vstv %s4190
        %v4192 = vmul.f32 %v4191, %v3925
        %v4193 = vadd.f32 %v4189, %v4192
        %s4194 = sld [smem:[#allocation3 + $0x175]]
        %v4195 = vstv %s4194
        %v4196 = vmul.f32 %v4195, %v3954
        %v4197 = vadd.f32 %v4193, %v4196
        %s4198 = sld [smem:[#allocation3 + $0x176]]
        %v4199 = vstv %s4198
        %v4200 = vmul.f32 %v4199, %v3983
        %v4201 = vadd.f32 %v4197, %v4200
        %s4202 = sld [smem:[#allocation3 + $0x177]]
        %v4203 = vstv %s4202
        %v4204 = vmul.f32 %v4203, %v4012
        %v4205 = vadd.f32 %v4201, %v4204
        %s4206 = sld [smem:[#allocation3 + $0x178]]
        %v4207 = vstv %s4206
        %v4208 = vmul.f32 %v4207, %v4041
        %v4209 = vadd.f32 %v4205, %v4208
        %s4210 = sld [smem:[#allocation3 + $0x179]]
        %v4211 = vstv %s4210
        %v4212 = vmul.f32 %v4211, %v4070
        %v4213 = vadd.f32 %v4209, %v4212
        %v4214 = vmul.f32 %v4213, 0.01
        %v4215 = vmax.f32 %v4213, %v4214
        %s4216 = sld [smem:[#allocation3 + $0x17a]]
        %v4217 = vstv %s4216
        %v4218 = vmul.f32 %v4217, %v3896
        %s4219 = sld [smem:[#allocation3 + $0x17b]]
        %v4220 = vstv %s4219
        %v4221 = vmul.f32 %v4220, %v3925
        %v4222 = vadd.f32 %v4218, %v4221
        %s4223 = sld [smem:[#allocation3 + $0x17c]]
        %v4224 = vstv %s4223
        %v4225 = vmul.f32 %v4224, %v3954
        %v4226 = vadd.f32 %v4222, %v4225
        %s4227 = sld [smem:[#allocation3 + $0x17d]]
        %v4228 = vstv %s4227
        %v4229 = vmul.f32 %v4228, %v3983
        %v4230 = vadd.f32 %v4226, %v4229
        %s4231 = sld [smem:[#allocation3 + $0x17e]]
        %v4232 = vstv %s4231
        %v4233 = vmul.f32 %v4232, %v4012
        %v4234 = vadd.f32 %v4230, %v4233
        %s4235 = sld [smem:[#allocation3 + $0x17f]]
        %v4236 = vstv %s4235
        %v4237 = vmul.f32 %v4236, %v4041
        %v4238 = vadd.f32 %v4234, %v4237
        %s4239 = sld [smem:[#allocation3 + $0x180]]
        %v4240 = vstv %s4239
        %v4241 = vmul.f32 %v4240, %v4070
        %v4242 = vadd.f32 %v4238, %v4241
        %v4243 = vmul.f32 %v4242, 0.01
        %v4244 = vmax.f32 %v4242, %v4243
        %s4245 = sld [smem:[#allocation3 + $0x181]]
        %v4246 = vstv %s4245
        %v4247 = vmul.f32 %v4246, %v3896
        %s4248 = sld [smem:[#allocation3 + $0x182]]
        %v4249 = vstv %s4248
        %v4250 = vmul.f32 %v4249, %v3925
        %v4251 = vadd.f32 %v4247, %v4250
        %s4252 = sld [smem:[#allocation3 + $0x183]]
        %v4253 = vstv %s4252
        %v4254 = vmul.f32 %v4253, %v3954
        %v4255 = vadd.f32 %v4251, %v4254
        %s4256 = sld [smem:[#allocation3 + $0x184]]
        %v4257 = vstv %s4256
        %v4258 = vmul.f32 %v4257, %v3983
        %v4259 = vadd.f32 %v4255, %v4258
        %s4260 = sld [smem:[#allocation3 + $0x185]]
        %v4261 = vstv %s4260
        %v4262 = vmul.f32 %v4261, %v4012
        %v4263 = vadd.f32 %v4259, %v4262
        %s4264 = sld [smem:[#allocation3 + $0x186]]
        %v4265 = vstv %s4264
        %v4266 = vmul.f32 %v4265, %v4041
        %v4267 = vadd.f32 %v4263, %v4266
        %s4268 = sld [smem:[#allocation3 + $0x187]]
        %v4269 = vstv %s4268
        %v4270 = vmul.f32 %v4269, %v4070
        %v4271 = vadd.f32 %v4267, %v4270
        %v4272 = vmul.f32 %v4271, 0.01
        %v4273 = vmax.f32 %v4271, %v4272
        %s4274 = sld [smem:[#allocation3 + $0x188]]
        %v4275 = vstv %s4274
        %v4276 = vmul.f32 %v4275, %v4099
        %s4277 = sld [smem:[#allocation3 + $0x189]]
        %v4278 = vstv %s4277
        %v4279 = vmul.f32 %v4278, %v4128
        %v4280 = vadd.f32 %v4276, %v4279
        %s4281 = sld [smem:[#allocation3 + $0x18a]]
        %v4282 = vstv %s4281
        %v4283 = vmul.f32 %v4282, %v4157
        %v4284 = vadd.f32 %v4280, %v4283
        %s4285 = sld [smem:[#allocation3 + $0x18b]]
        %v4286 = vstv %s4285
        %v4287 = vmul.f32 %v4286, %v4186
        %v4288 = vadd.f32 %v4284, %v4287
        %s4289 = sld [smem:[#allocation3 + $0x18c]]
        %v4290 = vstv %s4289
        %v4291 = vmul.f32 %v4290, %v4215
        %v4292 = vadd.f32 %v4288, %v4291
        %s4293 = sld [smem:[#allocation3 + $0x18d]]
        %v4294 = vstv %s4293
        %v4295 = vmul.f32 %v4294, %v4244
        %v4296 = vadd.f32 %v4292, %v4295
        %s4297 = sld [smem:[#allocation3 + $0x18e]]
        %v4298 = vstv %s4297
        %v4299 = vmul.f32 %v4298, %v4273
        %v4300 = vadd.f32 %v4296, %v4299
        %v4301 = vmul.f32 %v4300, 0.01
        %v4302 = vmax.f32 %v4300, %v4301
        %s4303 = sld [smem:[#allocation3 + $0x18f]]
        %v4304 = vstv %s4303
        %v4305 = vmul.f32 %v4304, %v4099
        %s4306 = sld [smem:[#allocation3 + $0x190]]
        %v4307 = vstv %s4306
        %v4308 = vmul.f32 %v4307, %v4128
        %v4309 = vadd.f32 %v4305, %v4308
        %s4310 = sld [smem:[#allocation3 + $0x191]]
        %v4311 = vstv %s4310
        %v4312 = vmul.f32 %v4311, %v4157
        %v4313 = vadd.f32 %v4309, %v4312
        %s4314 = sld [smem:[#allocation3 + $0x192]]
        %v4315 = vstv %s4314
        %v4316 = vmul.f32 %v4315, %v4186
        %v4317 = vadd.f32 %v4313, %v4316
        %s4318 = sld [smem:[#allocation3 + $0x193]]
        %v4319 = vstv %s4318
        %v4320 = vmul.f32 %v4319, %v4215
        %v4321 = vadd.f32 %v4317, %v4320
        %s4322 = sld [smem:[#allocation3 + $0x194]]
        %v4323 = vstv %s4322
        %v4324 = vmul.f32 %v4323, %v4244
        %v4325 = vadd.f32 %v4321, %v4324
        %s4326 = sld [smem:[#allocation3 + $0x195]]
        %v4327 = vstv %s4326
        %v4328 = vmul.f32 %v4327, %v4273
        %v4329 = vadd.f32 %v4325, %v4328
        %v4330 = vmul.f32 %v4329, 0.01
        %v4331 = vmax.f32 %v4329, %v4330
        %s4332 = sld [smem:[#allocation3 + $0x196]]
        %v4333 = vstv %s4332
        %v4334 = vmul.f32 %v4333, %v4099
        %s4335 = sld [smem:[#allocation3 + $0x197]]
        %v4336 = vstv %s4335
        %v4337 = vmul.f32 %v4336, %v4128
        %v4338 = vadd.f32 %v4334, %v4337
        %s4339 = sld [smem:[#allocation3 + $0x198]]
        %v4340 = vstv %s4339
        %v4341 = vmul.f32 %v4340, %v4157
        %v4342 = vadd.f32 %v4338, %v4341
        %s4343 = sld [smem:[#allocation3 + $0x199]]
        %v4344 = vstv %s4343
        %v4345 = vmul.f32 %v4344, %v4186
        %v4346 = vadd.f32 %v4342, %v4345
        %s4347 = sld [smem:[#allocation3 + $0x19a]]
        %v4348 = vstv %s4347
        %v4349 = vmul.f32 %v4348, %v4215
        %v4350 = vadd.f32 %v4346, %v4349
        %s4351 = sld [smem:[#allocation3 + $0x19b]]
        %v4352 = vstv %s4351
        %v4353 = vmul.f32 %v4352, %v4244
        %v4354 = vadd.f32 %v4350, %v4353
        %s4355 = sld [smem:[#allocation3 + $0x19c]]
        %v4356 = vstv %s4355
        %v4357 = vmul.f32 %v4356, %v4273
        %v4358 = vadd.f32 %v4354, %v4357
        %v4359 = vmul.f32 %v4358, 0.01
        %v4360 = vmax.f32 %v4358, %v4359
        %s4361 = sld [smem:[#allocation3 + $0x19d]]
        %v4362 = vstv %s4361
        %v4363 = vmul.f32 %v4362, %v4099
        %s4364 = sld [smem:[#allocation3 + $0x19e]]
        %v4365 = vstv %s4364
        %v4366 = vmul.f32 %v4365, %v4128
        %v4367 = vadd.f32 %v4363, %v4366
        %s4368 = sld [smem:[#allocation3 + $0x19f]]
        %v4369 = vstv %s4368
        %v4370 = vmul.f32 %v4369, %v4157
        %v4371 = vadd.f32 %v4367, %v4370
        %s4372 = sld [smem:[#allocation3 + $0x1a0]]
        %v4373 = vstv %s4372
        %v4374 = vmul.f32 %v4373, %v4186
        %v4375 = vadd.f32 %v4371, %v4374
        %s4376 = sld [smem:[#allocation3 + $0x1a1]]
        %v4377 = vstv %s4376
        %v4378 = vmul.f32 %v4377, %v4215
        %v4379 = vadd.f32 %v4375, %v4378
        %s4380 = sld [smem:[#allocation3 + $0x1a2]]
        %v4381 = vstv %s4380
        %v4382 = vmul.f32 %v4381, %v4244
        %v4383 = vadd.f32 %v4379, %v4382
        %s4384 = sld [smem:[#allocation3 + $0x1a3]]
        %v4385 = vstv %s4384
        %v4386 = vmul.f32 %v4385, %v4273
        %v4387 = vadd.f32 %v4383, %v4386
        %v4388 = vmul.f32 %v4387, 0.01
        %v4389 = vmax.f32 %v4387, %v4388
        %s4390 = sld [smem:[#allocation3 + $0x1a4]]
        %v4391 = vstv %s4390
        %v4392 = vmul.f32 %v4391, %v4099
        %s4393 = sld [smem:[#allocation3 + $0x1a5]]
        %v4394 = vstv %s4393
        %v4395 = vmul.f32 %v4394, %v4128
        %v4396 = vadd.f32 %v4392, %v4395
        %s4397 = sld [smem:[#allocation3 + $0x1a6]]
        %v4398 = vstv %s4397
        %v4399 = vmul.f32 %v4398, %v4157
        %v4400 = vadd.f32 %v4396, %v4399
        %s4401 = sld [smem:[#allocation3 + $0x1a7]]
        %v4402 = vstv %s4401
        %v4403 = vmul.f32 %v4402, %v4186
        %v4404 = vadd.f32 %v4400, %v4403
        %s4405 = sld [smem:[#allocation3 + $0x1a8]]
        %v4406 = vstv %s4405
        %v4407 = vmul.f32 %v4406, %v4215
        %v4408 = vadd.f32 %v4404, %v4407
        %s4409 = sld [smem:[#allocation3 + $0x1a9]]
        %v4410 = vstv %s4409
        %v4411 = vmul.f32 %v4410, %v4244
        %v4412 = vadd.f32 %v4408, %v4411
        %s4413 = sld [smem:[#allocation3 + $0x1aa]]
        %v4414 = vstv %s4413
        %v4415 = vmul.f32 %v4414, %v4273
        %v4416 = vadd.f32 %v4412, %v4415
        %v4417 = vmul.f32 %v4416, 0.01
        %v4418 = vmax.f32 %v4416, %v4417
        %s4419 = sld [smem:[#allocation3 + $0x1ab]]
        %v4420 = vstv %s4419
        %v4421 = vmul.f32 %v4420, %v4099
        %s4422 = sld [smem:[#allocation3 + $0x1ac]]
        %v4423 = vstv %s4422
        %v4424 = vmul.f32 %v4423, %v4128
        %v4425 = vadd.f32 %v4421, %v4424
        %s4426 = sld [smem:[#allocation3 + $0x1ad]]
        %v4427 = vstv %s4426
        %v4428 = vmul.f32 %v4427, %v4157
        %v4429 = vadd.f32 %v4425, %v4428
        %s4430 = sld [smem:[#allocation3 + $0x1ae]]
        %v4431 = vstv %s4430
        %v4432 = vmul.f32 %v4431, %v4186
        %v4433 = vadd.f32 %v4429, %v4432
        %s4434 = sld [smem:[#allocation3 + $0x1af]]
        %v4435 = vstv %s4434
        %v4436 = vmul.f32 %v4435, %v4215
        %v4437 = vadd.f32 %v4433, %v4436
        %s4438 = sld [smem:[#allocation3 + $0x1b0]]
        %v4439 = vstv %s4438
        %v4440 = vmul.f32 %v4439, %v4244
        %v4441 = vadd.f32 %v4437, %v4440
        %s4442 = sld [smem:[#allocation3 + $0x1b1]]
        %v4443 = vstv %s4442
        %v4444 = vmul.f32 %v4443, %v4273
        %v4445 = vadd.f32 %v4441, %v4444
        %v4446 = vmul.f32 %v4445, 0.01
        %v4447 = vmax.f32 %v4445, %v4446
        %s4448 = sld [smem:[#allocation3 + $0x1b2]]
        %v4449 = vstv %s4448
        %v4450 = vmul.f32 %v4449, %v4099
        %s4451 = sld [smem:[#allocation3 + $0x1b3]]
        %v4452 = vstv %s4451
        %v4453 = vmul.f32 %v4452, %v4128
        %v4454 = vadd.f32 %v4450, %v4453
        %s4455 = sld [smem:[#allocation3 + $0x1b4]]
        %v4456 = vstv %s4455
        %v4457 = vmul.f32 %v4456, %v4157
        %v4458 = vadd.f32 %v4454, %v4457
        %s4459 = sld [smem:[#allocation3 + $0x1b5]]
        %v4460 = vstv %s4459
        %v4461 = vmul.f32 %v4460, %v4186
        %v4462 = vadd.f32 %v4458, %v4461
        %s4463 = sld [smem:[#allocation3 + $0x1b6]]
        %v4464 = vstv %s4463
        %v4465 = vmul.f32 %v4464, %v4215
        %v4466 = vadd.f32 %v4462, %v4465
        %s4467 = sld [smem:[#allocation3 + $0x1b7]]
        %v4468 = vstv %s4467
        %v4469 = vmul.f32 %v4468, %v4244
        %v4470 = vadd.f32 %v4466, %v4469
        %s4471 = sld [smem:[#allocation3 + $0x1b8]]
        %v4472 = vstv %s4471
        %v4473 = vmul.f32 %v4472, %v4273
        %v4474 = vadd.f32 %v4470, %v4473
        %v4475 = vmul.f32 %v4474, 0.01
        %v4476 = vmax.f32 %v4474, %v4475
        %s4477 = sld [smem:[#allocation3 + $0x1b9]]
        %v4478 = vstv %s4477
        %v4479 = vmul.f32 %v4478, %v4302
        %s4480 = sld [smem:[#allocation3 + $0x1ba]]
        %v4481 = vstv %s4480
        %v4482 = vmul.f32 %v4481, %v4331
        %v4483 = vadd.f32 %v4479, %v4482
        %s4484 = sld [smem:[#allocation3 + $0x1bb]]
        %v4485 = vstv %s4484
        %v4486 = vmul.f32 %v4485, %v4360
        %v4487 = vadd.f32 %v4483, %v4486
        %s4488 = sld [smem:[#allocation3 + $0x1bc]]
        %v4489 = vstv %s4488
        %v4490 = vmul.f32 %v4489, %v4389
        %v4491 = vadd.f32 %v4487, %v4490
        %s4492 = sld [smem:[#allocation3 + $0x1bd]]
        %v4493 = vstv %s4492
        %v4494 = vmul.f32 %v4493, %v4418
        %v4495 = vadd.f32 %v4491, %v4494
        %s4496 = sld [smem:[#allocation3 + $0x1be]]
        %v4497 = vstv %s4496
        %v4498 = vmul.f32 %v4497, %v4447
        %v4499 = vadd.f32 %v4495, %v4498
        %s4500 = sld [smem:[#allocation3 + $0x1bf]]
        %v4501 = vstv %s4500
        %v4502 = vmul.f32 %v4501, %v4476
        %v4503 = vadd.f32 %v4499, %v4502
        %v4504 = vmul.f32 %v4503, 0.01
        %v4505 = vmax.f32 %v4503, %v4504
        %4506 = vst [vmem:[%s170 + $0x10] sm:$0xff] %v4505
        %s4507 = sand.u32 %s61, 1
        %s4508 = scalar_lea.sflag [#allocation6], %s4507
        %s4509 = sand.u32 %s61, 1
        %s4510 = smul.addr %s4509, 24
        %s4511 = scalar_lea.vmem [#allocation7], %s4510
        // Predicated region
        $region29: #{tpu_custom_call.1} parent=23 // pred_check
          %p4512 = pneg %p71
        $region30: #{tpu_custom_call.1} parent=23 // pred_check_branch
          %4514 = sbr.rel (%p4512) target = $region32
        $region31: #{tpu_custom_call.1} parent=23 // pred_region
          %s4515 = smul.u32 3, %s27
          %4517 = vsyncadd %s4508, 0
          %s4518 = smul.addr %s4515, 8
          %s4519 = scalar_lea.hbm %s2, %s4518
          %s4520 = sshll.u32 %s4511, 4
          %s4521 = int_to_ptr.vmem [resolvable:$true] %s4520
          %s4522 = sshll.u32 %s4519, 4
          %s4523 = int_to_ptr.hbm [resolvable:$true] %s4522
          %4528 = dma.vmem_to_hbm [thread:$0]  %s4521, 384, %s4523, %s4508, 128, 128, 8
        $region32: #{tpu_custom_call.1} parent=23 // pred_fallthru
          _
      $region24: #{tpu_custom_call.1} parent=5 // pred_fallthru
        _
      %p4529 = scmp.le.s32.totalorder 2, %s22
      // Predicated region
      $region33: #{tpu_custom_call.1} parent=5 // pred_check
        %p4530 = pneg %p4529
      $region34: #{tpu_custom_call.1} parent=5 // pred_check_branch
        %4532 = sbr.rel (%p4530) target = $region36
      $region35: #{tpu_custom_call.1} parent=5 // pred_region
        %s4533 = ssub.s32 %s22, 2
        // Predicated region
        $region37: #{tpu_custom_call.1} parent=35 // pred_check
          %p4534 = pneg %p77
        $region38: #{tpu_custom_call.1} parent=35 // pred_check_branch
          %4536 = sbr.rel (%p4534) target = $region40
        $region39: #{tpu_custom_call.1} parent=35 // pred_region
          %s4537 = sand.u32 %s62, 1
          %s4538 = scalar_lea.sflag [#allocation6], %s4537
          %s4539 = sand.u32 %s62, 1
          %s4540 = smul.addr %s4539, 24
          %s4541 = scalar_lea.vmem [#allocation7], %s4540
          %4543 = dma.done %s4538, 384
        $region40: #{tpu_custom_call.1} parent=35 // pred_fallthru
          _
      $region36: #{tpu_custom_call.1} parent=5 // pred_fallthru
        _
    $region6: #{tpu_custom_call.1} parent=1 // loop_footer
      %s26 = sadd.s32 1, %s22
    $region7: #{tpu_custom_call.1} parent=1 // loop_footer_branch
      %21 = sbr.rel target = $region3
    $region8: #{tpu_custom_call.1} parent=1 // loop_exit
      _
    %4544 = vsyncpa [#allocation5], 1
    %s4545 = scalar_lea.sflag [#allocation5], 1
    %4546 = vsyncpa %s4545, 1
    %4547 = vsyncpa [#allocation6], 1
    %s4548 = scalar_lea.sflag [#allocation6], 1
    %4549 = vsyncpa %s4548, 1

</llo_original>
